<compile_context>
chip_gen: v7x
topology: tpu7x:2x2x1
jax: 0.10.0
libtpu: 0.0.40
codegen_flags: <defaults>
</compile_context>

<pallas_src>
import math
import jax
import jax.numpy as jnp
from jax.experimental import pallas as pl
from jax.experimental.pallas import tpu as pltpu  # noqa: F401  (kept for TPU-specific tweaks)

# ----------------------- hyperparameters (small, forward-consistent) -----------------
NUM_FEATS = 4
OUTPUT_FEATS = 3
LSTM_LAYERS = 1
N_LAYERS = 1          # transformer encoder layers per encoder
N_HEADS = 2
HIDDEN_DIM = 16       # per-head query/value dim
FF_DIM = 64
TF_DEPTH = 2
D_MODEL = HIDDEN_DIM * N_HEADS   # 32
LSTM_HIDDEN = D_MODEL // 2       # 16

BATCH = 2
SEQ = 8


# ----------------------------------- fused kernels ------------------------------------

def make_bilstm_kernel(B, T, H, has_pre, has_post):
    """Fused bidirectional LSTM over a (B*T, D) slab.

    Optionally applies a pre-projection (initial_ff) and/or a post-projection
    (final_ff) inside the same kernel.  Both LSTM directions run in one kernel;
    the input projection is hoisted to one batched matmul per direction and the
    time recurrence is fully unrolled (static T) so all indexing is static.
    """

    def kernel(*refs):
        refs = list(refs)
        x_ref = refs.pop(0)
        if has_pre:
            pre_w_ref = refs.pop(0)
            pre_b_ref = refs.pop(0)
        wih_f_ref = refs.pop(0)
        whh_f_ref = refs.pop(0)
        bf_ref = refs.pop(0)
        wih_b_ref = refs.pop(0)
        whh_b_ref = refs.pop(0)
        bb_ref = refs.pop(0)
        if has_post:
            post_w_ref = refs.pop(0)
            post_b_ref = refs.pop(0)
        o_ref = refs.pop(0)

        x = x_ref[...]                                   # (B*T, Din)
        if has_pre:
            x = jnp.dot(x, pre_w_ref[...],
                        preferred_element_type=jnp.float32) + pre_b_ref[...]

        # Hoisted input projections for both directions: (B*T, 4H) each.
        gates_f = jnp.dot(x, wih_f_ref[...],
                          preferred_element_type=jnp.float32) + bf_ref[...]
        gates_b = jnp.dot(x, wih_b_ref[...],
                          preferred_element_type=jnp.float32) + bb_ref[...]
        whh_f = whh_f_ref[...]
        whh_b = whh_b_ref[...]

        def rows_at(g, t):
            # Gather rows {b*T + t} -> (B, 4H); static slices (B, T, t all static).
            return jnp.concatenate(
                [g[b * T + t: b * T + t + 1, :] for b in range(B)], axis=0)

        def cell(pre_gates, h, c, whh):
            g = pre_gates + jnp.dot(h, whh, preferred_element_type=jnp.float32)
            i = jax.nn.sigmoid(g[:, 0:H])                # PyTorch gate order i,f,g,o
            f = jax.nn.sigmoid(g[:, H:2 * H])
            gg = jnp.tanh(g[:, 2 * H:3 * H])
            o = jax.nn.sigmoid(g[:, 3 * H:4 * H])
            c_new = f * c + i * gg
            h_new = o * jnp.tanh(c_new)
            return h_new, c_new

        zero = jnp.zeros((B, H), jnp.float32)

        # forward direction
        h_f, c_f = zero, zero
        hs_f = []
        for t in range(T):
            h_f, c_f = cell(rows_at(gates_f, t), h_f, c_f, whh_f)
            hs_f.append(h_f)

        # backward direction (same input x, reversed time; output aligned to time t)
        h_b, c_b = zero, zero
        hs_b = [None] * T
        for t in range(T - 1, -1, -1):
            h_b, c_b = cell(rows_at(gates_b, t), h_b, c_b, whh_b)
            hs_b[t] = h_b

        # Assemble (B*T, 2H) output, b-major rows: [h_fwd(t) , h_bwd(t)].
        rows = []
        for b in range(B):
            fwd_rows = jnp.concatenate(
                [hs_f[t][b:b + 1, :] for t in range(T)], axis=0)   # (T, H)
            bwd_rows = jnp.concatenate(
                [hs_b[t][b:b + 1, :] for t in range(T)], axis=0)   # (T, H)
            rows.append(jnp.concatenate([fwd_rows, bwd_rows], axis=1))  # (T, 2H)
        out = jnp.concatenate(rows, axis=0)                         # (B*T, 2H)

        if has_post:
            out = jnp.dot(out, post_w_ref[...],
                          preferred_element_type=jnp.float32) + post_b_ref[...]

        o_ref[...] = out

    return kernel


def make_encoder_layer_kernel(B, T, D, n_heads, apply_final_norm):
    """Fully-fused fast-transformers encoder layer (linear attention).

    x -> [qkv proj (fused W)] -> per-(batch,head) linear attention -> out proj
      -> residual + LN1 -> FF1(relu) -> FF2 -> residual + LN2 [-> final encoder LN].
    Everything stays in VMEM/vregs; only x in / x out touch HBM.
    """
    Dh = D // n_heads

    def kernel(x_ref, wqkv_ref, bqkv_ref, wo_ref, bo_ref,
               ln1g_ref, ln1b_ref, wf1_ref, bf1_ref, wf2_ref, bf2_ref,
               ln2g_ref, ln2b_ref, *rest):
        if apply_final_norm:
            fng_ref, fnb_ref, o_ref = rest
        else:
            (o_ref,) = rest

        def layernorm(z, g, b):
            m = jnp.mean(z, axis=-1, keepdims=True)
            v = jnp.mean((z - m) ** 2, axis=-1, keepdims=True)
            return (z - m) * jax.lax.rsqrt(v + 1e-5) * g + b

        def elu_p1(z):
            # elu(z) + 1 ; clamp exp argument so the dead branch never produces inf.
            return jnp.where(z > 0, z + 1.0, jnp.exp(jnp.minimum(z, 0.0)))

        x = x_ref[...]                                          # (B*T, D)

        # fused Q/K/V projection
        qkv = jnp.dot(x, wqkv_ref[...],
                      preferred_element_type=jnp.float32) + bqkv_ref[...]
        q = qkv[:, 0:D]
        k = qkv[:, D:2 * D]
        v = qkv[:, 2 * D:3 * D]

        # non-causal linear attention per (batch, head), static loops (B, n_heads tiny)
        batch_rows = []
        for b in range(B):
            r0, r1 = b * T, (b + 1) * T
            head_cols = []
            for h in range(n_heads):
                c0, c1 = h * Dh, (h + 1) * Dh
                Qf = elu_p1(q[r0:r1, c0:c1])                    # (T, Dh)
                Kf = elu_p1(k[r0:r1, c0:c1])                    # (T, Dh)
                vh = v[r0:r1, c0:c1]                            # (T, Dh)
                kv = jax.lax.dot_general(Kf, vh, (((0,), (0,)), ((), ())),
                                         preferred_element_type=jnp.float32)  # (Dh, Dh)
                ksum = jnp.sum(Kf, axis=0, keepdims=True)       # (1, Dh)
                z = 1.0 / (jnp.sum(Qf * ksum, axis=-1, keepdims=True) + 1e-6)  # (T, 1)
                head_cols.append(
                    jnp.dot(Qf, kv, preferred_element_type=jnp.float32) * z)
            batch_rows.append(jnp.concatenate(head_cols, axis=1))              # (T, D)
        attn = jnp.concatenate(batch_rows, axis=0)                              # (B*T, D)
        attn = jnp.dot(attn, wo_ref[...],
                       preferred_element_type=jnp.float32) + bo_ref[...]

        # residual + LN1
        x = layernorm(x + attn, ln1g_ref[...], ln1b_ref[...])

        # feed-forward
        y = jnp.maximum(jnp.dot(x, wf1_ref[...],
                                preferred_element_type=jnp.float32) + bf1_ref[...], 0.0)
        y = jnp.dot(y, wf2_ref[...],
                    preferred_element_type=jnp.float32) + bf2_ref[...]

        # residual + LN2 (+ optional final encoder LayerNorm)
        x = layernorm(x + y, ln2g_ref[...], ln2b_ref[...])
        if apply_final_norm:
            x = layernorm(x, fng_ref[...], fnb_ref[...])

        o_ref[...] = x

    return kernel


# ----------------------------------- kernel wrappers ----------------------------------

def run_bilstm_layer(x2d, lp, B, T, H, pre=None, post=None):
    has_pre = pre is not None
    has_post = post is not None
    args = [x2d]
    if has_pre:
        args += [pre['w'], pre['b']]
    args += [lp['f']['wih'], lp['f']['whh'], lp['f']['b'],
             lp['b']['wih'], lp['b']['whh'], lp['b']['b']]
    if has_post:
        args += [post['w'], post['b']]

    BT = B * T
    out_dim = post['w'].shape[1] if has_post else 2 * H
    d_in = pre['w'].shape[1] if has_pre else x2d.shape[1]

    flops = 4 * BT * d_in * 4 * H + 4 * T * B * H * 4 * H
    if has_pre:
        flops += 2 * BT * x2d.shape[1] * d_in
    if has_post:
        flops += 2 * BT * 2 * H * out_dim
    nbytes = 4 * (x2d.size + BT * out_dim + sum(int(a.size) for a in args[1:]))
    ce = pl.CostEstimate(flops=int(flops), transcendentals=int(8 * T * B * H),
                         bytes_accessed=int(nbytes))

    return pl.pallas_call(
        make_bilstm_kernel(B, T, H, has_pre, has_post),
        out_shape=jax.ShapeDtypeStruct((BT, out_dim), jnp.float32),
        cost_estimate=ce,
    )(*args)


def bilstm(x2d, layers, B, T, H, pre=None, post=None):
    n = len(layers)
    for i, lp in enumerate(layers):
        x2d = run_bilstm_layer(
            x2d, lp, B, T, H,
            pre=pre if i == 0 else None,
            post=post if i == n - 1 else None)
    return x2d


def run_encoder_layer(x2d, lp, B, T, final_norm=None):
    apply_fn = final_norm is not None
    args = [x2d, lp['wqkv'], lp['bqkv'], lp['o']['w'], lp['o']['b'],
            lp['ln1_g'], lp['ln1_b'],
            lp['ff1']['w'], lp['ff1']['b'], lp['ff2']['w'], lp['ff2']['b'],
            lp['ln2_g'], lp['ln2_b']]
    if apply_fn:
        args += [final_norm['g'], final_norm['b']]

    BT, D = x2d.shape
    Dh = D // N_HEADS
    flops = (2 * BT * D * 3 * D + 2 * BT * D * D
             + 2 * BT * D * FF_DIM + 2 * BT * FF_DIM * D
             + B * N_HEADS * 4 * T * Dh * Dh)
    nbytes = 4 * (2 * x2d.size + sum(int(a.size) for a in args[1:]))
    ce = pl.CostEstimate(flops=int(flops), transcendentals=int(2 * BT * D),
                         bytes_accessed=int(nbytes))

    return pl.pallas_call(
        make_encoder_layer_kernel(B, T, D, N_HEADS, apply_fn),
        out_shape=jax.ShapeDtypeStruct((BT, D), jnp.float32),
        cost_estimate=ce,
    )(*args)


def encoder_forward(x2d, ep, B, T):
    n = len(ep['layers'])
    for i, lp in enumerate(ep['layers']):
        fn = {'g': ep['norm_g'], 'b': ep['norm_b']} if i == n - 1 else None
        x2d = run_encoder_layer(x2d, lp, B, T, final_norm=fn)
    return x2d


# ----------------------------------- model forward ------------------------------------

def lstut_forward(src, params):
    B, T, F = src.shape
    x = src.reshape(B * T, F)                                  # canonical (B*T, feat) slab
    # initial_ff fused into the first BiLSTM kernel
    x = bilstm(x, params['lstm1'], B, T, LSTM_HIDDEN, pre=params['initial_ff'])
    # same encoder (same weights) applied tf_depth times, as in the PyTorch module
    for _ in range(TF_DEPTH):
        x = encoder_forward(x, params['encoder'], B, T)
    # final_ff fused into the second BiLSTM kernel
    x = bilstm(x, params['lstm2'], B, T, LSTM_HIDDEN, post=params['final_ff'])
    return x.reshape(B, T, OUTPUT_FEATS)


# ----------------------------------- parameter init -----------------------------------

def init_params(key):
    keys = iter(jax.random.split(key, 128))

    def nk():
        return next(keys)

    def uni(shape, scale):
        return jax.random.uniform(nk(), shape, jnp.float32, -scale, scale)

    def linear_p(nin, nout):
        s = 1.0 / math.sqrt(nin)
        # weights stored as (in, out); PyTorch stores (out, in) — same math.
        return {'w': uni((nin, nout), s), 'b': uni((1, nout), s)}

    def lstm_dir_p(nin, H):
        s = 1.0 / math.sqrt(H)
        # combined bias = bias_ih + bias_hh (equivalent at forward time)
        return {'wih': uni((nin, 4 * H), s),
                'whh': uni((H, 4 * H), s),
                'b': uni((1, 4 * H), s)}

    def lstm_p(nin, H, nlayers):
        layers = []
        d_in = nin
        for _ in range(nlayers):
            layers.append({'f': lstm_dir_p(d_in, H), 'b': lstm_dir_p(d_in, H)})
            d_in = 2 * H
        return layers

    def enc_layer_p():
        s = 1.0 / math.sqrt(D_MODEL)
        return {
            'wqkv': uni((D_MODEL, 3 * D_MODEL), s),     # fused Q/K/V projection
            'bqkv': uni((1, 3 * D_MODEL), s),
            'o': linear_p(D_MODEL, D_MODEL),
            'ln1_g': jnp.ones((1, D_MODEL), jnp.float32),
            'ln1_b': jnp.zeros((1, D_MODEL), jnp.float32),
            'ff1': linear_p(D_MODEL, FF_DIM),
            'ff2': linear_p(FF_DIM, D_MODEL),
            'ln2_g': jnp.ones((1, D_MODEL), jnp.float32),
            'ln2_b': jnp.zeros((1, D_MODEL), jnp.float32),
        }

    return {
        'initial_ff': linear_p(NUM_FEATS, D_MODEL),
        'lstm1': lstm_p(D_MODEL, LSTM_HIDDEN, LSTM_LAYERS),
        'encoder': {'layers': [enc_layer_p() for _ in range(N_LAYERS)],
                    'norm_g': jnp.ones((1, D_MODEL), jnp.float32),
                    'norm_b': jnp.zeros((1, D_MODEL), jnp.float32)},
        'lstm2': lstm_p(D_MODEL, LSTM_HIDDEN, LSTM_LAYERS),
        'final_ff': linear_p(D_MODEL, OUTPUT_FEATS),
    }


# ----------------------------------------- main ----------------------------------------

if __name__ == "__main__":
    src = jax.random.normal(jax.random.PRNGKey(0), (BATCH, SEQ, NUM_FEATS), jnp.float32)
    params = init_params(jax.random.PRNGKey(42))

    fwd = jax.jit(lambda s: lstut_forward(s, params))
    out = fwd(src)
    jax.block_until_ready(out)

    assert out.shape == (BATCH, SEQ, OUTPUT_FEATS), out.shape
    assert bool(jnp.all(jnp.isfinite(out)))
    print("KERNEL_OK")
</pallas_src>

<mosaic_0001>
module attributes {stable_mosaic.version = 11 : i64} {
  func.func @kernel(%arg0: memref<16x32xf32, #tpu.memory_space<vmem>>, %arg1: memref<32x96xf32, #tpu.memory_space<vmem>>, %arg2: memref<1x96xf32, #tpu.memory_space<vmem>>, %arg3: memref<32x32xf32, #tpu.memory_space<vmem>>, %arg4: memref<1x32xf32, #tpu.memory_space<vmem>>, %arg5: memref<1x32xf32, #tpu.memory_space<vmem>>, %arg6: memref<1x32xf32, #tpu.memory_space<vmem>>, %arg7: memref<32x64xf32, #tpu.memory_space<vmem>>, %arg8: memref<1x64xf32, #tpu.memory_space<vmem>>, %arg9: memref<64x32xf32, #tpu.memory_space<vmem>>, %arg10: memref<1x32xf32, #tpu.memory_space<vmem>>, %arg11: memref<1x32xf32, #tpu.memory_space<vmem>>, %arg12: memref<1x32xf32, #tpu.memory_space<vmem>>, %arg13: memref<1x32xf32, #tpu.memory_space<vmem>>, %arg14: memref<1x32xf32, #tpu.memory_space<vmem>>, %arg15: memref<16x32xf32, #tpu.memory_space<vmem>>) attributes {dimension_semantics = [], scalar_prefetch = 0 : i64, scratch_operands = 0 : i64, tpu.core_type = #tpu.core_type<tc>} {
    %c0 = arith.constant 0 : index
    %c0_0 = arith.constant 0 : index
    %0 = vector.load %arg0[%c0, %c0_0] : memref<16x32xf32, #tpu.memory_space<vmem>>, vector<16x32xf32>
    %c0_1 = arith.constant 0 : index
    %c0_2 = arith.constant 0 : index
    %1 = vector.load %arg1[%c0_1, %c0_2] : memref<32x96xf32, #tpu.memory_space<vmem>>, vector<32x96xf32>
    %cst = arith.constant dense<0.000000e+00> : vector<16x96xf32>
    %2 = tpu.matmul %0, %1, %cst {dimension_numbers = #tpu.dot_dimension_numbers<[1], [0], [0], [1], [0, 0, 1, 1], [], []>} : vector<16x32xf32>, vector<32x96xf32>, vector<16x96xf32> -> vector<16x96xf32>
    %c0_3 = arith.constant 0 : index
    %c0_4 = arith.constant 0 : index
    %3 = vector.load %arg2[%c0_3, %c0_4] : memref<1x96xf32, #tpu.memory_space<vmem>>, vector<1x96xf32>
    %4 = vector.broadcast %3 : vector<1x96xf32> to vector<16x96xf32>
    %5 = arith.addf %2, %4 : vector<16x96xf32>
    %6 = vector.extract_strided_slice %5 {offsets = [0, 0], sizes = [16, 32], strides = [1, 1]} : vector<16x96xf32> to vector<16x32xf32>
    %7 = vector.extract_strided_slice %5 {offsets = [0, 32], sizes = [16, 32], strides = [1, 1]} : vector<16x96xf32> to vector<16x32xf32>
    %8 = vector.extract_strided_slice %5 {offsets = [0, 64], sizes = [16, 32], strides = [1, 1]} : vector<16x96xf32> to vector<16x32xf32>
    %9 = vector.extract_strided_slice %6 {offsets = [0, 0], sizes = [8, 16], strides = [1, 1]} : vector<16x32xf32> to vector<8x16xf32>
    %cst_5 = arith.constant 0.000000e+00 : f32
    %10 = vector.broadcast %cst_5 : f32 to vector<8x16xf32>
    %11 = arith.cmpf ogt, %9, %10 : vector<8x16xf32>
    %cst_6 = arith.constant 1.000000e+00 : f32
    %12 = vector.broadcast %cst_6 : f32 to vector<8x16xf32>
    %13 = arith.addf %9, %12 : vector<8x16xf32>
    %cst_7 = arith.constant 0.000000e+00 : f32
    %14 = vector.broadcast %cst_7 : f32 to vector<8x16xf32>
    %15 = arith.minimumf %9, %14 : vector<8x16xf32>
    %16 = math.exp %15 : vector<8x16xf32>
    %17 = arith.select %11, %13, %16 : vector<8x16xi1>, vector<8x16xf32>
    %18 = vector.extract_strided_slice %7 {offsets = [0, 0], sizes = [8, 16], strides = [1, 1]} : vector<16x32xf32> to vector<8x16xf32>
    %cst_8 = arith.constant 0.000000e+00 : f32
    %19 = vector.broadcast %cst_8 : f32 to vector<8x16xf32>
    %20 = arith.cmpf ogt, %18, %19 : vector<8x16xf32>
    %cst_9 = arith.constant 1.000000e+00 : f32
    %21 = vector.broadcast %cst_9 : f32 to vector<8x16xf32>
    %22 = arith.addf %18, %21 : vector<8x16xf32>
    %cst_10 = arith.constant 0.000000e+00 : f32
    %23 = vector.broadcast %cst_10 : f32 to vector<8x16xf32>
    %24 = arith.minimumf %18, %23 : vector<8x16xf32>
    %25 = math.exp %24 : vector<8x16xf32>
    %26 = arith.select %20, %22, %25 : vector<8x16xi1>, vector<8x16xf32>
    %27 = vector.extract_strided_slice %8 {offsets = [0, 0], sizes = [8, 16], strides = [1, 1]} : vector<16x32xf32> to vector<8x16xf32>
    %cst_11 = arith.constant dense<0.000000e+00> : vector<16x16xf32>
    %28 = tpu.matmul %26, %27, %cst_11 {dimension_numbers = #tpu.dot_dimension_numbers<[0], [0], [1], [1], [0, 1, 1, 1], [], []>} : vector<8x16xf32>, vector<8x16xf32>, vector<16x16xf32> -> vector<16x16xf32>
    %cst_12 = arith.constant dense<0.000000e+00> : vector<16xf32>
    %29 = vector.multi_reduction <add>, %26, %cst_12 [0] : vector<8x16xf32> to vector<16xf32>
    %30 = vector.shape_cast %29 : vector<16xf32> to vector<1x16xf32>
    %31 = vector.broadcast %30 : vector<1x16xf32> to vector<8x16xf32>
    %32 = arith.mulf %17, %31 : vector<8x16xf32>
    %cst_13 = arith.constant dense<0.000000e+00> : vector<8xf32>
    %33 = vector.multi_reduction <add>, %32, %cst_13 [1] : vector<8x16xf32> to vector<8xf32>
    %34 = vector.shape_cast %33 : vector<8xf32> to vector<8x1xf32>
    %cst_14 = arith.constant 9.99999997E-7 : f32
    %35 = vector.broadcast %cst_14 : f32 to vector<8x1xf32>
    %36 = arith.addf %34, %35 : vector<8x1xf32>
    %cst_15 = arith.constant 1.000000e+00 : f32
    %37 = vector.broadcast %cst_15 : f32 to vector<8x1xf32>
    %38 = arith.divf %37, %36 : vector<8x1xf32>
    %cst_16 = arith.constant dense<0.000000e+00> : vector<8x16xf32>
    %39 = tpu.matmul %17, %28, %cst_16 {dimension_numbers = #tpu.dot_dimension_numbers<[1], [0], [0], [1], [0, 0, 1, 1], [], []>} : vector<8x16xf32>, vector<16x16xf32>, vector<8x16xf32> -> vector<8x16xf32>
    %40 = vector.broadcast %38 : vector<8x1xf32> to vector<8x16xf32>
    %41 = arith.mulf %39, %40 : vector<8x16xf32>
    %42 = vector.extract_strided_slice %6 {offsets = [0, 16], sizes = [8, 16], strides = [1, 1]} : vector<16x32xf32> to vector<8x16xf32>
    %cst_17 = arith.constant 0.000000e+00 : f32
    %43 = vector.broadcast %cst_17 : f32 to vector<8x16xf32>
    %44 = arith.cmpf ogt, %42, %43 : vector<8x16xf32>
    %cst_18 = arith.constant 1.000000e+00 : f32
    %45 = vector.broadcast %cst_18 : f32 to vector<8x16xf32>
    %46 = arith.addf %42, %45 : vector<8x16xf32>
    %cst_19 = arith.constant 0.000000e+00 : f32
    %47 = vector.broadcast %cst_19 : f32 to vector<8x16xf32>
    %48 = arith.minimumf %42, %47 : vector<8x16xf32>
    %49 = math.exp %48 : vector<8x16xf32>
    %50 = arith.select %44, %46, %49 : vector<8x16xi1>, vector<8x16xf32>
    %51 = vector.extract_strided_slice %7 {offsets = [0, 16], sizes = [8, 16], strides = [1, 1]} : vector<16x32xf32> to vector<8x16xf32>
    %cst_20 = arith.constant 0.000000e+00 : f32
    %52 = vector.broadcast %cst_20 : f32 to vector<8x16xf32>
    %53 = arith.cmpf ogt, %51, %52 : vector<8x16xf32>
    %cst_21 = arith.constant 1.000000e+00 : f32
    %54 = vector.broadcast %cst_21 : f32 to vector<8x16xf32>
    %55 = arith.addf %51, %54 : vector<8x16xf32>
    %cst_22 = arith.constant 0.000000e+00 : f32
    %56 = vector.broadcast %cst_22 : f32 to vector<8x16xf32>
    %57 = arith.minimumf %51, %56 : vector<8x16xf32>
    %58 = math.exp %57 : vector<8x16xf32>
    %59 = arith.select %53, %55, %58 : vector<8x16xi1>, vector<8x16xf32>
    %60 = vector.extract_strided_slice %8 {offsets = [0, 16], sizes = [8, 16], strides = [1, 1]} : vector<16x32xf32> to vector<8x16xf32>
    %cst_23 = arith.constant dense<0.000000e+00> : vector<16x16xf32>
    %61 = tpu.matmul %59, %60, %cst_23 {dimension_numbers = #tpu.dot_dimension_numbers<[0], [0], [1], [1], [0, 1, 1, 1], [], []>} : vector<8x16xf32>, vector<8x16xf32>, vector<16x16xf32> -> vector<16x16xf32>
    %cst_24 = arith.constant dense<0.000000e+00> : vector<16xf32>
    %62 = vector.multi_reduction <add>, %59, %cst_24 [0] : vector<8x16xf32> to vector<16xf32>
    %63 = vector.shape_cast %62 : vector<16xf32> to vector<1x16xf32>
    %64 = vector.broadcast %63 : vector<1x16xf32> to vector<8x16xf32>
    %65 = arith.mulf %50, %64 : vector<8x16xf32>
    %cst_25 = arith.constant dense<0.000000e+00> : vector<8xf32>
    %66 = vector.multi_reduction <add>, %65, %cst_25 [1] : vector<8x16xf32> to vector<8xf32>
    %67 = vector.shape_cast %66 : vector<8xf32> to vector<8x1xf32>
    %cst_26 = arith.constant 9.99999997E-7 : f32
    %68 = vector.broadcast %cst_26 : f32 to vector<8x1xf32>
    %69 = arith.addf %67, %68 : vector<8x1xf32>
    %cst_27 = arith.constant 1.000000e+00 : f32
    %70 = vector.broadcast %cst_27 : f32 to vector<8x1xf32>
    %71 = arith.divf %70, %69 : vector<8x1xf32>
    %cst_28 = arith.constant dense<0.000000e+00> : vector<8x16xf32>
    %72 = tpu.matmul %50, %61, %cst_28 {dimension_numbers = #tpu.dot_dimension_numbers<[1], [0], [0], [1], [0, 0, 1, 1], [], []>} : vector<8x16xf32>, vector<16x16xf32>, vector<8x16xf32> -> vector<8x16xf32>
    %73 = vector.broadcast %71 : vector<8x1xf32> to vector<8x16xf32>
    %74 = arith.mulf %72, %73 : vector<8x16xf32>
    %75 = tpu.concatenate %41, %74 in 1 : vector<8x16xf32>, vector<8x16xf32> -> vector<8x32xf32>
    %76 = vector.extract_strided_slice %6 {offsets = [8, 0], sizes = [8, 16], strides = [1, 1]} : vector<16x32xf32> to vector<8x16xf32>
    %cst_29 = arith.constant 0.000000e+00 : f32
    %77 = vector.broadcast %cst_29 : f32 to vector<8x16xf32>
    %78 = arith.cmpf ogt, %76, %77 : vector<8x16xf32>
    %cst_30 = arith.constant 1.000000e+00 : f32
    %79 = vector.broadcast %cst_30 : f32 to vector<8x16xf32>
    %80 = arith.addf %76, %79 : vector<8x16xf32>
    %cst_31 = arith.constant 0.000000e+00 : f32
    %81 = vector.broadcast %cst_31 : f32 to vector<8x16xf32>
    %82 = arith.minimumf %76, %81 : vector<8x16xf32>
    %83 = math.exp %82 : vector<8x16xf32>
    %84 = arith.select %78, %80, %83 : vector<8x16xi1>, vector<8x16xf32>
    %85 = vector.extract_strided_slice %7 {offsets = [8, 0], sizes = [8, 16], strides = [1, 1]} : vector<16x32xf32> to vector<8x16xf32>
    %cst_32 = arith.constant 0.000000e+00 : f32
    %86 = vector.broadcast %cst_32 : f32 to vector<8x16xf32>
    %87 = arith.cmpf ogt, %85, %86 : vector<8x16xf32>
    %cst_33 = arith.constant 1.000000e+00 : f32
    %88 = vector.broadcast %cst_33 : f32 to vector<8x16xf32>
    %89 = arith.addf %85, %88 : vector<8x16xf32>
    %cst_34 = arith.constant 0.000000e+00 : f32
    %90 = vector.broadcast %cst_34 : f32 to vector<8x16xf32>
    %91 = arith.minimumf %85, %90 : vector<8x16xf32>
    %92 = math.exp %91 : vector<8x16xf32>
    %93 = arith.select %87, %89, %92 : vector<8x16xi1>, vector<8x16xf32>
    %94 = vector.extract_strided_slice %8 {offsets = [8, 0], sizes = [8, 16], strides = [1, 1]} : vector<16x32xf32> to vector<8x16xf32>
    %cst_35 = arith.constant dense<0.000000e+00> : vector<16x16xf32>
    %95 = tpu.matmul %93, %94, %cst_35 {dimension_numbers = #tpu.dot_dimension_numbers<[0], [0], [1], [1], [0, 1, 1, 1], [], []>} : vector<8x16xf32>, vector<8x16xf32>, vector<16x16xf32> -> vector<16x16xf32>
    %cst_36 = arith.constant dense<0.000000e+00> : vector<16xf32>
    %96 = vector.multi_reduction <add>, %93, %cst_36 [0] : vector<8x16xf32> to vector<16xf32>
    %97 = vector.shape_cast %96 : vector<16xf32> to vector<1x16xf32>
    %98 = vector.broadcast %97 : vector<1x16xf32> to vector<8x16xf32>
    %99 = arith.mulf %84, %98 : vector<8x16xf32>
    %cst_37 = arith.constant dense<0.000000e+00> : vector<8xf32>
    %100 = vector.multi_reduction <add>, %99, %cst_37 [1] : vector<8x16xf32> to vector<8xf32>
    %101 = vector.shape_cast %100 : vector<8xf32> to vector<8x1xf32>
    %cst_38 = arith.constant 9.99999997E-7 : f32
    %102 = vector.broadcast %cst_38 : f32 to vector<8x1xf32>
    %103 = arith.addf %101, %102 : vector<8x1xf32>
    %cst_39 = arith.constant 1.000000e+00 : f32
    %104 = vector.broadcast %cst_39 : f32 to vector<8x1xf32>
    %105 = arith.divf %104, %103 : vector<8x1xf32>
    %cst_40 = arith.constant dense<0.000000e+00> : vector<8x16xf32>
    %106 = tpu.matmul %84, %95, %cst_40 {dimension_numbers = #tpu.dot_dimension_numbers<[1], [0], [0], [1], [0, 0, 1, 1], [], []>} : vector<8x16xf32>, vector<16x16xf32>, vector<8x16xf32> -> vector<8x16xf32>
    %107 = vector.broadcast %105 : vector<8x1xf32> to vector<8x16xf32>
    %108 = arith.mulf %106, %107 : vector<8x16xf32>
    %109 = vector.extract_strided_slice %6 {offsets = [8, 16], sizes = [8, 16], strides = [1, 1]} : vector<16x32xf32> to vector<8x16xf32>
    %cst_41 = arith.constant 0.000000e+00 : f32
    %110 = vector.broadcast %cst_41 : f32 to vector<8x16xf32>
    %111 = arith.cmpf ogt, %109, %110 : vector<8x16xf32>
    %cst_42 = arith.constant 1.000000e+00 : f32
    %112 = vector.broadcast %cst_42 : f32 to vector<8x16xf32>
    %113 = arith.addf %109, %112 : vector<8x16xf32>
    %cst_43 = arith.constant 0.000000e+00 : f32
    %114 = vector.broadcast %cst_43 : f32 to vector<8x16xf32>
    %115 = arith.minimumf %109, %114 : vector<8x16xf32>
    %116 = math.exp %115 : vector<8x16xf32>
    %117 = arith.select %111, %113, %116 : vector<8x16xi1>, vector<8x16xf32>
    %118 = vector.extract_strided_slice %7 {offsets = [8, 16], sizes = [8, 16], strides = [1, 1]} : vector<16x32xf32> to vector<8x16xf32>
    %cst_44 = arith.constant 0.000000e+00 : f32
    %119 = vector.broadcast %cst_44 : f32 to vector<8x16xf32>
    %120 = arith.cmpf ogt, %118, %119 : vector<8x16xf32>
    %cst_45 = arith.constant 1.000000e+00 : f32
    %121 = vector.broadcast %cst_45 : f32 to vector<8x16xf32>
    %122 = arith.addf %118, %121 : vector<8x16xf32>
    %cst_46 = arith.constant 0.000000e+00 : f32
    %123 = vector.broadcast %cst_46 : f32 to vector<8x16xf32>
    %124 = arith.minimumf %118, %123 : vector<8x16xf32>
    %125 = math.exp %124 : vector<8x16xf32>
    %126 = arith.select %120, %122, %125 : vector<8x16xi1>, vector<8x16xf32>
    %127 = vector.extract_strided_slice %8 {offsets = [8, 16], sizes = [8, 16], strides = [1, 1]} : vector<16x32xf32> to vector<8x16xf32>
    %cst_47 = arith.constant dense<0.000000e+00> : vector<16x16xf32>
    %128 = tpu.matmul %126, %127, %cst_47 {dimension_numbers = #tpu.dot_dimension_numbers<[0], [0], [1], [1], [0, 1, 1, 1], [], []>} : vector<8x16xf32>, vector<8x16xf32>, vector<16x16xf32> -> vector<16x16xf32>
    %cst_48 = arith.constant dense<0.000000e+00> : vector<16xf32>
    %129 = vector.multi_reduction <add>, %126, %cst_48 [0] : vector<8x16xf32> to vector<16xf32>
    %130 = vector.shape_cast %129 : vector<16xf32> to vector<1x16xf32>
    %131 = vector.broadcast %130 : vector<1x16xf32> to vector<8x16xf32>
    %132 = arith.mulf %117, %131 : vector<8x16xf32>
    %cst_49 = arith.constant dense<0.000000e+00> : vector<8xf32>
    %133 = vector.multi_reduction <add>, %132, %cst_49 [1] : vector<8x16xf32> to vector<8xf32>
    %134 = vector.shape_cast %133 : vector<8xf32> to vector<8x1xf32>
    %cst_50 = arith.constant 9.99999997E-7 : f32
    %135 = vector.broadcast %cst_50 : f32 to vector<8x1xf32>
    %136 = arith.addf %134, %135 : vector<8x1xf32>
    %cst_51 = arith.constant 1.000000e+00 : f32
    %137 = vector.broadcast %cst_51 : f32 to vector<8x1xf32>
    %138 = arith.divf %137, %136 : vector<8x1xf32>
    %cst_52 = arith.constant dense<0.000000e+00> : vector<8x16xf32>
    %139 = tpu.matmul %117, %128, %cst_52 {dimension_numbers = #tpu.dot_dimension_numbers<[1], [0], [0], [1], [0, 0, 1, 1], [], []>} : vector<8x16xf32>, vector<16x16xf32>, vector<8x16xf32> -> vector<8x16xf32>
    %140 = vector.broadcast %138 : vector<8x1xf32> to vector<8x16xf32>
    %141 = arith.mulf %139, %140 : vector<8x16xf32>
    %142 = tpu.concatenate %108, %141 in 1 : vector<8x16xf32>, vector<8x16xf32> -> vector<8x32xf32>
    %143 = tpu.concatenate %75, %142 in 0 : vector<8x32xf32>, vector<8x32xf32> -> vector<16x32xf32>
    %c0_53 = arith.constant 0 : index
    %c0_54 = arith.constant 0 : index
    %144 = vector.load %arg3[%c0_53, %c0_54] : memref<32x32xf32, #tpu.memory_space<vmem>>, vector<32x32xf32>
    %cst_55 = arith.constant dense<0.000000e+00> : vector<16x32xf32>
    %145 = tpu.matmul %143, %144, %cst_55 {dimension_numbers = #tpu.dot_dimension_numbers<[1], [0], [0], [1], [0, 0, 1, 1], [], []>} : vector<16x32xf32>, vector<32x32xf32>, vector<16x32xf32> -> vector<16x32xf32>
    %c0_56 = arith.constant 0 : index
    %c0_57 = arith.constant 0 : index
    %146 = vector.load %arg4[%c0_56, %c0_57] : memref<1x32xf32, #tpu.memory_space<vmem>>, vector<1x32xf32>
    %147 = vector.broadcast %146 : vector<1x32xf32> to vector<16x32xf32>
    %148 = arith.addf %145, %147 : vector<16x32xf32>
    %149 = arith.addf %0, %148 : vector<16x32xf32>
    %c0_58 = arith.constant 0 : index
    %c0_59 = arith.constant 0 : index
    %150 = vector.load %arg5[%c0_58, %c0_59] : memref<1x32xf32, #tpu.memory_space<vmem>>, vector<1x32xf32>
    %c0_60 = arith.constant 0 : index
    %c0_61 = arith.constant 0 : index
    %151 = vector.load %arg6[%c0_60, %c0_61] : memref<1x32xf32, #tpu.memory_space<vmem>>, vector<1x32xf32>
    %cst_62 = arith.constant dense<0.000000e+00> : vector<16xf32>
    %152 = vector.multi_reduction <add>, %149, %cst_62 [1] : vector<16x32xf32> to vector<16xf32>
    %153 = vector.shape_cast %152 : vector<16xf32> to vector<16x1xf32>
    %cst_63 = arith.constant 3.200000e+01 : f32
    %154 = vector.broadcast %cst_63 : f32 to vector<16x1xf32>
    %155 = arith.divf %153, %154 : vector<16x1xf32>
    %156 = vector.broadcast %155 : vector<16x1xf32> to vector<16x32xf32>
    %157 = arith.subf %149, %156 : vector<16x32xf32>
    %158 = arith.mulf %157, %157 : vector<16x32xf32>
    %cst_64 = arith.constant dense<0.000000e+00> : vector<16xf32>
    %159 = vector.multi_reduction <add>, %158, %cst_64 [1] : vector<16x32xf32> to vector<16xf32>
    %160 = vector.shape_cast %159 : vector<16xf32> to vector<16x1xf32>
    %cst_65 = arith.constant 3.200000e+01 : f32
    %161 = vector.broadcast %cst_65 : f32 to vector<16x1xf32>
    %162 = arith.divf %160, %161 : vector<16x1xf32>
    %163 = vector.broadcast %155 : vector<16x1xf32> to vector<16x32xf32>
    %164 = arith.subf %149, %163 : vector<16x32xf32>
    %cst_66 = arith.constant 9.99999974E-6 : f32
    %165 = vector.broadcast %cst_66 : f32 to vector<16x1xf32>
    %166 = arith.addf %162, %165 : vector<16x1xf32>
    %167 = math.rsqrt %166 : vector<16x1xf32>
    %168 = vector.broadcast %167 : vector<16x1xf32> to vector<16x32xf32>
    %169 = arith.mulf %164, %168 : vector<16x32xf32>
    %170 = vector.broadcast %150 : vector<1x32xf32> to vector<16x32xf32>
    %171 = arith.mulf %169, %170 : vector<16x32xf32>
    %172 = vector.broadcast %151 : vector<1x32xf32> to vector<16x32xf32>
    %173 = arith.addf %171, %172 : vector<16x32xf32>
    %c0_67 = arith.constant 0 : index
    %c0_68 = arith.constant 0 : index
    %174 = vector.load %arg7[%c0_67, %c0_68] : memref<32x64xf32, #tpu.memory_space<vmem>>, vector<32x64xf32>
    %cst_69 = arith.constant dense<0.000000e+00> : vector<16x64xf32>
    %175 = tpu.matmul %173, %174, %cst_69 {dimension_numbers = #tpu.dot_dimension_numbers<[1], [0], [0], [1], [0, 0, 1, 1], [], []>} : vector<16x32xf32>, vector<32x64xf32>, vector<16x64xf32> -> vector<16x64xf32>
    %c0_70 = arith.constant 0 : index
    %c0_71 = arith.constant 0 : index
    %176 = vector.load %arg8[%c0_70, %c0_71] : memref<1x64xf32, #tpu.memory_space<vmem>>, vector<1x64xf32>
    %177 = vector.broadcast %176 : vector<1x64xf32> to vector<16x64xf32>
    %178 = arith.addf %175, %177 : vector<16x64xf32>
    %cst_72 = arith.constant 0.000000e+00 : f32
    %179 = vector.broadcast %cst_72 : f32 to vector<16x64xf32>
    %180 = arith.maximumf %178, %179 : vector<16x64xf32>
    %c0_73 = arith.constant 0 : index
    %c0_74 = arith.constant 0 : index
    %181 = vector.load %arg9[%c0_73, %c0_74] : memref<64x32xf32, #tpu.memory_space<vmem>>, vector<64x32xf32>
    %cst_75 = arith.constant dense<0.000000e+00> : vector<16x32xf32>
    %182 = tpu.matmul %180, %181, %cst_75 {dimension_numbers = #tpu.dot_dimension_numbers<[1], [0], [0], [1], [0, 0, 1, 1], [], []>} : vector<16x64xf32>, vector<64x32xf32>, vector<16x32xf32> -> vector<16x32xf32>
    %c0_76 = arith.constant 0 : index
    %c0_77 = arith.constant 0 : index
    %183 = vector.load %arg10[%c0_76, %c0_77] : memref<1x32xf32, #tpu.memory_space<vmem>>, vector<1x32xf32>
    %184 = vector.broadcast %183 : vector<1x32xf32> to vector<16x32xf32>
    %185 = arith.addf %182, %184 : vector<16x32xf32>
    %186 = arith.addf %173, %185 : vector<16x32xf32>
    %c0_78 = arith.constant 0 : index
    %c0_79 = arith.constant 0 : index
    %187 = vector.load %arg11[%c0_78, %c0_79] : memref<1x32xf32, #tpu.memory_space<vmem>>, vector<1x32xf32>
    %c0_80 = arith.constant 0 : index
    %c0_81 = arith.constant 0 : index
    %188 = vector.load %arg12[%c0_80, %c0_81] : memref<1x32xf32, #tpu.memory_space<vmem>>, vector<1x32xf32>
    %cst_82 = arith.constant dense<0.000000e+00> : vector<16xf32>
    %189 = vector.multi_reduction <add>, %186, %cst_82 [1] : vector<16x32xf32> to vector<16xf32>
    %190 = vector.shape_cast %189 : vector<16xf32> to vector<16x1xf32>
    %cst_83 = arith.constant 3.200000e+01 : f32
    %191 = vector.broadcast %cst_83 : f32 to vector<16x1xf32>
    %192 = arith.divf %190, %191 : vector<16x1xf32>
    %193 = vector.broadcast %192 : vector<16x1xf32> to vector<16x32xf32>
    %194 = arith.subf %186, %193 : vector<16x32xf32>
    %195 = arith.mulf %194, %194 : vector<16x32xf32>
    %cst_84 = arith.constant dense<0.000000e+00> : vector<16xf32>
    %196 = vector.multi_reduction <add>, %195, %cst_84 [1] : vector<16x32xf32> to vector<16xf32>
    %197 = vector.shape_cast %196 : vector<16xf32> to vector<16x1xf32>
    %cst_85 = arith.constant 3.200000e+01 : f32
    %198 = vector.broadcast %cst_85 : f32 to vector<16x1xf32>
    %199 = arith.divf %197, %198 : vector<16x1xf32>
    %200 = vector.broadcast %192 : vector<16x1xf32> to vector<16x32xf32>
    %201 = arith.subf %186, %200 : vector<16x32xf32>
    %cst_86 = arith.constant 9.99999974E-6 : f32
    %202 = vector.broadcast %cst_86 : f32 to vector<16x1xf32>
    %203 = arith.addf %199, %202 : vector<16x1xf32>
    %204 = math.rsqrt %203 : vector<16x1xf32>
    %205 = vector.broadcast %204 : vector<16x1xf32> to vector<16x32xf32>
    %206 = arith.mulf %201, %205 : vector<16x32xf32>
    %207 = vector.broadcast %187 : vector<1x32xf32> to vector<16x32xf32>
    %208 = arith.mulf %206, %207 : vector<16x32xf32>
    %209 = vector.broadcast %188 : vector<1x32xf32> to vector<16x32xf32>
    %210 = arith.addf %208, %209 : vector<16x32xf32>
    %c0_87 = arith.constant 0 : index
    %c0_88 = arith.constant 0 : index
    %211 = vector.load %arg13[%c0_87, %c0_88] : memref<1x32xf32, #tpu.memory_space<vmem>>, vector<1x32xf32>
    %c0_89 = arith.constant 0 : index
    %c0_90 = arith.constant 0 : index
    %212 = vector.load %arg14[%c0_89, %c0_90] : memref<1x32xf32, #tpu.memory_space<vmem>>, vector<1x32xf32>
    %cst_91 = arith.constant dense<0.000000e+00> : vector<16xf32>
    %213 = vector.multi_reduction <add>, %210, %cst_91 [1] : vector<16x32xf32> to vector<16xf32>
    %214 = vector.shape_cast %213 : vector<16xf32> to vector<16x1xf32>
    %cst_92 = arith.constant 3.200000e+01 : f32
    %215 = vector.broadcast %cst_92 : f32 to vector<16x1xf32>
    %216 = arith.divf %214, %215 : vector<16x1xf32>
    %217 = vector.broadcast %216 : vector<16x1xf32> to vector<16x32xf32>
    %218 = arith.subf %210, %217 : vector<16x32xf32>
    %219 = arith.mulf %218, %218 : vector<16x32xf32>
    %cst_93 = arith.constant dense<0.000000e+00> : vector<16xf32>
    %220 = vector.multi_reduction <add>, %219, %cst_93 [1] : vector<16x32xf32> to vector<16xf32>
    %221 = vector.shape_cast %220 : vector<16xf32> to vector<16x1xf32>
    %cst_94 = arith.constant 3.200000e+01 : f32
    %222 = vector.broadcast %cst_94 : f32 to vector<16x1xf32>
    %223 = arith.divf %221, %222 : vector<16x1xf32>
    %224 = vector.broadcast %216 : vector<16x1xf32> to vector<16x32xf32>
    %225 = arith.subf %210, %224 : vector<16x32xf32>
    %cst_95 = arith.constant 9.99999974E-6 : f32
    %226 = vector.broadcast %cst_95 : f32 to vector<16x1xf32>
    %227 = arith.addf %223, %226 : vector<16x1xf32>
    %228 = math.rsqrt %227 : vector<16x1xf32>
    %229 = vector.broadcast %228 : vector<16x1xf32> to vector<16x32xf32>
    %230 = arith.mulf %225, %229 : vector<16x32xf32>
    %231 = vector.broadcast %211 : vector<1x32xf32> to vector<16x32xf32>
    %232 = arith.mulf %230, %231 : vector<16x32xf32>
    %233 = vector.broadcast %212 : vector<1x32xf32> to vector<16x32xf32>
    %234 = arith.addf %232, %233 : vector<16x32xf32>
    %c0_96 = arith.constant 0 : index
    %c0_97 = arith.constant 0 : index
    %235 = vector.load %arg15[%c0_96, %c0_97] : memref<16x32xf32, #tpu.memory_space<vmem>>, vector<16x32xf32>
    tpu.vector_store %arg15[%c0_96, %c0_97], %234 {strides = array<i32>} : memref<16x32xf32, #tpu.memory_space<vmem>>, vector<16x32xf32>,
    return
  }
}

module attributes {stable_mosaic.version = 11 : i64} {
  func.func @kernel(%arg0: memref<16x4xf32, #tpu.memory_space<vmem>>, %arg1: memref<4x32xf32, #tpu.memory_space<vmem>>, %arg2: memref<1x32xf32, #tpu.memory_space<vmem>>, %arg3: memref<32x64xf32, #tpu.memory_space<vmem>>, %arg4: memref<16x64xf32, #tpu.memory_space<vmem>>, %arg5: memref<1x64xf32, #tpu.memory_space<vmem>>, %arg6: memref<32x64xf32, #tpu.memory_space<vmem>>, %arg7: memref<16x64xf32, #tpu.memory_space<vmem>>, %arg8: memref<1x64xf32, #tpu.memory_space<vmem>>, %arg9: memref<16x32xf32, #tpu.memory_space<vmem>>) attributes {dimension_semantics = [], scalar_prefetch = 0 : i64, scratch_operands = 0 : i64, tpu.core_type = #tpu.core_type<tc>} {
    %c0 = arith.constant 0 : index
    %c0_0 = arith.constant 0 : index
    %0 = vector.load %arg0[%c0, %c0_0] : memref<16x4xf32, #tpu.memory_space<vmem>>, vector<16x4xf32>
    %c0_1 = arith.constant 0 : index
    %c0_2 = arith.constant 0 : index
    %1 = vector.load %arg1[%c0_1, %c0_2] : memref<4x32xf32, #tpu.memory_space<vmem>>, vector<4x32xf32>
    %cst = arith.constant dense<0.000000e+00> : vector<16x32xf32>
    %2 = tpu.matmul %0, %1, %cst {dimension_numbers = #tpu.dot_dimension_numbers<[1], [0], [0], [1], [0, 0, 1, 1], [], []>} : vector<16x4xf32>, vector<4x32xf32>, vector<16x32xf32> -> vector<16x32xf32>
    %c0_3 = arith.constant 0 : index
    %c0_4 = arith.constant 0 : index
    %3 = vector.load %arg2[%c0_3, %c0_4] : memref<1x32xf32, #tpu.memory_space<vmem>>, vector<1x32xf32>
    %4 = vector.broadcast %3 : vector<1x32xf32> to vector<16x32xf32>
    %5 = arith.addf %2, %4 : vector<16x32xf32>
    %c0_5 = arith.constant 0 : index
    %c0_6 = arith.constant 0 : index
    %6 = vector.load %arg3[%c0_5, %c0_6] : memref<32x64xf32, #tpu.memory_space<vmem>>, vector<32x64xf32>
    %cst_7 = arith.constant dense<0.000000e+00> : vector<16x64xf32>
    %7 = tpu.matmul %5, %6, %cst_7 {dimension_numbers = #tpu.dot_dimension_numbers<[1], [0], [0], [1], [0, 0, 1, 1], [], []>} : vector<16x32xf32>, vector<32x64xf32>, vector<16x64xf32> -> vector<16x64xf32>
    %c0_8 = arith.constant 0 : index
    %c0_9 = arith.constant 0 : index
    %8 = vector.load %arg5[%c0_8, %c0_9] : memref<1x64xf32, #tpu.memory_space<vmem>>, vector<1x64xf32>
    %9 = vector.broadcast %8 : vector<1x64xf32> to vector<16x64xf32>
    %10 = arith.addf %7, %9 : vector<16x64xf32>
    %c0_10 = arith.constant 0 : index
    %c0_11 = arith.constant 0 : index
    %11 = vector.load %arg6[%c0_10, %c0_11] : memref<32x64xf32, #tpu.memory_space<vmem>>, vector<32x64xf32>
    %cst_12 = arith.constant dense<0.000000e+00> : vector<16x64xf32>
    %12 = tpu.matmul %5, %11, %cst_12 {dimension_numbers = #tpu.dot_dimension_numbers<[1], [0], [0], [1], [0, 0, 1, 1], [], []>} : vector<16x32xf32>, vector<32x64xf32>, vector<16x64xf32> -> vector<16x64xf32>
    %c0_13 = arith.constant 0 : index
    %c0_14 = arith.constant 0 : index
    %13 = vector.load %arg8[%c0_13, %c0_14] : memref<1x64xf32, #tpu.memory_space<vmem>>, vector<1x64xf32>
    %14 = vector.broadcast %13 : vector<1x64xf32> to vector<16x64xf32>
    %15 = arith.addf %12, %14 : vector<16x64xf32>
    %c0_15 = arith.constant 0 : index
    %c0_16 = arith.constant 0 : index
    %16 = vector.load %arg4[%c0_15, %c0_16] : memref<16x64xf32, #tpu.memory_space<vmem>>, vector<16x64xf32>
    %c0_17 = arith.constant 0 : index
    %c0_18 = arith.constant 0 : index
    %17 = vector.load %arg7[%c0_17, %c0_18] : memref<16x64xf32, #tpu.memory_space<vmem>>, vector<16x64xf32>
    %cst_19 = arith.constant 0.000000e+00 : f32
    %18 = vector.broadcast %cst_19 : f32 to vector<2x16xf32>
    %19 = vector.extract_strided_slice %10 {offsets = [0, 0], sizes = [1, 64], strides = [1, 1]} : vector<16x64xf32> to vector<1x64xf32>
    %20 = vector.extract_strided_slice %10 {offsets = [8, 0], sizes = [1, 64], strides = [1, 1]} : vector<16x64xf32> to vector<1x64xf32>
    %21 = tpu.concatenate %19, %20 in 0 : vector<1x64xf32>, vector<1x64xf32> -> vector<2x64xf32>
    %cst_20 = arith.constant dense<0.000000e+00> : vector<2x64xf32>
    %22 = tpu.matmul %18, %16, %cst_20 {dimension_numbers = #tpu.dot_dimension_numbers<[1], [0], [0], [1], [0, 0, 1, 1], [], []>} : vector<2x16xf32>, vector<16x64xf32>, vector<2x64xf32> -> vector<2x64xf32>
    %23 = arith.addf %21, %22 : vector<2x64xf32>
    %24 = vector.extract_strided_slice %23 {offsets = [0, 0], sizes = [2, 16], strides = [1, 1]} : vector<2x64xf32> to vector<2x16xf32>
    %25 = arith.negf %24 : vector<2x16xf32>
    %26 = math.exp %25 : vector<2x16xf32>
    %cst_21 = arith.constant 1.000000e+00 : f32
    %27 = vector.broadcast %cst_21 : f32 to vector<2x16xf32>
    %28 = arith.addf %27, %26 : vector<2x16xf32>
    %29 = arith.divf %27, %28 : vector<2x16xf32>
    %30 = vector.extract_strided_slice %23 {offsets = [0, 16], sizes = [2, 16], strides = [1, 1]} : vector<2x64xf32> to vector<2x16xf32>
    %31 = arith.negf %30 : vector<2x16xf32>
    %32 = math.exp %31 : vector<2x16xf32>
    %cst_22 = arith.constant 1.000000e+00 : f32
    %33 = vector.broadcast %cst_22 : f32 to vector<2x16xf32>
    %34 = arith.addf %33, %32 : vector<2x16xf32>
    %35 = arith.divf %33, %34 : vector<2x16xf32>
    %36 = vector.extract_strided_slice %23 {offsets = [0, 32], sizes = [2, 16], strides = [1, 1]} : vector<2x64xf32> to vector<2x16xf32>
    %37 = math.tanh %36 : vector<2x16xf32>
    %38 = vector.extract_strided_slice %23 {offsets = [0, 48], sizes = [2, 16], strides = [1, 1]} : vector<2x64xf32> to vector<2x16xf32>
    %39 = arith.negf %38 : vector<2x16xf32>
    %40 = math.exp %39 : vector<2x16xf32>
    %cst_23 = arith.constant 1.000000e+00 : f32
    %41 = vector.broadcast %cst_23 : f32 to vector<2x16xf32>
    %42 = arith.addf %41, %40 : vector<2x16xf32>
    %43 = arith.divf %41, %42 : vector<2x16xf32>
    %44 = arith.mulf %35, %18 : vector<2x16xf32>
    %45 = arith.mulf %29, %37 : vector<2x16xf32>
    %46 = arith.addf %44, %45 : vector<2x16xf32>
    %47 = math.tanh %46 : vector<2x16xf32>
    %48 = arith.mulf %43, %47 : vector<2x16xf32>
    %49 = vector.extract_strided_slice %10 {offsets = [1, 0], sizes = [1, 64], strides = [1, 1]} : vector<16x64xf32> to vector<1x64xf32>
    %50 = vector.extract_strided_slice %10 {offsets = [9, 0], sizes = [1, 64], strides = [1, 1]} : vector<16x64xf32> to vector<1x64xf32>
    %51 = tpu.concatenate %49, %50 in 0 : vector<1x64xf32>, vector<1x64xf32> -> vector<2x64xf32>
    %cst_24 = arith.constant dense<0.000000e+00> : vector<2x64xf32>
    %52 = tpu.matmul %48, %16, %cst_24 {dimension_numbers = #tpu.dot_dimension_numbers<[1], [0], [0], [1], [0, 0, 1, 1], [], []>} : vector<2x16xf32>, vector<16x64xf32>, vector<2x64xf32> -> vector<2x64xf32>
    %53 = arith.addf %51, %52 : vector<2x64xf32>
    %54 = vector.extract_strided_slice %53 {offsets = [0, 0], sizes = [2, 16], strides = [1, 1]} : vector<2x64xf32> to vector<2x16xf32>
    %55 = arith.negf %54 : vector<2x16xf32>
    %56 = math.exp %55 : vector<2x16xf32>
    %cst_25 = arith.constant 1.000000e+00 : f32
    %57 = vector.broadcast %cst_25 : f32 to vector<2x16xf32>
    %58 = arith.addf %57, %56 : vector<2x16xf32>
    %59 = arith.divf %57, %58 : vector<2x16xf32>
    %60 = vector.extract_strided_slice %53 {offsets = [0, 16], sizes = [2, 16], strides = [1, 1]} : vector<2x64xf32> to vector<2x16xf32>
    %61 = arith.negf %60 : vector<2x16xf32>
    %62 = math.exp %61 : vector<2x16xf32>
    %cst_26 = arith.constant 1.000000e+00 : f32
    %63 = vector.broadcast %cst_26 : f32 to vector<2x16xf32>
    %64 = arith.addf %63, %62 : vector<2x16xf32>
    %65 = arith.divf %63, %64 : vector<2x16xf32>
    %66 = vector.extract_strided_slice %53 {offsets = [0, 32], sizes = [2, 16], strides = [1, 1]} : vector<2x64xf32> to vector<2x16xf32>
    %67 = math.tanh %66 : vector<2x16xf32>
    %68 = vector.extract_strided_slice %53 {offsets = [0, 48], sizes = [2, 16], strides = [1, 1]} : vector<2x64xf32> to vector<2x16xf32>
    %69 = arith.negf %68 : vector<2x16xf32>
    %70 = math.exp %69 : vector<2x16xf32>
    %cst_27 = arith.constant 1.000000e+00 : f32
    %71 = vector.broadcast %cst_27 : f32 to vector<2x16xf32>
    %72 = arith.addf %71, %70 : vector<2x16xf32>
    %73 = arith.divf %71, %72 : vector<2x16xf32>
    %74 = arith.mulf %65, %46 : vector<2x16xf32>
    %75 = arith.mulf %59, %67 : vector<2x16xf32>
    %76 = arith.addf %74, %75 : vector<2x16xf32>
    %77 = math.tanh %76 : vector<2x16xf32>
    %78 = arith.mulf %73, %77 : vector<2x16xf32>
    %79 = vector.extract_strided_slice %10 {offsets = [2, 0], sizes = [1, 64], strides = [1, 1]} : vector<16x64xf32> to vector<1x64xf32>
    %80 = vector.extract_strided_slice %10 {offsets = [10, 0], sizes = [1, 64], strides = [1, 1]} : vector<16x64xf32> to vector<1x64xf32>
    %81 = tpu.concatenate %79, %80 in 0 : vector<1x64xf32>, vector<1x64xf32> -> vector<2x64xf32>
    %cst_28 = arith.constant dense<0.000000e+00> : vector<2x64xf32>
    %82 = tpu.matmul %78, %16, %cst_28 {dimension_numbers = #tpu.dot_dimension_numbers<[1], [0], [0], [1], [0, 0, 1, 1], [], []>} : vector<2x16xf32>, vector<16x64xf32>, vector<2x64xf32> -> vector<2x64xf32>
    %83 = arith.addf %81, %82 : vector<2x64xf32>
    %84 = vector.extract_strided_slice %83 {offsets = [0, 0], sizes = [2, 16], strides = [1, 1]} : vector<2x64xf32> to vector<2x16xf32>
    %85 = arith.negf %84 : vector<2x16xf32>
    %86 = math.exp %85 : vector<2x16xf32>
    %cst_29 = arith.constant 1.000000e+00 : f32
    %87 = vector.broadcast %cst_29 : f32 to vector<2x16xf32>
    %88 = arith.addf %87, %86 : vector<2x16xf32>
    %89 = arith.divf %87, %88 : vector<2x16xf32>
    %90 = vector.extract_strided_slice %83 {offsets = [0, 16], sizes = [2, 16], strides = [1, 1]} : vector<2x64xf32> to vector<2x16xf32>
    %91 = arith.negf %90 : vector<2x16xf32>
    %92 = math.exp %91 : vector<2x16xf32>
    %cst_30 = arith.constant 1.000000e+00 : f32
    %93 = vector.broadcast %cst_30 : f32 to vector<2x16xf32>
    %94 = arith.addf %93, %92 : vector<2x16xf32>
    %95 = arith.divf %93, %94 : vector<2x16xf32>
    %96 = vector.extract_strided_slice %83 {offsets = [0, 32], sizes = [2, 16], strides = [1, 1]} : vector<2x64xf32> to vector<2x16xf32>
    %97 = math.tanh %96 : vector<2x16xf32>
    %98 = vector.extract_strided_slice %83 {offsets = [0, 48], sizes = [2, 16], strides = [1, 1]} : vector<2x64xf32> to vector<2x16xf32>
    %99 = arith.negf %98 : vector<2x16xf32>
    %100 = math.exp %99 : vector<2x16xf32>
    %cst_31 = arith.constant 1.000000e+00 : f32
    %101 = vector.broadcast %cst_31 : f32 to vector<2x16xf32>
    %102 = arith.addf %101, %100 : vector<2x16xf32>
    %103 = arith.divf %101, %102 : vector<2x16xf32>
    %104 = arith.mulf %95, %76 : vector<2x16xf32>
    %105 = arith.mulf %89, %97 : vector<2x16xf32>
    %106 = arith.addf %104, %105 : vector<2x16xf32>
    %107 = math.tanh %106 : vector<2x16xf32>
    %108 = arith.mulf %103, %107 : vector<2x16xf32>
    %109 = vector.extract_strided_slice %10 {offsets = [3, 0], sizes = [1, 64], strides = [1, 1]} : vector<16x64xf32> to vector<1x64xf32>
    %110 = vector.extract_strided_slice %10 {offsets = [11, 0], sizes = [1, 64], strides = [1, 1]} : vector<16x64xf32> to vector<1x64xf32>
    %111 = tpu.concatenate %109, %110 in 0 : vector<1x64xf32>, vector<1x64xf32> -> vector<2x64xf32>
    %cst_32 = arith.constant dense<0.000000e+00> : vector<2x64xf32>
    %112 = tpu.matmul %108, %16, %cst_32 {dimension_numbers = #tpu.dot_dimension_numbers<[1], [0], [0], [1], [0, 0, 1, 1], [], []>} : vector<2x16xf32>, vector<16x64xf32>, vector<2x64xf32> -> vector<2x64xf32>
    %113 = arith.addf %111, %112 : vector<2x64xf32>
    %114 = vector.extract_strided_slice %113 {offsets = [0, 0], sizes = [2, 16], strides = [1, 1]} : vector<2x64xf32> to vector<2x16xf32>
    %115 = arith.negf %114 : vector<2x16xf32>
    %116 = math.exp %115 : vector<2x16xf32>
    %cst_33 = arith.constant 1.000000e+00 : f32
    %117 = vector.broadcast %cst_33 : f32 to vector<2x16xf32>
    %118 = arith.addf %117, %116 : vector<2x16xf32>
    %119 = arith.divf %117, %118 : vector<2x16xf32>
    %120 = vector.extract_strided_slice %113 {offsets = [0, 16], sizes = [2, 16], strides = [1, 1]} : vector<2x64xf32> to vector<2x16xf32>
    %121 = arith.negf %120 : vector<2x16xf32>
    %122 = math.exp %121 : vector<2x16xf32>
    %cst_34 = arith.constant 1.000000e+00 : f32
    %123 = vector.broadcast %cst_34 : f32 to vector<2x16xf32>
    %124 = arith.addf %123, %122 : vector<2x16xf32>
    %125 = arith.divf %123, %124 : vector<2x16xf32>
    %126 = vector.extract_strided_slice %113 {offsets = [0, 32], sizes = [2, 16], strides = [1, 1]} : vector<2x64xf32> to vector<2x16xf32>
    %127 = math.tanh %126 : vector<2x16xf32>
    %128 = vector.extract_strided_slice %113 {offsets = [0, 48], sizes = [2, 16], strides = [1, 1]} : vector<2x64xf32> to vector<2x16xf32>
    %129 = arith.negf %128 : vector<2x16xf32>
    %130 = math.exp %129 : vector<2x16xf32>
    %cst_35 = arith.constant 1.000000e+00 : f32
    %131 = vector.broadcast %cst_35 : f32 to vector<2x16xf32>
    %132 = arith.addf %131, %130 : vector<2x16xf32>
    %133 = arith.divf %131, %132 : vector<2x16xf32>
    %134 = arith.mulf %125, %106 : vector<2x16xf32>
    %135 = arith.mulf %119, %127 : vector<2x16xf32>
    %136 = arith.addf %134, %135 : vector<2x16xf32>
    %137 = math.tanh %136 : vector<2x16xf32>
    %138 = arith.mulf %133, %137 : vector<2x16xf32>
    %139 = vector.extract_strided_slice %10 {offsets = [4, 0], sizes = [1, 64], strides = [1, 1]} : vector<16x64xf32> to vector<1x64xf32>
    %140 = vector.extract_strided_slice %10 {offsets = [12, 0], sizes = [1, 64], strides = [1, 1]} : vector<16x64xf32> to vector<1x64xf32>
    %141 = tpu.concatenate %139, %140 in 0 : vector<1x64xf32>, vector<1x64xf32> -> vector<2x64xf32>
    %cst_36 = arith.constant dense<0.000000e+00> : vector<2x64xf32>
    %142 = tpu.matmul %138, %16, %cst_36 {dimension_numbers = #tpu.dot_dimension_numbers<[1], [0], [0], [1], [0, 0, 1, 1], [], []>} : vector<2x16xf32>, vector<16x64xf32>, vector<2x64xf32> -> vector<2x64xf32>
    %143 = arith.addf %141, %142 : vector<2x64xf32>
    %144 = vector.extract_strided_slice %143 {offsets = [0, 0], sizes = [2, 16], strides = [1, 1]} : vector<2x64xf32> to vector<2x16xf32>
    %145 = arith.negf %144 : vector<2x16xf32>
    %146 = math.exp %145 : vector<2x16xf32>
    %cst_37 = arith.constant 1.000000e+00 : f32
    %147 = vector.broadcast %cst_37 : f32 to vector<2x16xf32>
    %148 = arith.addf %147, %146 : vector<2x16xf32>
    %149 = arith.divf %147, %148 : vector<2x16xf32>
    %150 = vector.extract_strided_slice %143 {offsets = [0, 16], sizes = [2, 16], strides = [1, 1]} : vector<2x64xf32> to vector<2x16xf32>
    %151 = arith.negf %150 : vector<2x16xf32>
    %152 = math.exp %151 : vector<2x16xf32>
    %cst_38 = arith.constant 1.000000e+00 : f32
    %153 = vector.broadcast %cst_38 : f32 to vector<2x16xf32>
    %154 = arith.addf %153, %152 : vector<2x16xf32>
    %155 = arith.divf %153, %154 : vector<2x16xf32>
    %156 = vector.extract_strided_slice %143 {offsets = [0, 32], sizes = [2, 16], strides = [1, 1]} : vector<2x64xf32> to vector<2x16xf32>
    %157 = math.tanh %156 : vector<2x16xf32>
    %158 = vector.extract_strided_slice %143 {offsets = [0, 48], sizes = [2, 16], strides = [1, 1]} : vector<2x64xf32> to vector<2x16xf32>
    %159 = arith.negf %158 : vector<2x16xf32>
    %160 = math.exp %159 : vector<2x16xf32>
    %cst_39 = arith.constant 1.000000e+00 : f32
    %161 = vector.broadcast %cst_39 : f32 to vector<2x16xf32>
    %162 = arith.addf %161, %160 : vector<2x16xf32>
    %163 = arith.divf %161, %162 : vector<2x16xf32>
    %164 = arith.mulf %155, %136 : vector<2x16xf32>
    %165 = arith.mulf %149, %157 : vector<2x16xf32>
    %166 = arith.addf %164, %165 : vector<2x16xf32>
    %167 = math.tanh %166 : vector<2x16xf32>
    %168 = arith.mulf %163, %167 : vector<2x16xf32>
    %169 = vector.extract_strided_slice %10 {offsets = [5, 0], sizes = [1, 64], strides = [1, 1]} : vector<16x64xf32> to vector<1x64xf32>
    %170 = vector.extract_strided_slice %10 {offsets = [13, 0], sizes = [1, 64], strides = [1, 1]} : vector<16x64xf32> to vector<1x64xf32>
    %171 = tpu.concatenate %169, %170 in 0 : vector<1x64xf32>, vector<1x64xf32> -> vector<2x64xf32>
    %cst_40 = arith.constant dense<0.000000e+00> : vector<2x64xf32>
    %172 = tpu.matmul %168, %16, %cst_40 {dimension_numbers = #tpu.dot_dimension_numbers<[1], [0], [0], [1], [0, 0, 1, 1], [], []>} : vector<2x16xf32>, vector<16x64xf32>, vector<2x64xf32> -> vector<2x64xf32>
    %173 = arith.addf %171, %172 : vector<2x64xf32>
    %174 = vector.extract_strided_slice %173 {offsets = [0, 0], sizes = [2, 16], strides = [1, 1]} : vector<2x64xf32> to vector<2x16xf32>
    %175 = arith.negf %174 : vector<2x16xf32>
    %176 = math.exp %175 : vector<2x16xf32>
    %cst_41 = arith.constant 1.000000e+00 : f32
    %177 = vector.broadcast %cst_41 : f32 to vector<2x16xf32>
    %178 = arith.addf %177, %176 : vector<2x16xf32>
    %179 = arith.divf %177, %178 : vector<2x16xf32>
    %180 = vector.extract_strided_slice %173 {offsets = [0, 16], sizes = [2, 16], strides = [1, 1]} : vector<2x64xf32> to vector<2x16xf32>
    %181 = arith.negf %180 : vector<2x16xf32>
    %182 = math.exp %181 : vector<2x16xf32>
    %cst_42 = arith.constant 1.000000e+00 : f32
    %183 = vector.broadcast %cst_42 : f32 to vector<2x16xf32>
    %184 = arith.addf %183, %182 : vector<2x16xf32>
    %185 = arith.divf %183, %184 : vector<2x16xf32>
    %186 = vector.extract_strided_slice %173 {offsets = [0, 32], sizes = [2, 16], strides = [1, 1]} : vector<2x64xf32> to vector<2x16xf32>
    %187 = math.tanh %186 : vector<2x16xf32>
    %188 = vector.extract_strided_slice %173 {offsets = [0, 48], sizes = [2, 16], strides = [1, 1]} : vector<2x64xf32> to vector<2x16xf32>
    %189 = arith.negf %188 : vector<2x16xf32>
    %190 = math.exp %189 : vector<2x16xf32>
    %cst_43 = arith.constant 1.000000e+00 : f32
    %191 = vector.broadcast %cst_43 : f32 to vector<2x16xf32>
    %192 = arith.addf %191, %190 : vector<2x16xf32>
    %193 = arith.divf %191, %192 : vector<2x16xf32>
    %194 = arith.mulf %185, %166 : vector<2x16xf32>
    %195 = arith.mulf %179, %187 : vector<2x16xf32>
    %196 = arith.addf %194, %195 : vector<2x16xf32>
    %197 = math.tanh %196 : vector<2x16xf32>
    %198 = arith.mulf %193, %197 : vector<2x16xf32>
    %199 = vector.extract_strided_slice %10 {offsets = [6, 0], sizes = [1, 64], strides = [1, 1]} : vector<16x64xf32> to vector<1x64xf32>
    %200 = vector.extract_strided_slice %10 {offsets = [14, 0], sizes = [1, 64], strides = [1, 1]} : vector<16x64xf32> to vector<1x64xf32>
    %201 = tpu.concatenate %199, %200 in 0 : vector<1x64xf32>, vector<1x64xf32> -> vector<2x64xf32>
    %cst_44 = arith.constant dense<0.000000e+00> : vector<2x64xf32>
    %202 = tpu.matmul %198, %16, %cst_44 {dimension_numbers = #tpu.dot_dimension_numbers<[1], [0], [0], [1], [0, 0, 1, 1], [], []>} : vector<2x16xf32>, vector<16x64xf32>, vector<2x64xf32> -> vector<2x64xf32>
    %203 = arith.addf %201, %202 : vector<2x64xf32>
    %204 = vector.extract_strided_slice %203 {offsets = [0, 0], sizes = [2, 16], strides = [1, 1]} : vector<2x64xf32> to vector<2x16xf32>
    %205 = arith.negf %204 : vector<2x16xf32>
    %206 = math.exp %205 : vector<2x16xf32>
    %cst_45 = arith.constant 1.000000e+00 : f32
    %207 = vector.broadcast %cst_45 : f32 to vector<2x16xf32>
    %208 = arith.addf %207, %206 : vector<2x16xf32>
    %209 = arith.divf %207, %208 : vector<2x16xf32>
    %210 = vector.extract_strided_slice %203 {offsets = [0, 16], sizes = [2, 16], strides = [1, 1]} : vector<2x64xf32> to vector<2x16xf32>
    %211 = arith.negf %210 : vector<2x16xf32>
    %212 = math.exp %211 : vector<2x16xf32>
    %cst_46 = arith.constant 1.000000e+00 : f32
    %213 = vector.broadcast %cst_46 : f32 to vector<2x16xf32>
    %214 = arith.addf %213, %212 : vector<2x16xf32>
    %215 = arith.divf %213, %214 : vector<2x16xf32>
    %216 = vector.extract_strided_slice %203 {offsets = [0, 32], sizes = [2, 16], strides = [1, 1]} : vector<2x64xf32> to vector<2x16xf32>
    %217 = math.tanh %216 : vector<2x16xf32>
    %218 = vector.extract_strided_slice %203 {offsets = [0, 48], sizes = [2, 16], strides = [1, 1]} : vector<2x64xf32> to vector<2x16xf32>
    %219 = arith.negf %218 : vector<2x16xf32>
    %220 = math.exp %219 : vector<2x16xf32>
    %cst_47 = arith.constant 1.000000e+00 : f32
    %221 = vector.broadcast %cst_47 : f32 to vector<2x16xf32>
    %222 = arith.addf %221, %220 : vector<2x16xf32>
    %223 = arith.divf %221, %222 : vector<2x16xf32>
    %224 = arith.mulf %215, %196 : vector<2x16xf32>
    %225 = arith.mulf %209, %217 : vector<2x16xf32>
    %226 = arith.addf %224, %225 : vector<2x16xf32>
    %227 = math.tanh %226 : vector<2x16xf32>
    %228 = arith.mulf %223, %227 : vector<2x16xf32>
    %229 = vector.extract_strided_slice %10 {offsets = [7, 0], sizes = [1, 64], strides = [1, 1]} : vector<16x64xf32> to vector<1x64xf32>
    %230 = vector.extract_strided_slice %10 {offsets = [15, 0], sizes = [1, 64], strides = [1, 1]} : vector<16x64xf32> to vector<1x64xf32>
    %231 = tpu.concatenate %229, %230 in 0 : vector<1x64xf32>, vector<1x64xf32> -> vector<2x64xf32>
    %cst_48 = arith.constant dense<0.000000e+00> : vector<2x64xf32>
    %232 = tpu.matmul %228, %16, %cst_48 {dimension_numbers = #tpu.dot_dimension_numbers<[1], [0], [0], [1], [0, 0, 1, 1], [], []>} : vector<2x16xf32>, vector<16x64xf32>, vector<2x64xf32> -> vector<2x64xf32>
    %233 = arith.addf %231, %232 : vector<2x64xf32>
    %234 = vector.extract_strided_slice %233 {offsets = [0, 0], sizes = [2, 16], strides = [1, 1]} : vector<2x64xf32> to vector<2x16xf32>
    %235 = arith.negf %234 : vector<2x16xf32>
    %236 = math.exp %235 : vector<2x16xf32>
    %cst_49 = arith.constant 1.000000e+00 : f32
    %237 = vector.broadcast %cst_49 : f32 to vector<2x16xf32>
    %238 = arith.addf %237, %236 : vector<2x16xf32>
    %239 = arith.divf %237, %238 : vector<2x16xf32>
    %240 = vector.extract_strided_slice %233 {offsets = [0, 16], sizes = [2, 16], strides = [1, 1]} : vector<2x64xf32> to vector<2x16xf32>
    %241 = arith.negf %240 : vector<2x16xf32>
    %242 = math.exp %241 : vector<2x16xf32>
    %cst_50 = arith.constant 1.000000e+00 : f32
    %243 = vector.broadcast %cst_50 : f32 to vector<2x16xf32>
    %244 = arith.addf %243, %242 : vector<2x16xf32>
    %245 = arith.divf %243, %244 : vector<2x16xf32>
    %246 = vector.extract_strided_slice %233 {offsets = [0, 32], sizes = [2, 16], strides = [1, 1]} : vector<2x64xf32> to vector<2x16xf32>
    %247 = math.tanh %246 : vector<2x16xf32>
    %248 = vector.extract_strided_slice %233 {offsets = [0, 48], sizes = [2, 16], strides = [1, 1]} : vector<2x64xf32> to vector<2x16xf32>
    %249 = arith.negf %248 : vector<2x16xf32>
    %250 = math.exp %249 : vector<2x16xf32>
    %cst_51 = arith.constant 1.000000e+00 : f32
    %251 = vector.broadcast %cst_51 : f32 to vector<2x16xf32>
    %252 = arith.addf %251, %250 : vector<2x16xf32>
    %253 = arith.divf %251, %252 : vector<2x16xf32>
    %254 = arith.mulf %245, %226 : vector<2x16xf32>
    %255 = arith.mulf %239, %247 : vector<2x16xf32>
    %256 = arith.addf %254, %255 : vector<2x16xf32>
    %257 = math.tanh %256 : vector<2x16xf32>
    %258 = arith.mulf %253, %257 : vector<2x16xf32>
    %259 = vector.extract_strided_slice %15 {offsets = [7, 0], sizes = [1, 64], strides = [1, 1]} : vector<16x64xf32> to vector<1x64xf32>
    %260 = vector.extract_strided_slice %15 {offsets = [15, 0], sizes = [1, 64], strides = [1, 1]} : vector<16x64xf32> to vector<1x64xf32>
    %261 = tpu.concatenate %259, %260 in 0 : vector<1x64xf32>, vector<1x64xf32> -> vector<2x64xf32>
    %cst_52 = arith.constant dense<0.000000e+00> : vector<2x64xf32>
    %262 = tpu.matmul %18, %17, %cst_52 {dimension_numbers = #tpu.dot_dimension_numbers<[1], [0], [0], [1], [0, 0, 1, 1], [], []>} : vector<2x16xf32>, vector<16x64xf32>, vector<2x64xf32> -> vector<2x64xf32>
    %263 = arith.addf %261, %262 : vector<2x64xf32>
    %264 = vector.extract_strided_slice %263 {offsets = [0, 0], sizes = [2, 16], strides = [1, 1]} : vector<2x64xf32> to vector<2x16xf32>
    %265 = arith.negf %264 : vector<2x16xf32>
    %266 = math.exp %265 : vector<2x16xf32>
    %cst_53 = arith.constant 1.000000e+00 : f32
    %267 = vector.broadcast %cst_53 : f32 to vector<2x16xf32>
    %268 = arith.addf %267, %266 : vector<2x16xf32>
    %269 = arith.divf %267, %268 : vector<2x16xf32>
    %270 = vector.extract_strided_slice %263 {offsets = [0, 16], sizes = [2, 16], strides = [1, 1]} : vector<2x64xf32> to vector<2x16xf32>
    %271 = arith.negf %270 : vector<2x16xf32>
    %272 = math.exp %271 : vector<2x16xf32>
    %cst_54 = arith.constant 1.000000e+00 : f32
    %273 = vector.broadcast %cst_54 : f32 to vector<2x16xf32>
    %274 = arith.addf %273, %272 : vector<2x16xf32>
    %275 = arith.divf %273, %274 : vector<2x16xf32>
    %276 = vector.extract_strided_slice %263 {offsets = [0, 32], sizes = [2, 16], strides = [1, 1]} : vector<2x64xf32> to vector<2x16xf32>
    %277 = math.tanh %276 : vector<2x16xf32>
    %278 = vector.extract_strided_slice %263 {offsets = [0, 48], sizes = [2, 16], strides = [1, 1]} : vector<2x64xf32> to vector<2x16xf32>
    %279 = arith.negf %278 : vector<2x16xf32>
    %280 = math.exp %279 : vector<2x16xf32>
    %cst_55 = arith.constant 1.000000e+00 : f32
    %281 = vector.broadcast %cst_55 : f32 to vector<2x16xf32>
    %282 = arith.addf %281, %280 : vector<2x16xf32>
    %283 = arith.divf %281, %282 : vector<2x16xf32>
    %284 = arith.mulf %275, %18 : vector<2x16xf32>
    %285 = arith.mulf %269, %277 : vector<2x16xf32>
    %286 = arith.addf %284, %285 : vector<2x16xf32>
    %287 = math.tanh %286 : vector<2x16xf32>
    %288 = arith.mulf %283, %287 : vector<2x16xf32>
    %289 = vector.extract_strided_slice %15 {offsets = [6, 0], sizes = [1, 64], strides = [1, 1]} : vector<16x64xf32> to vector<1x64xf32>
    %290 = vector.extract_strided_slice %15 {offsets = [14, 0], sizes = [1, 64], strides = [1, 1]} : vector<16x64xf32> to vector<1x64xf32>
    %291 = tpu.concatenate %289, %290 in 0 : vector<1x64xf32>, vector<1x64xf32> -> vector<2x64xf32>
    %cst_56 = arith.constant dense<0.000000e+00> : vector<2x64xf32>
    %292 = tpu.matmul %288, %17, %cst_56 {dimension_numbers = #tpu.dot_dimension_numbers<[1], [0], [0], [1], [0, 0, 1, 1], [], []>} : vector<2x16xf32>, vector<16x64xf32>, vector<2x64xf32> -> vector<2x64xf32>
    %293 = arith.addf %291, %292 : vector<2x64xf32>
    %294 = vector.extract_strided_slice %293 {offsets = [0, 0], sizes = [2, 16], strides = [1, 1]} : vector<2x64xf32> to vector<2x16xf32>
    %295 = arith.negf %294 : vector<2x16xf32>
    %296 = math.exp %295 : vector<2x16xf32>
    %cst_57 = arith.constant 1.000000e+00 : f32
    %297 = vector.broadcast %cst_57 : f32 to vector<2x16xf32>
    %298 = arith.addf %297, %296 : vector<2x16xf32>
    %299 = arith.divf %297, %298 : vector<2x16xf32>
    %300 = vector.extract_strided_slice %293 {offsets = [0, 16], sizes = [2, 16], strides = [1, 1]} : vector<2x64xf32> to vector<2x16xf32>
    %301 = arith.negf %300 : vector<2x16xf32>
    %302 = math.exp %301 : vector<2x16xf32>
    %cst_58 = arith.constant 1.000000e+00 : f32
    %303 = vector.broadcast %cst_58 : f32 to vector<2x16xf32>
    %304 = arith.addf %303, %302 : vector<2x16xf32>
    %305 = arith.divf %303, %304 : vector<2x16xf32>
    %306 = vector.extract_strided_slice %293 {offsets = [0, 32], sizes = [2, 16], strides = [1, 1]} : vector<2x64xf32> to vector<2x16xf32>
    %307 = math.tanh %306 : vector<2x16xf32>
    %308 = vector.extract_strided_slice %293 {offsets = [0, 48], sizes = [2, 16], strides = [1, 1]} : vector<2x64xf32> to vector<2x16xf32>
    %309 = arith.negf %308 : vector<2x16xf32>
    %310 = math.exp %309 : vector<2x16xf32>
    %cst_59 = arith.constant 1.000000e+00 : f32
    %311 = vector.broadcast %cst_59 : f32 to vector<2x16xf32>
    %312 = arith.addf %311, %310 : vector<2x16xf32>
    %313 = arith.divf %311, %312 : vector<2x16xf32>
    %314 = arith.mulf %305, %286 : vector<2x16xf32>
    %315 = arith.mulf %299, %307 : vector<2x16xf32>
    %316 = arith.addf %314, %315 : vector<2x16xf32>
    %317 = math.tanh %316 : vector<2x16xf32>
    %318 = arith.mulf %313, %317 : vector<2x16xf32>
    %319 = vector.extract_strided_slice %15 {offsets = [5, 0], sizes = [1, 64], strides = [1, 1]} : vector<16x64xf32> to vector<1x64xf32>
    %320 = vector.extract_strided_slice %15 {offsets = [13, 0], sizes = [1, 64], strides = [1, 1]} : vector<16x64xf32> to vector<1x64xf32>
    %321 = tpu.concatenate %319, %320 in 0 : vector<1x64xf32>, vector<1x64xf32> -> vector<2x64xf32>
    %cst_60 = arith.constant dense<0.000000e+00> : vector<2x64xf32>
    %322 = tpu.matmul %318, %17, %cst_60 {dimension_numbers = #tpu.dot_dimension_numbers<[1], [0], [0], [1], [0, 0, 1, 1], [], []>} : vector<2x16xf32>, vector<16x64xf32>, vector<2x64xf32> -> vector<2x64xf32>
    %323 = arith.addf %321, %322 : vector<2x64xf32>
    %324 = vector.extract_strided_slice %323 {offsets = [0, 0], sizes = [2, 16], strides = [1, 1]} : vector<2x64xf32> to vector<2x16xf32>
    %325 = arith.negf %324 : vector<2x16xf32>
    %326 = math.exp %325 : vector<2x16xf32>
    %cst_61 = arith.constant 1.000000e+00 : f32
    %327 = vector.broadcast %cst_61 : f32 to vector<2x16xf32>
    %328 = arith.addf %327, %326 : vector<2x16xf32>
    %329 = arith.divf %327, %328 : vector<2x16xf32>
    %330 = vector.extract_strided_slice %323 {offsets = [0, 16], sizes = [2, 16], strides = [1, 1]} : vector<2x64xf32> to vector<2x16xf32>
    %331 = arith.negf %330 : vector<2x16xf32>
    %332 = math.exp %331 : vector<2x16xf32>
    %cst_62 = arith.constant 1.000000e+00 : f32
    %333 = vector.broadcast %cst_62 : f32 to vector<2x16xf32>
    %334 = arith.addf %333, %332 : vector<2x16xf32>
    %335 = arith.divf %333, %334 : vector<2x16xf32>
    %336 = vector.extract_strided_slice %323 {offsets = [0, 32], sizes = [2, 16], strides = [1, 1]} : vector<2x64xf32> to vector<2x16xf32>
    %337 = math.tanh %336 : vector<2x16xf32>
    %338 = vector.extract_strided_slice %323 {offsets = [0, 48], sizes = [2, 16], strides = [1, 1]} : vector<2x64xf32> to vector<2x16xf32>
    %339 = arith.negf %338 : vector<2x16xf32>
    %340 = math.exp %339 : vector<2x16xf32>
    %cst_63 = arith.constant 1.000000e+00 : f32
    %341 = vector.broadcast %cst_63 : f32 to vector<2x16xf32>
    %342 = arith.addf %341, %340 : vector<2x16xf32>
    %343 = arith.divf %341, %342 : vector<2x16xf32>
    %344 = arith.mulf %335, %316 : vector<2x16xf32>
    %345 = arith.mulf %329, %337 : vector<2x16xf32>
    %346 = arith.addf %344, %345 : vector<2x16xf32>
    %347 = math.tanh %346 : vector<2x16xf32>
    %348 = arith.mulf %343, %347 : vector<2x16xf32>
    %349 = vector.extract_strided_slice %15 {offsets = [4, 0], sizes = [1, 64], strides = [1, 1]} : vector<16x64xf32> to vector<1x64xf32>
    %350 = vector.extract_strided_slice %15 {offsets = [12, 0], sizes = [1, 64], strides = [1, 1]} : vector<16x64xf32> to vector<1x64xf32>
    %351 = tpu.concatenate %349, %350 in 0 : vector<1x64xf32>, vector<1x64xf32> -> vector<2x64xf32>
    %cst_64 = arith.constant dense<0.000000e+00> : vector<2x64xf32>
    %352 = tpu.matmul %348, %17, %cst_64 {dimension_numbers = #tpu.dot_dimension_numbers<[1], [0], [0], [1], [0, 0, 1, 1], [], []>} : vector<2x16xf32>, vector<16x64xf32>, vector<2x64xf32> -> vector<2x64xf32>
    %353 = arith.addf %351, %352 : vector<2x64xf32>
    %354 = vector.extract_strided_slice %353 {offsets = [0, 0], sizes = [2, 16], strides = [1, 1]} : vector<2x64xf32> to vector<2x16xf32>
    %355 = arith.negf %354 : vector<2x16xf32>
    %356 = math.exp %355 : vector<2x16xf32>
    %cst_65 = arith.constant 1.000000e+00 : f32
    %357 = vector.broadcast %cst_65 : f32 to vector<2x16xf32>
    %358 = arith.addf %357, %356 : vector<2x16xf32>
    %359 = arith.divf %357, %358 : vector<2x16xf32>
    %360 = vector.extract_strided_slice %353 {offsets = [0, 16], sizes = [2, 16], strides = [1, 1]} : vector<2x64xf32> to vector<2x16xf32>
    %361 = arith.negf %360 : vector<2x16xf32>
    %362 = math.exp %361 : vector<2x16xf32>
    %cst_66 = arith.constant 1.000000e+00 : f32
    %363 = vector.broadcast %cst_66 : f32 to vector<2x16xf32>
    %364 = arith.addf %363, %362 : vector<2x16xf32>
    %365 = arith.divf %363, %364 : vector<2x16xf32>
    %366 = vector.extract_strided_slice %353 {offsets = [0, 32], sizes = [2, 16], strides = [1, 1]} : vector<2x64xf32> to vector<2x16xf32>
    %367 = math.tanh %366 : vector<2x16xf32>
    %368 = vector.extract_strided_slice %353 {offsets = [0, 48], sizes = [2, 16], strides = [1, 1]} : vector<2x64xf32> to vector<2x16xf32>
    %369 = arith.negf %368 : vector<2x16xf32>
    %370 = math.exp %369 : vector<2x16xf32>
    %cst_67 = arith.constant 1.000000e+00 : f32
    %371 = vector.broadcast %cst_67 : f32 to vector<2x16xf32>
    %372 = arith.addf %371, %370 : vector<2x16xf32>
    %373 = arith.divf %371, %372 : vector<2x16xf32>
    %374 = arith.mulf %365, %346 : vector<2x16xf32>
    %375 = arith.mulf %359, %367 : vector<2x16xf32>
    %376 = arith.addf %374, %375 : vector<2x16xf32>
    %377 = math.tanh %376 : vector<2x16xf32>
    %378 = arith.mulf %373, %377 : vector<2x16xf32>
    %379 = vector.extract_strided_slice %15 {offsets = [3, 0], sizes = [1, 64], strides = [1, 1]} : vector<16x64xf32> to vector<1x64xf32>
    %380 = vector.extract_strided_slice %15 {offsets = [11, 0], sizes = [1, 64], strides = [1, 1]} : vector<16x64xf32> to vector<1x64xf32>
    %381 = tpu.concatenate %379, %380 in 0 : vector<1x64xf32>, vector<1x64xf32> -> vector<2x64xf32>
    %cst_68 = arith.constant dense<0.000000e+00> : vector<2x64xf32>
    %382 = tpu.matmul %378, %17, %cst_68 {dimension_numbers = #tpu.dot_dimension_numbers<[1], [0], [0], [1], [0, 0, 1, 1], [], []>} : vector<2x16xf32>, vector<16x64xf32>, vector<2x64xf32> -> vector<2x64xf32>
    %383 = arith.addf %381, %382 : vector<2x64xf32>
    %384 = vector.extract_strided_slice %383 {offsets = [0, 0], sizes = [2, 16], strides = [1, 1]} : vector<2x64xf32> to vector<2x16xf32>
    %385 = arith.negf %384 : vector<2x16xf32>
    %386 = math.exp %385 : vector<2x16xf32>
    %cst_69 = arith.constant 1.000000e+00 : f32
    %387 = vector.broadcast %cst_69 : f32 to vector<2x16xf32>
    %388 = arith.addf %387, %386 : vector<2x16xf32>
    %389 = arith.divf %387, %388 : vector<2x16xf32>
    %390 = vector.extract_strided_slice %383 {offsets = [0, 16], sizes = [2, 16], strides = [1, 1]} : vector<2x64xf32> to vector<2x16xf32>
    %391 = arith.negf %390 : vector<2x16xf32>
    %392 = math.exp %391 : vector<2x16xf32>
    %cst_70 = arith.constant 1.000000e+00 : f32
    %393 = vector.broadcast %cst_70 : f32 to vector<2x16xf32>
    %394 = arith.addf %393, %392 : vector<2x16xf32>
    %395 = arith.divf %393, %394 : vector<2x16xf32>
    %396 = vector.extract_strided_slice %383 {offsets = [0, 32], sizes = [2, 16], strides = [1, 1]} : vector<2x64xf32> to vector<2x16xf32>
    %397 = math.tanh %396 : vector<2x16xf32>
    %398 = vector.extract_strided_slice %383 {offsets = [0, 48], sizes = [2, 16], strides = [1, 1]} : vector<2x64xf32> to vector<2x16xf32>
    %399 = arith.negf %398 : vector<2x16xf32>
    %400 = math.exp %399 : vector<2x16xf32>
    %cst_71 = arith.constant 1.000000e+00 : f32
    %401 = vector.broadcast %cst_71 : f32 to vector<2x16xf32>
    %402 = arith.addf %401, %400 : vector<2x16xf32>
    %403 = arith.divf %401, %402 : vector<2x16xf32>
    %404 = arith.mulf %395, %376 : vector<2x16xf32>
    %405 = arith.mulf %389, %397 : vector<2x16xf32>
    %406 = arith.addf %404, %405 : vector<2x16xf32>
    %407 = math.tanh %406 : vector<2x16xf32>
    %408 = arith.mulf %403, %407 : vector<2x16xf32>
    %409 = vector.extract_strided_slice %15 {offsets = [2, 0], sizes = [1, 64], strides = [1, 1]} : vector<16x64xf32> to vector<1x64xf32>
    %410 = vector.extract_strided_slice %15 {offsets = [10, 0], sizes = [1, 64], strides = [1, 1]} : vector<16x64xf32> to vector<1x64xf32>
    %411 = tpu.concatenate %409, %410 in 0 : vector<1x64xf32>, vector<1x64xf32> -> vector<2x64xf32>
    %cst_72 = arith.constant dense<0.000000e+00> : vector<2x64xf32>
    %412 = tpu.matmul %408, %17, %cst_72 {dimension_numbers = #tpu.dot_dimension_numbers<[1], [0], [0], [1], [0, 0, 1, 1], [], []>} : vector<2x16xf32>, vector<16x64xf32>, vector<2x64xf32> -> vector<2x64xf32>
    %413 = arith.addf %411, %412 : vector<2x64xf32>
    %414 = vector.extract_strided_slice %413 {offsets = [0, 0], sizes = [2, 16], strides = [1, 1]} : vector<2x64xf32> to vector<2x16xf32>
    %415 = arith.negf %414 : vector<2x16xf32>
    %416 = math.exp %415 : vector<2x16xf32>
    %cst_73 = arith.constant 1.000000e+00 : f32
    %417 = vector.broadcast %cst_73 : f32 to vector<2x16xf32>
    %418 = arith.addf %417, %416 : vector<2x16xf32>
    %419 = arith.divf %417, %418 : vector<2x16xf32>
    %420 = vector.extract_strided_slice %413 {offsets = [0, 16], sizes = [2, 16], strides = [1, 1]} : vector<2x64xf32> to vector<2x16xf32>
    %421 = arith.negf %420 : vector<2x16xf32>
    %422 = math.exp %421 : vector<2x16xf32>
    %cst_74 = arith.constant 1.000000e+00 : f32
    %423 = vector.broadcast %cst_74 : f32 to vector<2x16xf32>
    %424 = arith.addf %423, %422 : vector<2x16xf32>
    %425 = arith.divf %423, %424 : vector<2x16xf32>
    %426 = vector.extract_strided_slice %413 {offsets = [0, 32], sizes = [2, 16], strides = [1, 1]} : vector<2x64xf32> to vector<2x16xf32>
    %427 = math.tanh %426 : vector<2x16xf32>
    %428 = vector.extract_strided_slice %413 {offsets = [0, 48], sizes = [2, 16], strides = [1, 1]} : vector<2x64xf32> to vector<2x16xf32>
    %429 = arith.negf %428 : vector<2x16xf32>
    %430 = math.exp %429 : vector<2x16xf32>
    %cst_75 = arith.constant 1.000000e+00 : f32
    %431 = vector.broadcast %cst_75 : f32 to vector<2x16xf32>
    %432 = arith.addf %431, %430 : vector<2x16xf32>
    %433 = arith.divf %431, %432 : vector<2x16xf32>
    %434 = arith.mulf %425, %406 : vector<2x16xf32>
    %435 = arith.mulf %419, %427 : vector<2x16xf32>
    %436 = arith.addf %434, %435 : vector<2x16xf32>
    %437 = math.tanh %436 : vector<2x16xf32>
    %438 = arith.mulf %433, %437 : vector<2x16xf32>
    %439 = vector.extract_strided_slice %15 {offsets = [1, 0], sizes = [1, 64], strides = [1, 1]} : vector<16x64xf32> to vector<1x64xf32>
    %440 = vector.extract_strided_slice %15 {offsets = [9, 0], sizes = [1, 64], strides = [1, 1]} : vector<16x64xf32> to vector<1x64xf32>
    %441 = tpu.concatenate %439, %440 in 0 : vector<1x64xf32>, vector<1x64xf32> -> vector<2x64xf32>
    %cst_76 = arith.constant dense<0.000000e+00> : vector<2x64xf32>
    %442 = tpu.matmul %438, %17, %cst_76 {dimension_numbers = #tpu.dot_dimension_numbers<[1], [0], [0], [1], [0, 0, 1, 1], [], []>} : vector<2x16xf32>, vector<16x64xf32>, vector<2x64xf32> -> vector<2x64xf32>
    %443 = arith.addf %441, %442 : vector<2x64xf32>
    %444 = vector.extract_strided_slice %443 {offsets = [0, 0], sizes = [2, 16], strides = [1, 1]} : vector<2x64xf32> to vector<2x16xf32>
    %445 = arith.negf %444 : vector<2x16xf32>
    %446 = math.exp %445 : vector<2x16xf32>
    %cst_77 = arith.constant 1.000000e+00 : f32
    %447 = vector.broadcast %cst_77 : f32 to vector<2x16xf32>
    %448 = arith.addf %447, %446 : vector<2x16xf32>
    %449 = arith.divf %447, %448 : vector<2x16xf32>
    %450 = vector.extract_strided_slice %443 {offsets = [0, 16], sizes = [2, 16], strides = [1, 1]} : vector<2x64xf32> to vector<2x16xf32>
    %451 = arith.negf %450 : vector<2x16xf32>
    %452 = math.exp %451 : vector<2x16xf32>
    %cst_78 = arith.constant 1.000000e+00 : f32
    %453 = vector.broadcast %cst_78 : f32 to vector<2x16xf32>
    %454 = arith.addf %453, %452 : vector<2x16xf32>
    %455 = arith.divf %453, %454 : vector<2x16xf32>
    %456 = vector.extract_strided_slice %443 {offsets = [0, 32], sizes = [2, 16], strides = [1, 1]} : vector<2x64xf32> to vector<2x16xf32>
    %457 = math.tanh %456 : vector<2x16xf32>
    %458 = vector.extract_strided_slice %443 {offsets = [0, 48], sizes = [2, 16], strides = [1, 1]} : vector<2x64xf32> to vector<2x16xf32>
    %459 = arith.negf %458 : vector<2x16xf32>
    %460 = math.exp %459 : vector<2x16xf32>
    %cst_79 = arith.constant 1.000000e+00 : f32
    %461 = vector.broadcast %cst_79 : f32 to vector<2x16xf32>
    %462 = arith.addf %461, %460 : vector<2x16xf32>
    %463 = arith.divf %461, %462 : vector<2x16xf32>
    %464 = arith.mulf %455, %436 : vector<2x16xf32>
    %465 = arith.mulf %449, %457 : vector<2x16xf32>
    %466 = arith.addf %464, %465 : vector<2x16xf32>
    %467 = math.tanh %466 : vector<2x16xf32>
    %468 = arith.mulf %463, %467 : vector<2x16xf32>
    %469 = vector.extract_strided_slice %15 {offsets = [0, 0], sizes = [1, 64], strides = [1, 1]} : vector<16x64xf32> to vector<1x64xf32>
    %470 = vector.extract_strided_slice %15 {offsets = [8, 0], sizes = [1, 64], strides = [1, 1]} : vector<16x64xf32> to vector<1x64xf32>
    %471 = tpu.concatenate %469, %470 in 0 : vector<1x64xf32>, vector<1x64xf32> -> vector<2x64xf32>
    %cst_80 = arith.constant dense<0.000000e+00> : vector<2x64xf32>
    %472 = tpu.matmul %468, %17, %cst_80 {dimension_numbers = #tpu.dot_dimension_numbers<[1], [0], [0], [1], [0, 0, 1, 1], [], []>} : vector<2x16xf32>, vector<16x64xf32>, vector<2x64xf32> -> vector<2x64xf32>
    %473 = arith.addf %471, %472 : vector<2x64xf32>
    %474 = vector.extract_strided_slice %473 {offsets = [0, 0], sizes = [2, 16], strides = [1, 1]} : vector<2x64xf32> to vector<2x16xf32>
    %475 = arith.negf %474 : vector<2x16xf32>
    %476 = math.exp %475 : vector<2x16xf32>
    %cst_81 = arith.constant 1.000000e+00 : f32
    %477 = vector.broadcast %cst_81 : f32 to vector<2x16xf32>
    %478 = arith.addf %477, %476 : vector<2x16xf32>
    %479 = arith.divf %477, %478 : vector<2x16xf32>
    %480 = vector.extract_strided_slice %473 {offsets = [0, 16], sizes = [2, 16], strides = [1, 1]} : vector<2x64xf32> to vector<2x16xf32>
    %481 = arith.negf %480 : vector<2x16xf32>
    %482 = math.exp %481 : vector<2x16xf32>
    %cst_82 = arith.constant 1.000000e+00 : f32
    %483 = vector.broadcast %cst_82 : f32 to vector<2x16xf32>
    %484 = arith.addf %483, %482 : vector<2x16xf32>
    %485 = arith.divf %483, %484 : vector<2x16xf32>
    %486 = vector.extract_strided_slice %473 {offsets = [0, 32], sizes = [2, 16], strides = [1, 1]} : vector<2x64xf32> to vector<2x16xf32>
    %487 = math.tanh %486 : vector<2x16xf32>
    %488 = vector.extract_strided_slice %473 {offsets = [0, 48], sizes = [2, 16], strides = [1, 1]} : vector<2x64xf32> to vector<2x16xf32>
    %489 = arith.negf %488 : vector<2x16xf32>
    %490 = math.exp %489 : vector<2x16xf32>
    %cst_83 = arith.constant 1.000000e+00 : f32
    %491 = vector.broadcast %cst_83 : f32 to vector<2x16xf32>
    %492 = arith.addf %491, %490 : vector<2x16xf32>
    %493 = arith.divf %491, %492 : vector<2x16xf32>
    %494 = arith.mulf %485, %466 : vector<2x16xf32>
    %495 = arith.mulf %479, %487 : vector<2x16xf32>
    %496 = arith.addf %494, %495 : vector<2x16xf32>
    %497 = math.tanh %496 : vector<2x16xf32>
    %498 = arith.mulf %493, %497 : vector<2x16xf32>
    %499 = vector.extract_strided_slice %48 {offsets = [0, 0], sizes = [1, 16], strides = [1, 1]} : vector<2x16xf32> to vector<1x16xf32>
    %500 = vector.extract_strided_slice %78 {offsets = [0, 0], sizes = [1, 16], strides = [1, 1]} : vector<2x16xf32> to vector<1x16xf32>
    %501 = vector.extract_strided_slice %108 {offsets = [0, 0], sizes = [1, 16], strides = [1, 1]} : vector<2x16xf32> to vector<1x16xf32>
    %502 = vector.extract_strided_slice %138 {offsets = [0, 0], sizes = [1, 16], strides = [1, 1]} : vector<2x16xf32> to vector<1x16xf32>
    %503 = vector.extract_strided_slice %168 {offsets = [0, 0], sizes = [1, 16], strides = [1, 1]} : vector<2x16xf32> to vector<1x16xf32>
    %504 = vector.extract_strided_slice %198 {offsets = [0, 0], sizes = [1, 16], strides = [1, 1]} : vector<2x16xf32> to vector<1x16xf32>
    %505 = vector.extract_strided_slice %228 {offsets = [0, 0], sizes = [1, 16], strides = [1, 1]} : vector<2x16xf32> to vector<1x16xf32>
    %506 = vector.extract_strided_slice %258 {offsets = [0, 0], sizes = [1, 16], strides = [1, 1]} : vector<2x16xf32> to vector<1x16xf32>
    %507 = tpu.concatenate %499, %500, %501, %502, %503, %504, %505, %506 in 0 : vector<1x16xf32>, vector<1x16xf32>, vector<1x16xf32>, vector<1x16xf32>, vector<1x16xf32>, vector<1x16xf32>, vector<1x16xf32>, vector<1x16xf32> -> vector<8x16xf32>
    %508 = vector.extract_strided_slice %498 {offsets = [0, 0], sizes = [1, 16], strides = [1, 1]} : vector<2x16xf32> to vector<1x16xf32>
    %509 = vector.extract_strided_slice %468 {offsets = [0, 0], sizes = [1, 16], strides = [1, 1]} : vector<2x16xf32> to vector<1x16xf32>
    %510 = vector.extract_strided_slice %438 {offsets = [0, 0], sizes = [1, 16], strides = [1, 1]} : vector<2x16xf32> to vector<1x16xf32>
    %511 = vector.extract_strided_slice %408 {offsets = [0, 0], sizes = [1, 16], strides = [1, 1]} : vector<2x16xf32> to vector<1x16xf32>
    %512 = vector.extract_strided_slice %378 {offsets = [0, 0], sizes = [1, 16], strides = [1, 1]} : vector<2x16xf32> to vector<1x16xf32>
    %513 = vector.extract_strided_slice %348 {offsets = [0, 0], sizes = [1, 16], strides = [1, 1]} : vector<2x16xf32> to vector<1x16xf32>
    %514 = vector.extract_strided_slice %318 {offsets = [0, 0], sizes = [1, 16], strides = [1, 1]} : vector<2x16xf32> to vector<1x16xf32>
    %515 = vector.extract_strided_slice %288 {offsets = [0, 0], sizes = [1, 16], strides = [1, 1]} : vector<2x16xf32> to vector<1x16xf32>
    %516 = tpu.concatenate %508, %509, %510, %511, %512, %513, %514, %515 in 0 : vector<1x16xf32>, vector<1x16xf32>, vector<1x16xf32>, vector<1x16xf32>, vector<1x16xf32>, vector<1x16xf32>, vector<1x16xf32>, vector<1x16xf32> -> vector<8x16xf32>
    %517 = tpu.concatenate %507, %516 in 1 : vector<8x16xf32>, vector<8x16xf32> -> vector<8x32xf32>
    %518 = vector.extract_strided_slice %48 {offsets = [1, 0], sizes = [1, 16], strides = [1, 1]} : vector<2x16xf32> to vector<1x16xf32>
    %519 = vector.extract_strided_slice %78 {offsets = [1, 0], sizes = [1, 16], strides = [1, 1]} : vector<2x16xf32> to vector<1x16xf32>
    %520 = vector.extract_strided_slice %108 {offsets = [1, 0], sizes = [1, 16], strides = [1, 1]} : vector<2x16xf32> to vector<1x16xf32>
    %521 = vector.extract_strided_slice %138 {offsets = [1, 0], sizes = [1, 16], strides = [1, 1]} : vector<2x16xf32> to vector<1x16xf32>
    %522 = vector.extract_strided_slice %168 {offsets = [1, 0], sizes = [1, 16], strides = [1, 1]} : vector<2x16xf32> to vector<1x16xf32>
    %523 = vector.extract_strided_slice %198 {offsets = [1, 0], sizes = [1, 16], strides = [1, 1]} : vector<2x16xf32> to vector<1x16xf32>
    %524 = vector.extract_strided_slice %228 {offsets = [1, 0], sizes = [1, 16], strides = [1, 1]} : vector<2x16xf32> to vector<1x16xf32>
    %525 = vector.extract_strided_slice %258 {offsets = [1, 0], sizes = [1, 16], strides = [1, 1]} : vector<2x16xf32> to vector<1x16xf32>
    %526 = tpu.concatenate %518, %519, %520, %521, %522, %523, %524, %525 in 0 : vector<1x16xf32>, vector<1x16xf32>, vector<1x16xf32>, vector<1x16xf32>, vector<1x16xf32>, vector<1x16xf32>, vector<1x16xf32>, vector<1x16xf32> -> vector<8x16xf32>
    %527 = vector.extract_strided_slice %498 {offsets = [1, 0], sizes = [1, 16], strides = [1, 1]} : vector<2x16xf32> to vector<1x16xf32>
    %528 = vector.extract_strided_slice %468 {offsets = [1, 0], sizes = [1, 16], strides = [1, 1]} : vector<2x16xf32> to vector<1x16xf32>
    %529 = vector.extract_strided_slice %438 {offsets = [1, 0], sizes = [1, 16], strides = [1, 1]} : vector<2x16xf32> to vector<1x16xf32>
    %530 = vector.extract_strided_slice %408 {offsets = [1, 0], sizes = [1, 16], strides = [1, 1]} : vector<2x16xf32> to vector<1x16xf32>
    %531 = vector.extract_strided_slice %378 {offsets = [1, 0], sizes = [1, 16], strides = [1, 1]} : vector<2x16xf32> to vector<1x16xf32>
    %532 = vector.extract_strided_slice %348 {offsets = [1, 0], sizes = [1, 16], strides = [1, 1]} : vector<2x16xf32> to vector<1x16xf32>
    %533 = vector.extract_strided_slice %318 {offsets = [1, 0], sizes = [1, 16], strides = [1, 1]} : vector<2x16xf32> to vector<1x16xf32>
    %534 = vector.extract_strided_slice %288 {offsets = [1, 0], sizes = [1, 16], strides = [1, 1]} : vector<2x16xf32> to vector<1x16xf32>
    %535 = tpu.concatenate %527, %528, %529, %530, %531, %532, %533, %534 in 0 : vector<1x16xf32>, vector<1x16xf32>, vector<1x16xf32>, vector<1x16xf32>, vector<1x16xf32>, vector<1x16xf32>, vector<1x16xf32>, vector<1x16xf32> -> vector<8x16xf32>
    %536 = tpu.concatenate %526, %535 in 1 : vector<8x16xf32>, vector<8x16xf32> -> vector<8x32xf32>
    %537 = tpu.concatenate %517, %536 in 0 : vector<8x32xf32>, vector<8x32xf32> -> vector<16x32xf32>
    %c0_84 = arith.constant 0 : index
    %c0_85 = arith.constant 0 : index
    %538 = vector.load %arg9[%c0_84, %c0_85] : memref<16x32xf32, #tpu.memory_space<vmem>>, vector<16x32xf32>
    tpu.vector_store %arg9[%c0_84, %c0_85], %537 {strides = array<i32>} : memref<16x32xf32, #tpu.memory_space<vmem>>, vector<16x32xf32>,
    return
  }
}

module attributes {stable_mosaic.version = 11 : i64} {
  func.func @kernel(%arg0: memref<16x32xf32, #tpu.memory_space<vmem>>, %arg1: memref<32x96xf32, #tpu.memory_space<vmem>>, %arg2: memref<1x96xf32, #tpu.memory_space<vmem>>, %arg3: memref<32x32xf32, #tpu.memory_space<vmem>>, %arg4: memref<1x32xf32, #tpu.memory_space<vmem>>, %arg5: memref<1x32xf32, #tpu.memory_space<vmem>>, %arg6: memref<1x32xf32, #tpu.memory_space<vmem>>, %arg7: memref<32x64xf32, #tpu.memory_space<vmem>>, %arg8: memref<1x64xf32, #tpu.memory_space<vmem>>, %arg9: memref<64x32xf32, #tpu.memory_space<vmem>>, %arg10: memref<1x32xf32, #tpu.memory_space<vmem>>, %arg11: memref<1x32xf32, #tpu.memory_space<vmem>>, %arg12: memref<1x32xf32, #tpu.memory_space<vmem>>, %arg13: memref<1x32xf32, #tpu.memory_space<vmem>>, %arg14: memref<1x32xf32, #tpu.memory_space<vmem>>, %arg15: memref<16x32xf32, #tpu.memory_space<vmem>>) attributes {dimension_semantics = [], scalar_prefetch = 0 : i64, scratch_operands = 0 : i64, tpu.core_type = #tpu.core_type<tc>} {
    %c0 = arith.constant 0 : index
    %c0_0 = arith.constant 0 : index
    %0 = vector.load %arg0[%c0, %c0_0] : memref<16x32xf32, #tpu.memory_space<vmem>>, vector<16x32xf32>
    %c0_1 = arith.constant 0 : index
    %c0_2 = arith.constant 0 : index
    %1 = vector.load %arg1[%c0_1, %c0_2] : memref<32x96xf32, #tpu.memory_space<vmem>>, vector<32x96xf32>
    %cst = arith.constant dense<0.000000e+00> : vector<16x96xf32>
    %2 = tpu.matmul %0, %1, %cst {dimension_numbers = #tpu.dot_dimension_numbers<[1], [0], [0], [1], [0, 0, 1, 1], [], []>} : vector<16x32xf32>, vector<32x96xf32>, vector<16x96xf32> -> vector<16x96xf32>
    %c0_3 = arith.constant 0 : index
    %c0_4 = arith.constant 0 : index
    %3 = vector.load %arg2[%c0_3, %c0_4] : memref<1x96xf32, #tpu.memory_space<vmem>>, vector<1x96xf32>
    %4 = vector.broadcast %3 : vector<1x96xf32> to vector<16x96xf32>
    %5 = arith.addf %2, %4 : vector<16x96xf32>
    %6 = vector.extract_strided_slice %5 {offsets = [0, 0], sizes = [16, 32], strides = [1, 1]} : vector<16x96xf32> to vector<16x32xf32>
    %7 = vector.extract_strided_slice %5 {offsets = [0, 32], sizes = [16, 32], strides = [1, 1]} : vector<16x96xf32> to vector<16x32xf32>
    %8 = vector.extract_strided_slice %5 {offsets = [0, 64], sizes = [16, 32], strides = [1, 1]} : vector<16x96xf32> to vector<16x32xf32>
    %9 = vector.extract_strided_slice %6 {offsets = [0, 0], sizes = [8, 16], strides = [1, 1]} : vector<16x32xf32> to vector<8x16xf32>
    %cst_5 = arith.constant 0.000000e+00 : f32
    %10 = vector.broadcast %cst_5 : f32 to vector<8x16xf32>
    %11 = arith.cmpf ogt, %9, %10 : vector<8x16xf32>
    %cst_6 = arith.constant 1.000000e+00 : f32
    %12 = vector.broadcast %cst_6 : f32 to vector<8x16xf32>
    %13 = arith.addf %9, %12 : vector<8x16xf32>
    %cst_7 = arith.constant 0.000000e+00 : f32
    %14 = vector.broadcast %cst_7 : f32 to vector<8x16xf32>
    %15 = arith.minimumf %9, %14 : vector<8x16xf32>
    %16 = math.exp %15 : vector<8x16xf32>
    %17 = arith.select %11, %13, %16 : vector<8x16xi1>, vector<8x16xf32>
    %18 = vector.extract_strided_slice %7 {offsets = [0, 0], sizes = [8, 16], strides = [1, 1]} : vector<16x32xf32> to vector<8x16xf32>
    %cst_8 = arith.constant 0.000000e+00 : f32
    %19 = vector.broadcast %cst_8 : f32 to vector<8x16xf32>
    %20 = arith.cmpf ogt, %18, %19 : vector<8x16xf32>
    %cst_9 = arith.constant 1.000000e+00 : f32
    %21 = vector.broadcast %cst_9 : f32 to vector<8x16xf32>
    %22 = arith.addf %18, %21 : vector<8x16xf32>
    %cst_10 = arith.constant 0.000000e+00 : f32
    %23 = vector.broadcast %cst_10 : f32 to vector<8x16xf32>
    %24 = arith.minimumf %18, %23 : vector<8x16xf32>
    %25 = math.exp %24 : vector<8x16xf32>
    %26 = arith.select %20, %22, %25 : vector<8x16xi1>, vector<8x16xf32>
    %27 = vector.extract_strided_slice %8 {offsets = [0, 0], sizes = [8, 16], strides = [1, 1]} : vector<16x32xf32> to vector<8x16xf32>
    %cst_11 = arith.constant dense<0.000000e+00> : vector<16x16xf32>
    %28 = tpu.matmul %26, %27, %cst_11 {dimension_numbers = #tpu.dot_dimension_numbers<[0], [0], [1], [1], [0, 1, 1, 1], [], []>} : vector<8x16xf32>, vector<8x16xf32>, vector<16x16xf32> -> vector<16x16xf32>
    %cst_12 = arith.constant dense<0.000000e+00> : vector<16xf32>
    %29 = vector.multi_reduction <add>, %26, %cst_12 [0] : vector<8x16xf32> to vector<16xf32>
    %30 = vector.shape_cast %29 : vector<16xf32> to vector<1x16xf32>
    %31 = vector.broadcast %30 : vector<1x16xf32> to vector<8x16xf32>
    %32 = arith.mulf %17, %31 : vector<8x16xf32>
    %cst_13 = arith.constant dense<0.000000e+00> : vector<8xf32>
    %33 = vector.multi_reduction <add>, %32, %cst_13 [1] : vector<8x16xf32> to vector<8xf32>
    %34 = vector.shape_cast %33 : vector<8xf32> to vector<8x1xf32>
    %cst_14 = arith.constant 9.99999997E-7 : f32
    %35 = vector.broadcast %cst_14 : f32 to vector<8x1xf32>
    %36 = arith.addf %34, %35 : vector<8x1xf32>
    %cst_15 = arith.constant 1.000000e+00 : f32
    %37 = vector.broadcast %cst_15 : f32 to vector<8x1xf32>
    %38 = arith.divf %37, %36 : vector<8x1xf32>
    %cst_16 = arith.constant dense<0.000000e+00> : vector<8x16xf32>
    %39 = tpu.matmul %17, %28, %cst_16 {dimension_numbers = #tpu.dot_dimension_numbers<[1], [0], [0], [1], [0, 0, 1, 1], [], []>} : vector<8x16xf32>, vector<16x16xf32>, vector<8x16xf32> -> vector<8x16xf32>
    %40 = vector.broadcast %38 : vector<8x1xf32> to vector<8x16xf32>
    %41 = arith.mulf %39, %40 : vector<8x16xf32>
    %42 = vector.extract_strided_slice %6 {offsets = [0, 16], sizes = [8, 16], strides = [1, 1]} : vector<16x32xf32> to vector<8x16xf32>
    %cst_17 = arith.constant 0.000000e+00 : f32
    %43 = vector.broadcast %cst_17 : f32 to vector<8x16xf32>
    %44 = arith.cmpf ogt, %42, %43 : vector<8x16xf32>
    %cst_18 = arith.constant 1.000000e+00 : f32
    %45 = vector.broadcast %cst_18 : f32 to vector<8x16xf32>
    %46 = arith.addf %42, %45 : vector<8x16xf32>
    %cst_19 = arith.constant 0.000000e+00 : f32
    %47 = vector.broadcast %cst_19 : f32 to vector<8x16xf32>
    %48 = arith.minimumf %42, %47 : vector<8x16xf32>
    %49 = math.exp %48 : vector<8x16xf32>
    %50 = arith.select %44, %46, %49 : vector<8x16xi1>, vector<8x16xf32>
    %51 = vector.extract_strided_slice %7 {offsets = [0, 16], sizes = [8, 16], strides = [1, 1]} : vector<16x32xf32> to vector<8x16xf32>
    %cst_20 = arith.constant 0.000000e+00 : f32
    %52 = vector.broadcast %cst_20 : f32 to vector<8x16xf32>
    %53 = arith.cmpf ogt, %51, %52 : vector<8x16xf32>
    %cst_21 = arith.constant 1.000000e+00 : f32
    %54 = vector.broadcast %cst_21 : f32 to vector<8x16xf32>
    %55 = arith.addf %51, %54 : vector<8x16xf32>
    %cst_22 = arith.constant 0.000000e+00 : f32
    %56 = vector.broadcast %cst_22 : f32 to vector<8x16xf32>
    %57 = arith.minimumf %51, %56 : vector<8x16xf32>
    %58 = math.exp %57 : vector<8x16xf32>
    %59 = arith.select %53, %55, %58 : vector<8x16xi1>, vector<8x16xf32>
    %60 = vector.extract_strided_slice %8 {offsets = [0, 16], sizes = [8, 16], strides = [1, 1]} : vector<16x32xf32> to vector<8x16xf32>
    %cst_23 = arith.constant dense<0.000000e+00> : vector<16x16xf32>
    %61 = tpu.matmul %59, %60, %cst_23 {dimension_numbers = #tpu.dot_dimension_numbers<[0], [0], [1], [1], [0, 1, 1, 1], [], []>} : vector<8x16xf32>, vector<8x16xf32>, vector<16x16xf32> -> vector<16x16xf32>
    %cst_24 = arith.constant dense<0.000000e+00> : vector<16xf32>
    %62 = vector.multi_reduction <add>, %59, %cst_24 [0] : vector<8x16xf32> to vector<16xf32>
    %63 = vector.shape_cast %62 : vector<16xf32> to vector<1x16xf32>
    %64 = vector.broadcast %63 : vector<1x16xf32> to vector<8x16xf32>
    %65 = arith.mulf %50, %64 : vector<8x16xf32>
    %cst_25 = arith.constant dense<0.000000e+00> : vector<8xf32>
    %66 = vector.multi_reduction <add>, %65, %cst_25 [1] : vector<8x16xf32> to vector<8xf32>
    %67 = vector.shape_cast %66 : vector<8xf32> to vector<8x1xf32>
    %cst_26 = arith.constant 9.99999997E-7 : f32
    %68 = vector.broadcast %cst_26 : f32 to vector<8x1xf32>
    %69 = arith.addf %67, %68 : vector<8x1xf32>
    %cst_27 = arith.constant 1.000000e+00 : f32
    %70 = vector.broadcast %cst_27 : f32 to vector<8x1xf32>
    %71 = arith.divf %70, %69 : vector<8x1xf32>
    %cst_28 = arith.constant dense<0.000000e+00> : vector<8x16xf32>
    %72 = tpu.matmul %50, %61, %cst_28 {dimension_numbers = #tpu.dot_dimension_numbers<[1], [0], [0], [1], [0, 0, 1, 1], [], []>} : vector<8x16xf32>, vector<16x16xf32>, vector<8x16xf32> -> vector<8x16xf32>
    %73 = vector.broadcast %71 : vector<8x1xf32> to vector<8x16xf32>
    %74 = arith.mulf %72, %73 : vector<8x16xf32>
    %75 = tpu.concatenate %41, %74 in 1 : vector<8x16xf32>, vector<8x16xf32> -> vector<8x32xf32>
    %76 = vector.extract_strided_slice %6 {offsets = [8, 0], sizes = [8, 16], strides = [1, 1]} : vector<16x32xf32> to vector<8x16xf32>
    %cst_29 = arith.constant 0.000000e+00 : f32
    %77 = vector.broadcast %cst_29 : f32 to vector<8x16xf32>
    %78 = arith.cmpf ogt, %76, %77 : vector<8x16xf32>
    %cst_30 = arith.constant 1.000000e+00 : f32
    %79 = vector.broadcast %cst_30 : f32 to vector<8x16xf32>
    %80 = arith.addf %76, %79 : vector<8x16xf32>
    %cst_31 = arith.constant 0.000000e+00 : f32
    %81 = vector.broadcast %cst_31 : f32 to vector<8x16xf32>
    %82 = arith.minimumf %76, %81 : vector<8x16xf32>
    %83 = math.exp %82 : vector<8x16xf32>
    %84 = arith.select %78, %80, %83 : vector<8x16xi1>, vector<8x16xf32>
    %85 = vector.extract_strided_slice %7 {offsets = [8, 0], sizes = [8, 16], strides = [1, 1]} : vector<16x32xf32> to vector<8x16xf32>
    %cst_32 = arith.constant 0.000000e+00 : f32
    %86 = vector.broadcast %cst_32 : f32 to vector<8x16xf32>
    %87 = arith.cmpf ogt, %85, %86 : vector<8x16xf32>
    %cst_33 = arith.constant 1.000000e+00 : f32
    %88 = vector.broadcast %cst_33 : f32 to vector<8x16xf32>
    %89 = arith.addf %85, %88 : vector<8x16xf32>
    %cst_34 = arith.constant 0.000000e+00 : f32
    %90 = vector.broadcast %cst_34 : f32 to vector<8x16xf32>
    %91 = arith.minimumf %85, %90 : vector<8x16xf32>
    %92 = math.exp %91 : vector<8x16xf32>
    %93 = arith.select %87, %89, %92 : vector<8x16xi1>, vector<8x16xf32>
    %94 = vector.extract_strided_slice %8 {offsets = [8, 0], sizes = [8, 16], strides = [1, 1]} : vector<16x32xf32> to vector<8x16xf32>
    %cst_35 = arith.constant dense<0.000000e+00> : vector<16x16xf32>
    %95 = tpu.matmul %93, %94, %cst_35 {dimension_numbers = #tpu.dot_dimension_numbers<[0], [0], [1], [1], [0, 1, 1, 1], [], []>} : vector<8x16xf32>, vector<8x16xf32>, vector<16x16xf32> -> vector<16x16xf32>
    %cst_36 = arith.constant dense<0.000000e+00> : vector<16xf32>
    %96 = vector.multi_reduction <add>, %93, %cst_36 [0] : vector<8x16xf32> to vector<16xf32>
    %97 = vector.shape_cast %96 : vector<16xf32> to vector<1x16xf32>
    %98 = vector.broadcast %97 : vector<1x16xf32> to vector<8x16xf32>
    %99 = arith.mulf %84, %98 : vector<8x16xf32>
    %cst_37 = arith.constant dense<0.000000e+00> : vector<8xf32>
    %100 = vector.multi_reduction <add>, %99, %cst_37 [1] : vector<8x16xf32> to vector<8xf32>
    %101 = vector.shape_cast %100 : vector<8xf32> to vector<8x1xf32>
    %cst_38 = arith.constant 9.99999997E-7 : f32
    %102 = vector.broadcast %cst_38 : f32 to vector<8x1xf32>
    %103 = arith.addf %101, %102 : vector<8x1xf32>
    %cst_39 = arith.constant 1.000000e+00 : f32
    %104 = vector.broadcast %cst_39 : f32 to vector<8x1xf32>
    %105 = arith.divf %104, %103 : vector<8x1xf32>
    %cst_40 = arith.constant dense<0.000000e+00> : vector<8x16xf32>
    %106 = tpu.matmul %84, %95, %cst_40 {dimension_numbers = #tpu.dot_dimension_numbers<[1], [0], [0], [1], [0, 0, 1, 1], [], []>} : vector<8x16xf32>, vector<16x16xf32>, vector<8x16xf32> -> vector<8x16xf32>
    %107 = vector.broadcast %105 : vector<8x1xf32> to vector<8x16xf32>
    %108 = arith.mulf %106, %107 : vector<8x16xf32>
    %109 = vector.extract_strided_slice %6 {offsets = [8, 16], sizes = [8, 16], strides = [1, 1]} : vector<16x32xf32> to vector<8x16xf32>
    %cst_41 = arith.constant 0.000000e+00 : f32
    %110 = vector.broadcast %cst_41 : f32 to vector<8x16xf32>
    %111 = arith.cmpf ogt, %109, %110 : vector<8x16xf32>
    %cst_42 = arith.constant 1.000000e+00 : f32
    %112 = vector.broadcast %cst_42 : f32 to vector<8x16xf32>
    %113 = arith.addf %109, %112 : vector<8x16xf32>
    %cst_43 = arith.constant 0.000000e+00 : f32
    %114 = vector.broadcast %cst_43 : f32 to vector<8x16xf32>
    %115 = arith.minimumf %109, %114 : vector<8x16xf32>
    %116 = math.exp %115 : vector<8x16xf32>
    %117 = arith.select %111, %113, %116 : vector<8x16xi1>, vector<8x16xf32>
    %118 = vector.extract_strided_slice %7 {offsets = [8, 16], sizes = [8, 16], strides = [1, 1]} : vector<16x32xf32> to vector<8x16xf32>
    %cst_44 = arith.constant 0.000000e+00 : f32
    %119 = vector.broadcast %cst_44 : f32 to vector<8x16xf32>
    %120 = arith.cmpf ogt, %118, %119 : vector<8x16xf32>
    %cst_45 = arith.constant 1.000000e+00 : f32
    %121 = vector.broadcast %cst_45 : f32 to vector<8x16xf32>
    %122 = arith.addf %118, %121 : vector<8x16xf32>
    %cst_46 = arith.constant 0.000000e+00 : f32
    %123 = vector.broadcast %cst_46 : f32 to vector<8x16xf32>
    %124 = arith.minimumf %118, %123 : vector<8x16xf32>
    %125 = math.exp %124 : vector<8x16xf32>
    %126 = arith.select %120, %122, %125 : vector<8x16xi1>, vector<8x16xf32>
    %127 = vector.extract_strided_slice %8 {offsets = [8, 16], sizes = [8, 16], strides = [1, 1]} : vector<16x32xf32> to vector<8x16xf32>
    %cst_47 = arith.constant dense<0.000000e+00> : vector<16x16xf32>
    %128 = tpu.matmul %126, %127, %cst_47 {dimension_numbers = #tpu.dot_dimension_numbers<[0], [0], [1], [1], [0, 1, 1, 1], [], []>} : vector<8x16xf32>, vector<8x16xf32>, vector<16x16xf32> -> vector<16x16xf32>
    %cst_48 = arith.constant dense<0.000000e+00> : vector<16xf32>
    %129 = vector.multi_reduction <add>, %126, %cst_48 [0] : vector<8x16xf32> to vector<16xf32>
    %130 = vector.shape_cast %129 : vector<16xf32> to vector<1x16xf32>
    %131 = vector.broadcast %130 : vector<1x16xf32> to vector<8x16xf32>
    %132 = arith.mulf %117, %131 : vector<8x16xf32>
    %cst_49 = arith.constant dense<0.000000e+00> : vector<8xf32>
    %133 = vector.multi_reduction <add>, %132, %cst_49 [1] : vector<8x16xf32> to vector<8xf32>
    %134 = vector.shape_cast %133 : vector<8xf32> to vector<8x1xf32>
    %cst_50 = arith.constant 9.99999997E-7 : f32
    %135 = vector.broadcast %cst_50 : f32 to vector<8x1xf32>
    %136 = arith.addf %134, %135 : vector<8x1xf32>
    %cst_51 = arith.constant 1.000000e+00 : f32
    %137 = vector.broadcast %cst_51 : f32 to vector<8x1xf32>
    %138 = arith.divf %137, %136 : vector<8x1xf32>
    %cst_52 = arith.constant dense<0.000000e+00> : vector<8x16xf32>
    %139 = tpu.matmul %117, %128, %cst_52 {dimension_numbers = #tpu.dot_dimension_numbers<[1], [0], [0], [1], [0, 0, 1, 1], [], []>} : vector<8x16xf32>, vector<16x16xf32>, vector<8x16xf32> -> vector<8x16xf32>
    %140 = vector.broadcast %138 : vector<8x1xf32> to vector<8x16xf32>
    %141 = arith.mulf %139, %140 : vector<8x16xf32>
    %142 = tpu.concatenate %108, %141 in 1 : vector<8x16xf32>, vector<8x16xf32> -> vector<8x32xf32>
    %143 = tpu.concatenate %75, %142 in 0 : vector<8x32xf32>, vector<8x32xf32> -> vector<16x32xf32>
    %c0_53 = arith.constant 0 : index
    %c0_54 = arith.constant 0 : index
    %144 = vector.load %arg3[%c0_53, %c0_54] : memref<32x32xf32, #tpu.memory_space<vmem>>, vector<32x32xf32>
    %cst_55 = arith.constant dense<0.000000e+00> : vector<16x32xf32>
    %145 = tpu.matmul %143, %144, %cst_55 {dimension_numbers = #tpu.dot_dimension_numbers<[1], [0], [0], [1], [0, 0, 1, 1], [], []>} : vector<16x32xf32>, vector<32x32xf32>, vector<16x32xf32> -> vector<16x32xf32>
    %c0_56 = arith.constant 0 : index
    %c0_57 = arith.constant 0 : index
    %146 = vector.load %arg4[%c0_56, %c0_57] : memref<1x32xf32, #tpu.memory_space<vmem>>, vector<1x32xf32>
    %147 = vector.broadcast %146 : vector<1x32xf32> to vector<16x32xf32>
    %148 = arith.addf %145, %147 : vector<16x32xf32>
    %149 = arith.addf %0, %148 : vector<16x32xf32>
    %c0_58 = arith.constant 0 : index
    %c0_59 = arith.constant 0 : index
    %150 = vector.load %arg5[%c0_58, %c0_59] : memref<1x32xf32, #tpu.memory_space<vmem>>, vector<1x32xf32>
    %c0_60 = arith.constant 0 : index
    %c0_61 = arith.constant 0 : index
    %151 = vector.load %arg6[%c0_60, %c0_61] : memref<1x32xf32, #tpu.memory_space<vmem>>, vector<1x32xf32>
    %cst_62 = arith.constant dense<0.000000e+00> : vector<16xf32>
    %152 = vector.multi_reduction <add>, %149, %cst_62 [1] : vector<16x32xf32> to vector<16xf32>
    %153 = vector.shape_cast %152 : vector<16xf32> to vector<16x1xf32>
    %cst_63 = arith.constant 3.200000e+01 : f32
    %154 = vector.broadcast %cst_63 : f32 to vector<16x1xf32>
    %155 = arith.divf %153, %154 : vector<16x1xf32>
    %156 = vector.broadcast %155 : vector<16x1xf32> to vector<16x32xf32>
    %157 = arith.subf %149, %156 : vector<16x32xf32>
    %158 = arith.mulf %157, %157 : vector<16x32xf32>
    %cst_64 = arith.constant dense<0.000000e+00> : vector<16xf32>
    %159 = vector.multi_reduction <add>, %158, %cst_64 [1] : vector<16x32xf32> to vector<16xf32>
    %160 = vector.shape_cast %159 : vector<16xf32> to vector<16x1xf32>
    %cst_65 = arith.constant 3.200000e+01 : f32
    %161 = vector.broadcast %cst_65 : f32 to vector<16x1xf32>
    %162 = arith.divf %160, %161 : vector<16x1xf32>
    %163 = vector.broadcast %155 : vector<16x1xf32> to vector<16x32xf32>
    %164 = arith.subf %149, %163 : vector<16x32xf32>
    %cst_66 = arith.constant 9.99999974E-6 : f32
    %165 = vector.broadcast %cst_66 : f32 to vector<16x1xf32>
    %166 = arith.addf %162, %165 : vector<16x1xf32>
    %167 = math.rsqrt %166 : vector<16x1xf32>
    %168 = vector.broadcast %167 : vector<16x1xf32> to vector<16x32xf32>
    %169 = arith.mulf %164, %168 : vector<16x32xf32>
    %170 = vector.broadcast %150 : vector<1x32xf32> to vector<16x32xf32>
    %171 = arith.mulf %169, %170 : vector<16x32xf32>
    %172 = vector.broadcast %151 : vector<1x32xf32> to vector<16x32xf32>
    %173 = arith.addf %171, %172 : vector<16x32xf32>
    %c0_67 = arith.constant 0 : index
    %c0_68 = arith.constant 0 : index
    %174 = vector.load %arg7[%c0_67, %c0_68] : memref<32x64xf32, #tpu.memory_space<vmem>>, vector<32x64xf32>
    %cst_69 = arith.constant dense<0.000000e+00> : vector<16x64xf32>
    %175 = tpu.matmul %173, %174, %cst_69 {dimension_numbers = #tpu.dot_dimension_numbers<[1], [0], [0], [1], [0, 0, 1, 1], [], []>} : vector<16x32xf32>, vector<32x64xf32>, vector<16x64xf32> -> vector<16x64xf32>
    %c0_70 = arith.constant 0 : index
    %c0_71 = arith.constant 0 : index
    %176 = vector.load %arg8[%c0_70, %c0_71] : memref<1x64xf32, #tpu.memory_space<vmem>>, vector<1x64xf32>
    %177 = vector.broadcast %176 : vector<1x64xf32> to vector<16x64xf32>
    %178 = arith.addf %175, %177 : vector<16x64xf32>
    %cst_72 = arith.constant 0.000000e+00 : f32
    %179 = vector.broadcast %cst_72 : f32 to vector<16x64xf32>
    %180 = arith.maximumf %178, %179 : vector<16x64xf32>
    %c0_73 = arith.constant 0 : index
    %c0_74 = arith.constant 0 : index
    %181 = vector.load %arg9[%c0_73, %c0_74] : memref<64x32xf32, #tpu.memory_space<vmem>>, vector<64x32xf32>
    %cst_75 = arith.constant dense<0.000000e+00> : vector<16x32xf32>
    %182 = tpu.matmul %180, %181, %cst_75 {dimension_numbers = #tpu.dot_dimension_numbers<[1], [0], [0], [1], [0, 0, 1, 1], [], []>} : vector<16x64xf32>, vector<64x32xf32>, vector<16x32xf32> -> vector<16x32xf32>
    %c0_76 = arith.constant 0 : index
    %c0_77 = arith.constant 0 : index
    %183 = vector.load %arg10[%c0_76, %c0_77] : memref<1x32xf32, #tpu.memory_space<vmem>>, vector<1x32xf32>
    %184 = vector.broadcast %183 : vector<1x32xf32> to vector<16x32xf32>
    %185 = arith.addf %182, %184 : vector<16x32xf32>
    %186 = arith.addf %173, %185 : vector<16x32xf32>
    %c0_78 = arith.constant 0 : index
    %c0_79 = arith.constant 0 : index
    %187 = vector.load %arg11[%c0_78, %c0_79] : memref<1x32xf32, #tpu.memory_space<vmem>>, vector<1x32xf32>
    %c0_80 = arith.constant 0 : index
    %c0_81 = arith.constant 0 : index
    %188 = vector.load %arg12[%c0_80, %c0_81] : memref<1x32xf32, #tpu.memory_space<vmem>>, vector<1x32xf32>
    %cst_82 = arith.constant dense<0.000000e+00> : vector<16xf32>
    %189 = vector.multi_reduction <add>, %186, %cst_82 [1] : vector<16x32xf32> to vector<16xf32>
    %190 = vector.shape_cast %189 : vector<16xf32> to vector<16x1xf32>
    %cst_83 = arith.constant 3.200000e+01 : f32
    %191 = vector.broadcast %cst_83 : f32 to vector<16x1xf32>
    %192 = arith.divf %190, %191 : vector<16x1xf32>
    %193 = vector.broadcast %192 : vector<16x1xf32> to vector<16x32xf32>
    %194 = arith.subf %186, %193 : vector<16x32xf32>
    %195 = arith.mulf %194, %194 : vector<16x32xf32>
    %cst_84 = arith.constant dense<0.000000e+00> : vector<16xf32>
    %196 = vector.multi_reduction <add>, %195, %cst_84 [1] : vector<16x32xf32> to vector<16xf32>
    %197 = vector.shape_cast %196 : vector<16xf32> to vector<16x1xf32>
    %cst_85 = arith.constant 3.200000e+01 : f32
    %198 = vector.broadcast %cst_85 : f32 to vector<16x1xf32>
    %199 = arith.divf %197, %198 : vector<16x1xf32>
    %200 = vector.broadcast %192 : vector<16x1xf32> to vector<16x32xf32>
    %201 = arith.subf %186, %200 : vector<16x32xf32>
    %cst_86 = arith.constant 9.99999974E-6 : f32
    %202 = vector.broadcast %cst_86 : f32 to vector<16x1xf32>
    %203 = arith.addf %199, %202 : vector<16x1xf32>
    %204 = math.rsqrt %203 : vector<16x1xf32>
    %205 = vector.broadcast %204 : vector<16x1xf32> to vector<16x32xf32>
    %206 = arith.mulf %201, %205 : vector<16x32xf32>
    %207 = vector.broadcast %187 : vector<1x32xf32> to vector<16x32xf32>
    %208 = arith.mulf %206, %207 : vector<16x32xf32>
    %209 = vector.broadcast %188 : vector<1x32xf32> to vector<16x32xf32>
    %210 = arith.addf %208, %209 : vector<16x32xf32>
    %c0_87 = arith.constant 0 : index
    %c0_88 = arith.constant 0 : index
    %211 = vector.load %arg13[%c0_87, %c0_88] : memref<1x32xf32, #tpu.memory_space<vmem>>, vector<1x32xf32>
    %c0_89 = arith.constant 0 : index
    %c0_90 = arith.constant 0 : index
    %212 = vector.load %arg14[%c0_89, %c0_90] : memref<1x32xf32, #tpu.memory_space<vmem>>, vector<1x32xf32>
    %cst_91 = arith.constant dense<0.000000e+00> : vector<16xf32>
    %213 = vector.multi_reduction <add>, %210, %cst_91 [1] : vector<16x32xf32> to vector<16xf32>
    %214 = vector.shape_cast %213 : vector<16xf32> to vector<16x1xf32>
    %cst_92 = arith.constant 3.200000e+01 : f32
    %215 = vector.broadcast %cst_92 : f32 to vector<16x1xf32>
    %216 = arith.divf %214, %215 : vector<16x1xf32>
    %217 = vector.broadcast %216 : vector<16x1xf32> to vector<16x32xf32>
    %218 = arith.subf %210, %217 : vector<16x32xf32>
    %219 = arith.mulf %218, %218 : vector<16x32xf32>
    %cst_93 = arith.constant dense<0.000000e+00> : vector<16xf32>
    %220 = vector.multi_reduction <add>, %219, %cst_93 [1] : vector<16x32xf32> to vector<16xf32>
    %221 = vector.shape_cast %220 : vector<16xf32> to vector<16x1xf32>
    %cst_94 = arith.constant 3.200000e+01 : f32
    %222 = vector.broadcast %cst_94 : f32 to vector<16x1xf32>
    %223 = arith.divf %221, %222 : vector<16x1xf32>
    %224 = vector.broadcast %216 : vector<16x1xf32> to vector<16x32xf32>
    %225 = arith.subf %210, %224 : vector<16x32xf32>
    %cst_95 = arith.constant 9.99999974E-6 : f32
    %226 = vector.broadcast %cst_95 : f32 to vector<16x1xf32>
    %227 = arith.addf %223, %226 : vector<16x1xf32>
    %228 = math.rsqrt %227 : vector<16x1xf32>
    %229 = vector.broadcast %228 : vector<16x1xf32> to vector<16x32xf32>
    %230 = arith.mulf %225, %229 : vector<16x32xf32>
    %231 = vector.broadcast %211 : vector<1x32xf32> to vector<16x32xf32>
    %232 = arith.mulf %230, %231 : vector<16x32xf32>
    %233 = vector.broadcast %212 : vector<1x32xf32> to vector<16x32xf32>
    %234 = arith.addf %232, %233 : vector<16x32xf32>
    %c0_96 = arith.constant 0 : index
    %c0_97 = arith.constant 0 : index
    %235 = vector.load %arg15[%c0_96, %c0_97] : memref<16x32xf32, #tpu.memory_space<vmem>>, vector<16x32xf32>
    tpu.vector_store %arg15[%c0_96, %c0_97], %234 {strides = array<i32>} : memref<16x32xf32, #tpu.memory_space<vmem>>, vector<16x32xf32>,
    return
  }
}

module attributes {stable_mosaic.version = 11 : i64} {
  func.func @kernel(%arg0: memref<16x32xf32, #tpu.memory_space<vmem>>, %arg1: memref<32x64xf32, #tpu.memory_space<vmem>>, %arg2: memref<16x64xf32, #tpu.memory_space<vmem>>, %arg3: memref<1x64xf32, #tpu.memory_space<vmem>>, %arg4: memref<32x64xf32, #tpu.memory_space<vmem>>, %arg5: memref<16x64xf32, #tpu.memory_space<vmem>>, %arg6: memref<1x64xf32, #tpu.memory_space<vmem>>, %arg7: memref<32x3xf32, #tpu.memory_space<vmem>>, %arg8: memref<1x3xf32, #tpu.memory_space<vmem>>, %arg9: memref<16x3xf32, #tpu.memory_space<vmem>>) attributes {dimension_semantics = [], scalar_prefetch = 0 : i64, scratch_operands = 0 : i64, tpu.core_type = #tpu.core_type<tc>} {
    %c0 = arith.constant 0 : index
    %c0_0 = arith.constant 0 : index
    %0 = vector.load %arg0[%c0, %c0_0] : memref<16x32xf32, #tpu.memory_space<vmem>>, vector<16x32xf32>
    %c0_1 = arith.constant 0 : index
    %c0_2 = arith.constant 0 : index
    %1 = vector.load %arg1[%c0_1, %c0_2] : memref<32x64xf32, #tpu.memory_space<vmem>>, vector<32x64xf32>
    %cst = arith.constant dense<0.000000e+00> : vector<16x64xf32>
    %2 = tpu.matmul %0, %1, %cst {dimension_numbers = #tpu.dot_dimension_numbers<[1], [0], [0], [1], [0, 0, 1, 1], [], []>} : vector<16x32xf32>, vector<32x64xf32>, vector<16x64xf32> -> vector<16x64xf32>
    %c0_3 = arith.constant 0 : index
    %c0_4 = arith.constant 0 : index
    %3 = vector.load %arg3[%c0_3, %c0_4] : memref<1x64xf32, #tpu.memory_space<vmem>>, vector<1x64xf32>
    %4 = vector.broadcast %3 : vector<1x64xf32> to vector<16x64xf32>
    %5 = arith.addf %2, %4 : vector<16x64xf32>
    %c0_5 = arith.constant 0 : index
    %c0_6 = arith.constant 0 : index
    %6 = vector.load %arg4[%c0_5, %c0_6] : memref<32x64xf32, #tpu.memory_space<vmem>>, vector<32x64xf32>
    %cst_7 = arith.constant dense<0.000000e+00> : vector<16x64xf32>
    %7 = tpu.matmul %0, %6, %cst_7 {dimension_numbers = #tpu.dot_dimension_numbers<[1], [0], [0], [1], [0, 0, 1, 1], [], []>} : vector<16x32xf32>, vector<32x64xf32>, vector<16x64xf32> -> vector<16x64xf32>
    %c0_8 = arith.constant 0 : index
    %c0_9 = arith.constant 0 : index
    %8 = vector.load %arg6[%c0_8, %c0_9] : memref<1x64xf32, #tpu.memory_space<vmem>>, vector<1x64xf32>
    %9 = vector.broadcast %8 : vector<1x64xf32> to vector<16x64xf32>
    %10 = arith.addf %7, %9 : vector<16x64xf32>
    %c0_10 = arith.constant 0 : index
    %c0_11 = arith.constant 0 : index
    %11 = vector.load %arg2[%c0_10, %c0_11] : memref<16x64xf32, #tpu.memory_space<vmem>>, vector<16x64xf32>
    %c0_12 = arith.constant 0 : index
    %c0_13 = arith.constant 0 : index
    %12 = vector.load %arg5[%c0_12, %c0_13] : memref<16x64xf32, #tpu.memory_space<vmem>>, vector<16x64xf32>
    %cst_14 = arith.constant 0.000000e+00 : f32
    %13 = vector.broadcast %cst_14 : f32 to vector<2x16xf32>
    %14 = vector.extract_strided_slice %5 {offsets = [0, 0], sizes = [1, 64], strides = [1, 1]} : vector<16x64xf32> to vector<1x64xf32>
    %15 = vector.extract_strided_slice %5 {offsets = [8, 0], sizes = [1, 64], strides = [1, 1]} : vector<16x64xf32> to vector<1x64xf32>
    %16 = tpu.concatenate %14, %15 in 0 : vector<1x64xf32>, vector<1x64xf32> -> vector<2x64xf32>
    %cst_15 = arith.constant dense<0.000000e+00> : vector<2x64xf32>
    %17 = tpu.matmul %13, %11, %cst_15 {dimension_numbers = #tpu.dot_dimension_numbers<[1], [0], [0], [1], [0, 0, 1, 1], [], []>} : vector<2x16xf32>, vector<16x64xf32>, vector<2x64xf32> -> vector<2x64xf32>
    %18 = arith.addf %16, %17 : vector<2x64xf32>
    %19 = vector.extract_strided_slice %18 {offsets = [0, 0], sizes = [2, 16], strides = [1, 1]} : vector<2x64xf32> to vector<2x16xf32>
    %20 = arith.negf %19 : vector<2x16xf32>
    %21 = math.exp %20 : vector<2x16xf32>
    %cst_16 = arith.constant 1.000000e+00 : f32
    %22 = vector.broadcast %cst_16 : f32 to vector<2x16xf32>
    %23 = arith.addf %22, %21 : vector<2x16xf32>
    %24 = arith.divf %22, %23 : vector<2x16xf32>
    %25 = vector.extract_strided_slice %18 {offsets = [0, 16], sizes = [2, 16], strides = [1, 1]} : vector<2x64xf32> to vector<2x16xf32>
    %26 = arith.negf %25 : vector<2x16xf32>
    %27 = math.exp %26 : vector<2x16xf32>
    %cst_17 = arith.constant 1.000000e+00 : f32
    %28 = vector.broadcast %cst_17 : f32 to vector<2x16xf32>
    %29 = arith.addf %28, %27 : vector<2x16xf32>
    %30 = arith.divf %28, %29 : vector<2x16xf32>
    %31 = vector.extract_strided_slice %18 {offsets = [0, 32], sizes = [2, 16], strides = [1, 1]} : vector<2x64xf32> to vector<2x16xf32>
    %32 = math.tanh %31 : vector<2x16xf32>
    %33 = vector.extract_strided_slice %18 {offsets = [0, 48], sizes = [2, 16], strides = [1, 1]} : vector<2x64xf32> to vector<2x16xf32>
    %34 = arith.negf %33 : vector<2x16xf32>
    %35 = math.exp %34 : vector<2x16xf32>
    %cst_18 = arith.constant 1.000000e+00 : f32
    %36 = vector.broadcast %cst_18 : f32 to vector<2x16xf32>
    %37 = arith.addf %36, %35 : vector<2x16xf32>
    %38 = arith.divf %36, %37 : vector<2x16xf32>
    %39 = arith.mulf %30, %13 : vector<2x16xf32>
    %40 = arith.mulf %24, %32 : vector<2x16xf32>
    %41 = arith.addf %39, %40 : vector<2x16xf32>
    %42 = math.tanh %41 : vector<2x16xf32>
    %43 = arith.mulf %38, %42 : vector<2x16xf32>
    %44 = vector.extract_strided_slice %5 {offsets = [1, 0], sizes = [1, 64], strides = [1, 1]} : vector<16x64xf32> to vector<1x64xf32>
    %45 = vector.extract_strided_slice %5 {offsets = [9, 0], sizes = [1, 64], strides = [1, 1]} : vector<16x64xf32> to vector<1x64xf32>
    %46 = tpu.concatenate %44, %45 in 0 : vector<1x64xf32>, vector<1x64xf32> -> vector<2x64xf32>
    %cst_19 = arith.constant dense<0.000000e+00> : vector<2x64xf32>
    %47 = tpu.matmul %43, %11, %cst_19 {dimension_numbers = #tpu.dot_dimension_numbers<[1], [0], [0], [1], [0, 0, 1, 1], [], []>} : vector<2x16xf32>, vector<16x64xf32>, vector<2x64xf32> -> vector<2x64xf32>
    %48 = arith.addf %46, %47 : vector<2x64xf32>
    %49 = vector.extract_strided_slice %48 {offsets = [0, 0], sizes = [2, 16], strides = [1, 1]} : vector<2x64xf32> to vector<2x16xf32>
    %50 = arith.negf %49 : vector<2x16xf32>
    %51 = math.exp %50 : vector<2x16xf32>
    %cst_20 = arith.constant 1.000000e+00 : f32
    %52 = vector.broadcast %cst_20 : f32 to vector<2x16xf32>
    %53 = arith.addf %52, %51 : vector<2x16xf32>
    %54 = arith.divf %52, %53 : vector<2x16xf32>
    %55 = vector.extract_strided_slice %48 {offsets = [0, 16], sizes = [2, 16], strides = [1, 1]} : vector<2x64xf32> to vector<2x16xf32>
    %56 = arith.negf %55 : vector<2x16xf32>
    %57 = math.exp %56 : vector<2x16xf32>
    %cst_21 = arith.constant 1.000000e+00 : f32
    %58 = vector.broadcast %cst_21 : f32 to vector<2x16xf32>
    %59 = arith.addf %58, %57 : vector<2x16xf32>
    %60 = arith.divf %58, %59 : vector<2x16xf32>
    %61 = vector.extract_strided_slice %48 {offsets = [0, 32], sizes = [2, 16], strides = [1, 1]} : vector<2x64xf32> to vector<2x16xf32>
    %62 = math.tanh %61 : vector<2x16xf32>
    %63 = vector.extract_strided_slice %48 {offsets = [0, 48], sizes = [2, 16], strides = [1, 1]} : vector<2x64xf32> to vector<2x16xf32>
    %64 = arith.negf %63 : vector<2x16xf32>
    %65 = math.exp %64 : vector<2x16xf32>
    %cst_22 = arith.constant 1.000000e+00 : f32
    %66 = vector.broadcast %cst_22 : f32 to vector<2x16xf32>
    %67 = arith.addf %66, %65 : vector<2x16xf32>
    %68 = arith.divf %66, %67 : vector<2x16xf32>
    %69 = arith.mulf %60, %41 : vector<2x16xf32>
    %70 = arith.mulf %54, %62 : vector<2x16xf32>
    %71 = arith.addf %69, %70 : vector<2x16xf32>
    %72 = math.tanh %71 : vector<2x16xf32>
    %73 = arith.mulf %68, %72 : vector<2x16xf32>
    %74 = vector.extract_strided_slice %5 {offsets = [2, 0], sizes = [1, 64], strides = [1, 1]} : vector<16x64xf32> to vector<1x64xf32>
    %75 = vector.extract_strided_slice %5 {offsets = [10, 0], sizes = [1, 64], strides = [1, 1]} : vector<16x64xf32> to vector<1x64xf32>
    %76 = tpu.concatenate %74, %75 in 0 : vector<1x64xf32>, vector<1x64xf32> -> vector<2x64xf32>
    %cst_23 = arith.constant dense<0.000000e+00> : vector<2x64xf32>
    %77 = tpu.matmul %73, %11, %cst_23 {dimension_numbers = #tpu.dot_dimension_numbers<[1], [0], [0], [1], [0, 0, 1, 1], [], []>} : vector<2x16xf32>, vector<16x64xf32>, vector<2x64xf32> -> vector<2x64xf32>
    %78 = arith.addf %76, %77 : vector<2x64xf32>
    %79 = vector.extract_strided_slice %78 {offsets = [0, 0], sizes = [2, 16], strides = [1, 1]} : vector<2x64xf32> to vector<2x16xf32>
    %80 = arith.negf %79 : vector<2x16xf32>
    %81 = math.exp %80 : vector<2x16xf32>
    %cst_24 = arith.constant 1.000000e+00 : f32
    %82 = vector.broadcast %cst_24 : f32 to vector<2x16xf32>
    %83 = arith.addf %82, %81 : vector<2x16xf32>
    %84 = arith.divf %82, %83 : vector<2x16xf32>
    %85 = vector.extract_strided_slice %78 {offsets = [0, 16], sizes = [2, 16], strides = [1, 1]} : vector<2x64xf32> to vector<2x16xf32>
    %86 = arith.negf %85 : vector<2x16xf32>
    %87 = math.exp %86 : vector<2x16xf32>
    %cst_25 = arith.constant 1.000000e+00 : f32
    %88 = vector.broadcast %cst_25 : f32 to vector<2x16xf32>
    %89 = arith.addf %88, %87 : vector<2x16xf32>
    %90 = arith.divf %88, %89 : vector<2x16xf32>
    %91 = vector.extract_strided_slice %78 {offsets = [0, 32], sizes = [2, 16], strides = [1, 1]} : vector<2x64xf32> to vector<2x16xf32>
    %92 = math.tanh %91 : vector<2x16xf32>
    %93 = vector.extract_strided_slice %78 {offsets = [0, 48], sizes = [2, 16], strides = [1, 1]} : vector<2x64xf32> to vector<2x16xf32>
    %94 = arith.negf %93 : vector<2x16xf32>
    %95 = math.exp %94 : vector<2x16xf32>
    %cst_26 = arith.constant 1.000000e+00 : f32
    %96 = vector.broadcast %cst_26 : f32 to vector<2x16xf32>
    %97 = arith.addf %96, %95 : vector<2x16xf32>
    %98 = arith.divf %96, %97 : vector<2x16xf32>
    %99 = arith.mulf %90, %71 : vector<2x16xf32>
    %100 = arith.mulf %84, %92 : vector<2x16xf32>
    %101 = arith.addf %99, %100 : vector<2x16xf32>
    %102 = math.tanh %101 : vector<2x16xf32>
    %103 = arith.mulf %98, %102 : vector<2x16xf32>
    %104 = vector.extract_strided_slice %5 {offsets = [3, 0], sizes = [1, 64], strides = [1, 1]} : vector<16x64xf32> to vector<1x64xf32>
    %105 = vector.extract_strided_slice %5 {offsets = [11, 0], sizes = [1, 64], strides = [1, 1]} : vector<16x64xf32> to vector<1x64xf32>
    %106 = tpu.concatenate %104, %105 in 0 : vector<1x64xf32>, vector<1x64xf32> -> vector<2x64xf32>
    %cst_27 = arith.constant dense<0.000000e+00> : vector<2x64xf32>
    %107 = tpu.matmul %103, %11, %cst_27 {dimension_numbers = #tpu.dot_dimension_numbers<[1], [0], [0], [1], [0, 0, 1, 1], [], []>} : vector<2x16xf32>, vector<16x64xf32>, vector<2x64xf32> -> vector<2x64xf32>
    %108 = arith.addf %106, %107 : vector<2x64xf32>
    %109 = vector.extract_strided_slice %108 {offsets = [0, 0], sizes = [2, 16], strides = [1, 1]} : vector<2x64xf32> to vector<2x16xf32>
    %110 = arith.negf %109 : vector<2x16xf32>
    %111 = math.exp %110 : vector<2x16xf32>
    %cst_28 = arith.constant 1.000000e+00 : f32
    %112 = vector.broadcast %cst_28 : f32 to vector<2x16xf32>
    %113 = arith.addf %112, %111 : vector<2x16xf32>
    %114 = arith.divf %112, %113 : vector<2x16xf32>
    %115 = vector.extract_strided_slice %108 {offsets = [0, 16], sizes = [2, 16], strides = [1, 1]} : vector<2x64xf32> to vector<2x16xf32>
    %116 = arith.negf %115 : vector<2x16xf32>
    %117 = math.exp %116 : vector<2x16xf32>
    %cst_29 = arith.constant 1.000000e+00 : f32
    %118 = vector.broadcast %cst_29 : f32 to vector<2x16xf32>
    %119 = arith.addf %118, %117 : vector<2x16xf32>
    %120 = arith.divf %118, %119 : vector<2x16xf32>
    %121 = vector.extract_strided_slice %108 {offsets = [0, 32], sizes = [2, 16], strides = [1, 1]} : vector<2x64xf32> to vector<2x16xf32>
    %122 = math.tanh %121 : vector<2x16xf32>
    %123 = vector.extract_strided_slice %108 {offsets = [0, 48], sizes = [2, 16], strides = [1, 1]} : vector<2x64xf32> to vector<2x16xf32>
    %124 = arith.negf %123 : vector<2x16xf32>
    %125 = math.exp %124 : vector<2x16xf32>
    %cst_30 = arith.constant 1.000000e+00 : f32
    %126 = vector.broadcast %cst_30 : f32 to vector<2x16xf32>
    %127 = arith.addf %126, %125 : vector<2x16xf32>
    %128 = arith.divf %126, %127 : vector<2x16xf32>
    %129 = arith.mulf %120, %101 : vector<2x16xf32>
    %130 = arith.mulf %114, %122 : vector<2x16xf32>
    %131 = arith.addf %129, %130 : vector<2x16xf32>
    %132 = math.tanh %131 : vector<2x16xf32>
    %133 = arith.mulf %128, %132 : vector<2x16xf32>
    %134 = vector.extract_strided_slice %5 {offsets = [4, 0], sizes = [1, 64], strides = [1, 1]} : vector<16x64xf32> to vector<1x64xf32>
    %135 = vector.extract_strided_slice %5 {offsets = [12, 0], sizes = [1, 64], strides = [1, 1]} : vector<16x64xf32> to vector<1x64xf32>
    %136 = tpu.concatenate %134, %135 in 0 : vector<1x64xf32>, vector<1x64xf32> -> vector<2x64xf32>
    %cst_31 = arith.constant dense<0.000000e+00> : vector<2x64xf32>
    %137 = tpu.matmul %133, %11, %cst_31 {dimension_numbers = #tpu.dot_dimension_numbers<[1], [0], [0], [1], [0, 0, 1, 1], [], []>} : vector<2x16xf32>, vector<16x64xf32>, vector<2x64xf32> -> vector<2x64xf32>
    %138 = arith.addf %136, %137 : vector<2x64xf32>
    %139 = vector.extract_strided_slice %138 {offsets = [0, 0], sizes = [2, 16], strides = [1, 1]} : vector<2x64xf32> to vector<2x16xf32>
    %140 = arith.negf %139 : vector<2x16xf32>
    %141 = math.exp %140 : vector<2x16xf32>
    %cst_32 = arith.constant 1.000000e+00 : f32
    %142 = vector.broadcast %cst_32 : f32 to vector<2x16xf32>
    %143 = arith.addf %142, %141 : vector<2x16xf32>
    %144 = arith.divf %142, %143 : vector<2x16xf32>
    %145 = vector.extract_strided_slice %138 {offsets = [0, 16], sizes = [2, 16], strides = [1, 1]} : vector<2x64xf32> to vector<2x16xf32>
    %146 = arith.negf %145 : vector<2x16xf32>
    %147 = math.exp %146 : vector<2x16xf32>
    %cst_33 = arith.constant 1.000000e+00 : f32
    %148 = vector.broadcast %cst_33 : f32 to vector<2x16xf32>
    %149 = arith.addf %148, %147 : vector<2x16xf32>
    %150 = arith.divf %148, %149 : vector<2x16xf32>
    %151 = vector.extract_strided_slice %138 {offsets = [0, 32], sizes = [2, 16], strides = [1, 1]} : vector<2x64xf32> to vector<2x16xf32>
    %152 = math.tanh %151 : vector<2x16xf32>
    %153 = vector.extract_strided_slice %138 {offsets = [0, 48], sizes = [2, 16], strides = [1, 1]} : vector<2x64xf32> to vector<2x16xf32>
    %154 = arith.negf %153 : vector<2x16xf32>
    %155 = math.exp %154 : vector<2x16xf32>
    %cst_34 = arith.constant 1.000000e+00 : f32
    %156 = vector.broadcast %cst_34 : f32 to vector<2x16xf32>
    %157 = arith.addf %156, %155 : vector<2x16xf32>
    %158 = arith.divf %156, %157 : vector<2x16xf32>
    %159 = arith.mulf %150, %131 : vector<2x16xf32>
    %160 = arith.mulf %144, %152 : vector<2x16xf32>
    %161 = arith.addf %159, %160 : vector<2x16xf32>
    %162 = math.tanh %161 : vector<2x16xf32>
    %163 = arith.mulf %158, %162 : vector<2x16xf32>
    %164 = vector.extract_strided_slice %5 {offsets = [5, 0], sizes = [1, 64], strides = [1, 1]} : vector<16x64xf32> to vector<1x64xf32>
    %165 = vector.extract_strided_slice %5 {offsets = [13, 0], sizes = [1, 64], strides = [1, 1]} : vector<16x64xf32> to vector<1x64xf32>
    %166 = tpu.concatenate %164, %165 in 0 : vector<1x64xf32>, vector<1x64xf32> -> vector<2x64xf32>
    %cst_35 = arith.constant dense<0.000000e+00> : vector<2x64xf32>
    %167 = tpu.matmul %163, %11, %cst_35 {dimension_numbers = #tpu.dot_dimension_numbers<[1], [0], [0], [1], [0, 0, 1, 1], [], []>} : vector<2x16xf32>, vector<16x64xf32>, vector<2x64xf32> -> vector<2x64xf32>
    %168 = arith.addf %166, %167 : vector<2x64xf32>
    %169 = vector.extract_strided_slice %168 {offsets = [0, 0], sizes = [2, 16], strides = [1, 1]} : vector<2x64xf32> to vector<2x16xf32>
    %170 = arith.negf %169 : vector<2x16xf32>
    %171 = math.exp %170 : vector<2x16xf32>
    %cst_36 = arith.constant 1.000000e+00 : f32
    %172 = vector.broadcast %cst_36 : f32 to vector<2x16xf32>
    %173 = arith.addf %172, %171 : vector<2x16xf32>
    %174 = arith.divf %172, %173 : vector<2x16xf32>
    %175 = vector.extract_strided_slice %168 {offsets = [0, 16], sizes = [2, 16], strides = [1, 1]} : vector<2x64xf32> to vector<2x16xf32>
    %176 = arith.negf %175 : vector<2x16xf32>
    %177 = math.exp %176 : vector<2x16xf32>
    %cst_37 = arith.constant 1.000000e+00 : f32
    %178 = vector.broadcast %cst_37 : f32 to vector<2x16xf32>
    %179 = arith.addf %178, %177 : vector<2x16xf32>
    %180 = arith.divf %178, %179 : vector<2x16xf32>
    %181 = vector.extract_strided_slice %168 {offsets = [0, 32], sizes = [2, 16], strides = [1, 1]} : vector<2x64xf32> to vector<2x16xf32>
    %182 = math.tanh %181 : vector<2x16xf32>
    %183 = vector.extract_strided_slice %168 {offsets = [0, 48], sizes = [2, 16], strides = [1, 1]} : vector<2x64xf32> to vector<2x16xf32>
    %184 = arith.negf %183 : vector<2x16xf32>
    %185 = math.exp %184 : vector<2x16xf32>
    %cst_38 = arith.constant 1.000000e+00 : f32
    %186 = vector.broadcast %cst_38 : f32 to vector<2x16xf32>
    %187 = arith.addf %186, %185 : vector<2x16xf32>
    %188 = arith.divf %186, %187 : vector<2x16xf32>
    %189 = arith.mulf %180, %161 : vector<2x16xf32>
    %190 = arith.mulf %174, %182 : vector<2x16xf32>
    %191 = arith.addf %189, %190 : vector<2x16xf32>
    %192 = math.tanh %191 : vector<2x16xf32>
    %193 = arith.mulf %188, %192 : vector<2x16xf32>
    %194 = vector.extract_strided_slice %5 {offsets = [6, 0], sizes = [1, 64], strides = [1, 1]} : vector<16x64xf32> to vector<1x64xf32>
    %195 = vector.extract_strided_slice %5 {offsets = [14, 0], sizes = [1, 64], strides = [1, 1]} : vector<16x64xf32> to vector<1x64xf32>
    %196 = tpu.concatenate %194, %195 in 0 : vector<1x64xf32>, vector<1x64xf32> -> vector<2x64xf32>
    %cst_39 = arith.constant dense<0.000000e+00> : vector<2x64xf32>
    %197 = tpu.matmul %193, %11, %cst_39 {dimension_numbers = #tpu.dot_dimension_numbers<[1], [0], [0], [1], [0, 0, 1, 1], [], []>} : vector<2x16xf32>, vector<16x64xf32>, vector<2x64xf32> -> vector<2x64xf32>
    %198 = arith.addf %196, %197 : vector<2x64xf32>
    %199 = vector.extract_strided_slice %198 {offsets = [0, 0], sizes = [2, 16], strides = [1, 1]} : vector<2x64xf32> to vector<2x16xf32>
    %200 = arith.negf %199 : vector<2x16xf32>
    %201 = math.exp %200 : vector<2x16xf32>
    %cst_40 = arith.constant 1.000000e+00 : f32
    %202 = vector.broadcast %cst_40 : f32 to vector<2x16xf32>
    %203 = arith.addf %202, %201 : vector<2x16xf32>
    %204 = arith.divf %202, %203 : vector<2x16xf32>
    %205 = vector.extract_strided_slice %198 {offsets = [0, 16], sizes = [2, 16], strides = [1, 1]} : vector<2x64xf32> to vector<2x16xf32>
    %206 = arith.negf %205 : vector<2x16xf32>
    %207 = math.exp %206 : vector<2x16xf32>
    %cst_41 = arith.constant 1.000000e+00 : f32
    %208 = vector.broadcast %cst_41 : f32 to vector<2x16xf32>
    %209 = arith.addf %208, %207 : vector<2x16xf32>
    %210 = arith.divf %208, %209 : vector<2x16xf32>
    %211 = vector.extract_strided_slice %198 {offsets = [0, 32], sizes = [2, 16], strides = [1, 1]} : vector<2x64xf32> to vector<2x16xf32>
    %212 = math.tanh %211 : vector<2x16xf32>
    %213 = vector.extract_strided_slice %198 {offsets = [0, 48], sizes = [2, 16], strides = [1, 1]} : vector<2x64xf32> to vector<2x16xf32>
    %214 = arith.negf %213 : vector<2x16xf32>
    %215 = math.exp %214 : vector<2x16xf32>
    %cst_42 = arith.constant 1.000000e+00 : f32
    %216 = vector.broadcast %cst_42 : f32 to vector<2x16xf32>
    %217 = arith.addf %216, %215 : vector<2x16xf32>
    %218 = arith.divf %216, %217 : vector<2x16xf32>
    %219 = arith.mulf %210, %191 : vector<2x16xf32>
    %220 = arith.mulf %204, %212 : vector<2x16xf32>
    %221 = arith.addf %219, %220 : vector<2x16xf32>
    %222 = math.tanh %221 : vector<2x16xf32>
    %223 = arith.mulf %218, %222 : vector<2x16xf32>
    %224 = vector.extract_strided_slice %5 {offsets = [7, 0], sizes = [1, 64], strides = [1, 1]} : vector<16x64xf32> to vector<1x64xf32>
    %225 = vector.extract_strided_slice %5 {offsets = [15, 0], sizes = [1, 64], strides = [1, 1]} : vector<16x64xf32> to vector<1x64xf32>
    %226 = tpu.concatenate %224, %225 in 0 : vector<1x64xf32>, vector<1x64xf32> -> vector<2x64xf32>
    %cst_43 = arith.constant dense<0.000000e+00> : vector<2x64xf32>
    %227 = tpu.matmul %223, %11, %cst_43 {dimension_numbers = #tpu.dot_dimension_numbers<[1], [0], [0], [1], [0, 0, 1, 1], [], []>} : vector<2x16xf32>, vector<16x64xf32>, vector<2x64xf32> -> vector<2x64xf32>
    %228 = arith.addf %226, %227 : vector<2x64xf32>
    %229 = vector.extract_strided_slice %228 {offsets = [0, 0], sizes = [2, 16], strides = [1, 1]} : vector<2x64xf32> to vector<2x16xf32>
    %230 = arith.negf %229 : vector<2x16xf32>
    %231 = math.exp %230 : vector<2x16xf32>
    %cst_44 = arith.constant 1.000000e+00 : f32
    %232 = vector.broadcast %cst_44 : f32 to vector<2x16xf32>
    %233 = arith.addf %232, %231 : vector<2x16xf32>
    %234 = arith.divf %232, %233 : vector<2x16xf32>
    %235 = vector.extract_strided_slice %228 {offsets = [0, 16], sizes = [2, 16], strides = [1, 1]} : vector<2x64xf32> to vector<2x16xf32>
    %236 = arith.negf %235 : vector<2x16xf32>
    %237 = math.exp %236 : vector<2x16xf32>
    %cst_45 = arith.constant 1.000000e+00 : f32
    %238 = vector.broadcast %cst_45 : f32 to vector<2x16xf32>
    %239 = arith.addf %238, %237 : vector<2x16xf32>
    %240 = arith.divf %238, %239 : vector<2x16xf32>
    %241 = vector.extract_strided_slice %228 {offsets = [0, 32], sizes = [2, 16], strides = [1, 1]} : vector<2x64xf32> to vector<2x16xf32>
    %242 = math.tanh %241 : vector<2x16xf32>
    %243 = vector.extract_strided_slice %228 {offsets = [0, 48], sizes = [2, 16], strides = [1, 1]} : vector<2x64xf32> to vector<2x16xf32>
    %244 = arith.negf %243 : vector<2x16xf32>
    %245 = math.exp %244 : vector<2x16xf32>
    %cst_46 = arith.constant 1.000000e+00 : f32
    %246 = vector.broadcast %cst_46 : f32 to vector<2x16xf32>
    %247 = arith.addf %246, %245 : vector<2x16xf32>
    %248 = arith.divf %246, %247 : vector<2x16xf32>
    %249 = arith.mulf %240, %221 : vector<2x16xf32>
    %250 = arith.mulf %234, %242 : vector<2x16xf32>
    %251 = arith.addf %249, %250 : vector<2x16xf32>
    %252 = math.tanh %251 : vector<2x16xf32>
    %253 = arith.mulf %248, %252 : vector<2x16xf32>
    %254 = vector.extract_strided_slice %10 {offsets = [7, 0], sizes = [1, 64], strides = [1, 1]} : vector<16x64xf32> to vector<1x64xf32>
    %255 = vector.extract_strided_slice %10 {offsets = [15, 0], sizes = [1, 64], strides = [1, 1]} : vector<16x64xf32> to vector<1x64xf32>
    %256 = tpu.concatenate %254, %255 in 0 : vector<1x64xf32>, vector<1x64xf32> -> vector<2x64xf32>
    %cst_47 = arith.constant dense<0.000000e+00> : vector<2x64xf32>
    %257 = tpu.matmul %13, %12, %cst_47 {dimension_numbers = #tpu.dot_dimension_numbers<[1], [0], [0], [1], [0, 0, 1, 1], [], []>} : vector<2x16xf32>, vector<16x64xf32>, vector<2x64xf32> -> vector<2x64xf32>
    %258 = arith.addf %256, %257 : vector<2x64xf32>
    %259 = vector.extract_strided_slice %258 {offsets = [0, 0], sizes = [2, 16], strides = [1, 1]} : vector<2x64xf32> to vector<2x16xf32>
    %260 = arith.negf %259 : vector<2x16xf32>
    %261 = math.exp %260 : vector<2x16xf32>
    %cst_48 = arith.constant 1.000000e+00 : f32
    %262 = vector.broadcast %cst_48 : f32 to vector<2x16xf32>
    %263 = arith.addf %262, %261 : vector<2x16xf32>
    %264 = arith.divf %262, %263 : vector<2x16xf32>
    %265 = vector.extract_strided_slice %258 {offsets = [0, 16], sizes = [2, 16], strides = [1, 1]} : vector<2x64xf32> to vector<2x16xf32>
    %266 = arith.negf %265 : vector<2x16xf32>
    %267 = math.exp %266 : vector<2x16xf32>
    %cst_49 = arith.constant 1.000000e+00 : f32
    %268 = vector.broadcast %cst_49 : f32 to vector<2x16xf32>
    %269 = arith.addf %268, %267 : vector<2x16xf32>
    %270 = arith.divf %268, %269 : vector<2x16xf32>
    %271 = vector.extract_strided_slice %258 {offsets = [0, 32], sizes = [2, 16], strides = [1, 1]} : vector<2x64xf32> to vector<2x16xf32>
    %272 = math.tanh %271 : vector<2x16xf32>
    %273 = vector.extract_strided_slice %258 {offsets = [0, 48], sizes = [2, 16], strides = [1, 1]} : vector<2x64xf32> to vector<2x16xf32>
    %274 = arith.negf %273 : vector<2x16xf32>
    %275 = math.exp %274 : vector<2x16xf32>
    %cst_50 = arith.constant 1.000000e+00 : f32
    %276 = vector.broadcast %cst_50 : f32 to vector<2x16xf32>
    %277 = arith.addf %276, %275 : vector<2x16xf32>
    %278 = arith.divf %276, %277 : vector<2x16xf32>
    %279 = arith.mulf %270, %13 : vector<2x16xf32>
    %280 = arith.mulf %264, %272 : vector<2x16xf32>
    %281 = arith.addf %279, %280 : vector<2x16xf32>
    %282 = math.tanh %281 : vector<2x16xf32>
    %283 = arith.mulf %278, %282 : vector<2x16xf32>
    %284 = vector.extract_strided_slice %10 {offsets = [6, 0], sizes = [1, 64], strides = [1, 1]} : vector<16x64xf32> to vector<1x64xf32>
    %285 = vector.extract_strided_slice %10 {offsets = [14, 0], sizes = [1, 64], strides = [1, 1]} : vector<16x64xf32> to vector<1x64xf32>
    %286 = tpu.concatenate %284, %285 in 0 : vector<1x64xf32>, vector<1x64xf32> -> vector<2x64xf32>
    %cst_51 = arith.constant dense<0.000000e+00> : vector<2x64xf32>
    %287 = tpu.matmul %283, %12, %cst_51 {dimension_numbers = #tpu.dot_dimension_numbers<[1], [0], [0], [1], [0, 0, 1, 1], [], []>} : vector<2x16xf32>, vector<16x64xf32>, vector<2x64xf32> -> vector<2x64xf32>
    %288 = arith.addf %286, %287 : vector<2x64xf32>
    %289 = vector.extract_strided_slice %288 {offsets = [0, 0], sizes = [2, 16], strides = [1, 1]} : vector<2x64xf32> to vector<2x16xf32>
    %290 = arith.negf %289 : vector<2x16xf32>
    %291 = math.exp %290 : vector<2x16xf32>
    %cst_52 = arith.constant 1.000000e+00 : f32
    %292 = vector.broadcast %cst_52 : f32 to vector<2x16xf32>
    %293 = arith.addf %292, %291 : vector<2x16xf32>
    %294 = arith.divf %292, %293 : vector<2x16xf32>
    %295 = vector.extract_strided_slice %288 {offsets = [0, 16], sizes = [2, 16], strides = [1, 1]} : vector<2x64xf32> to vector<2x16xf32>
    %296 = arith.negf %295 : vector<2x16xf32>
    %297 = math.exp %296 : vector<2x16xf32>
    %cst_53 = arith.constant 1.000000e+00 : f32
    %298 = vector.broadcast %cst_53 : f32 to vector<2x16xf32>
    %299 = arith.addf %298, %297 : vector<2x16xf32>
    %300 = arith.divf %298, %299 : vector<2x16xf32>
    %301 = vector.extract_strided_slice %288 {offsets = [0, 32], sizes = [2, 16], strides = [1, 1]} : vector<2x64xf32> to vector<2x16xf32>
    %302 = math.tanh %301 : vector<2x16xf32>
    %303 = vector.extract_strided_slice %288 {offsets = [0, 48], sizes = [2, 16], strides = [1, 1]} : vector<2x64xf32> to vector<2x16xf32>
    %304 = arith.negf %303 : vector<2x16xf32>
    %305 = math.exp %304 : vector<2x16xf32>
    %cst_54 = arith.constant 1.000000e+00 : f32
    %306 = vector.broadcast %cst_54 : f32 to vector<2x16xf32>
    %307 = arith.addf %306, %305 : vector<2x16xf32>
    %308 = arith.divf %306, %307 : vector<2x16xf32>
    %309 = arith.mulf %300, %281 : vector<2x16xf32>
    %310 = arith.mulf %294, %302 : vector<2x16xf32>
    %311 = arith.addf %309, %310 : vector<2x16xf32>
    %312 = math.tanh %311 : vector<2x16xf32>
    %313 = arith.mulf %308, %312 : vector<2x16xf32>
    %314 = vector.extract_strided_slice %10 {offsets = [5, 0], sizes = [1, 64], strides = [1, 1]} : vector<16x64xf32> to vector<1x64xf32>
    %315 = vector.extract_strided_slice %10 {offsets = [13, 0], sizes = [1, 64], strides = [1, 1]} : vector<16x64xf32> to vector<1x64xf32>
    %316 = tpu.concatenate %314, %315 in 0 : vector<1x64xf32>, vector<1x64xf32> -> vector<2x64xf32>
    %cst_55 = arith.constant dense<0.000000e+00> : vector<2x64xf32>
    %317 = tpu.matmul %313, %12, %cst_55 {dimension_numbers = #tpu.dot_dimension_numbers<[1], [0], [0], [1], [0, 0, 1, 1], [], []>} : vector<2x16xf32>, vector<16x64xf32>, vector<2x64xf32> -> vector<2x64xf32>
    %318 = arith.addf %316, %317 : vector<2x64xf32>
    %319 = vector.extract_strided_slice %318 {offsets = [0, 0], sizes = [2, 16], strides = [1, 1]} : vector<2x64xf32> to vector<2x16xf32>
    %320 = arith.negf %319 : vector<2x16xf32>
    %321 = math.exp %320 : vector<2x16xf32>
    %cst_56 = arith.constant 1.000000e+00 : f32
    %322 = vector.broadcast %cst_56 : f32 to vector<2x16xf32>
    %323 = arith.addf %322, %321 : vector<2x16xf32>
    %324 = arith.divf %322, %323 : vector<2x16xf32>
    %325 = vector.extract_strided_slice %318 {offsets = [0, 16], sizes = [2, 16], strides = [1, 1]} : vector<2x64xf32> to vector<2x16xf32>
    %326 = arith.negf %325 : vector<2x16xf32>
    %327 = math.exp %326 : vector<2x16xf32>
    %cst_57 = arith.constant 1.000000e+00 : f32
    %328 = vector.broadcast %cst_57 : f32 to vector<2x16xf32>
    %329 = arith.addf %328, %327 : vector<2x16xf32>
    %330 = arith.divf %328, %329 : vector<2x16xf32>
    %331 = vector.extract_strided_slice %318 {offsets = [0, 32], sizes = [2, 16], strides = [1, 1]} : vector<2x64xf32> to vector<2x16xf32>
    %332 = math.tanh %331 : vector<2x16xf32>
    %333 = vector.extract_strided_slice %318 {offsets = [0, 48], sizes = [2, 16], strides = [1, 1]} : vector<2x64xf32> to vector<2x16xf32>
    %334 = arith.negf %333 : vector<2x16xf32>
    %335 = math.exp %334 : vector<2x16xf32>
    %cst_58 = arith.constant 1.000000e+00 : f32
    %336 = vector.broadcast %cst_58 : f32 to vector<2x16xf32>
    %337 = arith.addf %336, %335 : vector<2x16xf32>
    %338 = arith.divf %336, %337 : vector<2x16xf32>
    %339 = arith.mulf %330, %311 : vector<2x16xf32>
    %340 = arith.mulf %324, %332 : vector<2x16xf32>
    %341 = arith.addf %339, %340 : vector<2x16xf32>
    %342 = math.tanh %341 : vector<2x16xf32>
    %343 = arith.mulf %338, %342 : vector<2x16xf32>
    %344 = vector.extract_strided_slice %10 {offsets = [4, 0], sizes = [1, 64], strides = [1, 1]} : vector<16x64xf32> to vector<1x64xf32>
    %345 = vector.extract_strided_slice %10 {offsets = [12, 0], sizes = [1, 64], strides = [1, 1]} : vector<16x64xf32> to vector<1x64xf32>
    %346 = tpu.concatenate %344, %345 in 0 : vector<1x64xf32>, vector<1x64xf32> -> vector<2x64xf32>
    %cst_59 = arith.constant dense<0.000000e+00> : vector<2x64xf32>
    %347 = tpu.matmul %343, %12, %cst_59 {dimension_numbers = #tpu.dot_dimension_numbers<[1], [0], [0], [1], [0, 0, 1, 1], [], []>} : vector<2x16xf32>, vector<16x64xf32>, vector<2x64xf32> -> vector<2x64xf32>
    %348 = arith.addf %346, %347 : vector<2x64xf32>
    %349 = vector.extract_strided_slice %348 {offsets = [0, 0], sizes = [2, 16], strides = [1, 1]} : vector<2x64xf32> to vector<2x16xf32>
    %350 = arith.negf %349 : vector<2x16xf32>
    %351 = math.exp %350 : vector<2x16xf32>
    %cst_60 = arith.constant 1.000000e+00 : f32
    %352 = vector.broadcast %cst_60 : f32 to vector<2x16xf32>
    %353 = arith.addf %352, %351 : vector<2x16xf32>
    %354 = arith.divf %352, %353 : vector<2x16xf32>
    %355 = vector.extract_strided_slice %348 {offsets = [0, 16], sizes = [2, 16], strides = [1, 1]} : vector<2x64xf32> to vector<2x16xf32>
    %356 = arith.negf %355 : vector<2x16xf32>
    %357 = math.exp %356 : vector<2x16xf32>
    %cst_61 = arith.constant 1.000000e+00 : f32
    %358 = vector.broadcast %cst_61 : f32 to vector<2x16xf32>
    %359 = arith.addf %358, %357 : vector<2x16xf32>
    %360 = arith.divf %358, %359 : vector<2x16xf32>
    %361 = vector.extract_strided_slice %348 {offsets = [0, 32], sizes = [2, 16], strides = [1, 1]} : vector<2x64xf32> to vector<2x16xf32>
    %362 = math.tanh %361 : vector<2x16xf32>
    %363 = vector.extract_strided_slice %348 {offsets = [0, 48], sizes = [2, 16], strides = [1, 1]} : vector<2x64xf32> to vector<2x16xf32>
    %364 = arith.negf %363 : vector<2x16xf32>
    %365 = math.exp %364 : vector<2x16xf32>
    %cst_62 = arith.constant 1.000000e+00 : f32
    %366 = vector.broadcast %cst_62 : f32 to vector<2x16xf32>
    %367 = arith.addf %366, %365 : vector<2x16xf32>
    %368 = arith.divf %366, %367 : vector<2x16xf32>
    %369 = arith.mulf %360, %341 : vector<2x16xf32>
    %370 = arith.mulf %354, %362 : vector<2x16xf32>
    %371 = arith.addf %369, %370 : vector<2x16xf32>
    %372 = math.tanh %371 : vector<2x16xf32>
    %373 = arith.mulf %368, %372 : vector<2x16xf32>
    %374 = vector.extract_strided_slice %10 {offsets = [3, 0], sizes = [1, 64], strides = [1, 1]} : vector<16x64xf32> to vector<1x64xf32>
    %375 = vector.extract_strided_slice %10 {offsets = [11, 0], sizes = [1, 64], strides = [1, 1]} : vector<16x64xf32> to vector<1x64xf32>
    %376 = tpu.concatenate %374, %375 in 0 : vector<1x64xf32>, vector<1x64xf32> -> vector<2x64xf32>
    %cst_63 = arith.constant dense<0.000000e+00> : vector<2x64xf32>
    %377 = tpu.matmul %373, %12, %cst_63 {dimension_numbers = #tpu.dot_dimension_numbers<[1], [0], [0], [1], [0, 0, 1, 1], [], []>} : vector<2x16xf32>, vector<16x64xf32>, vector<2x64xf32> -> vector<2x64xf32>
    %378 = arith.addf %376, %377 : vector<2x64xf32>
    %379 = vector.extract_strided_slice %378 {offsets = [0, 0], sizes = [2, 16], strides = [1, 1]} : vector<2x64xf32> to vector<2x16xf32>
    %380 = arith.negf %379 : vector<2x16xf32>
    %381 = math.exp %380 : vector<2x16xf32>
    %cst_64 = arith.constant 1.000000e+00 : f32
    %382 = vector.broadcast %cst_64 : f32 to vector<2x16xf32>
    %383 = arith.addf %382, %381 : vector<2x16xf32>
    %384 = arith.divf %382, %383 : vector<2x16xf32>
    %385 = vector.extract_strided_slice %378 {offsets = [0, 16], sizes = [2, 16], strides = [1, 1]} : vector<2x64xf32> to vector<2x16xf32>
    %386 = arith.negf %385 : vector<2x16xf32>
    %387 = math.exp %386 : vector<2x16xf32>
    %cst_65 = arith.constant 1.000000e+00 : f32
    %388 = vector.broadcast %cst_65 : f32 to vector<2x16xf32>
    %389 = arith.addf %388, %387 : vector<2x16xf32>
    %390 = arith.divf %388, %389 : vector<2x16xf32>
    %391 = vector.extract_strided_slice %378 {offsets = [0, 32], sizes = [2, 16], strides = [1, 1]} : vector<2x64xf32> to vector<2x16xf32>
    %392 = math.tanh %391 : vector<2x16xf32>
    %393 = vector.extract_strided_slice %378 {offsets = [0, 48], sizes = [2, 16], strides = [1, 1]} : vector<2x64xf32> to vector<2x16xf32>
    %394 = arith.negf %393 : vector<2x16xf32>
    %395 = math.exp %394 : vector<2x16xf32>
    %cst_66 = arith.constant 1.000000e+00 : f32
    %396 = vector.broadcast %cst_66 : f32 to vector<2x16xf32>
    %397 = arith.addf %396, %395 : vector<2x16xf32>
    %398 = arith.divf %396, %397 : vector<2x16xf32>
    %399 = arith.mulf %390, %371 : vector<2x16xf32>
    %400 = arith.mulf %384, %392 : vector<2x16xf32>
    %401 = arith.addf %399, %400 : vector<2x16xf32>
    %402 = math.tanh %401 : vector<2x16xf32>
    %403 = arith.mulf %398, %402 : vector<2x16xf32>
    %404 = vector.extract_strided_slice %10 {offsets = [2, 0], sizes = [1, 64], strides = [1, 1]} : vector<16x64xf32> to vector<1x64xf32>
    %405 = vector.extract_strided_slice %10 {offsets = [10, 0], sizes = [1, 64], strides = [1, 1]} : vector<16x64xf32> to vector<1x64xf32>
    %406 = tpu.concatenate %404, %405 in 0 : vector<1x64xf32>, vector<1x64xf32> -> vector<2x64xf32>
    %cst_67 = arith.constant dense<0.000000e+00> : vector<2x64xf32>
    %407 = tpu.matmul %403, %12, %cst_67 {dimension_numbers = #tpu.dot_dimension_numbers<[1], [0], [0], [1], [0, 0, 1, 1], [], []>} : vector<2x16xf32>, vector<16x64xf32>, vector<2x64xf32> -> vector<2x64xf32>
    %408 = arith.addf %406, %407 : vector<2x64xf32>
    %409 = vector.extract_strided_slice %408 {offsets = [0, 0], sizes = [2, 16], strides = [1, 1]} : vector<2x64xf32> to vector<2x16xf32>
    %410 = arith.negf %409 : vector<2x16xf32>
    %411 = math.exp %410 : vector<2x16xf32>
    %cst_68 = arith.constant 1.000000e+00 : f32
    %412 = vector.broadcast %cst_68 : f32 to vector<2x16xf32>
    %413 = arith.addf %412, %411 : vector<2x16xf32>
    %414 = arith.divf %412, %413 : vector<2x16xf32>
    %415 = vector.extract_strided_slice %408 {offsets = [0, 16], sizes = [2, 16], strides = [1, 1]} : vector<2x64xf32> to vector<2x16xf32>
    %416 = arith.negf %415 : vector<2x16xf32>
    %417 = math.exp %416 : vector<2x16xf32>
    %cst_69 = arith.constant 1.000000e+00 : f32
    %418 = vector.broadcast %cst_69 : f32 to vector<2x16xf32>
    %419 = arith.addf %418, %417 : vector<2x16xf32>
    %420 = arith.divf %418, %419 : vector<2x16xf32>
    %421 = vector.extract_strided_slice %408 {offsets = [0, 32], sizes = [2, 16], strides = [1, 1]} : vector<2x64xf32> to vector<2x16xf32>
    %422 = math.tanh %421 : vector<2x16xf32>
    %423 = vector.extract_strided_slice %408 {offsets = [0, 48], sizes = [2, 16], strides = [1, 1]} : vector<2x64xf32> to vector<2x16xf32>
    %424 = arith.negf %423 : vector<2x16xf32>
    %425 = math.exp %424 : vector<2x16xf32>
    %cst_70 = arith.constant 1.000000e+00 : f32
    %426 = vector.broadcast %cst_70 : f32 to vector<2x16xf32>
    %427 = arith.addf %426, %425 : vector<2x16xf32>
    %428 = arith.divf %426, %427 : vector<2x16xf32>
    %429 = arith.mulf %420, %401 : vector<2x16xf32>
    %430 = arith.mulf %414, %422 : vector<2x16xf32>
    %431 = arith.addf %429, %430 : vector<2x16xf32>
    %432 = math.tanh %431 : vector<2x16xf32>
    %433 = arith.mulf %428, %432 : vector<2x16xf32>
    %434 = vector.extract_strided_slice %10 {offsets = [1, 0], sizes = [1, 64], strides = [1, 1]} : vector<16x64xf32> to vector<1x64xf32>
    %435 = vector.extract_strided_slice %10 {offsets = [9, 0], sizes = [1, 64], strides = [1, 1]} : vector<16x64xf32> to vector<1x64xf32>
    %436 = tpu.concatenate %434, %435 in 0 : vector<1x64xf32>, vector<1x64xf32> -> vector<2x64xf32>
    %cst_71 = arith.constant dense<0.000000e+00> : vector<2x64xf32>
    %437 = tpu.matmul %433, %12, %cst_71 {dimension_numbers = #tpu.dot_dimension_numbers<[1], [0], [0], [1], [0, 0, 1, 1], [], []>} : vector<2x16xf32>, vector<16x64xf32>, vector<2x64xf32> -> vector<2x64xf32>
    %438 = arith.addf %436, %437 : vector<2x64xf32>
    %439 = vector.extract_strided_slice %438 {offsets = [0, 0], sizes = [2, 16], strides = [1, 1]} : vector<2x64xf32> to vector<2x16xf32>
    %440 = arith.negf %439 : vector<2x16xf32>
    %441 = math.exp %440 : vector<2x16xf32>
    %cst_72 = arith.constant 1.000000e+00 : f32
    %442 = vector.broadcast %cst_72 : f32 to vector<2x16xf32>
    %443 = arith.addf %442, %441 : vector<2x16xf32>
    %444 = arith.divf %442, %443 : vector<2x16xf32>
    %445 = vector.extract_strided_slice %438 {offsets = [0, 16], sizes = [2, 16], strides = [1, 1]} : vector<2x64xf32> to vector<2x16xf32>
    %446 = arith.negf %445 : vector<2x16xf32>
    %447 = math.exp %446 : vector<2x16xf32>
    %cst_73 = arith.constant 1.000000e+00 : f32
    %448 = vector.broadcast %cst_73 : f32 to vector<2x16xf32>
    %449 = arith.addf %448, %447 : vector<2x16xf32>
    %450 = arith.divf %448, %449 : vector<2x16xf32>
    %451 = vector.extract_strided_slice %438 {offsets = [0, 32], sizes = [2, 16], strides = [1, 1]} : vector<2x64xf32> to vector<2x16xf32>
    %452 = math.tanh %451 : vector<2x16xf32>
    %453 = vector.extract_strided_slice %438 {offsets = [0, 48], sizes = [2, 16], strides = [1, 1]} : vector<2x64xf32> to vector<2x16xf32>
    %454 = arith.negf %453 : vector<2x16xf32>
    %455 = math.exp %454 : vector<2x16xf32>
    %cst_74 = arith.constant 1.000000e+00 : f32
    %456 = vector.broadcast %cst_74 : f32 to vector<2x16xf32>
    %457 = arith.addf %456, %455 : vector<2x16xf32>
    %458 = arith.divf %456, %457 : vector<2x16xf32>
    %459 = arith.mulf %450, %431 : vector<2x16xf32>
    %460 = arith.mulf %444, %452 : vector<2x16xf32>
    %461 = arith.addf %459, %460 : vector<2x16xf32>
    %462 = math.tanh %461 : vector<2x16xf32>
    %463 = arith.mulf %458, %462 : vector<2x16xf32>
    %464 = vector.extract_strided_slice %10 {offsets = [0, 0], sizes = [1, 64], strides = [1, 1]} : vector<16x64xf32> to vector<1x64xf32>
    %465 = vector.extract_strided_slice %10 {offsets = [8, 0], sizes = [1, 64], strides = [1, 1]} : vector<16x64xf32> to vector<1x64xf32>
    %466 = tpu.concatenate %464, %465 in 0 : vector<1x64xf32>, vector<1x64xf32> -> vector<2x64xf32>
    %cst_75 = arith.constant dense<0.000000e+00> : vector<2x64xf32>
    %467 = tpu.matmul %463, %12, %cst_75 {dimension_numbers = #tpu.dot_dimension_numbers<[1], [0], [0], [1], [0, 0, 1, 1], [], []>} : vector<2x16xf32>, vector<16x64xf32>, vector<2x64xf32> -> vector<2x64xf32>
    %468 = arith.addf %466, %467 : vector<2x64xf32>
    %469 = vector.extract_strided_slice %468 {offsets = [0, 0], sizes = [2, 16], strides = [1, 1]} : vector<2x64xf32> to vector<2x16xf32>
    %470 = arith.negf %469 : vector<2x16xf32>
    %471 = math.exp %470 : vector<2x16xf32>
    %cst_76 = arith.constant 1.000000e+00 : f32
    %472 = vector.broadcast %cst_76 : f32 to vector<2x16xf32>
    %473 = arith.addf %472, %471 : vector<2x16xf32>
    %474 = arith.divf %472, %473 : vector<2x16xf32>
    %475 = vector.extract_strided_slice %468 {offsets = [0, 16], sizes = [2, 16], strides = [1, 1]} : vector<2x64xf32> to vector<2x16xf32>
    %476 = arith.negf %475 : vector<2x16xf32>
    %477 = math.exp %476 : vector<2x16xf32>
    %cst_77 = arith.constant 1.000000e+00 : f32
    %478 = vector.broadcast %cst_77 : f32 to vector<2x16xf32>
    %479 = arith.addf %478, %477 : vector<2x16xf32>
    %480 = arith.divf %478, %479 : vector<2x16xf32>
    %481 = vector.extract_strided_slice %468 {offsets = [0, 32], sizes = [2, 16], strides = [1, 1]} : vector<2x64xf32> to vector<2x16xf32>
    %482 = math.tanh %481 : vector<2x16xf32>
    %483 = vector.extract_strided_slice %468 {offsets = [0, 48], sizes = [2, 16], strides = [1, 1]} : vector<2x64xf32> to vector<2x16xf32>
    %484 = arith.negf %483 : vector<2x16xf32>
    %485 = math.exp %484 : vector<2x16xf32>
    %cst_78 = arith.constant 1.000000e+00 : f32
    %486 = vector.broadcast %cst_78 : f32 to vector<2x16xf32>
    %487 = arith.addf %486, %485 : vector<2x16xf32>
    %488 = arith.divf %486, %487 : vector<2x16xf32>
    %489 = arith.mulf %480, %461 : vector<2x16xf32>
    %490 = arith.mulf %474, %482 : vector<2x16xf32>
    %491 = arith.addf %489, %490 : vector<2x16xf32>
    %492 = math.tanh %491 : vector<2x16xf32>
    %493 = arith.mulf %488, %492 : vector<2x16xf32>
    %494 = vector.extract_strided_slice %43 {offsets = [0, 0], sizes = [1, 16], strides = [1, 1]} : vector<2x16xf32> to vector<1x16xf32>
    %495 = vector.extract_strided_slice %73 {offsets = [0, 0], sizes = [1, 16], strides = [1, 1]} : vector<2x16xf32> to vector<1x16xf32>
    %496 = vector.extract_strided_slice %103 {offsets = [0, 0], sizes = [1, 16], strides = [1, 1]} : vector<2x16xf32> to vector<1x16xf32>
    %497 = vector.extract_strided_slice %133 {offsets = [0, 0], sizes = [1, 16], strides = [1, 1]} : vector<2x16xf32> to vector<1x16xf32>
    %498 = vector.extract_strided_slice %163 {offsets = [0, 0], sizes = [1, 16], strides = [1, 1]} : vector<2x16xf32> to vector<1x16xf32>
    %499 = vector.extract_strided_slice %193 {offsets = [0, 0], sizes = [1, 16], strides = [1, 1]} : vector<2x16xf32> to vector<1x16xf32>
    %500 = vector.extract_strided_slice %223 {offsets = [0, 0], sizes = [1, 16], strides = [1, 1]} : vector<2x16xf32> to vector<1x16xf32>
    %501 = vector.extract_strided_slice %253 {offsets = [0, 0], sizes = [1, 16], strides = [1, 1]} : vector<2x16xf32> to vector<1x16xf32>
    %502 = tpu.concatenate %494, %495, %496, %497, %498, %499, %500, %501 in 0 : vector<1x16xf32>, vector<1x16xf32>, vector<1x16xf32>, vector<1x16xf32>, vector<1x16xf32>, vector<1x16xf32>, vector<1x16xf32>, vector<1x16xf32> -> vector<8x16xf32>
    %503 = vector.extract_strided_slice %493 {offsets = [0, 0], sizes = [1, 16], strides = [1, 1]} : vector<2x16xf32> to vector<1x16xf32>
    %504 = vector.extract_strided_slice %463 {offsets = [0, 0], sizes = [1, 16], strides = [1, 1]} : vector<2x16xf32> to vector<1x16xf32>
    %505 = vector.extract_strided_slice %433 {offsets = [0, 0], sizes = [1, 16], strides = [1, 1]} : vector<2x16xf32> to vector<1x16xf32>
    %506 = vector.extract_strided_slice %403 {offsets = [0, 0], sizes = [1, 16], strides = [1, 1]} : vector<2x16xf32> to vector<1x16xf32>
    %507 = vector.extract_strided_slice %373 {offsets = [0, 0], sizes = [1, 16], strides = [1, 1]} : vector<2x16xf32> to vector<1x16xf32>
    %508 = vector.extract_strided_slice %343 {offsets = [0, 0], sizes = [1, 16], strides = [1, 1]} : vector<2x16xf32> to vector<1x16xf32>
    %509 = vector.extract_strided_slice %313 {offsets = [0, 0], sizes = [1, 16], strides = [1, 1]} : vector<2x16xf32> to vector<1x16xf32>
    %510 = vector.extract_strided_slice %283 {offsets = [0, 0], sizes = [1, 16], strides = [1, 1]} : vector<2x16xf32> to vector<1x16xf32>
    %511 = tpu.concatenate %503, %504, %505, %506, %507, %508, %509, %510 in 0 : vector<1x16xf32>, vector<1x16xf32>, vector<1x16xf32>, vector<1x16xf32>, vector<1x16xf32>, vector<1x16xf32>, vector<1x16xf32>, vector<1x16xf32> -> vector<8x16xf32>
    %512 = tpu.concatenate %502, %511 in 1 : vector<8x16xf32>, vector<8x16xf32> -> vector<8x32xf32>
    %513 = vector.extract_strided_slice %43 {offsets = [1, 0], sizes = [1, 16], strides = [1, 1]} : vector<2x16xf32> to vector<1x16xf32>
    %514 = vector.extract_strided_slice %73 {offsets = [1, 0], sizes = [1, 16], strides = [1, 1]} : vector<2x16xf32> to vector<1x16xf32>
    %515 = vector.extract_strided_slice %103 {offsets = [1, 0], sizes = [1, 16], strides = [1, 1]} : vector<2x16xf32> to vector<1x16xf32>
    %516 = vector.extract_strided_slice %133 {offsets = [1, 0], sizes = [1, 16], strides = [1, 1]} : vector<2x16xf32> to vector<1x16xf32>
    %517 = vector.extract_strided_slice %163 {offsets = [1, 0], sizes = [1, 16], strides = [1, 1]} : vector<2x16xf32> to vector<1x16xf32>
    %518 = vector.extract_strided_slice %193 {offsets = [1, 0], sizes = [1, 16], strides = [1, 1]} : vector<2x16xf32> to vector<1x16xf32>
    %519 = vector.extract_strided_slice %223 {offsets = [1, 0], sizes = [1, 16], strides = [1, 1]} : vector<2x16xf32> to vector<1x16xf32>
    %520 = vector.extract_strided_slice %253 {offsets = [1, 0], sizes = [1, 16], strides = [1, 1]} : vector<2x16xf32> to vector<1x16xf32>
    %521 = tpu.concatenate %513, %514, %515, %516, %517, %518, %519, %520 in 0 : vector<1x16xf32>, vector<1x16xf32>, vector<1x16xf32>, vector<1x16xf32>, vector<1x16xf32>, vector<1x16xf32>, vector<1x16xf32>, vector<1x16xf32> -> vector<8x16xf32>
    %522 = vector.extract_strided_slice %493 {offsets = [1, 0], sizes = [1, 16], strides = [1, 1]} : vector<2x16xf32> to vector<1x16xf32>
    %523 = vector.extract_strided_slice %463 {offsets = [1, 0], sizes = [1, 16], strides = [1, 1]} : vector<2x16xf32> to vector<1x16xf32>
    %524 = vector.extract_strided_slice %433 {offsets = [1, 0], sizes = [1, 16], strides = [1, 1]} : vector<2x16xf32> to vector<1x16xf32>
    %525 = vector.extract_strided_slice %403 {offsets = [1, 0], sizes = [1, 16], strides = [1, 1]} : vector<2x16xf32> to vector<1x16xf32>
    %526 = vector.extract_strided_slice %373 {offsets = [1, 0], sizes = [1, 16], strides = [1, 1]} : vector<2x16xf32> to vector<1x16xf32>
    %527 = vector.extract_strided_slice %343 {offsets = [1, 0], sizes = [1, 16], strides = [1, 1]} : vector<2x16xf32> to vector<1x16xf32>
    %528 = vector.extract_strided_slice %313 {offsets = [1, 0], sizes = [1, 16], strides = [1, 1]} : vector<2x16xf32> to vector<1x16xf32>
    %529 = vector.extract_strided_slice %283 {offsets = [1, 0], sizes = [1, 16], strides = [1, 1]} : vector<2x16xf32> to vector<1x16xf32>
    %530 = tpu.concatenate %522, %523, %524, %525, %526, %527, %528, %529 in 0 : vector<1x16xf32>, vector<1x16xf32>, vector<1x16xf32>, vector<1x16xf32>, vector<1x16xf32>, vector<1x16xf32>, vector<1x16xf32>, vector<1x16xf32> -> vector<8x16xf32>
    %531 = tpu.concatenate %521, %530 in 1 : vector<8x16xf32>, vector<8x16xf32> -> vector<8x32xf32>
    %532 = tpu.concatenate %512, %531 in 0 : vector<8x32xf32>, vector<8x32xf32> -> vector<16x32xf32>
    %c0_79 = arith.constant 0 : index
    %c0_80 = arith.constant 0 : index
    %533 = vector.load %arg7[%c0_79, %c0_80] : memref<32x3xf32, #tpu.memory_space<vmem>>, vector<32x3xf32>
    %cst_81 = arith.constant dense<0.000000e+00> : vector<16x3xf32>
    %534 = tpu.matmul %532, %533, %cst_81 {dimension_numbers = #tpu.dot_dimension_numbers<[1], [0], [0], [1], [0, 0, 1, 1], [], []>} : vector<16x32xf32>, vector<32x3xf32>, vector<16x3xf32> -> vector<16x3xf32>
    %c0_82 = arith.constant 0 : index
    %c0_83 = arith.constant 0 : index
    %535 = vector.load %arg8[%c0_82, %c0_83] : memref<1x3xf32, #tpu.memory_space<vmem>>, vector<1x3xf32>
    %536 = vector.broadcast %535 : vector<1x3xf32> to vector<16x3xf32>
    %537 = arith.addf %534, %536 : vector<16x3xf32>
    %c0_84 = arith.constant 0 : index
    %c0_85 = arith.constant 0 : index
    %538 = vector.load %arg9[%c0_84, %c0_85] : memref<16x3xf32, #tpu.memory_space<vmem>>, vector<16x3xf32>
    tpu.vector_store %arg9[%c0_84, %c0_85], %537 {strides = array<i32>} : memref<16x3xf32, #tpu.memory_space<vmem>>, vector<16x3xf32>,
    return
  }
}

</mosaic_0001>

<llo_original>
// kernel: _lambda_.4
$region0: #{_lambda_.4}
  #allocation0 [shape = 'u32[]', space=smem, size = 0x4, offset = 0x4, fixed_abs, tag = 'smem constant byte address 0x4 - core index']
  #allocation1 [shape = 'u32[144,128]{1,0:T(1,128)}', space=vmem, size = 0x12000, scoped, tag = 'internal scratch']
  %s0 = inlined_call_operand.vmem [shape: f32[16,4], index: 0, kind: input, shape index: {}]
  %s1 = inlined_call_operand.hbm [shape: f32[4,32], index: 1, kind: input, shape index: {}]
  %s2 = inlined_call_operand.vmem [shape: f32[1,32], index: 2, kind: input, shape index: {}]
  %s3 = inlined_call_operand.vmem [shape: f32[32,64], index: 3, kind: input, shape index: {}]
  %s4 = inlined_call_operand.hbm [shape: f32[16,64], index: 4, kind: input, shape index: {}]
  %s5 = inlined_call_operand.vmem [shape: f32[1,64], index: 5, kind: input, shape index: {}]
  %s6 = inlined_call_operand.vmem [shape: f32[32,64], index: 6, kind: input, shape index: {}]
  %s7 = inlined_call_operand.vmem [shape: f32[16,64], index: 7, kind: input, shape index: {}]
  %s8 = inlined_call_operand.vmem [shape: f32[1,64], index: 8, kind: input, shape index: {}]
  %s9 = inlined_call_operand.vmem [shape: f32[16,32], index: 9, kind: output, shape index: {}]
  %s10 = sld [smem:[#allocation0]]
  $region54: #{_lambda_.4} parent=0
    _
  %s12 = ssub.s32 1, %s10
  %s13 = scalar_select 0, %s12, %s10
  $region1: #{_lambda_.4} parent=0
    #allocation2 [shape = 'u8[2048]{0}', space=vmem, size = 0x800, scoped, tag = 'input window, operand 1, single buffered']
    #allocation3 [shape = 's32[1]{0}', space=sflag, size = 0x4, scoped, tag = 'scoped memory for _lambda_.4']
    #allocation4 [shape = 'u8[8192]{0}', space=vmem, size = 0x2000, scoped, tag = 'input window, operand 4, single buffered']
    #allocation5 [shape = 's32[1]{0}', space=sflag, size = 0x4, scoped, tag = 'scoped memory for _lambda_.4']
    %14 = vsyncpa [#allocation3], 0
    %15 = vsyncpa [#allocation5], 0
    // Predicated region
    $region2: #{_lambda_.4} parent=1 // pred_check
      _
    $region3: #{_lambda_.4} parent=1 // pred_check_branch
      %17 = sbr.rel (0) target = $region5
    $region4: #{_lambda_.4} parent=1 // pred_region
      _
    $region5: #{_lambda_.4} parent=1 // pred_fallthru
      _
    // Predicated region
    $region6: #{_lambda_.4} parent=1 // pred_check
      _
    $region7: #{_lambda_.4} parent=1 // pred_check_branch
      %19 = sbr.rel (0) target = $region9
    $region8: #{_lambda_.4} parent=1 // pred_region
      %s21 = ssub.s32 64, 64
      %22 = vsyncadd [#allocation3], %s21
      %s24 = sshll.u32 [#allocation2], 4
      %s25 = int_to_ptr.vmem [resolvable:$true] %s24
      %27 = dma.hbm_to_vmem [thread:$0]  %s1, 64, %s25, [#allocation3]
    $region9: #{_lambda_.4} parent=1 // pred_fallthru
      _
    // Predicated region
    $region10: #{_lambda_.4} parent=1 // pred_check
      _
    $region11: #{_lambda_.4} parent=1 // pred_check_branch
      %29 = sbr.rel (0) target = $region13
    $region12: #{_lambda_.4} parent=1 // pred_region
      _
    $region13: #{_lambda_.4} parent=1 // pred_fallthru
      _
    // Predicated region
    $region14: #{_lambda_.4} parent=1 // pred_check
      _
    $region15: #{_lambda_.4} parent=1 // pred_check_branch
      %31 = sbr.rel (0) target = $region17
    $region16: #{_lambda_.4} parent=1 // pred_region
      _
    $region17: #{_lambda_.4} parent=1 // pred_fallthru
      _
    // Predicated region
    $region18: #{_lambda_.4} parent=1 // pred_check
      _
    $region19: #{_lambda_.4} parent=1 // pred_check_branch
      %33 = sbr.rel (0) target = $region21
    $region20: #{_lambda_.4} parent=1 // pred_region
      %s35 = ssub.s32 256, 256
      %36 = vsyncadd [#allocation5], %s35
      %s37 = sshll.u32 [#allocation4], 4
      %s38 = int_to_ptr.vmem [resolvable:$true] %s37
      %43 = dma.hbm_to_vmem [thread:$0]  %s4, 256, %s38, [#allocation5], 128, 128, 8
    $region21: #{_lambda_.4} parent=1 // pred_fallthru
      _
    // Predicated region
    $region22: #{_lambda_.4} parent=1 // pred_check
      _
    $region23: #{_lambda_.4} parent=1 // pred_check_branch
      %45 = sbr.rel (0) target = $region25
    $region24: #{_lambda_.4} parent=1 // pred_region
      _
    $region25: #{_lambda_.4} parent=1 // pred_fallthru
      _
    // Predicated region
    $region26: #{_lambda_.4} parent=1 // pred_check
      _
    $region27: #{_lambda_.4} parent=1 // pred_check_branch
      %47 = sbr.rel (0) target = $region29
    $region28: #{_lambda_.4} parent=1 // pred_region
      _
    $region29: #{_lambda_.4} parent=1 // pred_fallthru
      _
    // Predicated region
    $region30: #{_lambda_.4} parent=1 // pred_check
      _
    $region31: #{_lambda_.4} parent=1 // pred_check_branch
      %49 = sbr.rel (0) target = $region33
    $region32: #{_lambda_.4} parent=1 // pred_region
      _
    $region33: #{_lambda_.4} parent=1 // pred_fallthru
      _
    // Predicated region
    $region34: #{_lambda_.4} parent=1 // pred_check
      _
    $region35: #{_lambda_.4} parent=1 // pred_check_branch
      %51 = sbr.rel (0) target = $region37
    $region36: #{_lambda_.4} parent=1 // pred_region
      _
    $region37: #{_lambda_.4} parent=1 // pred_fallthru
      _
    // Predicated region
    $region38: #{_lambda_.4} parent=1 // pred_check
      _
    $region39: #{_lambda_.4} parent=1 // pred_check_branch
      %53 = sbr.rel (0) target = $region41
    $region40: #{_lambda_.4} parent=1 // pred_region
      %54 = dma.done [#allocation3], 64
    $region41: #{_lambda_.4} parent=1 // pred_fallthru
      _
    // Predicated region
    $region42: #{_lambda_.4} parent=1 // pred_check
      _
    $region43: #{_lambda_.4} parent=1 // pred_check_branch
      %56 = sbr.rel (0) target = $region45
    $region44: #{_lambda_.4} parent=1 // pred_region
      %57 = dma.done [#allocation5], 256
    $region45: #{_lambda_.4} parent=1 // pred_fallthru
      _
    %v58 = vld [vmem:[%s0] sm:$0xff]
    %v59 = vld [vmem:[%s0 + $0x8] sm:$0xff]
    %v60 = vld [vmem:[#allocation2] sm:$0xf]
    %v61 = vld [vmem:[%s2] sm:$0x1]
    %v63 = vlaneseq
    %v64 = vshrl.u32 %v63, 7
    %v65 = vsub.s32 0, %v64
    %v66 = vrot.slane %v61, %v65
    %vm68 = vcmask 31744
    %v70 = vsel %vm68, %v58, 0
    %v73 = vsel %vm68, %v59, 0
    %vm75 = vcmask 1043456
    %v77 = vsel %vm75, %v60, 0
    %79 = vmatprep.subr.mxu0 0.0
    %80 = vmatpush1.msra.mxu0 %v77
    %81 = vmatprep.subr.mxu0 0.0
    %82 = vmatpush1.msra.mxu0 0.0
    %83 = vmatprep.subr.mxu0 0.0
    %84 = vmatpush1.msra.mxu0 0.0
    %85 = vmatprep.subr.mxu0 0.0
    %86 = vmatpush1.msra.mxu0 0.0
    %87 = vmatprep.subr.mxu0 0.0
    %88 = vmatpush1.msra.mxu0 0.0
    %89 = vmatprep.subr.mxu0 0.0
    %90 = vmatpush1.msra.mxu0 0.0
    %91 = vmatprep.subr.mxu0 0.0
    %92 = vmatpush1.msra.mxu0 0.0
    %93 = vmatprep.subr.mxu0 0.0
    %94 = vmatpush1.msra.mxu0 0.0
    %95 = vmatprep.subr.mxu0 0.0
    %96 = vmatpush1.msra.mxu0 0.0
    %97 = vmatprep.subr.mxu0 0.0
    %98 = vmatpush1.msra.mxu0 0.0
    %99 = vmatprep.subr.mxu0 0.0
    %100 = vmatpush1.msra.mxu0 0.0
    %101 = vmatprep.subr.mxu0 0.0
    %102 = vmatpush1.msra.mxu0 0.0
    %103 = vmatprep.subr.mxu0 0.0
    %104 = vmatpush1.msra.mxu0 0.0
    %105 = vmatprep.subr.mxu0 0.0
    %106 = vmatpush1.msra.mxu0 0.0
    %107 = vmatprep.subr.mxu0 0.0
    %108 = vmatpush1.msra.mxu0 0.0
    %109 = vmatprep.subr.mxu0 0.0
    %110 = vmatpush1.msra.mxu0 0.0
    %111 = vmatprep.subr.mxu0 0.0
    %112 = vmatpush1.msra.mxu0 0.0
    %113 = vmatprep.subr.mxu0 0.0
    %114 = vmatpush1.msra.mxu0 0.0
    %115 = vmatprep.subr.mxu0 0.0
    %116 = vmatpush1.msra.mxu0 0.0
    %117 = vmatprep.subr.mxu0 0.0
    %118 = vmatpush1.msra.mxu0 0.0
    %119 = vmatprep.subr.mxu0 0.0
    %120 = vmatpush1.msra.mxu0 0.0
    %121 = vmatprep.subr.mxu0 0.0
    %122 = vmatpush1.msra.mxu0 0.0
    %123 = vmatprep.subr.mxu0 0.0
    %124 = vmatpush1.msra.mxu0 0.0
    %125 = vmatprep.subr.mxu0 0.0
    %126 = vmatpush1.msra.mxu0 0.0
    %127 = vmatprep.subr.mxu0 0.0
    %128 = vmatpush1.msra.mxu0 0.0
    %129 = vmatprep.subr.mxu0 0.0
    %130 = vmatpush1.msra.mxu0 0.0
    %131 = vmatprep.subr.mxu0 0.0
    %132 = vmatpush1.msra.mxu0 0.0
    %133 = vmatprep.subr.mxu0 0.0
    %134 = vmatpush1.msra.mxu0 0.0
    %135 = vmatprep.subr.mxu0 0.0
    %136 = vmatpush1.msra.mxu0 0.0
    %137 = vmatprep.subr.mxu0 0.0
    %138 = vmatpush1.msra.mxu0 0.0
    %139 = vmatprep.subr.mxu0 0.0
    %140 = vmatpush1.msra.mxu0 0.0
    %141 = vmatprep.subr.mxu0 0.0
    %142 = vmatpush1.msra.mxu0 0.0
    %143 = vmatprep.mubr.f32.mxu0 0.0
    %144 = vmatmul.mubr.f32.gmra.mrb[0].mxu0 %v70
    %v145 = vpop.f32.mrb[0].mxu0
    %v146 = vadd.f32 %v66, %v145
    %v147 = vpop.f32.mrb[0].mxu0
    %148 = vmatprep.mubr.f32.mxu0 0.0
    %149 = vmatmul.mubr.f32.gmra.mrb[0].mxu0 %v73
    %v150 = vpop.f32.mrb[0].mxu0
    %v151 = vadd.f32 %v66, %v150
    %v152 = vpop.f32.mrb[0].mxu0
    %153 = vdwg.mxu0
    %v154 = vld [vmem:[%s3] sm:$0xff]
    %v155 = vld [vmem:[%s3 + $0x8] sm:$0xff]
    %v156 = vld [vmem:[%s3 + $0x10] sm:$0xff]
    %v157 = vld [vmem:[%s3 + $0x18] sm:$0xff]
    %v158 = vld [vmem:[%s5] sm:$0x1]
    %v160 = vlaneseq
    %v161 = vshrl.u32 %v160, 7
    %v162 = vsub.s32 0, %v161
    %v163 = vrot.slane %v158, %v162
    %vm165 = vcmask 261120
    %v167 = vsel %vm165, %v146, 0
    %v170 = vsel %vm165, %v151, 0
    %172 = vmatprep.subr.mxu0 0.0
    %173 = vmatpush1.msra.mxu0 %v154
    %174 = vmatprep.subr.mxu0 0.0
    %175 = vmatpush1.msra.mxu0 %v155
    %176 = vmatprep.subr.mxu0 0.0
    %177 = vmatpush1.msra.mxu0 %v156
    %178 = vmatprep.subr.mxu0 0.0
    %179 = vmatpush1.msra.mxu0 %v157
    %180 = vmatprep.subr.mxu0 0.0
    %181 = vmatpush1.msra.mxu0 0.0
    %182 = vmatprep.subr.mxu0 0.0
    %183 = vmatpush1.msra.mxu0 0.0
    %184 = vmatprep.subr.mxu0 0.0
    %185 = vmatpush1.msra.mxu0 0.0
    %186 = vmatprep.subr.mxu0 0.0
    %187 = vmatpush1.msra.mxu0 0.0
    %188 = vmatprep.subr.mxu0 0.0
    %189 = vmatpush1.msra.mxu0 0.0
    %190 = vmatprep.subr.mxu0 0.0
    %191 = vmatpush1.msra.mxu0 0.0
    %192 = vmatprep.subr.mxu0 0.0
    %193 = vmatpush1.msra.mxu0 0.0
    %194 = vmatprep.subr.mxu0 0.0
    %195 = vmatpush1.msra.mxu0 0.0
    %196 = vmatprep.subr.mxu0 0.0
    %197 = vmatpush1.msra.mxu0 0.0
    %198 = vmatprep.subr.mxu0 0.0
    %199 = vmatpush1.msra.mxu0 0.0
    %200 = vmatprep.subr.mxu0 0.0
    %201 = vmatpush1.msra.mxu0 0.0
    %202 = vmatprep.subr.mxu0 0.0
    %203 = vmatpush1.msra.mxu0 0.0
    %204 = vmatprep.subr.mxu0 0.0
    %205 = vmatpush1.msra.mxu0 0.0
    %206 = vmatprep.subr.mxu0 0.0
    %207 = vmatpush1.msra.mxu0 0.0
    %208 = vmatprep.subr.mxu0 0.0
    %209 = vmatpush1.msra.mxu0 0.0
    %210 = vmatprep.subr.mxu0 0.0
    %211 = vmatpush1.msra.mxu0 0.0
    %212 = vmatprep.subr.mxu0 0.0
    %213 = vmatpush1.msra.mxu0 0.0
    %214 = vmatprep.subr.mxu0 0.0
    %215 = vmatpush1.msra.mxu0 0.0
    %216 = vmatprep.subr.mxu0 0.0
    %217 = vmatpush1.msra.mxu0 0.0
    %218 = vmatprep.subr.mxu0 0.0
    %219 = vmatpush1.msra.mxu0 0.0
    %220 = vmatprep.subr.mxu0 0.0
    %221 = vmatpush1.msra.mxu0 0.0
    %222 = vmatprep.subr.mxu0 0.0
    %223 = vmatpush1.msra.mxu0 0.0
    %224 = vmatprep.subr.mxu0 0.0
    %225 = vmatpush1.msra.mxu0 0.0
    %226 = vmatprep.subr.mxu0 0.0
    %227 = vmatpush1.msra.mxu0 0.0
    %228 = vmatprep.subr.mxu0 0.0
    %229 = vmatpush1.msra.mxu0 0.0
    %230 = vmatprep.subr.mxu0 0.0
    %231 = vmatpush1.msra.mxu0 0.0
    %232 = vmatprep.subr.mxu0 0.0
    %233 = vmatpush1.msra.mxu0 0.0
    %234 = vmatprep.subr.mxu0 0.0
    %235 = vmatpush1.msra.mxu0 0.0
    %236 = vmatprep.mubr.f32.mxu0 0.0
    %237 = vmatmul.mubr.f32.gmra.mrb[0].mxu0 %v167
    %v238 = vpop.f32.mrb[0].mxu0
    %v239 = vadd.f32 %v163, %v238
    %v240 = vpop.f32.mrb[0].mxu0
    %241 = vmatprep.mubr.f32.mxu0 0.0
    %242 = vmatmul.mubr.f32.gmra.mrb[0].mxu0 %v170
    %v243 = vpop.f32.mrb[0].mxu0
    %v244 = vadd.f32 %v163, %v243
    %v245 = vpop.f32.mrb[0].mxu0
    %246 = vdwg.mxu0
    %v247 = vld [vmem:[%s6] sm:$0xff]
    %v248 = vld [vmem:[%s6 + $0x8] sm:$0xff]
    %v249 = vld [vmem:[%s6 + $0x10] sm:$0xff]
    %v250 = vld [vmem:[%s6 + $0x18] sm:$0xff]
    %v251 = vld [vmem:[%s8] sm:$0x1]
    %v253 = vlaneseq
    %v254 = vshrl.u32 %v253, 7
    %v255 = vsub.s32 0, %v254
    %v256 = vrot.slane %v251, %v255
    %258 = vmatprep.subr.mxu0 0.0
    %259 = vmatpush1.msra.mxu0 %v247
    %260 = vmatprep.subr.mxu0 0.0
    %261 = vmatpush1.msra.mxu0 %v248
    %262 = vmatprep.subr.mxu0 0.0
    %263 = vmatpush1.msra.mxu0 %v249
    %264 = vmatprep.subr.mxu0 0.0
    %265 = vmatpush1.msra.mxu0 %v250
    %266 = vmatprep.subr.mxu0 0.0
    %267 = vmatpush1.msra.mxu0 0.0
    %268 = vmatprep.subr.mxu0 0.0
    %269 = vmatpush1.msra.mxu0 0.0
    %270 = vmatprep.subr.mxu0 0.0
    %271 = vmatpush1.msra.mxu0 0.0
    %272 = vmatprep.subr.mxu0 0.0
    %273 = vmatpush1.msra.mxu0 0.0
    %274 = vmatprep.subr.mxu0 0.0
    %275 = vmatpush1.msra.mxu0 0.0
    %276 = vmatprep.subr.mxu0 0.0
    %277 = vmatpush1.msra.mxu0 0.0
    %278 = vmatprep.subr.mxu0 0.0
    %279 = vmatpush1.msra.mxu0 0.0
    %280 = vmatprep.subr.mxu0 0.0
    %281 = vmatpush1.msra.mxu0 0.0
    %282 = vmatprep.subr.mxu0 0.0
    %283 = vmatpush1.msra.mxu0 0.0
    %284 = vmatprep.subr.mxu0 0.0
    %285 = vmatpush1.msra.mxu0 0.0
    %286 = vmatprep.subr.mxu0 0.0
    %287 = vmatpush1.msra.mxu0 0.0
    %288 = vmatprep.subr.mxu0 0.0
    %289 = vmatpush1.msra.mxu0 0.0
    %290 = vmatprep.subr.mxu0 0.0
    %291 = vmatpush1.msra.mxu0 0.0
    %292 = vmatprep.subr.mxu0 0.0
    %293 = vmatpush1.msra.mxu0 0.0
    %294 = vmatprep.subr.mxu0 0.0
    %295 = vmatpush1.msra.mxu0 0.0
    %296 = vmatprep.subr.mxu0 0.0
    %297 = vmatpush1.msra.mxu0 0.0
    %298 = vmatprep.subr.mxu0 0.0
    %299 = vmatpush1.msra.mxu0 0.0
    %300 = vmatprep.subr.mxu0 0.0
    %301 = vmatpush1.msra.mxu0 0.0
    %302 = vmatprep.subr.mxu0 0.0
    %303 = vmatpush1.msra.mxu0 0.0
    %304 = vmatprep.subr.mxu0 0.0
    %305 = vmatpush1.msra.mxu0 0.0
    %306 = vmatprep.subr.mxu0 0.0
    %307 = vmatpush1.msra.mxu0 0.0
    %308 = vmatprep.subr.mxu0 0.0
    %309 = vmatpush1.msra.mxu0 0.0
    %310 = vmatprep.subr.mxu0 0.0
    %311 = vmatpush1.msra.mxu0 0.0
    %312 = vmatprep.subr.mxu0 0.0
    %313 = vmatpush1.msra.mxu0 0.0
    %314 = vmatprep.subr.mxu0 0.0
    %315 = vmatpush1.msra.mxu0 0.0
    %316 = vmatprep.subr.mxu0 0.0
    %317 = vmatpush1.msra.mxu0 0.0
    %318 = vmatprep.subr.mxu0 0.0
    %319 = vmatpush1.msra.mxu0 0.0
    %320 = vmatprep.subr.mxu0 0.0
    %321 = vmatpush1.msra.mxu0 0.0
    %322 = vmatprep.mubr.f32.mxu0 0.0
    %323 = vmatmul.mubr.f32.gmra.mrb[0].mxu0 %v167
    %v324 = vpop.f32.mrb[0].mxu0
    %v325 = vadd.f32 %v256, %v324
    %v326 = vpop.f32.mrb[0].mxu0
    %327 = vmatprep.mubr.f32.mxu0 0.0
    %328 = vmatmul.mubr.f32.gmra.mrb[0].mxu0 %v170
    %v329 = vpop.f32.mrb[0].mxu0
    %v330 = vadd.f32 %v256, %v329
    %v331 = vpop.f32.mrb[0].mxu0
    %332 = vdwg.mxu0
    %v333 = vld [vmem:[#allocation4] sm:$0xff]
    %v334 = vld [vmem:[#allocation4 + $0x8] sm:$0xff]
    %v335 = vld [vmem:[%s7] sm:$0xff]
    %v336 = vld [vmem:[%s7 + $0x8] sm:$0xff]
    %v338 = vrot.slane %v244, 7
    %vm340 = vcmask 1040384
    %v341 = vsel %vm340, %v239, %v338
    %vm342 = vcmask 130048
    %v344 = vsel %vm342, 0.0, 0
    %346 = vmatprep.subr.mxu0 0.0
    %347 = vmatpush1.msra.mxu0 %v333
    %348 = vmatprep.subr.mxu0 0.0
    %349 = vmatpush1.msra.mxu0 %v334
    %350 = vmatprep.subr.mxu0 0.0
    %351 = vmatpush1.msra.mxu0 0.0
    %352 = vmatprep.subr.mxu0 0.0
    %353 = vmatpush1.msra.mxu0 0.0
    %354 = vmatprep.subr.mxu0 0.0
    %355 = vmatpush1.msra.mxu0 0.0
    %356 = vmatprep.subr.mxu0 0.0
    %357 = vmatpush1.msra.mxu0 0.0
    %358 = vmatprep.subr.mxu0 0.0
    %359 = vmatpush1.msra.mxu0 0.0
    %360 = vmatprep.subr.mxu0 0.0
    %361 = vmatpush1.msra.mxu0 0.0
    %362 = vmatprep.subr.mxu0 0.0
    %363 = vmatpush1.msra.mxu0 0.0
    %364 = vmatprep.subr.mxu0 0.0
    %365 = vmatpush1.msra.mxu0 0.0
    %366 = vmatprep.subr.mxu0 0.0
    %367 = vmatpush1.msra.mxu0 0.0
    %368 = vmatprep.subr.mxu0 0.0
    %369 = vmatpush1.msra.mxu0 0.0
    %370 = vmatprep.subr.mxu0 0.0
    %371 = vmatpush1.msra.mxu0 0.0
    %372 = vmatprep.subr.mxu0 0.0
    %373 = vmatpush1.msra.mxu0 0.0
    %374 = vmatprep.subr.mxu0 0.0
    %375 = vmatpush1.msra.mxu0 0.0
    %376 = vmatprep.subr.mxu0 0.0
    %377 = vmatpush1.msra.mxu0 0.0
    %378 = vmatprep.subr.mxu0 0.0
    %379 = vmatpush1.msra.mxu0 0.0
    %380 = vmatprep.subr.mxu0 0.0
    %381 = vmatpush1.msra.mxu0 0.0
    %382 = vmatprep.subr.mxu0 0.0
    %383 = vmatpush1.msra.mxu0 0.0
    %384 = vmatprep.subr.mxu0 0.0
    %385 = vmatpush1.msra.mxu0 0.0
    %386 = vmatprep.subr.mxu0 0.0
    %387 = vmatpush1.msra.mxu0 0.0
    %388 = vmatprep.subr.mxu0 0.0
    %389 = vmatpush1.msra.mxu0 0.0
    %390 = vmatprep.subr.mxu0 0.0
    %391 = vmatpush1.msra.mxu0 0.0
    %392 = vmatprep.subr.mxu0 0.0
    %393 = vmatpush1.msra.mxu0 0.0
    %394 = vmatprep.subr.mxu0 0.0
    %395 = vmatpush1.msra.mxu0 0.0
    %396 = vmatprep.subr.mxu0 0.0
    %397 = vmatpush1.msra.mxu0 0.0
    %398 = vmatprep.subr.mxu0 0.0
    %399 = vmatpush1.msra.mxu0 0.0
    %400 = vmatprep.subr.mxu0 0.0
    %401 = vmatpush1.msra.mxu0 0.0
    %402 = vmatprep.subr.mxu0 0.0
    %403 = vmatpush1.msra.mxu0 0.0
    %404 = vmatprep.subr.mxu0 0.0
    %405 = vmatpush1.msra.mxu0 0.0
    %406 = vmatprep.subr.mxu0 0.0
    %407 = vmatpush1.msra.mxu0 0.0
    %408 = vmatprep.subr.mxu0 0.0
    %409 = vmatpush1.msra.mxu0 0.0
    %410 = vmatprep.mubr.f32.mxu0 0.0
    %411 = vmatmul.mubr.f32.gmra.mrb[0].mxu0 %v344
    %v412 = vpop.f32.mrb[0].mxu0
    %v413 = vadd.f32 0.0, %v412
    %v414 = vpop.f32.mrb[0].mxu0
    %415 = vdwg.mxu0
    %v416 = vadd.f32 %v341, %v413
    %v417 = vxor.u32 %v416, 2147483648
    %v418 = vmul.f32 %v417, 1.442695
    %v419 = vpow.pop %v418
    %v420 = vadd.f32 %v419, 1.0
    %v421 = vrcp.pop %v420
    %v422 = vmul.f32 1.0, %v421
    %v423 = vtanh.pop %v416
    %v424 = vmul.f32 %v422, 0.0
    %426 = vrot.lane.b32.xlu0 %v423, 96
    %v427 = vpop.permute.xlu0 %426
    %v429 = vmul.f32 %v422, %v427
    %431 = vrot.lane.b32.xlu0 %v429, 16
    %v432 = vpop.permute.xlu0 %431
    %v434 = vadd.f32 %v424, %v432
    %v435 = vtanh.pop %v434
    %437 = vrot.lane.b32.xlu0 %v435, 32
    %v438 = vpop.permute.xlu0 %437
    %v440 = vmul.f32 %v422, %v438
    %v442 = vrot.slane %v239, 1
    %v444 = vsel %vm340, %v442, %v244
    %446 = vrot.lane.b32.xlu0 %v440, 80
    %v447 = vpop.permute.xlu0 %446
    %v448 = vsel %vm342, %v447, 0
    %450 = vmatprep.subr.mxu0 0.0
    %451 = vmatpush1.msra.mxu0 %v333
    %452 = vmatprep.subr.mxu0 0.0
    %453 = vmatpush1.msra.mxu0 %v334
    %454 = vmatprep.subr.mxu0 0.0
    %455 = vmatpush1.msra.mxu0 0.0
    %456 = vmatprep.subr.mxu0 0.0
    %457 = vmatpush1.msra.mxu0 0.0
    %458 = vmatprep.subr.mxu0 0.0
    %459 = vmatpush1.msra.mxu0 0.0
    %460 = vmatprep.subr.mxu0 0.0
    %461 = vmatpush1.msra.mxu0 0.0
    %462 = vmatprep.subr.mxu0 0.0
    %463 = vmatpush1.msra.mxu0 0.0
    %464 = vmatprep.subr.mxu0 0.0
    %465 = vmatpush1.msra.mxu0 0.0
    %466 = vmatprep.subr.mxu0 0.0
    %467 = vmatpush1.msra.mxu0 0.0
    %468 = vmatprep.subr.mxu0 0.0
    %469 = vmatpush1.msra.mxu0 0.0
    %470 = vmatprep.subr.mxu0 0.0
    %471 = vmatpush1.msra.mxu0 0.0
    %472 = vmatprep.subr.mxu0 0.0
    %473 = vmatpush1.msra.mxu0 0.0
    %474 = vmatprep.subr.mxu0 0.0
    %475 = vmatpush1.msra.mxu0 0.0
    %476 = vmatprep.subr.mxu0 0.0
    %477 = vmatpush1.msra.mxu0 0.0
    %478 = vmatprep.subr.mxu0 0.0
    %479 = vmatpush1.msra.mxu0 0.0
    %480 = vmatprep.subr.mxu0 0.0
    %481 = vmatpush1.msra.mxu0 0.0
    %482 = vmatprep.subr.mxu0 0.0
    %483 = vmatpush1.msra.mxu0 0.0
    %484 = vmatprep.subr.mxu0 0.0
    %485 = vmatpush1.msra.mxu0 0.0
    %486 = vmatprep.subr.mxu0 0.0
    %487 = vmatpush1.msra.mxu0 0.0
    %488 = vmatprep.subr.mxu0 0.0
    %489 = vmatpush1.msra.mxu0 0.0
    %490 = vmatprep.subr.mxu0 0.0
    %491 = vmatpush1.msra.mxu0 0.0
    %492 = vmatprep.subr.mxu0 0.0
    %493 = vmatpush1.msra.mxu0 0.0
    %494 = vmatprep.subr.mxu0 0.0
    %495 = vmatpush1.msra.mxu0 0.0
    %496 = vmatprep.subr.mxu0 0.0
    %497 = vmatpush1.msra.mxu0 0.0
    %498 = vmatprep.subr.mxu0 0.0
    %499 = vmatpush1.msra.mxu0 0.0
    %500 = vmatprep.subr.mxu0 0.0
    %501 = vmatpush1.msra.mxu0 0.0
    %502 = vmatprep.subr.mxu0 0.0
    %503 = vmatpush1.msra.mxu0 0.0
    %504 = vmatprep.subr.mxu0 0.0
    %505 = vmatpush1.msra.mxu0 0.0
    %506 = vmatprep.subr.mxu0 0.0
    %507 = vmatpush1.msra.mxu0 0.0
    %508 = vmatprep.subr.mxu0 0.0
    %509 = vmatpush1.msra.mxu0 0.0
    %510 = vmatprep.subr.mxu0 0.0
    %511 = vmatpush1.msra.mxu0 0.0
    %512 = vmatprep.subr.mxu0 0.0
    %513 = vmatpush1.msra.mxu0 0.0
    %514 = vmatprep.mubr.f32.mxu0 0.0
    %515 = vmatmul.mubr.f32.gmra.mrb[0].mxu0 %v448
    %v516 = vpop.f32.mrb[0].mxu0
    %v517 = vadd.f32 0.0, %v516
    %v518 = vpop.f32.mrb[0].mxu0
    %519 = vdwg.mxu0
    %v520 = vadd.f32 %v444, %v517
    %v521 = vxor.u32 %v520, 2147483648
    %v522 = vmul.f32 %v521, 1.442695
    %v523 = vpow.pop %v522
    %v524 = vadd.f32 %v523, 1.0
    %v525 = vrcp.pop %v524
    %v526 = vmul.f32 1.0, %v525
    %v527 = vtanh.pop %v520
    %v528 = vmul.f32 %v526, %v434
    %530 = vrot.lane.b32.xlu0 %v527, 96
    %v531 = vpop.permute.xlu0 %530
    %v533 = vmul.f32 %v526, %v531
    %535 = vrot.lane.b32.xlu0 %v533, 16
    %v536 = vpop.permute.xlu0 %535
    %v538 = vadd.f32 %v528, %v536
    %v539 = vtanh.pop %v538
    %541 = vrot.lane.b32.xlu0 %v539, 32
    %v542 = vpop.permute.xlu0 %541
    %v544 = vmul.f32 %v526, %v542
    %v545 = vrot.slane %v239, 2
    %v547 = vrot.slane %v244, 1
    %v549 = vsel %vm340, %v545, %v547
    %551 = vrot.lane.b32.xlu0 %v544, 80
    %v552 = vpop.permute.xlu0 %551
    %v553 = vsel %vm342, %v552, 0
    %555 = vmatprep.subr.mxu0 0.0
    %556 = vmatpush1.msra.mxu0 %v333
    %557 = vmatprep.subr.mxu0 0.0
    %558 = vmatpush1.msra.mxu0 %v334
    %559 = vmatprep.subr.mxu0 0.0
    %560 = vmatpush1.msra.mxu0 0.0
    %561 = vmatprep.subr.mxu0 0.0
    %562 = vmatpush1.msra.mxu0 0.0
    %563 = vmatprep.subr.mxu0 0.0
    %564 = vmatpush1.msra.mxu0 0.0
    %565 = vmatprep.subr.mxu0 0.0
    %566 = vmatpush1.msra.mxu0 0.0
    %567 = vmatprep.subr.mxu0 0.0
    %568 = vmatpush1.msra.mxu0 0.0
    %569 = vmatprep.subr.mxu0 0.0
    %570 = vmatpush1.msra.mxu0 0.0
    %571 = vmatprep.subr.mxu0 0.0
    %572 = vmatpush1.msra.mxu0 0.0
    %573 = vmatprep.subr.mxu0 0.0
    %574 = vmatpush1.msra.mxu0 0.0
    %575 = vmatprep.subr.mxu0 0.0
    %576 = vmatpush1.msra.mxu0 0.0
    %577 = vmatprep.subr.mxu0 0.0
    %578 = vmatpush1.msra.mxu0 0.0
    %579 = vmatprep.subr.mxu0 0.0
    %580 = vmatpush1.msra.mxu0 0.0
    %581 = vmatprep.subr.mxu0 0.0
    %582 = vmatpush1.msra.mxu0 0.0
    %583 = vmatprep.subr.mxu0 0.0
    %584 = vmatpush1.msra.mxu0 0.0
    %585 = vmatprep.subr.mxu0 0.0
    %586 = vmatpush1.msra.mxu0 0.0
    %587 = vmatprep.subr.mxu0 0.0
    %588 = vmatpush1.msra.mxu0 0.0
    %589 = vmatprep.subr.mxu0 0.0
    %590 = vmatpush1.msra.mxu0 0.0
    %591 = vmatprep.subr.mxu0 0.0
    %592 = vmatpush1.msra.mxu0 0.0
    %593 = vmatprep.subr.mxu0 0.0
    %594 = vmatpush1.msra.mxu0 0.0
    %595 = vmatprep.subr.mxu0 0.0
    %596 = vmatpush1.msra.mxu0 0.0
    %597 = vmatprep.subr.mxu0 0.0
    %598 = vmatpush1.msra.mxu0 0.0
    %599 = vmatprep.subr.mxu0 0.0
    %600 = vmatpush1.msra.mxu0 0.0
    %601 = vmatprep.subr.mxu0 0.0
    %602 = vmatpush1.msra.mxu0 0.0
    %603 = vmatprep.subr.mxu0 0.0
    %604 = vmatpush1.msra.mxu0 0.0
    %605 = vmatprep.subr.mxu0 0.0
    %606 = vmatpush1.msra.mxu0 0.0
    %607 = vmatprep.subr.mxu0 0.0
    %608 = vmatpush1.msra.mxu0 0.0
    %609 = vmatprep.subr.mxu0 0.0
    %610 = vmatpush1.msra.mxu0 0.0
    %611 = vmatprep.subr.mxu0 0.0
    %612 = vmatpush1.msra.mxu0 0.0
    %613 = vmatprep.subr.mxu0 0.0
    %614 = vmatpush1.msra.mxu0 0.0
    %615 = vmatprep.subr.mxu0 0.0
    %616 = vmatpush1.msra.mxu0 0.0
    %617 = vmatprep.subr.mxu0 0.0
    %618 = vmatpush1.msra.mxu0 0.0
    %619 = vmatprep.mubr.f32.mxu0 0.0
    %620 = vmatmul.mubr.f32.gmra.mrb[0].mxu0 %v553
    %v621 = vpop.f32.mrb[0].mxu0
    %v622 = vadd.f32 0.0, %v621
    %v623 = vpop.f32.mrb[0].mxu0
    %624 = vdwg.mxu0
    %v625 = vadd.f32 %v549, %v622
    %v626 = vxor.u32 %v625, 2147483648
    %v627 = vmul.f32 %v626, 1.442695
    %v628 = vpow.pop %v627
    %v629 = vadd.f32 %v628, 1.0
    %v630 = vrcp.pop %v629
    %v631 = vmul.f32 1.0, %v630
    %v632 = vtanh.pop %v625
    %v633 = vmul.f32 %v631, %v538
    %635 = vrot.lane.b32.xlu0 %v632, 96
    %v636 = vpop.permute.xlu0 %635
    %v638 = vmul.f32 %v631, %v636
    %640 = vrot.lane.b32.xlu0 %v638, 16
    %v641 = vpop.permute.xlu0 %640
    %v643 = vadd.f32 %v633, %v641
    %v644 = vtanh.pop %v643
    %646 = vrot.lane.b32.xlu0 %v644, 32
    %v647 = vpop.permute.xlu0 %646
    %v649 = vmul.f32 %v631, %v647
    %v650 = vrot.slane %v239, 3
    %v652 = vrot.slane %v244, 2
    %v654 = vsel %vm340, %v650, %v652
    %656 = vrot.lane.b32.xlu0 %v649, 80
    %v657 = vpop.permute.xlu0 %656
    %v658 = vsel %vm342, %v657, 0
    %660 = vmatprep.subr.mxu0 0.0
    %661 = vmatpush1.msra.mxu0 %v333
    %662 = vmatprep.subr.mxu0 0.0
    %663 = vmatpush1.msra.mxu0 %v334
    %664 = vmatprep.subr.mxu0 0.0
    %665 = vmatpush1.msra.mxu0 0.0
    %666 = vmatprep.subr.mxu0 0.0
    %667 = vmatpush1.msra.mxu0 0.0
    %668 = vmatprep.subr.mxu0 0.0
    %669 = vmatpush1.msra.mxu0 0.0
    %670 = vmatprep.subr.mxu0 0.0
    %671 = vmatpush1.msra.mxu0 0.0
    %672 = vmatprep.subr.mxu0 0.0
    %673 = vmatpush1.msra.mxu0 0.0
    %674 = vmatprep.subr.mxu0 0.0
    %675 = vmatpush1.msra.mxu0 0.0
    %676 = vmatprep.subr.mxu0 0.0
    %677 = vmatpush1.msra.mxu0 0.0
    %678 = vmatprep.subr.mxu0 0.0
    %679 = vmatpush1.msra.mxu0 0.0
    %680 = vmatprep.subr.mxu0 0.0
    %681 = vmatpush1.msra.mxu0 0.0
    %682 = vmatprep.subr.mxu0 0.0
    %683 = vmatpush1.msra.mxu0 0.0
    %684 = vmatprep.subr.mxu0 0.0
    %685 = vmatpush1.msra.mxu0 0.0
    %686 = vmatprep.subr.mxu0 0.0
    %687 = vmatpush1.msra.mxu0 0.0
    %688 = vmatprep.subr.mxu0 0.0
    %689 = vmatpush1.msra.mxu0 0.0
    %690 = vmatprep.subr.mxu0 0.0
    %691 = vmatpush1.msra.mxu0 0.0
    %692 = vmatprep.subr.mxu0 0.0
    %693 = vmatpush1.msra.mxu0 0.0
    %694 = vmatprep.subr.mxu0 0.0
    %695 = vmatpush1.msra.mxu0 0.0
    %696 = vmatprep.subr.mxu0 0.0
    %697 = vmatpush1.msra.mxu0 0.0
    %698 = vmatprep.subr.mxu0 0.0
    %699 = vmatpush1.msra.mxu0 0.0
    %700 = vmatprep.subr.mxu0 0.0
    %701 = vmatpush1.msra.mxu0 0.0
    %702 = vmatprep.subr.mxu0 0.0
    %703 = vmatpush1.msra.mxu0 0.0
    %704 = vmatprep.subr.mxu0 0.0
    %705 = vmatpush1.msra.mxu0 0.0
    %706 = vmatprep.subr.mxu0 0.0
    %707 = vmatpush1.msra.mxu0 0.0
    %708 = vmatprep.subr.mxu0 0.0
    %709 = vmatpush1.msra.mxu0 0.0
    %710 = vmatprep.subr.mxu0 0.0
    %711 = vmatpush1.msra.mxu0 0.0
    %712 = vmatprep.subr.mxu0 0.0
    %713 = vmatpush1.msra.mxu0 0.0
    %714 = vmatprep.subr.mxu0 0.0
    %715 = vmatpush1.msra.mxu0 0.0
    %716 = vmatprep.subr.mxu0 0.0
    %717 = vmatpush1.msra.mxu0 0.0
    %718 = vmatprep.subr.mxu0 0.0
    %719 = vmatpush1.msra.mxu0 0.0
    %720 = vmatprep.subr.mxu0 0.0
    %721 = vmatpush1.msra.mxu0 0.0
    %722 = vmatprep.subr.mxu0 0.0
    %723 = vmatpush1.msra.mxu0 0.0
    %724 = vmatprep.mubr.f32.mxu0 0.0
    %725 = vmatmul.mubr.f32.gmra.mrb[0].mxu0 %v658
    %v726 = vpop.f32.mrb[0].mxu0
    %v727 = vadd.f32 0.0, %v726
    %v728 = vpop.f32.mrb[0].mxu0
    %729 = vdwg.mxu0
    %v730 = vadd.f32 %v654, %v727
    %v731 = vxor.u32 %v730, 2147483648
    %v732 = vmul.f32 %v731, 1.442695
    %v733 = vpow.pop %v732
    %v734 = vadd.f32 %v733, 1.0
    %v735 = vrcp.pop %v734
    %v736 = vmul.f32 1.0, %v735
    %v737 = vtanh.pop %v730
    %v738 = vmul.f32 %v736, %v643
    %740 = vrot.lane.b32.xlu0 %v737, 96
    %v741 = vpop.permute.xlu0 %740
    %v743 = vmul.f32 %v736, %v741
    %745 = vrot.lane.b32.xlu0 %v743, 16
    %v746 = vpop.permute.xlu0 %745
    %v748 = vadd.f32 %v738, %v746
    %v749 = vtanh.pop %v748
    %751 = vrot.lane.b32.xlu0 %v749, 32
    %v752 = vpop.permute.xlu0 %751
    %v754 = vmul.f32 %v736, %v752
    %v755 = vrot.slane %v239, 4
    %v757 = vrot.slane %v244, 3
    %v759 = vsel %vm340, %v755, %v757
    %761 = vrot.lane.b32.xlu0 %v754, 80
    %v762 = vpop.permute.xlu0 %761
    %v763 = vsel %vm342, %v762, 0
    %765 = vmatprep.subr.mxu0 0.0
    %766 = vmatpush1.msra.mxu0 %v333
    %767 = vmatprep.subr.mxu0 0.0
    %768 = vmatpush1.msra.mxu0 %v334
    %769 = vmatprep.subr.mxu0 0.0
    %770 = vmatpush1.msra.mxu0 0.0
    %771 = vmatprep.subr.mxu0 0.0
    %772 = vmatpush1.msra.mxu0 0.0
    %773 = vmatprep.subr.mxu0 0.0
    %774 = vmatpush1.msra.mxu0 0.0
    %775 = vmatprep.subr.mxu0 0.0
    %776 = vmatpush1.msra.mxu0 0.0
    %777 = vmatprep.subr.mxu0 0.0
    %778 = vmatpush1.msra.mxu0 0.0
    %779 = vmatprep.subr.mxu0 0.0
    %780 = vmatpush1.msra.mxu0 0.0
    %781 = vmatprep.subr.mxu0 0.0
    %782 = vmatpush1.msra.mxu0 0.0
    %783 = vmatprep.subr.mxu0 0.0
    %784 = vmatpush1.msra.mxu0 0.0
    %785 = vmatprep.subr.mxu0 0.0
    %786 = vmatpush1.msra.mxu0 0.0
    %787 = vmatprep.subr.mxu0 0.0
    %788 = vmatpush1.msra.mxu0 0.0
    %789 = vmatprep.subr.mxu0 0.0
    %790 = vmatpush1.msra.mxu0 0.0
    %791 = vmatprep.subr.mxu0 0.0
    %792 = vmatpush1.msra.mxu0 0.0
    %793 = vmatprep.subr.mxu0 0.0
    %794 = vmatpush1.msra.mxu0 0.0
    %795 = vmatprep.subr.mxu0 0.0
    %796 = vmatpush1.msra.mxu0 0.0
    %797 = vmatprep.subr.mxu0 0.0
    %798 = vmatpush1.msra.mxu0 0.0
    %799 = vmatprep.subr.mxu0 0.0
    %800 = vmatpush1.msra.mxu0 0.0
    %801 = vmatprep.subr.mxu0 0.0
    %802 = vmatpush1.msra.mxu0 0.0
    %803 = vmatprep.subr.mxu0 0.0
    %804 = vmatpush1.msra.mxu0 0.0
    %805 = vmatprep.subr.mxu0 0.0
    %806 = vmatpush1.msra.mxu0 0.0
    %807 = vmatprep.subr.mxu0 0.0
    %808 = vmatpush1.msra.mxu0 0.0
    %809 = vmatprep.subr.mxu0 0.0
    %810 = vmatpush1.msra.mxu0 0.0
    %811 = vmatprep.subr.mxu0 0.0
    %812 = vmatpush1.msra.mxu0 0.0
    %813 = vmatprep.subr.mxu0 0.0
    %814 = vmatpush1.msra.mxu0 0.0
    %815 = vmatprep.subr.mxu0 0.0
    %816 = vmatpush1.msra.mxu0 0.0
    %817 = vmatprep.subr.mxu0 0.0
    %818 = vmatpush1.msra.mxu0 0.0
    %819 = vmatprep.subr.mxu0 0.0
    %820 = vmatpush1.msra.mxu0 0.0
    %821 = vmatprep.subr.mxu0 0.0
    %822 = vmatpush1.msra.mxu0 0.0
    %823 = vmatprep.subr.mxu0 0.0
    %824 = vmatpush1.msra.mxu0 0.0
    %825 = vmatprep.subr.mxu0 0.0
    %826 = vmatpush1.msra.mxu0 0.0
    %827 = vmatprep.subr.mxu0 0.0
    %828 = vmatpush1.msra.mxu0 0.0
    %829 = vmatprep.mubr.f32.mxu0 0.0
    %830 = vmatmul.mubr.f32.gmra.mrb[0].mxu0 %v763
    %v831 = vpop.f32.mrb[0].mxu0
    %v832 = vadd.f32 0.0, %v831
    %v833 = vpop.f32.mrb[0].mxu0
    %834 = vdwg.mxu0
    %v835 = vadd.f32 %v759, %v832
    %v836 = vxor.u32 %v835, 2147483648
    %v837 = vmul.f32 %v836, 1.442695
    %v838 = vpow.pop %v837
    %v839 = vadd.f32 %v838, 1.0
    %v840 = vrcp.pop %v839
    %v841 = vmul.f32 1.0, %v840
    %v842 = vtanh.pop %v835
    %v843 = vmul.f32 %v841, %v748
    %845 = vrot.lane.b32.xlu0 %v842, 96
    %v846 = vpop.permute.xlu0 %845
    %v848 = vmul.f32 %v841, %v846
    %850 = vrot.lane.b32.xlu0 %v848, 16
    %v851 = vpop.permute.xlu0 %850
    %v853 = vadd.f32 %v843, %v851
    %v854 = vtanh.pop %v853
    %856 = vrot.lane.b32.xlu0 %v854, 32
    %v857 = vpop.permute.xlu0 %856
    %v859 = vmul.f32 %v841, %v857
    %v860 = vrot.slane %v239, 5
    %v862 = vrot.slane %v244, 4
    %v864 = vsel %vm340, %v860, %v862
    %866 = vrot.lane.b32.xlu0 %v859, 80
    %v867 = vpop.permute.xlu0 %866
    %v868 = vsel %vm342, %v867, 0
    %870 = vmatprep.subr.mxu0 0.0
    %871 = vmatpush1.msra.mxu0 %v333
    %872 = vmatprep.subr.mxu0 0.0
    %873 = vmatpush1.msra.mxu0 %v334
    %874 = vmatprep.subr.mxu0 0.0
    %875 = vmatpush1.msra.mxu0 0.0
    %876 = vmatprep.subr.mxu0 0.0
    %877 = vmatpush1.msra.mxu0 0.0
    %878 = vmatprep.subr.mxu0 0.0
    %879 = vmatpush1.msra.mxu0 0.0
    %880 = vmatprep.subr.mxu0 0.0
    %881 = vmatpush1.msra.mxu0 0.0
    %882 = vmatprep.subr.mxu0 0.0
    %883 = vmatpush1.msra.mxu0 0.0
    %884 = vmatprep.subr.mxu0 0.0
    %885 = vmatpush1.msra.mxu0 0.0
    %886 = vmatprep.subr.mxu0 0.0
    %887 = vmatpush1.msra.mxu0 0.0
    %888 = vmatprep.subr.mxu0 0.0
    %889 = vmatpush1.msra.mxu0 0.0
    %890 = vmatprep.subr.mxu0 0.0
    %891 = vmatpush1.msra.mxu0 0.0
    %892 = vmatprep.subr.mxu0 0.0
    %893 = vmatpush1.msra.mxu0 0.0
    %894 = vmatprep.subr.mxu0 0.0
    %895 = vmatpush1.msra.mxu0 0.0
    %896 = vmatprep.subr.mxu0 0.0
    %897 = vmatpush1.msra.mxu0 0.0
    %898 = vmatprep.subr.mxu0 0.0
    %899 = vmatpush1.msra.mxu0 0.0
    %900 = vmatprep.subr.mxu0 0.0
    %901 = vmatpush1.msra.mxu0 0.0
    %902 = vmatprep.subr.mxu0 0.0
    %903 = vmatpush1.msra.mxu0 0.0
    %904 = vmatprep.subr.mxu0 0.0
    %905 = vmatpush1.msra.mxu0 0.0
    %906 = vmatprep.subr.mxu0 0.0
    %907 = vmatpush1.msra.mxu0 0.0
    %908 = vmatprep.subr.mxu0 0.0
    %909 = vmatpush1.msra.mxu0 0.0
    %910 = vmatprep.subr.mxu0 0.0
    %911 = vmatpush1.msra.mxu0 0.0
    %912 = vmatprep.subr.mxu0 0.0
    %913 = vmatpush1.msra.mxu0 0.0
    %914 = vmatprep.subr.mxu0 0.0
    %915 = vmatpush1.msra.mxu0 0.0
    %916 = vmatprep.subr.mxu0 0.0
    %917 = vmatpush1.msra.mxu0 0.0
    %918 = vmatprep.subr.mxu0 0.0
    %919 = vmatpush1.msra.mxu0 0.0
    %920 = vmatprep.subr.mxu0 0.0
    %921 = vmatpush1.msra.mxu0 0.0
    %922 = vmatprep.subr.mxu0 0.0
    %923 = vmatpush1.msra.mxu0 0.0
    %924 = vmatprep.subr.mxu0 0.0
    %925 = vmatpush1.msra.mxu0 0.0
    %926 = vmatprep.subr.mxu0 0.0
    %927 = vmatpush1.msra.mxu0 0.0
    %928 = vmatprep.subr.mxu0 0.0
    %929 = vmatpush1.msra.mxu0 0.0
    %930 = vmatprep.subr.mxu0 0.0
    %931 = vmatpush1.msra.mxu0 0.0
    %932 = vmatprep.subr.mxu0 0.0
    %933 = vmatpush1.msra.mxu0 0.0
    %934 = vmatprep.mubr.f32.mxu0 0.0
    %935 = vmatmul.mubr.f32.gmra.mrb[0].mxu0 %v868
    %v936 = vpop.f32.mrb[0].mxu0
    %v937 = vadd.f32 0.0, %v936
    %v938 = vpop.f32.mrb[0].mxu0
    %939 = vdwg.mxu0
    %v940 = vadd.f32 %v864, %v937
    %v941 = vxor.u32 %v940, 2147483648
    %v942 = vmul.f32 %v941, 1.442695
    %v943 = vpow.pop %v942
    %v944 = vadd.f32 %v943, 1.0
    %v945 = vrcp.pop %v944
    %v946 = vmul.f32 1.0, %v945
    %v947 = vtanh.pop %v940
    %v948 = vmul.f32 %v946, %v853
    %950 = vrot.lane.b32.xlu0 %v947, 96
    %v951 = vpop.permute.xlu0 %950
    %v953 = vmul.f32 %v946, %v951
    %955 = vrot.lane.b32.xlu0 %v953, 16
    %v956 = vpop.permute.xlu0 %955
    %v958 = vadd.f32 %v948, %v956
    %v959 = vtanh.pop %v958
    %961 = vrot.lane.b32.xlu0 %v959, 32
    %v962 = vpop.permute.xlu0 %961
    %v964 = vmul.f32 %v946, %v962
    %v965 = vrot.slane %v239, 6
    %v967 = vrot.slane %v244, 5
    %v969 = vsel %vm340, %v965, %v967
    %971 = vrot.lane.b32.xlu0 %v964, 80
    %v972 = vpop.permute.xlu0 %971
    %v973 = vsel %vm342, %v972, 0
    %975 = vmatprep.subr.mxu0 0.0
    %976 = vmatpush1.msra.mxu0 %v333
    %977 = vmatprep.subr.mxu0 0.0
    %978 = vmatpush1.msra.mxu0 %v334
    %979 = vmatprep.subr.mxu0 0.0
    %980 = vmatpush1.msra.mxu0 0.0
    %981 = vmatprep.subr.mxu0 0.0
    %982 = vmatpush1.msra.mxu0 0.0
    %983 = vmatprep.subr.mxu0 0.0
    %984 = vmatpush1.msra.mxu0 0.0
    %985 = vmatprep.subr.mxu0 0.0
    %986 = vmatpush1.msra.mxu0 0.0
    %987 = vmatprep.subr.mxu0 0.0
    %988 = vmatpush1.msra.mxu0 0.0
    %989 = vmatprep.subr.mxu0 0.0
    %990 = vmatpush1.msra.mxu0 0.0
    %991 = vmatprep.subr.mxu0 0.0
    %992 = vmatpush1.msra.mxu0 0.0
    %993 = vmatprep.subr.mxu0 0.0
    %994 = vmatpush1.msra.mxu0 0.0
    %995 = vmatprep.subr.mxu0 0.0
    %996 = vmatpush1.msra.mxu0 0.0
    %997 = vmatprep.subr.mxu0 0.0
    %998 = vmatpush1.msra.mxu0 0.0
    %999 = vmatprep.subr.mxu0 0.0
    %1000 = vmatpush1.msra.mxu0 0.0
    %1001 = vmatprep.subr.mxu0 0.0
    %1002 = vmatpush1.msra.mxu0 0.0
    %1003 = vmatprep.subr.mxu0 0.0
    %1004 = vmatpush1.msra.mxu0 0.0
    %1005 = vmatprep.subr.mxu0 0.0
    %1006 = vmatpush1.msra.mxu0 0.0
    %1007 = vmatprep.subr.mxu0 0.0
    %1008 = vmatpush1.msra.mxu0 0.0
    %1009 = vmatprep.subr.mxu0 0.0
    %1010 = vmatpush1.msra.mxu0 0.0
    %1011 = vmatprep.subr.mxu0 0.0
    %1012 = vmatpush1.msra.mxu0 0.0
    %1013 = vmatprep.subr.mxu0 0.0
    %1014 = vmatpush1.msra.mxu0 0.0
    %1015 = vmatprep.subr.mxu0 0.0
    %1016 = vmatpush1.msra.mxu0 0.0
    %1017 = vmatprep.subr.mxu0 0.0
    %1018 = vmatpush1.msra.mxu0 0.0
    %1019 = vmatprep.subr.mxu0 0.0
    %1020 = vmatpush1.msra.mxu0 0.0
    %1021 = vmatprep.subr.mxu0 0.0
    %1022 = vmatpush1.msra.mxu0 0.0
    %1023 = vmatprep.subr.mxu0 0.0
    %1024 = vmatpush1.msra.mxu0 0.0
    %1025 = vmatprep.subr.mxu0 0.0
    %1026 = vmatpush1.msra.mxu0 0.0
    %1027 = vmatprep.subr.mxu0 0.0
    %1028 = vmatpush1.msra.mxu0 0.0
    %1029 = vmatprep.subr.mxu0 0.0
    %1030 = vmatpush1.msra.mxu0 0.0
    %1031 = vmatprep.subr.mxu0 0.0
    %1032 = vmatpush1.msra.mxu0 0.0
    %1033 = vmatprep.subr.mxu0 0.0
    %1034 = vmatpush1.msra.mxu0 0.0
    %1035 = vmatprep.subr.mxu0 0.0
    %1036 = vmatpush1.msra.mxu0 0.0
    %1037 = vmatprep.subr.mxu0 0.0
    %1038 = vmatpush1.msra.mxu0 0.0
    %1039 = vmatprep.mubr.f32.mxu0 0.0
    %1040 = vmatmul.mubr.f32.gmra.mrb[0].mxu0 %v973
    %v1041 = vpop.f32.mrb[0].mxu0
    %v1042 = vadd.f32 0.0, %v1041
    %v1043 = vpop.f32.mrb[0].mxu0
    %1044 = vdwg.mxu0
    %v1045 = vadd.f32 %v969, %v1042
    %v1046 = vxor.u32 %v1045, 2147483648
    %v1047 = vmul.f32 %v1046, 1.442695
    %v1048 = vpow.pop %v1047
    %v1049 = vadd.f32 %v1048, 1.0
    %v1050 = vrcp.pop %v1049
    %v1051 = vmul.f32 1.0, %v1050
    %v1052 = vtanh.pop %v1045
    %v1053 = vmul.f32 %v1051, %v958
    %1055 = vrot.lane.b32.xlu0 %v1052, 96
    %v1056 = vpop.permute.xlu0 %1055
    %v1058 = vmul.f32 %v1051, %v1056
    %1060 = vrot.lane.b32.xlu0 %v1058, 16
    %v1061 = vpop.permute.xlu0 %1060
    %v1063 = vadd.f32 %v1053, %v1061
    %v1064 = vtanh.pop %v1063
    %1066 = vrot.lane.b32.xlu0 %v1064, 32
    %v1067 = vpop.permute.xlu0 %1066
    %v1069 = vmul.f32 %v1051, %v1067
    %v1070 = vrot.slane %v239, 7
    %v1072 = vrot.slane %v244, 6
    %v1074 = vsel %vm340, %v1070, %v1072
    %1076 = vrot.lane.b32.xlu0 %v1069, 80
    %v1077 = vpop.permute.xlu0 %1076
    %v1078 = vsel %vm342, %v1077, 0
    %1080 = vmatprep.subr.mxu0 0.0
    %1081 = vmatpush1.msra.mxu0 %v333
    %1082 = vmatprep.subr.mxu0 0.0
    %1083 = vmatpush1.msra.mxu0 %v334
    %1084 = vmatprep.subr.mxu0 0.0
    %1085 = vmatpush1.msra.mxu0 0.0
    %1086 = vmatprep.subr.mxu0 0.0
    %1087 = vmatpush1.msra.mxu0 0.0
    %1088 = vmatprep.subr.mxu0 0.0
    %1089 = vmatpush1.msra.mxu0 0.0
    %1090 = vmatprep.subr.mxu0 0.0
    %1091 = vmatpush1.msra.mxu0 0.0
    %1092 = vmatprep.subr.mxu0 0.0
    %1093 = vmatpush1.msra.mxu0 0.0
    %1094 = vmatprep.subr.mxu0 0.0
    %1095 = vmatpush1.msra.mxu0 0.0
    %1096 = vmatprep.subr.mxu0 0.0
    %1097 = vmatpush1.msra.mxu0 0.0
    %1098 = vmatprep.subr.mxu0 0.0
    %1099 = vmatpush1.msra.mxu0 0.0
    %1100 = vmatprep.subr.mxu0 0.0
    %1101 = vmatpush1.msra.mxu0 0.0
    %1102 = vmatprep.subr.mxu0 0.0
    %1103 = vmatpush1.msra.mxu0 0.0
    %1104 = vmatprep.subr.mxu0 0.0
    %1105 = vmatpush1.msra.mxu0 0.0
    %1106 = vmatprep.subr.mxu0 0.0
    %1107 = vmatpush1.msra.mxu0 0.0
    %1108 = vmatprep.subr.mxu0 0.0
    %1109 = vmatpush1.msra.mxu0 0.0
    %1110 = vmatprep.subr.mxu0 0.0
    %1111 = vmatpush1.msra.mxu0 0.0
    %1112 = vmatprep.subr.mxu0 0.0
    %1113 = vmatpush1.msra.mxu0 0.0
    %1114 = vmatprep.subr.mxu0 0.0
    %1115 = vmatpush1.msra.mxu0 0.0
    %1116 = vmatprep.subr.mxu0 0.0
    %1117 = vmatpush1.msra.mxu0 0.0
    %1118 = vmatprep.subr.mxu0 0.0
    %1119 = vmatpush1.msra.mxu0 0.0
    %1120 = vmatprep.subr.mxu0 0.0
    %1121 = vmatpush1.msra.mxu0 0.0
    %1122 = vmatprep.subr.mxu0 0.0
    %1123 = vmatpush1.msra.mxu0 0.0
    %1124 = vmatprep.subr.mxu0 0.0
    %1125 = vmatpush1.msra.mxu0 0.0
    %1126 = vmatprep.subr.mxu0 0.0
    %1127 = vmatpush1.msra.mxu0 0.0
    %1128 = vmatprep.subr.mxu0 0.0
    %1129 = vmatpush1.msra.mxu0 0.0
    %1130 = vmatprep.subr.mxu0 0.0
    %1131 = vmatpush1.msra.mxu0 0.0
    %1132 = vmatprep.subr.mxu0 0.0
    %1133 = vmatpush1.msra.mxu0 0.0
    %1134 = vmatprep.subr.mxu0 0.0
    %1135 = vmatpush1.msra.mxu0 0.0
    %1136 = vmatprep.subr.mxu0 0.0
    %1137 = vmatpush1.msra.mxu0 0.0
    %1138 = vmatprep.subr.mxu0 0.0
    %1139 = vmatpush1.msra.mxu0 0.0
    %1140 = vmatprep.subr.mxu0 0.0
    %1141 = vmatpush1.msra.mxu0 0.0
    %1142 = vmatprep.subr.mxu0 0.0
    %1143 = vmatpush1.msra.mxu0 0.0
    %1144 = vmatprep.mubr.f32.mxu0 0.0
    %1145 = vmatmul.mubr.f32.gmra.mrb[0].mxu0 %v1078
    %v1146 = vpop.f32.mrb[0].mxu0
    %v1147 = vadd.f32 0.0, %v1146
    %v1148 = vpop.f32.mrb[0].mxu0
    %1149 = vdwg.mxu0
    %v1150 = vadd.f32 %v1074, %v1147
    %v1151 = vxor.u32 %v1150, 2147483648
    %v1152 = vmul.f32 %v1151, 1.442695
    %v1153 = vpow.pop %v1152
    %v1154 = vadd.f32 %v1153, 1.0
    %v1155 = vrcp.pop %v1154
    %v1156 = vmul.f32 1.0, %v1155
    %v1157 = vtanh.pop %v1150
    %v1158 = vmul.f32 %v1156, %v1063
    %1160 = vrot.lane.b32.xlu0 %v1157, 96
    %v1161 = vpop.permute.xlu0 %1160
    %v1163 = vmul.f32 %v1156, %v1161
    %1165 = vrot.lane.b32.xlu0 %v1163, 16
    %v1166 = vpop.permute.xlu0 %1165
    %v1168 = vadd.f32 %v1158, %v1166
    %v1169 = vtanh.pop %v1168
    %1171 = vrot.lane.b32.xlu0 %v1169, 32
    %v1172 = vpop.permute.xlu0 %1171
    %v1174 = vmul.f32 %v1156, %v1172
    %v1176 = vrot.slane %v325, 7
    %v1179 = vrot.slane %v330, 6
    %v1181 = vsel %vm340, %v1176, %v1179
    %1182 = vmatprep.subr.mxu0 0.0
    %1183 = vmatpush1.msra.mxu0 %v335
    %1184 = vmatprep.subr.mxu0 0.0
    %1185 = vmatpush1.msra.mxu0 %v336
    %1186 = vmatprep.subr.mxu0 0.0
    %1187 = vmatpush1.msra.mxu0 0.0
    %1188 = vmatprep.subr.mxu0 0.0
    %1189 = vmatpush1.msra.mxu0 0.0
    %1190 = vmatprep.subr.mxu0 0.0
    %1191 = vmatpush1.msra.mxu0 0.0
    %1192 = vmatprep.subr.mxu0 0.0
    %1193 = vmatpush1.msra.mxu0 0.0
    %1194 = vmatprep.subr.mxu0 0.0
    %1195 = vmatpush1.msra.mxu0 0.0
    %1196 = vmatprep.subr.mxu0 0.0
    %1197 = vmatpush1.msra.mxu0 0.0
    %1198 = vmatprep.subr.mxu0 0.0
    %1199 = vmatpush1.msra.mxu0 0.0
    %1200 = vmatprep.subr.mxu0 0.0
    %1201 = vmatpush1.msra.mxu0 0.0
    %1202 = vmatprep.subr.mxu0 0.0
    %1203 = vmatpush1.msra.mxu0 0.0
    %1204 = vmatprep.subr.mxu0 0.0
    %1205 = vmatpush1.msra.mxu0 0.0
    %1206 = vmatprep.subr.mxu0 0.0
    %1207 = vmatpush1.msra.mxu0 0.0
    %1208 = vmatprep.subr.mxu0 0.0
    %1209 = vmatpush1.msra.mxu0 0.0
    %1210 = vmatprep.subr.mxu0 0.0
    %1211 = vmatpush1.msra.mxu0 0.0
    %1212 = vmatprep.subr.mxu0 0.0
    %1213 = vmatpush1.msra.mxu0 0.0
    %1214 = vmatprep.subr.mxu0 0.0
    %1215 = vmatpush1.msra.mxu0 0.0
    %1216 = vmatprep.subr.mxu0 0.0
    %1217 = vmatpush1.msra.mxu0 0.0
    %1218 = vmatprep.subr.mxu0 0.0
    %1219 = vmatpush1.msra.mxu0 0.0
    %1220 = vmatprep.subr.mxu0 0.0
    %1221 = vmatpush1.msra.mxu0 0.0
    %1222 = vmatprep.subr.mxu0 0.0
    %1223 = vmatpush1.msra.mxu0 0.0
    %1224 = vmatprep.subr.mxu0 0.0
    %1225 = vmatpush1.msra.mxu0 0.0
    %1226 = vmatprep.subr.mxu0 0.0
    %1227 = vmatpush1.msra.mxu0 0.0
    %1228 = vmatprep.subr.mxu0 0.0
    %1229 = vmatpush1.msra.mxu0 0.0
    %1230 = vmatprep.subr.mxu0 0.0
    %1231 = vmatpush1.msra.mxu0 0.0
    %1232 = vmatprep.subr.mxu0 0.0
    %1233 = vmatpush1.msra.mxu0 0.0
    %1234 = vmatprep.subr.mxu0 0.0
    %1235 = vmatpush1.msra.mxu0 0.0
    %1236 = vmatprep.subr.mxu0 0.0
    %1237 = vmatpush1.msra.mxu0 0.0
    %1238 = vmatprep.subr.mxu0 0.0
    %1239 = vmatpush1.msra.mxu0 0.0
    %1240 = vmatprep.subr.mxu0 0.0
    %1241 = vmatpush1.msra.mxu0 0.0
    %1242 = vmatprep.subr.mxu0 0.0
    %1243 = vmatpush1.msra.mxu0 0.0
    %1244 = vmatprep.subr.mxu0 0.0
    %1245 = vmatpush1.msra.mxu0 0.0
    %1246 = vmatprep.mubr.f32.mxu0 0.0
    %1247 = vmatmul.mubr.f32.gmra.mrb[0].mxu0 %v344
    %v1248 = vpop.f32.mrb[0].mxu0
    %v1249 = vadd.f32 0.0, %v1248
    %v1250 = vpop.f32.mrb[0].mxu0
    %1251 = vdwg.mxu0
    %v1252 = vadd.f32 %v1181, %v1249
    %v1253 = vxor.u32 %v1252, 2147483648
    %v1254 = vmul.f32 %v1253, 1.442695
    %v1255 = vpow.pop %v1254
    %v1256 = vadd.f32 %v1255, 1.0
    %v1257 = vrcp.pop %v1256
    %v1258 = vmul.f32 1.0, %v1257
    %v1259 = vtanh.pop %v1252
    %v1260 = vmul.f32 %v1258, 0.0
    %1262 = vrot.lane.b32.xlu0 %v1259, 96
    %v1263 = vpop.permute.xlu0 %1262
    %v1265 = vmul.f32 %v1258, %v1263
    %1267 = vrot.lane.b32.xlu0 %v1265, 16
    %v1268 = vpop.permute.xlu0 %1267
    %v1270 = vadd.f32 %v1260, %v1268
    %v1271 = vtanh.pop %v1270
    %1273 = vrot.lane.b32.xlu0 %v1271, 32
    %v1274 = vpop.permute.xlu0 %1273
    %v1276 = vmul.f32 %v1258, %v1274
    %v1277 = vrot.slane %v325, 6
    %v1279 = vrot.slane %v330, 5
    %v1281 = vsel %vm340, %v1277, %v1279
    %1283 = vrot.lane.b32.xlu0 %v1276, 80
    %v1284 = vpop.permute.xlu0 %1283
    %v1285 = vsel %vm342, %v1284, 0
    %1287 = vmatprep.subr.mxu0 0.0
    %1288 = vmatpush1.msra.mxu0 %v335
    %1289 = vmatprep.subr.mxu0 0.0
    %1290 = vmatpush1.msra.mxu0 %v336
    %1291 = vmatprep.subr.mxu0 0.0
    %1292 = vmatpush1.msra.mxu0 0.0
    %1293 = vmatprep.subr.mxu0 0.0
    %1294 = vmatpush1.msra.mxu0 0.0
    %1295 = vmatprep.subr.mxu0 0.0
    %1296 = vmatpush1.msra.mxu0 0.0
    %1297 = vmatprep.subr.mxu0 0.0
    %1298 = vmatpush1.msra.mxu0 0.0
    %1299 = vmatprep.subr.mxu0 0.0
    %1300 = vmatpush1.msra.mxu0 0.0
    %1301 = vmatprep.subr.mxu0 0.0
    %1302 = vmatpush1.msra.mxu0 0.0
    %1303 = vmatprep.subr.mxu0 0.0
    %1304 = vmatpush1.msra.mxu0 0.0
    %1305 = vmatprep.subr.mxu0 0.0
    %1306 = vmatpush1.msra.mxu0 0.0
    %1307 = vmatprep.subr.mxu0 0.0
    %1308 = vmatpush1.msra.mxu0 0.0
    %1309 = vmatprep.subr.mxu0 0.0
    %1310 = vmatpush1.msra.mxu0 0.0
    %1311 = vmatprep.subr.mxu0 0.0
    %1312 = vmatpush1.msra.mxu0 0.0
    %1313 = vmatprep.subr.mxu0 0.0
    %1314 = vmatpush1.msra.mxu0 0.0
    %1315 = vmatprep.subr.mxu0 0.0
    %1316 = vmatpush1.msra.mxu0 0.0
    %1317 = vmatprep.subr.mxu0 0.0
    %1318 = vmatpush1.msra.mxu0 0.0
    %1319 = vmatprep.subr.mxu0 0.0
    %1320 = vmatpush1.msra.mxu0 0.0
    %1321 = vmatprep.subr.mxu0 0.0
    %1322 = vmatpush1.msra.mxu0 0.0
    %1323 = vmatprep.subr.mxu0 0.0
    %1324 = vmatpush1.msra.mxu0 0.0
    %1325 = vmatprep.subr.mxu0 0.0
    %1326 = vmatpush1.msra.mxu0 0.0
    %1327 = vmatprep.subr.mxu0 0.0
    %1328 = vmatpush1.msra.mxu0 0.0
    %1329 = vmatprep.subr.mxu0 0.0
    %1330 = vmatpush1.msra.mxu0 0.0
    %1331 = vmatprep.subr.mxu0 0.0
    %1332 = vmatpush1.msra.mxu0 0.0
    %1333 = vmatprep.subr.mxu0 0.0
    %1334 = vmatpush1.msra.mxu0 0.0
    %1335 = vmatprep.subr.mxu0 0.0
    %1336 = vmatpush1.msra.mxu0 0.0
    %1337 = vmatprep.subr.mxu0 0.0
    %1338 = vmatpush1.msra.mxu0 0.0
    %1339 = vmatprep.subr.mxu0 0.0
    %1340 = vmatpush1.msra.mxu0 0.0
    %1341 = vmatprep.subr.mxu0 0.0
    %1342 = vmatpush1.msra.mxu0 0.0
    %1343 = vmatprep.subr.mxu0 0.0
    %1344 = vmatpush1.msra.mxu0 0.0
    %1345 = vmatprep.subr.mxu0 0.0
    %1346 = vmatpush1.msra.mxu0 0.0
    %1347 = vmatprep.subr.mxu0 0.0
    %1348 = vmatpush1.msra.mxu0 0.0
    %1349 = vmatprep.subr.mxu0 0.0
    %1350 = vmatpush1.msra.mxu0 0.0
    %1351 = vmatprep.mubr.f32.mxu0 0.0
    %1352 = vmatmul.mubr.f32.gmra.mrb[0].mxu0 %v1285
    %v1353 = vpop.f32.mrb[0].mxu0
    %v1354 = vadd.f32 0.0, %v1353
    %v1355 = vpop.f32.mrb[0].mxu0
    %1356 = vdwg.mxu0
    %v1357 = vadd.f32 %v1281, %v1354
    %v1358 = vxor.u32 %v1357, 2147483648
    %v1359 = vmul.f32 %v1358, 1.442695
    %v1360 = vpow.pop %v1359
    %v1361 = vadd.f32 %v1360, 1.0
    %v1362 = vrcp.pop %v1361
    %v1363 = vmul.f32 1.0, %v1362
    %v1364 = vtanh.pop %v1357
    %v1365 = vmul.f32 %v1363, %v1270
    %1367 = vrot.lane.b32.xlu0 %v1364, 96
    %v1368 = vpop.permute.xlu0 %1367
    %v1370 = vmul.f32 %v1363, %v1368
    %1372 = vrot.lane.b32.xlu0 %v1370, 16
    %v1373 = vpop.permute.xlu0 %1372
    %v1375 = vadd.f32 %v1365, %v1373
    %v1376 = vtanh.pop %v1375
    %1378 = vrot.lane.b32.xlu0 %v1376, 32
    %v1379 = vpop.permute.xlu0 %1378
    %v1381 = vmul.f32 %v1363, %v1379
    %v1382 = vrot.slane %v325, 5
    %v1384 = vrot.slane %v330, 4
    %v1386 = vsel %vm340, %v1382, %v1384
    %1388 = vrot.lane.b32.xlu0 %v1381, 80
    %v1389 = vpop.permute.xlu0 %1388
    %v1390 = vsel %vm342, %v1389, 0
    %1392 = vmatprep.subr.mxu0 0.0
    %1393 = vmatpush1.msra.mxu0 %v335
    %1394 = vmatprep.subr.mxu0 0.0
    %1395 = vmatpush1.msra.mxu0 %v336
    %1396 = vmatprep.subr.mxu0 0.0
    %1397 = vmatpush1.msra.mxu0 0.0
    %1398 = vmatprep.subr.mxu0 0.0
    %1399 = vmatpush1.msra.mxu0 0.0
    %1400 = vmatprep.subr.mxu0 0.0
    %1401 = vmatpush1.msra.mxu0 0.0
    %1402 = vmatprep.subr.mxu0 0.0
    %1403 = vmatpush1.msra.mxu0 0.0
    %1404 = vmatprep.subr.mxu0 0.0
    %1405 = vmatpush1.msra.mxu0 0.0
    %1406 = vmatprep.subr.mxu0 0.0
    %1407 = vmatpush1.msra.mxu0 0.0
    %1408 = vmatprep.subr.mxu0 0.0
    %1409 = vmatpush1.msra.mxu0 0.0
    %1410 = vmatprep.subr.mxu0 0.0
    %1411 = vmatpush1.msra.mxu0 0.0
    %1412 = vmatprep.subr.mxu0 0.0
    %1413 = vmatpush1.msra.mxu0 0.0
    %1414 = vmatprep.subr.mxu0 0.0
    %1415 = vmatpush1.msra.mxu0 0.0
    %1416 = vmatprep.subr.mxu0 0.0
    %1417 = vmatpush1.msra.mxu0 0.0
    %1418 = vmatprep.subr.mxu0 0.0
    %1419 = vmatpush1.msra.mxu0 0.0
    %1420 = vmatprep.subr.mxu0 0.0
    %1421 = vmatpush1.msra.mxu0 0.0
    %1422 = vmatprep.subr.mxu0 0.0
    %1423 = vmatpush1.msra.mxu0 0.0
    %1424 = vmatprep.subr.mxu0 0.0
    %1425 = vmatpush1.msra.mxu0 0.0
    %1426 = vmatprep.subr.mxu0 0.0
    %1427 = vmatpush1.msra.mxu0 0.0
    %1428 = vmatprep.subr.mxu0 0.0
    %1429 = vmatpush1.msra.mxu0 0.0
    %1430 = vmatprep.subr.mxu0 0.0
    %1431 = vmatpush1.msra.mxu0 0.0
    %1432 = vmatprep.subr.mxu0 0.0
    %1433 = vmatpush1.msra.mxu0 0.0
    %1434 = vmatprep.subr.mxu0 0.0
    %1435 = vmatpush1.msra.mxu0 0.0
    %1436 = vmatprep.subr.mxu0 0.0
    %1437 = vmatpush1.msra.mxu0 0.0
    %1438 = vmatprep.subr.mxu0 0.0
    %1439 = vmatpush1.msra.mxu0 0.0
    %1440 = vmatprep.subr.mxu0 0.0
    %1441 = vmatpush1.msra.mxu0 0.0
    %1442 = vmatprep.subr.mxu0 0.0
    %1443 = vmatpush1.msra.mxu0 0.0
    %1444 = vmatprep.subr.mxu0 0.0
    %1445 = vmatpush1.msra.mxu0 0.0
    %1446 = vmatprep.subr.mxu0 0.0
    %1447 = vmatpush1.msra.mxu0 0.0
    %1448 = vmatprep.subr.mxu0 0.0
    %1449 = vmatpush1.msra.mxu0 0.0
    %1450 = vmatprep.subr.mxu0 0.0
    %1451 = vmatpush1.msra.mxu0 0.0
    %1452 = vmatprep.subr.mxu0 0.0
    %1453 = vmatpush1.msra.mxu0 0.0
    %1454 = vmatprep.subr.mxu0 0.0
    %1455 = vmatpush1.msra.mxu0 0.0
    %1456 = vmatprep.mubr.f32.mxu0 0.0
    %1457 = vmatmul.mubr.f32.gmra.mrb[0].mxu0 %v1390
    %v1458 = vpop.f32.mrb[0].mxu0
    %v1459 = vadd.f32 0.0, %v1458
    %v1460 = vpop.f32.mrb[0].mxu0
    %1461 = vdwg.mxu0
    %v1462 = vadd.f32 %v1386, %v1459
    %v1463 = vxor.u32 %v1462, 2147483648
    %v1464 = vmul.f32 %v1463, 1.442695
    %v1465 = vpow.pop %v1464
    %v1466 = vadd.f32 %v1465, 1.0
    %v1467 = vrcp.pop %v1466
    %v1468 = vmul.f32 1.0, %v1467
    %v1469 = vtanh.pop %v1462
    %v1470 = vmul.f32 %v1468, %v1375
    %1472 = vrot.lane.b32.xlu0 %v1469, 96
    %v1473 = vpop.permute.xlu0 %1472
    %v1475 = vmul.f32 %v1468, %v1473
    %1477 = vrot.lane.b32.xlu0 %v1475, 16
    %v1478 = vpop.permute.xlu0 %1477
    %v1480 = vadd.f32 %v1470, %v1478
    %v1481 = vtanh.pop %v1480
    %1483 = vrot.lane.b32.xlu0 %v1481, 32
    %v1484 = vpop.permute.xlu0 %1483
    %v1486 = vmul.f32 %v1468, %v1484
    %v1487 = vrot.slane %v325, 4
    %v1489 = vrot.slane %v330, 3
    %v1491 = vsel %vm340, %v1487, %v1489
    %1493 = vrot.lane.b32.xlu0 %v1486, 80
    %v1494 = vpop.permute.xlu0 %1493
    %v1495 = vsel %vm342, %v1494, 0
    %1497 = vmatprep.subr.mxu0 0.0
    %1498 = vmatpush1.msra.mxu0 %v335
    %1499 = vmatprep.subr.mxu0 0.0
    %1500 = vmatpush1.msra.mxu0 %v336
    %1501 = vmatprep.subr.mxu0 0.0
    %1502 = vmatpush1.msra.mxu0 0.0
    %1503 = vmatprep.subr.mxu0 0.0
    %1504 = vmatpush1.msra.mxu0 0.0
    %1505 = vmatprep.subr.mxu0 0.0
    %1506 = vmatpush1.msra.mxu0 0.0
    %1507 = vmatprep.subr.mxu0 0.0
    %1508 = vmatpush1.msra.mxu0 0.0
    %1509 = vmatprep.subr.mxu0 0.0
    %1510 = vmatpush1.msra.mxu0 0.0
    %1511 = vmatprep.subr.mxu0 0.0
    %1512 = vmatpush1.msra.mxu0 0.0
    %1513 = vmatprep.subr.mxu0 0.0
    %1514 = vmatpush1.msra.mxu0 0.0
    %1515 = vmatprep.subr.mxu0 0.0
    %1516 = vmatpush1.msra.mxu0 0.0
    %1517 = vmatprep.subr.mxu0 0.0
    %1518 = vmatpush1.msra.mxu0 0.0
    %1519 = vmatprep.subr.mxu0 0.0
    %1520 = vmatpush1.msra.mxu0 0.0
    %1521 = vmatprep.subr.mxu0 0.0
    %1522 = vmatpush1.msra.mxu0 0.0
    %1523 = vmatprep.subr.mxu0 0.0
    %1524 = vmatpush1.msra.mxu0 0.0
    %1525 = vmatprep.subr.mxu0 0.0
    %1526 = vmatpush1.msra.mxu0 0.0
    %1527 = vmatprep.subr.mxu0 0.0
    %1528 = vmatpush1.msra.mxu0 0.0
    %1529 = vmatprep.subr.mxu0 0.0
    %1530 = vmatpush1.msra.mxu0 0.0
    %1531 = vmatprep.subr.mxu0 0.0
    %1532 = vmatpush1.msra.mxu0 0.0
    %1533 = vmatprep.subr.mxu0 0.0
    %1534 = vmatpush1.msra.mxu0 0.0
    %1535 = vmatprep.subr.mxu0 0.0
    %1536 = vmatpush1.msra.mxu0 0.0
    %1537 = vmatprep.subr.mxu0 0.0
    %1538 = vmatpush1.msra.mxu0 0.0
    %1539 = vmatprep.subr.mxu0 0.0
    %1540 = vmatpush1.msra.mxu0 0.0
    %1541 = vmatprep.subr.mxu0 0.0
    %1542 = vmatpush1.msra.mxu0 0.0
    %1543 = vmatprep.subr.mxu0 0.0
    %1544 = vmatpush1.msra.mxu0 0.0
    %1545 = vmatprep.subr.mxu0 0.0
    %1546 = vmatpush1.msra.mxu0 0.0
    %1547 = vmatprep.subr.mxu0 0.0
    %1548 = vmatpush1.msra.mxu0 0.0
    %1549 = vmatprep.subr.mxu0 0.0
    %1550 = vmatpush1.msra.mxu0 0.0
    %1551 = vmatprep.subr.mxu0 0.0
    %1552 = vmatpush1.msra.mxu0 0.0
    %1553 = vmatprep.subr.mxu0 0.0
    %1554 = vmatpush1.msra.mxu0 0.0
    %1555 = vmatprep.subr.mxu0 0.0
    %1556 = vmatpush1.msra.mxu0 0.0
    %1557 = vmatprep.subr.mxu0 0.0
    %1558 = vmatpush1.msra.mxu0 0.0
    %1559 = vmatprep.subr.mxu0 0.0
    %1560 = vmatpush1.msra.mxu0 0.0
    %1561 = vmatprep.mubr.f32.mxu0 0.0
    %1562 = vmatmul.mubr.f32.gmra.mrb[0].mxu0 %v1495
    %v1563 = vpop.f32.mrb[0].mxu0
    %v1564 = vadd.f32 0.0, %v1563
    %v1565 = vpop.f32.mrb[0].mxu0
    %1566 = vdwg.mxu0
    %v1567 = vadd.f32 %v1491, %v1564
    %v1568 = vxor.u32 %v1567, 2147483648
    %v1569 = vmul.f32 %v1568, 1.442695
    %v1570 = vpow.pop %v1569
    %v1571 = vadd.f32 %v1570, 1.0
    %v1572 = vrcp.pop %v1571
    %v1573 = vmul.f32 1.0, %v1572
    %v1574 = vtanh.pop %v1567
    %v1575 = vmul.f32 %v1573, %v1480
    %1577 = vrot.lane.b32.xlu0 %v1574, 96
    %v1578 = vpop.permute.xlu0 %1577
    %v1580 = vmul.f32 %v1573, %v1578
    %1582 = vrot.lane.b32.xlu0 %v1580, 16
    %v1583 = vpop.permute.xlu0 %1582
    %v1585 = vadd.f32 %v1575, %v1583
    %v1586 = vtanh.pop %v1585
    %1588 = vrot.lane.b32.xlu0 %v1586, 32
    %v1589 = vpop.permute.xlu0 %1588
    %v1591 = vmul.f32 %v1573, %v1589
    %v1592 = vrot.slane %v325, 3
    %v1594 = vrot.slane %v330, 2
    %v1596 = vsel %vm340, %v1592, %v1594
    %1598 = vrot.lane.b32.xlu0 %v1591, 80
    %v1599 = vpop.permute.xlu0 %1598
    %v1600 = vsel %vm342, %v1599, 0
    %1602 = vmatprep.subr.mxu0 0.0
    %1603 = vmatpush1.msra.mxu0 %v335
    %1604 = vmatprep.subr.mxu0 0.0
    %1605 = vmatpush1.msra.mxu0 %v336
    %1606 = vmatprep.subr.mxu0 0.0
    %1607 = vmatpush1.msra.mxu0 0.0
    %1608 = vmatprep.subr.mxu0 0.0
    %1609 = vmatpush1.msra.mxu0 0.0
    %1610 = vmatprep.subr.mxu0 0.0
    %1611 = vmatpush1.msra.mxu0 0.0
    %1612 = vmatprep.subr.mxu0 0.0
    %1613 = vmatpush1.msra.mxu0 0.0
    %1614 = vmatprep.subr.mxu0 0.0
    %1615 = vmatpush1.msra.mxu0 0.0
    %1616 = vmatprep.subr.mxu0 0.0
    %1617 = vmatpush1.msra.mxu0 0.0
    %1618 = vmatprep.subr.mxu0 0.0
    %1619 = vmatpush1.msra.mxu0 0.0
    %1620 = vmatprep.subr.mxu0 0.0
    %1621 = vmatpush1.msra.mxu0 0.0
    %1622 = vmatprep.subr.mxu0 0.0
    %1623 = vmatpush1.msra.mxu0 0.0
    %1624 = vmatprep.subr.mxu0 0.0
    %1625 = vmatpush1.msra.mxu0 0.0
    %1626 = vmatprep.subr.mxu0 0.0
    %1627 = vmatpush1.msra.mxu0 0.0
    %1628 = vmatprep.subr.mxu0 0.0
    %1629 = vmatpush1.msra.mxu0 0.0
    %1630 = vmatprep.subr.mxu0 0.0
    %1631 = vmatpush1.msra.mxu0 0.0
    %1632 = vmatprep.subr.mxu0 0.0
    %1633 = vmatpush1.msra.mxu0 0.0
    %1634 = vmatprep.subr.mxu0 0.0
    %1635 = vmatpush1.msra.mxu0 0.0
    %1636 = vmatprep.subr.mxu0 0.0
    %1637 = vmatpush1.msra.mxu0 0.0
    %1638 = vmatprep.subr.mxu0 0.0
    %1639 = vmatpush1.msra.mxu0 0.0
    %1640 = vmatprep.subr.mxu0 0.0
    %1641 = vmatpush1.msra.mxu0 0.0
    %1642 = vmatprep.subr.mxu0 0.0
    %1643 = vmatpush1.msra.mxu0 0.0
    %1644 = vmatprep.subr.mxu0 0.0
    %1645 = vmatpush1.msra.mxu0 0.0
    %1646 = vmatprep.subr.mxu0 0.0
    %1647 = vmatpush1.msra.mxu0 0.0
    %1648 = vmatprep.subr.mxu0 0.0
    %1649 = vmatpush1.msra.mxu0 0.0
    %1650 = vmatprep.subr.mxu0 0.0
    %1651 = vmatpush1.msra.mxu0 0.0
    %1652 = vmatprep.subr.mxu0 0.0
    %1653 = vmatpush1.msra.mxu0 0.0
    %1654 = vmatprep.subr.mxu0 0.0
    %1655 = vmatpush1.msra.mxu0 0.0
    %1656 = vmatprep.subr.mxu0 0.0
    %1657 = vmatpush1.msra.mxu0 0.0
    %1658 = vmatprep.subr.mxu0 0.0
    %1659 = vmatpush1.msra.mxu0 0.0
    %1660 = vmatprep.subr.mxu0 0.0
    %1661 = vmatpush1.msra.mxu0 0.0
    %1662 = vmatprep.subr.mxu0 0.0
    %1663 = vmatpush1.msra.mxu0 0.0
    %1664 = vmatprep.subr.mxu0 0.0
    %1665 = vmatpush1.msra.mxu0 0.0
    %1666 = vmatprep.mubr.f32.mxu0 0.0
    %1667 = vmatmul.mubr.f32.gmra.mrb[0].mxu0 %v1600
    %v1668 = vpop.f32.mrb[0].mxu0
    %v1669 = vadd.f32 0.0, %v1668
    %v1670 = vpop.f32.mrb[0].mxu0
    %1671 = vdwg.mxu0
    %v1672 = vadd.f32 %v1596, %v1669
    %v1673 = vxor.u32 %v1672, 2147483648
    %v1674 = vmul.f32 %v1673, 1.442695
    %v1675 = vpow.pop %v1674
    %v1676 = vadd.f32 %v1675, 1.0
    %v1677 = vrcp.pop %v1676
    %v1678 = vmul.f32 1.0, %v1677
    %v1679 = vtanh.pop %v1672
    %v1680 = vmul.f32 %v1678, %v1585
    %1682 = vrot.lane.b32.xlu0 %v1679, 96
    %v1683 = vpop.permute.xlu0 %1682
    %v1685 = vmul.f32 %v1678, %v1683
    %1687 = vrot.lane.b32.xlu0 %v1685, 16
    %v1688 = vpop.permute.xlu0 %1687
    %v1690 = vadd.f32 %v1680, %v1688
    %v1691 = vtanh.pop %v1690
    %1693 = vrot.lane.b32.xlu0 %v1691, 32
    %v1694 = vpop.permute.xlu0 %1693
    %v1696 = vmul.f32 %v1678, %v1694
    %v1697 = vrot.slane %v325, 2
    %v1699 = vrot.slane %v330, 1
    %v1701 = vsel %vm340, %v1697, %v1699
    %1703 = vrot.lane.b32.xlu0 %v1696, 80
    %v1704 = vpop.permute.xlu0 %1703
    %v1705 = vsel %vm342, %v1704, 0
    %1707 = vmatprep.subr.mxu0 0.0
    %1708 = vmatpush1.msra.mxu0 %v335
    %1709 = vmatprep.subr.mxu0 0.0
    %1710 = vmatpush1.msra.mxu0 %v336
    %1711 = vmatprep.subr.mxu0 0.0
    %1712 = vmatpush1.msra.mxu0 0.0
    %1713 = vmatprep.subr.mxu0 0.0
    %1714 = vmatpush1.msra.mxu0 0.0
    %1715 = vmatprep.subr.mxu0 0.0
    %1716 = vmatpush1.msra.mxu0 0.0
    %1717 = vmatprep.subr.mxu0 0.0
    %1718 = vmatpush1.msra.mxu0 0.0
    %1719 = vmatprep.subr.mxu0 0.0
    %1720 = vmatpush1.msra.mxu0 0.0
    %1721 = vmatprep.subr.mxu0 0.0
    %1722 = vmatpush1.msra.mxu0 0.0
    %1723 = vmatprep.subr.mxu0 0.0
    %1724 = vmatpush1.msra.mxu0 0.0
    %1725 = vmatprep.subr.mxu0 0.0
    %1726 = vmatpush1.msra.mxu0 0.0
    %1727 = vmatprep.subr.mxu0 0.0
    %1728 = vmatpush1.msra.mxu0 0.0
    %1729 = vmatprep.subr.mxu0 0.0
    %1730 = vmatpush1.msra.mxu0 0.0
    %1731 = vmatprep.subr.mxu0 0.0
    %1732 = vmatpush1.msra.mxu0 0.0
    %1733 = vmatprep.subr.mxu0 0.0
    %1734 = vmatpush1.msra.mxu0 0.0
    %1735 = vmatprep.subr.mxu0 0.0
    %1736 = vmatpush1.msra.mxu0 0.0
    %1737 = vmatprep.subr.mxu0 0.0
    %1738 = vmatpush1.msra.mxu0 0.0
    %1739 = vmatprep.subr.mxu0 0.0
    %1740 = vmatpush1.msra.mxu0 0.0
    %1741 = vmatprep.subr.mxu0 0.0
    %1742 = vmatpush1.msra.mxu0 0.0
    %1743 = vmatprep.subr.mxu0 0.0
    %1744 = vmatpush1.msra.mxu0 0.0
    %1745 = vmatprep.subr.mxu0 0.0
    %1746 = vmatpush1.msra.mxu0 0.0
    %1747 = vmatprep.subr.mxu0 0.0
    %1748 = vmatpush1.msra.mxu0 0.0
    %1749 = vmatprep.subr.mxu0 0.0
    %1750 = vmatpush1.msra.mxu0 0.0
    %1751 = vmatprep.subr.mxu0 0.0
    %1752 = vmatpush1.msra.mxu0 0.0
    %1753 = vmatprep.subr.mxu0 0.0
    %1754 = vmatpush1.msra.mxu0 0.0
    %1755 = vmatprep.subr.mxu0 0.0
    %1756 = vmatpush1.msra.mxu0 0.0
    %1757 = vmatprep.subr.mxu0 0.0
    %1758 = vmatpush1.msra.mxu0 0.0
    %1759 = vmatprep.subr.mxu0 0.0
    %1760 = vmatpush1.msra.mxu0 0.0
    %1761 = vmatprep.subr.mxu0 0.0
    %1762 = vmatpush1.msra.mxu0 0.0
    %1763 = vmatprep.subr.mxu0 0.0
    %1764 = vmatpush1.msra.mxu0 0.0
    %1765 = vmatprep.subr.mxu0 0.0
    %1766 = vmatpush1.msra.mxu0 0.0
    %1767 = vmatprep.subr.mxu0 0.0
    %1768 = vmatpush1.msra.mxu0 0.0
    %1769 = vmatprep.subr.mxu0 0.0
    %1770 = vmatpush1.msra.mxu0 0.0
    %1771 = vmatprep.mubr.f32.mxu0 0.0
    %1772 = vmatmul.mubr.f32.gmra.mrb[0].mxu0 %v1705
    %v1773 = vpop.f32.mrb[0].mxu0
    %v1774 = vadd.f32 0.0, %v1773
    %v1775 = vpop.f32.mrb[0].mxu0
    %1776 = vdwg.mxu0
    %v1777 = vadd.f32 %v1701, %v1774
    %v1778 = vxor.u32 %v1777, 2147483648
    %v1779 = vmul.f32 %v1778, 1.442695
    %v1780 = vpow.pop %v1779
    %v1781 = vadd.f32 %v1780, 1.0
    %v1782 = vrcp.pop %v1781
    %v1783 = vmul.f32 1.0, %v1782
    %v1784 = vtanh.pop %v1777
    %v1785 = vmul.f32 %v1783, %v1690
    %1787 = vrot.lane.b32.xlu0 %v1784, 96
    %v1788 = vpop.permute.xlu0 %1787
    %v1790 = vmul.f32 %v1783, %v1788
    %1792 = vrot.lane.b32.xlu0 %v1790, 16
    %v1793 = vpop.permute.xlu0 %1792
    %v1795 = vadd.f32 %v1785, %v1793
    %v1796 = vtanh.pop %v1795
    %1798 = vrot.lane.b32.xlu0 %v1796, 32
    %v1799 = vpop.permute.xlu0 %1798
    %v1801 = vmul.f32 %v1783, %v1799
    %v1802 = vrot.slane %v325, 1
    %v1804 = vsel %vm340, %v1802, %v330
    %1806 = vrot.lane.b32.xlu0 %v1801, 80
    %v1807 = vpop.permute.xlu0 %1806
    %v1808 = vsel %vm342, %v1807, 0
    %1810 = vmatprep.subr.mxu0 0.0
    %1811 = vmatpush1.msra.mxu0 %v335
    %1812 = vmatprep.subr.mxu0 0.0
    %1813 = vmatpush1.msra.mxu0 %v336
    %1814 = vmatprep.subr.mxu0 0.0
    %1815 = vmatpush1.msra.mxu0 0.0
    %1816 = vmatprep.subr.mxu0 0.0
    %1817 = vmatpush1.msra.mxu0 0.0
    %1818 = vmatprep.subr.mxu0 0.0
    %1819 = vmatpush1.msra.mxu0 0.0
    %1820 = vmatprep.subr.mxu0 0.0
    %1821 = vmatpush1.msra.mxu0 0.0
    %1822 = vmatprep.subr.mxu0 0.0
    %1823 = vmatpush1.msra.mxu0 0.0
    %1824 = vmatprep.subr.mxu0 0.0
    %1825 = vmatpush1.msra.mxu0 0.0
    %1826 = vmatprep.subr.mxu0 0.0
    %1827 = vmatpush1.msra.mxu0 0.0
    %1828 = vmatprep.subr.mxu0 0.0
    %1829 = vmatpush1.msra.mxu0 0.0
    %1830 = vmatprep.subr.mxu0 0.0
    %1831 = vmatpush1.msra.mxu0 0.0
    %1832 = vmatprep.subr.mxu0 0.0
    %1833 = vmatpush1.msra.mxu0 0.0
    %1834 = vmatprep.subr.mxu0 0.0
    %1835 = vmatpush1.msra.mxu0 0.0
    %1836 = vmatprep.subr.mxu0 0.0
    %1837 = vmatpush1.msra.mxu0 0.0
    %1838 = vmatprep.subr.mxu0 0.0
    %1839 = vmatpush1.msra.mxu0 0.0
    %1840 = vmatprep.subr.mxu0 0.0
    %1841 = vmatpush1.msra.mxu0 0.0
    %1842 = vmatprep.subr.mxu0 0.0
    %1843 = vmatpush1.msra.mxu0 0.0
    %1844 = vmatprep.subr.mxu0 0.0
    %1845 = vmatpush1.msra.mxu0 0.0
    %1846 = vmatprep.subr.mxu0 0.0
    %1847 = vmatpush1.msra.mxu0 0.0
    %1848 = vmatprep.subr.mxu0 0.0
    %1849 = vmatpush1.msra.mxu0 0.0
    %1850 = vmatprep.subr.mxu0 0.0
    %1851 = vmatpush1.msra.mxu0 0.0
    %1852 = vmatprep.subr.mxu0 0.0
    %1853 = vmatpush1.msra.mxu0 0.0
    %1854 = vmatprep.subr.mxu0 0.0
    %1855 = vmatpush1.msra.mxu0 0.0
    %1856 = vmatprep.subr.mxu0 0.0
    %1857 = vmatpush1.msra.mxu0 0.0
    %1858 = vmatprep.subr.mxu0 0.0
    %1859 = vmatpush1.msra.mxu0 0.0
    %1860 = vmatprep.subr.mxu0 0.0
    %1861 = vmatpush1.msra.mxu0 0.0
    %1862 = vmatprep.subr.mxu0 0.0
    %1863 = vmatpush1.msra.mxu0 0.0
    %1864 = vmatprep.subr.mxu0 0.0
    %1865 = vmatpush1.msra.mxu0 0.0
    %1866 = vmatprep.subr.mxu0 0.0
    %1867 = vmatpush1.msra.mxu0 0.0
    %1868 = vmatprep.subr.mxu0 0.0
    %1869 = vmatpush1.msra.mxu0 0.0
    %1870 = vmatprep.subr.mxu0 0.0
    %1871 = vmatpush1.msra.mxu0 0.0
    %1872 = vmatprep.subr.mxu0 0.0
    %1873 = vmatpush1.msra.mxu0 0.0
    %1874 = vmatprep.mubr.f32.mxu0 0.0
    %1875 = vmatmul.mubr.f32.gmra.mrb[0].mxu0 %v1808
    %v1876 = vpop.f32.mrb[0].mxu0
    %v1877 = vadd.f32 0.0, %v1876
    %v1878 = vpop.f32.mrb[0].mxu0
    %1879 = vdwg.mxu0
    %v1880 = vadd.f32 %v1804, %v1877
    %v1881 = vxor.u32 %v1880, 2147483648
    %v1882 = vmul.f32 %v1881, 1.442695
    %v1883 = vpow.pop %v1882
    %v1884 = vadd.f32 %v1883, 1.0
    %v1885 = vrcp.pop %v1884
    %v1886 = vmul.f32 1.0, %v1885
    %v1887 = vtanh.pop %v1880
    %v1888 = vmul.f32 %v1886, %v1795
    %1890 = vrot.lane.b32.xlu0 %v1887, 96
    %v1891 = vpop.permute.xlu0 %1890
    %v1893 = vmul.f32 %v1886, %v1891
    %1895 = vrot.lane.b32.xlu0 %v1893, 16
    %v1896 = vpop.permute.xlu0 %1895
    %v1898 = vadd.f32 %v1888, %v1896
    %v1899 = vtanh.pop %v1898
    %1901 = vrot.lane.b32.xlu0 %v1899, 32
    %v1902 = vpop.permute.xlu0 %1901
    %v1904 = vmul.f32 %v1886, %v1902
    %v1905 = vrot.slane %v330, 7
    %v1907 = vsel %vm340, %v325, %v1905
    %1909 = vrot.lane.b32.xlu0 %v1904, 80
    %v1910 = vpop.permute.xlu0 %1909
    %v1911 = vsel %vm342, %v1910, 0
    %1913 = vmatprep.subr.mxu0 0.0
    %1914 = vmatpush1.msra.mxu0 %v335
    %1915 = vmatprep.subr.mxu0 0.0
    %1916 = vmatpush1.msra.mxu0 %v336
    %1917 = vmatprep.subr.mxu0 0.0
    %1918 = vmatpush1.msra.mxu0 0.0
    %1919 = vmatprep.subr.mxu0 0.0
    %1920 = vmatpush1.msra.mxu0 0.0
    %1921 = vmatprep.subr.mxu0 0.0
    %1922 = vmatpush1.msra.mxu0 0.0
    %1923 = vmatprep.subr.mxu0 0.0
    %1924 = vmatpush1.msra.mxu0 0.0
    %1925 = vmatprep.subr.mxu0 0.0
    %1926 = vmatpush1.msra.mxu0 0.0
    %1927 = vmatprep.subr.mxu0 0.0
    %1928 = vmatpush1.msra.mxu0 0.0
    %1929 = vmatprep.subr.mxu0 0.0
    %1930 = vmatpush1.msra.mxu0 0.0
    %1931 = vmatprep.subr.mxu0 0.0
    %1932 = vmatpush1.msra.mxu0 0.0
    %1933 = vmatprep.subr.mxu0 0.0
    %1934 = vmatpush1.msra.mxu0 0.0
    %1935 = vmatprep.subr.mxu0 0.0
    %1936 = vmatpush1.msra.mxu0 0.0
    %1937 = vmatprep.subr.mxu0 0.0
    %1938 = vmatpush1.msra.mxu0 0.0
    %1939 = vmatprep.subr.mxu0 0.0
    %1940 = vmatpush1.msra.mxu0 0.0
    %1941 = vmatprep.subr.mxu0 0.0
    %1942 = vmatpush1.msra.mxu0 0.0
    %1943 = vmatprep.subr.mxu0 0.0
    %1944 = vmatpush1.msra.mxu0 0.0
    %1945 = vmatprep.subr.mxu0 0.0
    %1946 = vmatpush1.msra.mxu0 0.0
    %1947 = vmatprep.subr.mxu0 0.0
    %1948 = vmatpush1.msra.mxu0 0.0
    %1949 = vmatprep.subr.mxu0 0.0
    %1950 = vmatpush1.msra.mxu0 0.0
    %1951 = vmatprep.subr.mxu0 0.0
    %1952 = vmatpush1.msra.mxu0 0.0
    %1953 = vmatprep.subr.mxu0 0.0
    %1954 = vmatpush1.msra.mxu0 0.0
    %1955 = vmatprep.subr.mxu0 0.0
    %1956 = vmatpush1.msra.mxu0 0.0
    %1957 = vmatprep.subr.mxu0 0.0
    %1958 = vmatpush1.msra.mxu0 0.0
    %1959 = vmatprep.subr.mxu0 0.0
    %1960 = vmatpush1.msra.mxu0 0.0
    %1961 = vmatprep.subr.mxu0 0.0
    %1962 = vmatpush1.msra.mxu0 0.0
    %1963 = vmatprep.subr.mxu0 0.0
    %1964 = vmatpush1.msra.mxu0 0.0
    %1965 = vmatprep.subr.mxu0 0.0
    %1966 = vmatpush1.msra.mxu0 0.0
    %1967 = vmatprep.subr.mxu0 0.0
    %1968 = vmatpush1.msra.mxu0 0.0
    %1969 = vmatprep.subr.mxu0 0.0
    %1970 = vmatpush1.msra.mxu0 0.0
    %1971 = vmatprep.subr.mxu0 0.0
    %1972 = vmatpush1.msra.mxu0 0.0
    %1973 = vmatprep.subr.mxu0 0.0
    %1974 = vmatpush1.msra.mxu0 0.0
    %1975 = vmatprep.subr.mxu0 0.0
    %1976 = vmatpush1.msra.mxu0 0.0
    %1977 = vmatprep.mubr.f32.mxu0 0.0
    %1978 = vmatmul.mubr.f32.gmra.mrb[0].mxu0 %v1911
    %v1979 = vpop.f32.mrb[0].mxu0
    %v1980 = vadd.f32 0.0, %v1979
    %v1981 = vpop.f32.mrb[0].mxu0
    %1982 = vdwg.mxu0
    %v1983 = vadd.f32 %v1907, %v1980
    %v1984 = vxor.u32 %v1983, 2147483648
    %v1985 = vmul.f32 %v1984, 1.442695
    %v1986 = vpow.pop %v1985
    %v1987 = vadd.f32 %v1986, 1.0
    %v1988 = vrcp.pop %v1987
    %v1989 = vmul.f32 1.0, %v1988
    %v1990 = vtanh.pop %v1983
    %v1991 = vmul.f32 %v1989, %v1898
    %1993 = vrot.lane.b32.xlu0 %v1990, 96
    %v1994 = vpop.permute.xlu0 %1993
    %v1996 = vmul.f32 %v1989, %v1994
    %1998 = vrot.lane.b32.xlu0 %v1996, 16
    %v1999 = vpop.permute.xlu0 %1998
    %v2001 = vadd.f32 %v1991, %v1999
    %v2002 = vtanh.pop %v2001
    %2004 = vrot.lane.b32.xlu0 %v2002, 32
    %v2005 = vpop.permute.xlu0 %2004
    %v2007 = vmul.f32 %v1989, %v2005
    %v2008 = vrot.slane %v544, 7
    %v2010 = vrot.slane %v649, 6
    %v2012 = vrot.slane %v754, 5
    %v2014 = vrot.slane %v859, 4
    %v2016 = vrot.slane %v964, 3
    %v2018 = vrot.slane %v1069, 2
    %v2021 = vrot.slane %v1174, 1
    %v2023 = vsel %vm340, %v440, %v2008
    %vm2024 = vcmask 1041408
    %v2025 = vsel %vm2024, %v2023, %v2010
    %vm2026 = vcmask 1042432
    %v2027 = vsel %vm2026, %v2025, %v2012
    %v2028 = vsel %vm75, %v2027, %v2014
    %vm2029 = vcmask 1044480
    %v2030 = vsel %vm2029, %v2028, %v2016
    %vm2031 = vcmask 1045504
    %v2032 = vsel %vm2031, %v2030, %v2018
    %vm2033 = vcmask 1046528
    %v2034 = vsel %vm2033, %v2032, %v2021
    %v2035 = vrot.slane %v1904, 7
    %v2037 = vrot.slane %v1801, 6
    %v2039 = vrot.slane %v1696, 5
    %v2041 = vrot.slane %v1591, 4
    %v2043 = vrot.slane %v1486, 3
    %v2045 = vrot.slane %v1381, 2
    %v2047 = vrot.slane %v1276, 1
    %v2049 = vsel %vm340, %v2007, %v2035
    %v2050 = vsel %vm2024, %v2049, %v2037
    %v2051 = vsel %vm2026, %v2050, %v2039
    %v2052 = vsel %vm75, %v2051, %v2041
    %v2053 = vsel %vm2029, %v2052, %v2043
    %v2054 = vsel %vm2031, %v2053, %v2045
    %v2055 = vsel %vm2033, %v2054, %v2047
    %2057 = vrot.lane.b32.xlu0 %v2034, 80
    %v2058 = vpop.permute.xlu0 %2057
    %2061 = vrot.lane.b32.xlu0 %v2055, 96
    %v2062 = vpop.permute.xlu0 %2061
    %v2064 = vsel %vm342, %v2058, %v2062
    %v2065 = vrot.slane %v440, 1
    %v2067 = vrot.slane %v649, 7
    %v2069 = vrot.slane %v754, 6
    %v2071 = vrot.slane %v859, 5
    %v2073 = vrot.slane %v964, 4
    %v2075 = vrot.slane %v1069, 3
    %v2077 = vrot.slane %v1174, 2
    %v2079 = vsel %vm340, %v2065, %v544
    %v2080 = vsel %vm2024, %v2079, %v2067
    %v2081 = vsel %vm2026, %v2080, %v2069
    %v2082 = vsel %vm75, %v2081, %v2071
    %v2083 = vsel %vm2029, %v2082, %v2073
    %v2084 = vsel %vm2031, %v2083, %v2075
    %v2085 = vsel %vm2033, %v2084, %v2077
    %v2087 = vrot.slane %v2007, 1
    %v2089 = vrot.slane %v1801, 7
    %v2091 = vrot.slane %v1696, 6
    %v2093 = vrot.slane %v1591, 5
    %v2095 = vrot.slane %v1486, 4
    %v2097 = vrot.slane %v1381, 3
    %v2099 = vrot.slane %v1276, 2
    %v2101 = vsel %vm340, %v2087, %v1904
    %v2102 = vsel %vm2024, %v2101, %v2089
    %v2103 = vsel %vm2026, %v2102, %v2091
    %v2104 = vsel %vm75, %v2103, %v2093
    %v2105 = vsel %vm2029, %v2104, %v2095
    %v2106 = vsel %vm2031, %v2105, %v2097
    %v2107 = vsel %vm2033, %v2106, %v2099
    %2109 = vrot.lane.b32.xlu0 %v2085, 80
    %v2110 = vpop.permute.xlu0 %2109
    %2113 = vrot.lane.b32.xlu0 %v2107, 96
    %v2114 = vpop.permute.xlu0 %2113
    %v2116 = vsel %vm342, %v2110, %v2114
    %2117 = vst.msk [vmem:[%s9] sm:$0xff] %vm165, %v2064
    %2118 = vst.msk [vmem:[%s9 + $0x8] sm:$0xff] %vm165, %v2116
    // Predicated region
    $region46: #{_lambda_.4} parent=1 // pred_check
      _
    $region47: #{_lambda_.4} parent=1 // pred_check_branch
      %2120 = sbr.rel (0) target = $region49
    $region48: #{_lambda_.4} parent=1 // pred_region
      _
    $region49: #{_lambda_.4} parent=1 // pred_fallthru
      _
    // Predicated region
    $region50: #{_lambda_.4} parent=1 // pred_check
      _
    $region51: #{_lambda_.4} parent=1 // pred_check_branch
      %2122 = sbr.rel (0) target = $region53
    $region52: #{_lambda_.4} parent=1 // pred_region
      _
    $region53: #{_lambda_.4} parent=1 // pred_fallthru
      _
    %2123 = vsyncpa [#allocation3], 1
    %2124 = vsyncpa [#allocation5], 1

// kernel: _lambda_.5
$region0: #{_lambda_.5}
  #allocation0 [shape = 'u32[]', space=smem, size = 0x4, offset = 0x4, fixed_abs, tag = 'smem constant byte address 0x4 - core index']
  #allocation1 [shape = 'u32[144,128]{1,0:T(1,128)}', space=vmem, size = 0x12000, scoped, tag = 'internal scratch']
  %s0 = inlined_call_operand.vmem [shape: f32[16,32], index: 0, kind: input, shape index: {}]
  %s1 = inlined_call_operand.vmem [shape: f32[32,96], index: 1, kind: input, shape index: {}]
  %s2 = inlined_call_operand.hbm [shape: f32[1,96], index: 2, kind: input, shape index: {}]
  %s3 = inlined_call_operand.vmem [shape: f32[32,32], index: 3, kind: input, shape index: {}]
  %s4 = inlined_call_operand.hbm [shape: f32[1,32], index: 4, kind: input, shape index: {}]
  %s5 = inlined_call_operand.vmem [shape: f32[1,32], index: 5, kind: input, shape index: {}, may-alias: {5,11,13}]
  %s6 = inlined_call_operand.vmem [shape: f32[1,32], index: 6, kind: input, shape index: {}, may-alias: {6,12,14}]
  %s7 = inlined_call_operand.vmem [shape: f32[32,64], index: 7, kind: input, shape index: {}]
  %s8 = inlined_call_operand.vmem [shape: f32[1,64], index: 8, kind: input, shape index: {}]
  %s9 = inlined_call_operand.vmem [shape: f32[64,32], index: 9, kind: input, shape index: {}]
  %s10 = inlined_call_operand.vmem [shape: f32[1,32], index: 10, kind: input, shape index: {}]
  %s11 = inlined_call_operand.vmem [shape: f32[1,32], index: 11, kind: input, shape index: {}, may-alias: {5,11,13}]
  %s12 = inlined_call_operand.vmem [shape: f32[1,32], index: 12, kind: input, shape index: {}, may-alias: {6,12,14}]
  %s13 = inlined_call_operand.vmem [shape: f32[1,32], index: 13, kind: input, shape index: {}, may-alias: {5,11,13}]
  %s14 = inlined_call_operand.vmem [shape: f32[1,32], index: 14, kind: input, shape index: {}, may-alias: {6,12,14}]
  %s15 = inlined_call_operand.vmem [shape: f32[16,32], index: 15, kind: output, shape index: {}]
  %s16 = sld [smem:[#allocation0]]
  $region78: #{_lambda_.5} parent=0
    _
  %s18 = ssub.s32 1, %s16
  %s19 = scalar_select 0, %s18, %s16
  $region1: #{_lambda_.5} parent=0
    #allocation2 [shape = 'u8[512]{0}', space=vmem, size = 0x400, scoped, tag = 'input window, operand 2, single buffered']
    #allocation3 [shape = 's32[1]{0}', space=sflag, size = 0x4, scoped, tag = 'scoped memory for _lambda_.5']
    #allocation4 [shape = 'u8[512]{0}', space=vmem, size = 0x400, scoped, tag = 'input window, operand 4, single buffered']
    #allocation5 [shape = 's32[1]{0}', space=sflag, size = 0x4, scoped, tag = 'scoped memory for _lambda_.5']
    %20 = vsyncpa [#allocation3], 0
    %21 = vsyncpa [#allocation5], 0
    // Predicated region
    $region2: #{_lambda_.5} parent=1 // pred_check
      _
    $region3: #{_lambda_.5} parent=1 // pred_check_branch
      %23 = sbr.rel (0) target = $region5
    $region4: #{_lambda_.5} parent=1 // pred_region
      _
    $region5: #{_lambda_.5} parent=1 // pred_fallthru
      _
    // Predicated region
    $region6: #{_lambda_.5} parent=1 // pred_check
      _
    $region7: #{_lambda_.5} parent=1 // pred_check_branch
      %25 = sbr.rel (0) target = $region9
    $region8: #{_lambda_.5} parent=1 // pred_region
      _
    $region9: #{_lambda_.5} parent=1 // pred_fallthru
      _
    // Predicated region
    $region10: #{_lambda_.5} parent=1 // pred_check
      _
    $region11: #{_lambda_.5} parent=1 // pred_check_branch
      %27 = sbr.rel (0) target = $region13
    $region12: #{_lambda_.5} parent=1 // pred_region
      %s29 = ssub.s32 16, 16
      %30 = vsyncadd [#allocation3], %s29
      %s32 = sshll.u32 [#allocation2], 4
      %s33 = int_to_ptr.vmem [resolvable:$true] %s32
      %35 = dma.hbm_to_vmem [thread:$0]  %s2, 16, %s33, [#allocation3]
    $region13: #{_lambda_.5} parent=1 // pred_fallthru
      _
    // Predicated region
    $region14: #{_lambda_.5} parent=1 // pred_check
      _
    $region15: #{_lambda_.5} parent=1 // pred_check_branch
      %37 = sbr.rel (0) target = $region17
    $region16: #{_lambda_.5} parent=1 // pred_region
      _
    $region17: #{_lambda_.5} parent=1 // pred_fallthru
      _
    // Predicated region
    $region18: #{_lambda_.5} parent=1 // pred_check
      _
    $region19: #{_lambda_.5} parent=1 // pred_check_branch
      %39 = sbr.rel (0) target = $region21
    $region20: #{_lambda_.5} parent=1 // pred_region
      %s41 = ssub.s32 16, 16
      %42 = vsyncadd [#allocation5], %s41
      %s44 = sshll.u32 [#allocation4], 4
      %s45 = int_to_ptr.vmem [resolvable:$true] %s44
      %47 = dma.hbm_to_vmem [thread:$0]  %s4, 16, %s45, [#allocation5]
    $region21: #{_lambda_.5} parent=1 // pred_fallthru
      _
    // Predicated region
    $region22: #{_lambda_.5} parent=1 // pred_check
      _
    $region23: #{_lambda_.5} parent=1 // pred_check_branch
      %49 = sbr.rel (0) target = $region25
    $region24: #{_lambda_.5} parent=1 // pred_region
      _
    $region25: #{_lambda_.5} parent=1 // pred_fallthru
      _
    // Predicated region
    $region26: #{_lambda_.5} parent=1 // pred_check
      _
    $region27: #{_lambda_.5} parent=1 // pred_check_branch
      %51 = sbr.rel (0) target = $region29
    $region28: #{_lambda_.5} parent=1 // pred_region
      _
    $region29: #{_lambda_.5} parent=1 // pred_fallthru
      _
    // Predicated region
    $region30: #{_lambda_.5} parent=1 // pred_check
      _
    $region31: #{_lambda_.5} parent=1 // pred_check_branch
      %53 = sbr.rel (0) target = $region33
    $region32: #{_lambda_.5} parent=1 // pred_region
      _
    $region33: #{_lambda_.5} parent=1 // pred_fallthru
      _
    // Predicated region
    $region34: #{_lambda_.5} parent=1 // pred_check
      _
    $region35: #{_lambda_.5} parent=1 // pred_check_branch
      %55 = sbr.rel (0) target = $region37
    $region36: #{_lambda_.5} parent=1 // pred_region
      _
    $region37: #{_lambda_.5} parent=1 // pred_fallthru
      _
    // Predicated region
    $region38: #{_lambda_.5} parent=1 // pred_check
      _
    $region39: #{_lambda_.5} parent=1 // pred_check_branch
      %57 = sbr.rel (0) target = $region41
    $region40: #{_lambda_.5} parent=1 // pred_region
      _
    $region41: #{_lambda_.5} parent=1 // pred_fallthru
      _
    // Predicated region
    $region42: #{_lambda_.5} parent=1 // pred_check
      _
    $region43: #{_lambda_.5} parent=1 // pred_check_branch
      %59 = sbr.rel (0) target = $region45
    $region44: #{_lambda_.5} parent=1 // pred_region
      _
    $region45: #{_lambda_.5} parent=1 // pred_fallthru
      _
    // Predicated region
    $region46: #{_lambda_.5} parent=1 // pred_check
      _
    $region47: #{_lambda_.5} parent=1 // pred_check_branch
      %61 = sbr.rel (0) target = $region49
    $region48: #{_lambda_.5} parent=1 // pred_region
      _
    $region49: #{_lambda_.5} parent=1 // pred_fallthru
      _
    // Predicated region
    $region50: #{_lambda_.5} parent=1 // pred_check
      _
    $region51: #{_lambda_.5} parent=1 // pred_check_branch
      %63 = sbr.rel (0) target = $region53
    $region52: #{_lambda_.5} parent=1 // pred_region
      _
    $region53: #{_lambda_.5} parent=1 // pred_fallthru
      _
    // Predicated region
    $region54: #{_lambda_.5} parent=1 // pred_check
      _
    $region55: #{_lambda_.5} parent=1 // pred_check_branch
      %65 = sbr.rel (0) target = $region57
    $region56: #{_lambda_.5} parent=1 // pred_region
      _
    $region57: #{_lambda_.5} parent=1 // pred_fallthru
      _
    // Predicated region
    $region58: #{_lambda_.5} parent=1 // pred_check
      _
    $region59: #{_lambda_.5} parent=1 // pred_check_branch
      %67 = sbr.rel (0) target = $region61
    $region60: #{_lambda_.5} parent=1 // pred_region
      _
    $region61: #{_lambda_.5} parent=1 // pred_fallthru
      _
    // Predicated region
    $region62: #{_lambda_.5} parent=1 // pred_check
      _
    $region63: #{_lambda_.5} parent=1 // pred_check_branch
      %69 = sbr.rel (0) target = $region65
    $region64: #{_lambda_.5} parent=1 // pred_region
      %70 = dma.done [#allocation3], 16
    $region65: #{_lambda_.5} parent=1 // pred_fallthru
      _
    // Predicated region
    $region66: #{_lambda_.5} parent=1 // pred_check
      _
    $region67: #{_lambda_.5} parent=1 // pred_check_branch
      %72 = sbr.rel (0) target = $region69
    $region68: #{_lambda_.5} parent=1 // pred_region
      %73 = dma.done [#allocation5], 16
    $region69: #{_lambda_.5} parent=1 // pred_fallthru
      _
    %v74 = vld [vmem:[%s0] sm:$0xff]
    %v75 = vld [vmem:[%s0 + $0x8] sm:$0xff]
    %v76 = vld [vmem:[%s1] sm:$0xff]
    %v77 = vld [vmem:[%s1 + $0x8] sm:$0xff]
    %v78 = vld [vmem:[%s1 + $0x10] sm:$0xff]
    %v79 = vld [vmem:[%s1 + $0x18] sm:$0xff]
    %v80 = vld [vmem:[#allocation2] sm:$0x1]
    %v82 = vlaneseq
    %v83 = vshrl.u32 %v82, 7
    %v84 = vsub.s32 0, %v83
    %v85 = vrot.slane %v80, %v84
    %vm87 = vcmask 261120
    %v89 = vsel %vm87, %v74, 0
    %v92 = vsel %vm87, %v75, 0
    %94 = vmatprep.subr.mxu0 0.0
    %95 = vmatpush1.msra.mxu0 %v76
    %96 = vmatprep.subr.mxu0 0.0
    %97 = vmatpush1.msra.mxu0 %v77
    %98 = vmatprep.subr.mxu0 0.0
    %99 = vmatpush1.msra.mxu0 %v78
    %100 = vmatprep.subr.mxu0 0.0
    %101 = vmatpush1.msra.mxu0 %v79
    %102 = vmatprep.subr.mxu0 0.0
    %103 = vmatpush1.msra.mxu0 0.0
    %104 = vmatprep.subr.mxu0 0.0
    %105 = vmatpush1.msra.mxu0 0.0
    %106 = vmatprep.subr.mxu0 0.0
    %107 = vmatpush1.msra.mxu0 0.0
    %108 = vmatprep.subr.mxu0 0.0
    %109 = vmatpush1.msra.mxu0 0.0
    %110 = vmatprep.subr.mxu0 0.0
    %111 = vmatpush1.msra.mxu0 0.0
    %112 = vmatprep.subr.mxu0 0.0
    %113 = vmatpush1.msra.mxu0 0.0
    %114 = vmatprep.subr.mxu0 0.0
    %115 = vmatpush1.msra.mxu0 0.0
    %116 = vmatprep.subr.mxu0 0.0
    %117 = vmatpush1.msra.mxu0 0.0
    %118 = vmatprep.subr.mxu0 0.0
    %119 = vmatpush1.msra.mxu0 0.0
    %120 = vmatprep.subr.mxu0 0.0
    %121 = vmatpush1.msra.mxu0 0.0
    %122 = vmatprep.subr.mxu0 0.0
    %123 = vmatpush1.msra.mxu0 0.0
    %124 = vmatprep.subr.mxu0 0.0
    %125 = vmatpush1.msra.mxu0 0.0
    %126 = vmatprep.subr.mxu0 0.0
    %127 = vmatpush1.msra.mxu0 0.0
    %128 = vmatprep.subr.mxu0 0.0
    %129 = vmatpush1.msra.mxu0 0.0
    %130 = vmatprep.subr.mxu0 0.0
    %131 = vmatpush1.msra.mxu0 0.0
    %132 = vmatprep.subr.mxu0 0.0
    %133 = vmatpush1.msra.mxu0 0.0
    %134 = vmatprep.subr.mxu0 0.0
    %135 = vmatpush1.msra.mxu0 0.0
    %136 = vmatprep.subr.mxu0 0.0
    %137 = vmatpush1.msra.mxu0 0.0
    %138 = vmatprep.subr.mxu0 0.0
    %139 = vmatpush1.msra.mxu0 0.0
    %140 = vmatprep.subr.mxu0 0.0
    %141 = vmatpush1.msra.mxu0 0.0
    %142 = vmatprep.subr.mxu0 0.0
    %143 = vmatpush1.msra.mxu0 0.0
    %144 = vmatprep.subr.mxu0 0.0
    %145 = vmatpush1.msra.mxu0 0.0
    %146 = vmatprep.subr.mxu0 0.0
    %147 = vmatpush1.msra.mxu0 0.0
    %148 = vmatprep.subr.mxu0 0.0
    %149 = vmatpush1.msra.mxu0 0.0
    %150 = vmatprep.subr.mxu0 0.0
    %151 = vmatpush1.msra.mxu0 0.0
    %152 = vmatprep.subr.mxu0 0.0
    %153 = vmatpush1.msra.mxu0 0.0
    %154 = vmatprep.subr.mxu0 0.0
    %155 = vmatpush1.msra.mxu0 0.0
    %156 = vmatprep.subr.mxu0 0.0
    %157 = vmatpush1.msra.mxu0 0.0
    %158 = vmatprep.mubr.f32.mxu0 0.0
    %159 = vmatmul.mubr.f32.gmra.mrb[0].mxu0 %v89
    %v160 = vpop.f32.mrb[0].mxu0
    %v161 = vadd.f32 %v85, %v160
    %v162 = vpop.f32.mrb[0].mxu0
    %163 = vmatprep.mubr.f32.mxu0 0.0
    %164 = vmatmul.mubr.f32.gmra.mrb[0].mxu0 %v92
    %v165 = vpop.f32.mrb[0].mxu0
    %v166 = vadd.f32 %v85, %v165
    %v167 = vpop.f32.mrb[0].mxu0
    %168 = vdwg.mxu0
    %vm169 = vcmp.gt.f32.partialorder %v161, 0.0
    %v170 = vadd.f32 %v161, 1.0
    %v171 = vmin.f32 %v161, 0.0
    %v172 = vmul.f32 %v171, 1.442695
    %v173 = vpow.pop %v172
    %v174 = vsel %vm169, %v170, %v173
    %176 = vrot.lane.b32.xlu0 %v174, 96
    %v177 = vpop.permute.xlu0 %176
    %179 = vxpose.xlu0.b32.start [1/16] %v177, 128
    %180 = vxpose.xlu0.b32.cont [2/16] 0.0, 128
    %181 = vxpose.xlu0.b32.cont [3/16] 0.0, 128
    %182 = vxpose.xlu0.b32.cont [4/16] 0.0, 128
    %183 = vxpose.xlu0.b32.cont [5/16] 0.0, 128
    %184 = vxpose.xlu0.b32.cont [6/16] 0.0, 128
    %185 = vxpose.xlu0.b32.cont [7/16] 0.0, 128
    %186 = vxpose.xlu0.b32.cont [8/16] 0.0, 128
    %187 = vxpose.xlu0.b32.cont [9/16] 0.0, 128
    %188 = vxpose.xlu0.b32.cont [10/16] 0.0, 128
    %189 = vxpose.xlu0.b32.cont [11/16] 0.0, 128
    %190 = vxpose.xlu0.b32.cont [12/16] 0.0, 128
    %191 = vxpose.xlu0.b32.cont [13/16] 0.0, 128
    %192 = vxpose.xlu0.b32.cont [14/16] 0.0, 128
    %193 = vxpose.xlu0.b32.cont [15/16] 0.0, 128
    %194 = vxpose.xlu0.b32.end [16/16] 0.0, 128
    %v195 = vpop.trf.xlu0
    %v196 = vpop.trf.xlu0
    %v197 = vpop.trf.xlu0
    %v198 = vpop.trf.xlu0
    %v199 = vpop.trf.xlu0
    %v200 = vpop.trf.xlu0
    %v201 = vpop.trf.xlu0
    %v202 = vpop.trf.xlu0
    %v203 = vpop.trf.xlu0
    %v204 = vpop.trf.xlu0
    %v205 = vpop.trf.xlu0
    %v206 = vpop.trf.xlu0
    %v207 = vpop.trf.xlu0
    %v208 = vpop.trf.xlu0
    %v209 = vpop.trf.xlu0
    %v210 = vpop.trf.xlu0
    %212 = vrot.lane.b32.xlu0 %v161, 64
    %v213 = vpop.permute.xlu0 %212
    %vm215 = vcmask 64512
    %v217 = vsel %vm215, %v195, 0
    %v220 = vsel %vm215, %v196, 0
    %222 = vmatprep.subr.mxu0 0.0
    %223 = vmatpush1.msra.mxu0 %v213
    %224 = vmatprep.subr.mxu0 0.0
    %225 = vmatpush1.msra.mxu0 0.0
    %226 = vmatprep.subr.mxu0 0.0
    %227 = vmatpush1.msra.mxu0 0.0
    %228 = vmatprep.subr.mxu0 0.0
    %229 = vmatpush1.msra.mxu0 0.0
    %230 = vmatprep.subr.mxu0 0.0
    %231 = vmatpush1.msra.mxu0 0.0
    %232 = vmatprep.subr.mxu0 0.0
    %233 = vmatpush1.msra.mxu0 0.0
    %234 = vmatprep.subr.mxu0 0.0
    %235 = vmatpush1.msra.mxu0 0.0
    %236 = vmatprep.subr.mxu0 0.0
    %237 = vmatpush1.msra.mxu0 0.0
    %238 = vmatprep.subr.mxu0 0.0
    %239 = vmatpush1.msra.mxu0 0.0
    %240 = vmatprep.subr.mxu0 0.0
    %241 = vmatpush1.msra.mxu0 0.0
    %242 = vmatprep.subr.mxu0 0.0
    %243 = vmatpush1.msra.mxu0 0.0
    %244 = vmatprep.subr.mxu0 0.0
    %245 = vmatpush1.msra.mxu0 0.0
    %246 = vmatprep.subr.mxu0 0.0
    %247 = vmatpush1.msra.mxu0 0.0
    %248 = vmatprep.subr.mxu0 0.0
    %249 = vmatpush1.msra.mxu0 0.0
    %250 = vmatprep.subr.mxu0 0.0
    %251 = vmatpush1.msra.mxu0 0.0
    %252 = vmatprep.subr.mxu0 0.0
    %253 = vmatpush1.msra.mxu0 0.0
    %254 = vmatprep.subr.mxu0 0.0
    %255 = vmatpush1.msra.mxu0 0.0
    %256 = vmatprep.subr.mxu0 0.0
    %257 = vmatpush1.msra.mxu0 0.0
    %258 = vmatprep.subr.mxu0 0.0
    %259 = vmatpush1.msra.mxu0 0.0
    %260 = vmatprep.subr.mxu0 0.0
    %261 = vmatpush1.msra.mxu0 0.0
    %262 = vmatprep.subr.mxu0 0.0
    %263 = vmatpush1.msra.mxu0 0.0
    %264 = vmatprep.subr.mxu0 0.0
    %265 = vmatpush1.msra.mxu0 0.0
    %266 = vmatprep.subr.mxu0 0.0
    %267 = vmatpush1.msra.mxu0 0.0
    %268 = vmatprep.subr.mxu0 0.0
    %269 = vmatpush1.msra.mxu0 0.0
    %270 = vmatprep.subr.mxu0 0.0
    %271 = vmatpush1.msra.mxu0 0.0
    %272 = vmatprep.subr.mxu0 0.0
    %273 = vmatpush1.msra.mxu0 0.0
    %274 = vmatprep.subr.mxu0 0.0
    %275 = vmatpush1.msra.mxu0 0.0
    %276 = vmatprep.subr.mxu0 0.0
    %277 = vmatpush1.msra.mxu0 0.0
    %278 = vmatprep.subr.mxu0 0.0
    %279 = vmatpush1.msra.mxu0 0.0
    %280 = vmatprep.subr.mxu0 0.0
    %281 = vmatpush1.msra.mxu0 0.0
    %282 = vmatprep.subr.mxu0 0.0
    %283 = vmatpush1.msra.mxu0 0.0
    %284 = vmatprep.subr.mxu0 0.0
    %285 = vmatpush1.msra.mxu0 0.0
    %286 = vmatprep.mubr.f32.mxu0 0.0
    %287 = vmatmul.mubr.f32.gmra.mrb[0].mxu0 %v217
    %v288 = vpop.f32.mrb[0].mxu0
    %v289 = vadd.f32 0.0, %v288
    %v290 = vpop.f32.mrb[0].mxu0
    %291 = vmatprep.mubr.f32.mxu0 0.0
    %292 = vmatmul.mubr.f32.gmra.mrb[0].mxu0 %v220
    %v293 = vpop.f32.mrb[0].mxu0
    %v294 = vadd.f32 0.0, %v293
    %v295 = vpop.f32.mrb[0].mxu0
    %296 = vdwg.mxu0
    %vm297 = vcmask 392448
    %v298 = vsel %vm297, %v174, 0.0
    %v299 = vrot.slane %v298, 4
    %v300 = vadd.f32 %v298, %v299
    %v301 = vrot.slane %v300, 2
    %v302 = vadd.f32 %v300, %v301
    %v303 = vrot.slane %v302, 1
    %v304 = vadd.f32 %v302, %v303
    %306 = vrot.lane.b32.xlu0 %v304, 96
    %v307 = vpop.permute.xlu0 %306
    %v309 = vmul.f32 %v174, %v307
    %vm310 = vcmask 130048
    %v311 = vsel %vm310, %v309, 0.0
    %312 = vadd.xlane.f32.xlu0 %v311
    %v313 = vpop.xlane.xlu0 %312
    %v314 = vadd.f32 %v313, 1e-06
    %v315 = vrcp.pop %v314
    %v316 = vmul.f32 1.0, %v315
    %v317 = vsel %vm310, %v174, 0
    %319 = vmatprep.subr.mxu0 0.0
    %320 = vmatpush1.msra.mxu0 %v289
    %321 = vmatprep.subr.mxu0 0.0
    %322 = vmatpush1.msra.mxu0 %v294
    %323 = vmatprep.subr.mxu0 0.0
    %324 = vmatpush1.msra.mxu0 0.0
    %325 = vmatprep.subr.mxu0 0.0
    %326 = vmatpush1.msra.mxu0 0.0
    %327 = vmatprep.subr.mxu0 0.0
    %328 = vmatpush1.msra.mxu0 0.0
    %329 = vmatprep.subr.mxu0 0.0
    %330 = vmatpush1.msra.mxu0 0.0
    %331 = vmatprep.subr.mxu0 0.0
    %332 = vmatpush1.msra.mxu0 0.0
    %333 = vmatprep.subr.mxu0 0.0
    %334 = vmatpush1.msra.mxu0 0.0
    %335 = vmatprep.subr.mxu0 0.0
    %336 = vmatpush1.msra.mxu0 0.0
    %337 = vmatprep.subr.mxu0 0.0
    %338 = vmatpush1.msra.mxu0 0.0
    %339 = vmatprep.subr.mxu0 0.0
    %340 = vmatpush1.msra.mxu0 0.0
    %341 = vmatprep.subr.mxu0 0.0
    %342 = vmatpush1.msra.mxu0 0.0
    %343 = vmatprep.subr.mxu0 0.0
    %344 = vmatpush1.msra.mxu0 0.0
    %345 = vmatprep.subr.mxu0 0.0
    %346 = vmatpush1.msra.mxu0 0.0
    %347 = vmatprep.subr.mxu0 0.0
    %348 = vmatpush1.msra.mxu0 0.0
    %349 = vmatprep.subr.mxu0 0.0
    %350 = vmatpush1.msra.mxu0 0.0
    %351 = vmatprep.subr.mxu0 0.0
    %352 = vmatpush1.msra.mxu0 0.0
    %353 = vmatprep.subr.mxu0 0.0
    %354 = vmatpush1.msra.mxu0 0.0
    %355 = vmatprep.subr.mxu0 0.0
    %356 = vmatpush1.msra.mxu0 0.0
    %357 = vmatprep.subr.mxu0 0.0
    %358 = vmatpush1.msra.mxu0 0.0
    %359 = vmatprep.subr.mxu0 0.0
    %360 = vmatpush1.msra.mxu0 0.0
    %361 = vmatprep.subr.mxu0 0.0
    %362 = vmatpush1.msra.mxu0 0.0
    %363 = vmatprep.subr.mxu0 0.0
    %364 = vmatpush1.msra.mxu0 0.0
    %365 = vmatprep.subr.mxu0 0.0
    %366 = vmatpush1.msra.mxu0 0.0
    %367 = vmatprep.subr.mxu0 0.0
    %368 = vmatpush1.msra.mxu0 0.0
    %369 = vmatprep.subr.mxu0 0.0
    %370 = vmatpush1.msra.mxu0 0.0
    %371 = vmatprep.subr.mxu0 0.0
    %372 = vmatpush1.msra.mxu0 0.0
    %373 = vmatprep.subr.mxu0 0.0
    %374 = vmatpush1.msra.mxu0 0.0
    %375 = vmatprep.subr.mxu0 0.0
    %376 = vmatpush1.msra.mxu0 0.0
    %377 = vmatprep.subr.mxu0 0.0
    %378 = vmatpush1.msra.mxu0 0.0
    %379 = vmatprep.subr.mxu0 0.0
    %380 = vmatpush1.msra.mxu0 0.0
    %381 = vmatprep.subr.mxu0 0.0
    %382 = vmatpush1.msra.mxu0 0.0
    %383 = vmatprep.mubr.f32.mxu0 0.0
    %384 = vmatmul.mubr.f32.gmra.mrb[0].mxu0 %v317
    %v385 = vpop.f32.mrb[0].mxu0
    %v386 = vadd.f32 0.0, %v385
    %v387 = vpop.f32.mrb[0].mxu0
    %388 = vdwg.mxu0
    %v389 = vmul.f32 %v386, %v316
    %390 = vrot.lane.b32.xlu0 %v174, 80
    %v391 = vpop.permute.xlu0 %390
    %393 = vxpose.xlu0.b32.start [1/16] %v391, 128
    %394 = vxpose.xlu0.b32.cont [2/16] 0.0, 128
    %395 = vxpose.xlu0.b32.cont [3/16] 0.0, 128
    %396 = vxpose.xlu0.b32.cont [4/16] 0.0, 128
    %397 = vxpose.xlu0.b32.cont [5/16] 0.0, 128
    %398 = vxpose.xlu0.b32.cont [6/16] 0.0, 128
    %399 = vxpose.xlu0.b32.cont [7/16] 0.0, 128
    %400 = vxpose.xlu0.b32.cont [8/16] 0.0, 128
    %401 = vxpose.xlu0.b32.cont [9/16] 0.0, 128
    %402 = vxpose.xlu0.b32.cont [10/16] 0.0, 128
    %403 = vxpose.xlu0.b32.cont [11/16] 0.0, 128
    %404 = vxpose.xlu0.b32.cont [12/16] 0.0, 128
    %405 = vxpose.xlu0.b32.cont [13/16] 0.0, 128
    %406 = vxpose.xlu0.b32.cont [14/16] 0.0, 128
    %407 = vxpose.xlu0.b32.cont [15/16] 0.0, 128
    %408 = vxpose.xlu0.b32.end [16/16] 0.0, 128
    %v409 = vpop.trf.xlu0
    %v410 = vpop.trf.xlu0
    %v411 = vpop.trf.xlu0
    %v412 = vpop.trf.xlu0
    %v413 = vpop.trf.xlu0
    %v414 = vpop.trf.xlu0
    %v415 = vpop.trf.xlu0
    %v416 = vpop.trf.xlu0
    %v417 = vpop.trf.xlu0
    %v418 = vpop.trf.xlu0
    %v419 = vpop.trf.xlu0
    %v420 = vpop.trf.xlu0
    %v421 = vpop.trf.xlu0
    %v422 = vpop.trf.xlu0
    %v423 = vpop.trf.xlu0
    %v424 = vpop.trf.xlu0
    %425 = vrot.lane.b32.xlu0 %v161, 48
    %v426 = vpop.permute.xlu0 %425
    %v429 = vsel %vm215, %v409, 0
    %v432 = vsel %vm215, %v410, 0
    %434 = vmatprep.subr.mxu0 0.0
    %435 = vmatpush1.msra.mxu0 %v426
    %436 = vmatprep.subr.mxu0 0.0
    %437 = vmatpush1.msra.mxu0 0.0
    %438 = vmatprep.subr.mxu0 0.0
    %439 = vmatpush1.msra.mxu0 0.0
    %440 = vmatprep.subr.mxu0 0.0
    %441 = vmatpush1.msra.mxu0 0.0
    %442 = vmatprep.subr.mxu0 0.0
    %443 = vmatpush1.msra.mxu0 0.0
    %444 = vmatprep.subr.mxu0 0.0
    %445 = vmatpush1.msra.mxu0 0.0
    %446 = vmatprep.subr.mxu0 0.0
    %447 = vmatpush1.msra.mxu0 0.0
    %448 = vmatprep.subr.mxu0 0.0
    %449 = vmatpush1.msra.mxu0 0.0
    %450 = vmatprep.subr.mxu0 0.0
    %451 = vmatpush1.msra.mxu0 0.0
    %452 = vmatprep.subr.mxu0 0.0
    %453 = vmatpush1.msra.mxu0 0.0
    %454 = vmatprep.subr.mxu0 0.0
    %455 = vmatpush1.msra.mxu0 0.0
    %456 = vmatprep.subr.mxu0 0.0
    %457 = vmatpush1.msra.mxu0 0.0
    %458 = vmatprep.subr.mxu0 0.0
    %459 = vmatpush1.msra.mxu0 0.0
    %460 = vmatprep.subr.mxu0 0.0
    %461 = vmatpush1.msra.mxu0 0.0
    %462 = vmatprep.subr.mxu0 0.0
    %463 = vmatpush1.msra.mxu0 0.0
    %464 = vmatprep.subr.mxu0 0.0
    %465 = vmatpush1.msra.mxu0 0.0
    %466 = vmatprep.subr.mxu0 0.0
    %467 = vmatpush1.msra.mxu0 0.0
    %468 = vmatprep.subr.mxu0 0.0
    %469 = vmatpush1.msra.mxu0 0.0
    %470 = vmatprep.subr.mxu0 0.0
    %471 = vmatpush1.msra.mxu0 0.0
    %472 = vmatprep.subr.mxu0 0.0
    %473 = vmatpush1.msra.mxu0 0.0
    %474 = vmatprep.subr.mxu0 0.0
    %475 = vmatpush1.msra.mxu0 0.0
    %476 = vmatprep.subr.mxu0 0.0
    %477 = vmatpush1.msra.mxu0 0.0
    %478 = vmatprep.subr.mxu0 0.0
    %479 = vmatpush1.msra.mxu0 0.0
    %480 = vmatprep.subr.mxu0 0.0
    %481 = vmatpush1.msra.mxu0 0.0
    %482 = vmatprep.subr.mxu0 0.0
    %483 = vmatpush1.msra.mxu0 0.0
    %484 = vmatprep.subr.mxu0 0.0
    %485 = vmatpush1.msra.mxu0 0.0
    %486 = vmatprep.subr.mxu0 0.0
    %487 = vmatpush1.msra.mxu0 0.0
    %488 = vmatprep.subr.mxu0 0.0
    %489 = vmatpush1.msra.mxu0 0.0
    %490 = vmatprep.subr.mxu0 0.0
    %491 = vmatpush1.msra.mxu0 0.0
    %492 = vmatprep.subr.mxu0 0.0
    %493 = vmatpush1.msra.mxu0 0.0
    %494 = vmatprep.subr.mxu0 0.0
    %495 = vmatpush1.msra.mxu0 0.0
    %496 = vmatprep.subr.mxu0 0.0
    %497 = vmatpush1.msra.mxu0 0.0
    %498 = vmatprep.mubr.f32.mxu0 0.0
    %499 = vmatmul.mubr.f32.gmra.mrb[0].mxu0 %v429
    %v500 = vpop.f32.mrb[0].mxu0
    %v501 = vadd.f32 0.0, %v500
    %v502 = vpop.f32.mrb[0].mxu0
    %503 = vmatprep.mubr.f32.mxu0 0.0
    %504 = vmatmul.mubr.f32.gmra.mrb[0].mxu0 %v432
    %v505 = vpop.f32.mrb[0].mxu0
    %v506 = vadd.f32 0.0, %v505
    %v507 = vpop.f32.mrb[0].mxu0
    %508 = vdwg.mxu0
    %vm509 = vcmask 523648
    %v510 = vsel %vm509, %v174, 0.0
    %v511 = vrot.slane %v510, 4
    %v512 = vadd.f32 %v510, %v511
    %v513 = vrot.slane %v512, 2
    %v514 = vadd.f32 %v512, %v513
    %v515 = vrot.slane %v514, 1
    %v516 = vadd.f32 %v514, %v515
    %518 = vrot.lane.b32.xlu0 %v516, 96
    %v519 = vpop.permute.xlu0 %518
    %v521 = vmul.f32 %v174, %v519
    %523 = vrot.lane.b32.xlu0 %v521, 112
    %v524 = vpop.permute.xlu0 %523
    %v526 = vsel %vm310, %v524, 0.0
    %527 = vadd.xlane.f32.xlu0 %v526
    %v528 = vpop.xlane.xlu0 %527
    %v529 = vadd.f32 %v528, 1e-06
    %v530 = vrcp.pop %v529
    %v531 = vmul.f32 1.0, %v530
    %532 = vrot.lane.b32.xlu0 %v174, 112
    %v533 = vpop.permute.xlu0 %532
    %v534 = vsel %vm310, %v533, 0
    %536 = vmatprep.subr.mxu0 0.0
    %537 = vmatpush1.msra.mxu0 %v501
    %538 = vmatprep.subr.mxu0 0.0
    %539 = vmatpush1.msra.mxu0 %v506
    %540 = vmatprep.subr.mxu0 0.0
    %541 = vmatpush1.msra.mxu0 0.0
    %542 = vmatprep.subr.mxu0 0.0
    %543 = vmatpush1.msra.mxu0 0.0
    %544 = vmatprep.subr.mxu0 0.0
    %545 = vmatpush1.msra.mxu0 0.0
    %546 = vmatprep.subr.mxu0 0.0
    %547 = vmatpush1.msra.mxu0 0.0
    %548 = vmatprep.subr.mxu0 0.0
    %549 = vmatpush1.msra.mxu0 0.0
    %550 = vmatprep.subr.mxu0 0.0
    %551 = vmatpush1.msra.mxu0 0.0
    %552 = vmatprep.subr.mxu0 0.0
    %553 = vmatpush1.msra.mxu0 0.0
    %554 = vmatprep.subr.mxu0 0.0
    %555 = vmatpush1.msra.mxu0 0.0
    %556 = vmatprep.subr.mxu0 0.0
    %557 = vmatpush1.msra.mxu0 0.0
    %558 = vmatprep.subr.mxu0 0.0
    %559 = vmatpush1.msra.mxu0 0.0
    %560 = vmatprep.subr.mxu0 0.0
    %561 = vmatpush1.msra.mxu0 0.0
    %562 = vmatprep.subr.mxu0 0.0
    %563 = vmatpush1.msra.mxu0 0.0
    %564 = vmatprep.subr.mxu0 0.0
    %565 = vmatpush1.msra.mxu0 0.0
    %566 = vmatprep.subr.mxu0 0.0
    %567 = vmatpush1.msra.mxu0 0.0
    %568 = vmatprep.subr.mxu0 0.0
    %569 = vmatpush1.msra.mxu0 0.0
    %570 = vmatprep.subr.mxu0 0.0
    %571 = vmatpush1.msra.mxu0 0.0
    %572 = vmatprep.subr.mxu0 0.0
    %573 = vmatpush1.msra.mxu0 0.0
    %574 = vmatprep.subr.mxu0 0.0
    %575 = vmatpush1.msra.mxu0 0.0
    %576 = vmatprep.subr.mxu0 0.0
    %577 = vmatpush1.msra.mxu0 0.0
    %578 = vmatprep.subr.mxu0 0.0
    %579 = vmatpush1.msra.mxu0 0.0
    %580 = vmatprep.subr.mxu0 0.0
    %581 = vmatpush1.msra.mxu0 0.0
    %582 = vmatprep.subr.mxu0 0.0
    %583 = vmatpush1.msra.mxu0 0.0
    %584 = vmatprep.subr.mxu0 0.0
    %585 = vmatpush1.msra.mxu0 0.0
    %586 = vmatprep.subr.mxu0 0.0
    %587 = vmatpush1.msra.mxu0 0.0
    %588 = vmatprep.subr.mxu0 0.0
    %589 = vmatpush1.msra.mxu0 0.0
    %590 = vmatprep.subr.mxu0 0.0
    %591 = vmatpush1.msra.mxu0 0.0
    %592 = vmatprep.subr.mxu0 0.0
    %593 = vmatpush1.msra.mxu0 0.0
    %594 = vmatprep.subr.mxu0 0.0
    %595 = vmatpush1.msra.mxu0 0.0
    %596 = vmatprep.subr.mxu0 0.0
    %597 = vmatpush1.msra.mxu0 0.0
    %598 = vmatprep.subr.mxu0 0.0
    %599 = vmatpush1.msra.mxu0 0.0
    %600 = vmatprep.mubr.f32.mxu0 0.0
    %601 = vmatmul.mubr.f32.gmra.mrb[0].mxu0 %v534
    %v602 = vpop.f32.mrb[0].mxu0
    %v603 = vadd.f32 0.0, %v602
    %v604 = vpop.f32.mrb[0].mxu0
    %605 = vdwg.mxu0
    %v606 = vmul.f32 %v603, %v531
    %608 = vrot.lane.b32.xlu0 %v606, 16
    %v609 = vpop.permute.xlu0 %608
    %v611 = vsel %vm310, %v389, %v609
    %vm612 = vcmp.gt.f32.partialorder %v166, 0.0
    %v613 = vadd.f32 %v166, 1.0
    %v614 = vmin.f32 %v166, 0.0
    %v615 = vmul.f32 %v614, 1.442695
    %v616 = vpow.pop %v615
    %v617 = vsel %vm612, %v613, %v616
    %619 = vrot.lane.b32.xlu0 %v617, 96
    %v620 = vpop.permute.xlu0 %619
    %622 = vxpose.xlu0.b32.start [1/16] %v620, 128
    %623 = vxpose.xlu0.b32.cont [2/16] 0.0, 128
    %624 = vxpose.xlu0.b32.cont [3/16] 0.0, 128
    %625 = vxpose.xlu0.b32.cont [4/16] 0.0, 128
    %626 = vxpose.xlu0.b32.cont [5/16] 0.0, 128
    %627 = vxpose.xlu0.b32.cont [6/16] 0.0, 128
    %628 = vxpose.xlu0.b32.cont [7/16] 0.0, 128
    %629 = vxpose.xlu0.b32.cont [8/16] 0.0, 128
    %630 = vxpose.xlu0.b32.cont [9/16] 0.0, 128
    %631 = vxpose.xlu0.b32.cont [10/16] 0.0, 128
    %632 = vxpose.xlu0.b32.cont [11/16] 0.0, 128
    %633 = vxpose.xlu0.b32.cont [12/16] 0.0, 128
    %634 = vxpose.xlu0.b32.cont [13/16] 0.0, 128
    %635 = vxpose.xlu0.b32.cont [14/16] 0.0, 128
    %636 = vxpose.xlu0.b32.cont [15/16] 0.0, 128
    %637 = vxpose.xlu0.b32.end [16/16] 0.0, 128
    %v638 = vpop.trf.xlu0
    %v639 = vpop.trf.xlu0
    %v640 = vpop.trf.xlu0
    %v641 = vpop.trf.xlu0
    %v642 = vpop.trf.xlu0
    %v643 = vpop.trf.xlu0
    %v644 = vpop.trf.xlu0
    %v645 = vpop.trf.xlu0
    %v646 = vpop.trf.xlu0
    %v647 = vpop.trf.xlu0
    %v648 = vpop.trf.xlu0
    %v649 = vpop.trf.xlu0
    %v650 = vpop.trf.xlu0
    %v651 = vpop.trf.xlu0
    %v652 = vpop.trf.xlu0
    %v653 = vpop.trf.xlu0
    %655 = vrot.lane.b32.xlu0 %v166, 64
    %v656 = vpop.permute.xlu0 %655
    %v659 = vsel %vm215, %v638, 0
    %v662 = vsel %vm215, %v639, 0
    %664 = vmatprep.subr.mxu0 0.0
    %665 = vmatpush1.msra.mxu0 %v656
    %666 = vmatprep.subr.mxu0 0.0
    %667 = vmatpush1.msra.mxu0 0.0
    %668 = vmatprep.subr.mxu0 0.0
    %669 = vmatpush1.msra.mxu0 0.0
    %670 = vmatprep.subr.mxu0 0.0
    %671 = vmatpush1.msra.mxu0 0.0
    %672 = vmatprep.subr.mxu0 0.0
    %673 = vmatpush1.msra.mxu0 0.0
    %674 = vmatprep.subr.mxu0 0.0
    %675 = vmatpush1.msra.mxu0 0.0
    %676 = vmatprep.subr.mxu0 0.0
    %677 = vmatpush1.msra.mxu0 0.0
    %678 = vmatprep.subr.mxu0 0.0
    %679 = vmatpush1.msra.mxu0 0.0
    %680 = vmatprep.subr.mxu0 0.0
    %681 = vmatpush1.msra.mxu0 0.0
    %682 = vmatprep.subr.mxu0 0.0
    %683 = vmatpush1.msra.mxu0 0.0
    %684 = vmatprep.subr.mxu0 0.0
    %685 = vmatpush1.msra.mxu0 0.0
    %686 = vmatprep.subr.mxu0 0.0
    %687 = vmatpush1.msra.mxu0 0.0
    %688 = vmatprep.subr.mxu0 0.0
    %689 = vmatpush1.msra.mxu0 0.0
    %690 = vmatprep.subr.mxu0 0.0
    %691 = vmatpush1.msra.mxu0 0.0
    %692 = vmatprep.subr.mxu0 0.0
    %693 = vmatpush1.msra.mxu0 0.0
    %694 = vmatprep.subr.mxu0 0.0
    %695 = vmatpush1.msra.mxu0 0.0
    %696 = vmatprep.subr.mxu0 0.0
    %697 = vmatpush1.msra.mxu0 0.0
    %698 = vmatprep.subr.mxu0 0.0
    %699 = vmatpush1.msra.mxu0 0.0
    %700 = vmatprep.subr.mxu0 0.0
    %701 = vmatpush1.msra.mxu0 0.0
    %702 = vmatprep.subr.mxu0 0.0
    %703 = vmatpush1.msra.mxu0 0.0
    %704 = vmatprep.subr.mxu0 0.0
    %705 = vmatpush1.msra.mxu0 0.0
    %706 = vmatprep.subr.mxu0 0.0
    %707 = vmatpush1.msra.mxu0 0.0
    %708 = vmatprep.subr.mxu0 0.0
    %709 = vmatpush1.msra.mxu0 0.0
    %710 = vmatprep.subr.mxu0 0.0
    %711 = vmatpush1.msra.mxu0 0.0
    %712 = vmatprep.subr.mxu0 0.0
    %713 = vmatpush1.msra.mxu0 0.0
    %714 = vmatprep.subr.mxu0 0.0
    %715 = vmatpush1.msra.mxu0 0.0
    %716 = vmatprep.subr.mxu0 0.0
    %717 = vmatpush1.msra.mxu0 0.0
    %718 = vmatprep.subr.mxu0 0.0
    %719 = vmatpush1.msra.mxu0 0.0
    %720 = vmatprep.subr.mxu0 0.0
    %721 = vmatpush1.msra.mxu0 0.0
    %722 = vmatprep.subr.mxu0 0.0
    %723 = vmatpush1.msra.mxu0 0.0
    %724 = vmatprep.subr.mxu0 0.0
    %725 = vmatpush1.msra.mxu0 0.0
    %726 = vmatprep.subr.mxu0 0.0
    %727 = vmatpush1.msra.mxu0 0.0
    %728 = vmatprep.mubr.f32.mxu0 0.0
    %729 = vmatmul.mubr.f32.gmra.mrb[0].mxu0 %v659
    %v730 = vpop.f32.mrb[0].mxu0
    %v731 = vadd.f32 0.0, %v730
    %v732 = vpop.f32.mrb[0].mxu0
    %733 = vmatprep.mubr.f32.mxu0 0.0
    %734 = vmatmul.mubr.f32.gmra.mrb[0].mxu0 %v662
    %v735 = vpop.f32.mrb[0].mxu0
    %v736 = vadd.f32 0.0, %v735
    %v737 = vpop.f32.mrb[0].mxu0
    %738 = vdwg.mxu0
    %v739 = vsel %vm297, %v617, 0.0
    %v740 = vrot.slane %v739, 4
    %v741 = vadd.f32 %v739, %v740
    %v742 = vrot.slane %v741, 2
    %v743 = vadd.f32 %v741, %v742
    %v744 = vrot.slane %v743, 1
    %v745 = vadd.f32 %v743, %v744
    %747 = vrot.lane.b32.xlu0 %v745, 96
    %v748 = vpop.permute.xlu0 %747
    %v750 = vmul.f32 %v617, %v748
    %v751 = vsel %vm310, %v750, 0.0
    %752 = vadd.xlane.f32.xlu0 %v751
    %v753 = vpop.xlane.xlu0 %752
    %v754 = vadd.f32 %v753, 1e-06
    %v755 = vrcp.pop %v754
    %v756 = vmul.f32 1.0, %v755
    %v757 = vsel %vm310, %v617, 0
    %759 = vmatprep.subr.mxu0 0.0
    %760 = vmatpush1.msra.mxu0 %v731
    %761 = vmatprep.subr.mxu0 0.0
    %762 = vmatpush1.msra.mxu0 %v736
    %763 = vmatprep.subr.mxu0 0.0
    %764 = vmatpush1.msra.mxu0 0.0
    %765 = vmatprep.subr.mxu0 0.0
    %766 = vmatpush1.msra.mxu0 0.0
    %767 = vmatprep.subr.mxu0 0.0
    %768 = vmatpush1.msra.mxu0 0.0
    %769 = vmatprep.subr.mxu0 0.0
    %770 = vmatpush1.msra.mxu0 0.0
    %771 = vmatprep.subr.mxu0 0.0
    %772 = vmatpush1.msra.mxu0 0.0
    %773 = vmatprep.subr.mxu0 0.0
    %774 = vmatpush1.msra.mxu0 0.0
    %775 = vmatprep.subr.mxu0 0.0
    %776 = vmatpush1.msra.mxu0 0.0
    %777 = vmatprep.subr.mxu0 0.0
    %778 = vmatpush1.msra.mxu0 0.0
    %779 = vmatprep.subr.mxu0 0.0
    %780 = vmatpush1.msra.mxu0 0.0
    %781 = vmatprep.subr.mxu0 0.0
    %782 = vmatpush1.msra.mxu0 0.0
    %783 = vmatprep.subr.mxu0 0.0
    %784 = vmatpush1.msra.mxu0 0.0
    %785 = vmatprep.subr.mxu0 0.0
    %786 = vmatpush1.msra.mxu0 0.0
    %787 = vmatprep.subr.mxu0 0.0
    %788 = vmatpush1.msra.mxu0 0.0
    %789 = vmatprep.subr.mxu0 0.0
    %790 = vmatpush1.msra.mxu0 0.0
    %791 = vmatprep.subr.mxu0 0.0
    %792 = vmatpush1.msra.mxu0 0.0
    %793 = vmatprep.subr.mxu0 0.0
    %794 = vmatpush1.msra.mxu0 0.0
    %795 = vmatprep.subr.mxu0 0.0
    %796 = vmatpush1.msra.mxu0 0.0
    %797 = vmatprep.subr.mxu0 0.0
    %798 = vmatpush1.msra.mxu0 0.0
    %799 = vmatprep.subr.mxu0 0.0
    %800 = vmatpush1.msra.mxu0 0.0
    %801 = vmatprep.subr.mxu0 0.0
    %802 = vmatpush1.msra.mxu0 0.0
    %803 = vmatprep.subr.mxu0 0.0
    %804 = vmatpush1.msra.mxu0 0.0
    %805 = vmatprep.subr.mxu0 0.0
    %806 = vmatpush1.msra.mxu0 0.0
    %807 = vmatprep.subr.mxu0 0.0
    %808 = vmatpush1.msra.mxu0 0.0
    %809 = vmatprep.subr.mxu0 0.0
    %810 = vmatpush1.msra.mxu0 0.0
    %811 = vmatprep.subr.mxu0 0.0
    %812 = vmatpush1.msra.mxu0 0.0
    %813 = vmatprep.subr.mxu0 0.0
    %814 = vmatpush1.msra.mxu0 0.0
    %815 = vmatprep.subr.mxu0 0.0
    %816 = vmatpush1.msra.mxu0 0.0
    %817 = vmatprep.subr.mxu0 0.0
    %818 = vmatpush1.msra.mxu0 0.0
    %819 = vmatprep.subr.mxu0 0.0
    %820 = vmatpush1.msra.mxu0 0.0
    %821 = vmatprep.subr.mxu0 0.0
    %822 = vmatpush1.msra.mxu0 0.0
    %823 = vmatprep.mubr.f32.mxu0 0.0
    %824 = vmatmul.mubr.f32.gmra.mrb[0].mxu0 %v757
    %v825 = vpop.f32.mrb[0].mxu0
    %v826 = vadd.f32 0.0, %v825
    %v827 = vpop.f32.mrb[0].mxu0
    %828 = vdwg.mxu0
    %v829 = vmul.f32 %v826, %v756
    %830 = vrot.lane.b32.xlu0 %v617, 80
    %v831 = vpop.permute.xlu0 %830
    %833 = vxpose.xlu0.b32.start [1/16] %v831, 128
    %834 = vxpose.xlu0.b32.cont [2/16] 0.0, 128
    %835 = vxpose.xlu0.b32.cont [3/16] 0.0, 128
    %836 = vxpose.xlu0.b32.cont [4/16] 0.0, 128
    %837 = vxpose.xlu0.b32.cont [5/16] 0.0, 128
    %838 = vxpose.xlu0.b32.cont [6/16] 0.0, 128
    %839 = vxpose.xlu0.b32.cont [7/16] 0.0, 128
    %840 = vxpose.xlu0.b32.cont [8/16] 0.0, 128
    %841 = vxpose.xlu0.b32.cont [9/16] 0.0, 128
    %842 = vxpose.xlu0.b32.cont [10/16] 0.0, 128
    %843 = vxpose.xlu0.b32.cont [11/16] 0.0, 128
    %844 = vxpose.xlu0.b32.cont [12/16] 0.0, 128
    %845 = vxpose.xlu0.b32.cont [13/16] 0.0, 128
    %846 = vxpose.xlu0.b32.cont [14/16] 0.0, 128
    %847 = vxpose.xlu0.b32.cont [15/16] 0.0, 128
    %848 = vxpose.xlu0.b32.end [16/16] 0.0, 128
    %v849 = vpop.trf.xlu0
    %v850 = vpop.trf.xlu0
    %v851 = vpop.trf.xlu0
    %v852 = vpop.trf.xlu0
    %v853 = vpop.trf.xlu0
    %v854 = vpop.trf.xlu0
    %v855 = vpop.trf.xlu0
    %v856 = vpop.trf.xlu0
    %v857 = vpop.trf.xlu0
    %v858 = vpop.trf.xlu0
    %v859 = vpop.trf.xlu0
    %v860 = vpop.trf.xlu0
    %v861 = vpop.trf.xlu0
    %v862 = vpop.trf.xlu0
    %v863 = vpop.trf.xlu0
    %v864 = vpop.trf.xlu0
    %865 = vrot.lane.b32.xlu0 %v166, 48
    %v866 = vpop.permute.xlu0 %865
    %v869 = vsel %vm215, %v849, 0
    %v872 = vsel %vm215, %v850, 0
    %874 = vmatprep.subr.mxu0 0.0
    %875 = vmatpush1.msra.mxu0 %v866
    %876 = vmatprep.subr.mxu0 0.0
    %877 = vmatpush1.msra.mxu0 0.0
    %878 = vmatprep.subr.mxu0 0.0
    %879 = vmatpush1.msra.mxu0 0.0
    %880 = vmatprep.subr.mxu0 0.0
    %881 = vmatpush1.msra.mxu0 0.0
    %882 = vmatprep.subr.mxu0 0.0
    %883 = vmatpush1.msra.mxu0 0.0
    %884 = vmatprep.subr.mxu0 0.0
    %885 = vmatpush1.msra.mxu0 0.0
    %886 = vmatprep.subr.mxu0 0.0
    %887 = vmatpush1.msra.mxu0 0.0
    %888 = vmatprep.subr.mxu0 0.0
    %889 = vmatpush1.msra.mxu0 0.0
    %890 = vmatprep.subr.mxu0 0.0
    %891 = vmatpush1.msra.mxu0 0.0
    %892 = vmatprep.subr.mxu0 0.0
    %893 = vmatpush1.msra.mxu0 0.0
    %894 = vmatprep.subr.mxu0 0.0
    %895 = vmatpush1.msra.mxu0 0.0
    %896 = vmatprep.subr.mxu0 0.0
    %897 = vmatpush1.msra.mxu0 0.0
    %898 = vmatprep.subr.mxu0 0.0
    %899 = vmatpush1.msra.mxu0 0.0
    %900 = vmatprep.subr.mxu0 0.0
    %901 = vmatpush1.msra.mxu0 0.0
    %902 = vmatprep.subr.mxu0 0.0
    %903 = vmatpush1.msra.mxu0 0.0
    %904 = vmatprep.subr.mxu0 0.0
    %905 = vmatpush1.msra.mxu0 0.0
    %906 = vmatprep.subr.mxu0 0.0
    %907 = vmatpush1.msra.mxu0 0.0
    %908 = vmatprep.subr.mxu0 0.0
    %909 = vmatpush1.msra.mxu0 0.0
    %910 = vmatprep.subr.mxu0 0.0
    %911 = vmatpush1.msra.mxu0 0.0
    %912 = vmatprep.subr.mxu0 0.0
    %913 = vmatpush1.msra.mxu0 0.0
    %914 = vmatprep.subr.mxu0 0.0
    %915 = vmatpush1.msra.mxu0 0.0
    %916 = vmatprep.subr.mxu0 0.0
    %917 = vmatpush1.msra.mxu0 0.0
    %918 = vmatprep.subr.mxu0 0.0
    %919 = vmatpush1.msra.mxu0 0.0
    %920 = vmatprep.subr.mxu0 0.0
    %921 = vmatpush1.msra.mxu0 0.0
    %922 = vmatprep.subr.mxu0 0.0
    %923 = vmatpush1.msra.mxu0 0.0
    %924 = vmatprep.subr.mxu0 0.0
    %925 = vmatpush1.msra.mxu0 0.0
    %926 = vmatprep.subr.mxu0 0.0
    %927 = vmatpush1.msra.mxu0 0.0
    %928 = vmatprep.subr.mxu0 0.0
    %929 = vmatpush1.msra.mxu0 0.0
    %930 = vmatprep.subr.mxu0 0.0
    %931 = vmatpush1.msra.mxu0 0.0
    %932 = vmatprep.subr.mxu0 0.0
    %933 = vmatpush1.msra.mxu0 0.0
    %934 = vmatprep.subr.mxu0 0.0
    %935 = vmatpush1.msra.mxu0 0.0
    %936 = vmatprep.subr.mxu0 0.0
    %937 = vmatpush1.msra.mxu0 0.0
    %938 = vmatprep.mubr.f32.mxu0 0.0
    %939 = vmatmul.mubr.f32.gmra.mrb[0].mxu0 %v869
    %v940 = vpop.f32.mrb[0].mxu0
    %v941 = vadd.f32 0.0, %v940
    %v942 = vpop.f32.mrb[0].mxu0
    %943 = vmatprep.mubr.f32.mxu0 0.0
    %944 = vmatmul.mubr.f32.gmra.mrb[0].mxu0 %v872
    %v945 = vpop.f32.mrb[0].mxu0
    %v946 = vadd.f32 0.0, %v945
    %v947 = vpop.f32.mrb[0].mxu0
    %948 = vdwg.mxu0
    %v949 = vsel %vm509, %v617, 0.0
    %v950 = vrot.slane %v949, 4
    %v951 = vadd.f32 %v949, %v950
    %v952 = vrot.slane %v951, 2
    %v953 = vadd.f32 %v951, %v952
    %v954 = vrot.slane %v953, 1
    %v955 = vadd.f32 %v953, %v954
    %957 = vrot.lane.b32.xlu0 %v955, 96
    %v958 = vpop.permute.xlu0 %957
    %v960 = vmul.f32 %v617, %v958
    %962 = vrot.lane.b32.xlu0 %v960, 112
    %v963 = vpop.permute.xlu0 %962
    %v965 = vsel %vm310, %v963, 0.0
    %966 = vadd.xlane.f32.xlu0 %v965
    %v967 = vpop.xlane.xlu0 %966
    %v968 = vadd.f32 %v967, 1e-06
    %v969 = vrcp.pop %v968
    %v970 = vmul.f32 1.0, %v969
    %971 = vrot.lane.b32.xlu0 %v617, 112
    %v972 = vpop.permute.xlu0 %971
    %v973 = vsel %vm310, %v972, 0
    %975 = vmatprep.subr.mxu0 0.0
    %976 = vmatpush1.msra.mxu0 %v941
    %977 = vmatprep.subr.mxu0 0.0
    %978 = vmatpush1.msra.mxu0 %v946
    %979 = vmatprep.subr.mxu0 0.0
    %980 = vmatpush1.msra.mxu0 0.0
    %981 = vmatprep.subr.mxu0 0.0
    %982 = vmatpush1.msra.mxu0 0.0
    %983 = vmatprep.subr.mxu0 0.0
    %984 = vmatpush1.msra.mxu0 0.0
    %985 = vmatprep.subr.mxu0 0.0
    %986 = vmatpush1.msra.mxu0 0.0
    %987 = vmatprep.subr.mxu0 0.0
    %988 = vmatpush1.msra.mxu0 0.0
    %989 = vmatprep.subr.mxu0 0.0
    %990 = vmatpush1.msra.mxu0 0.0
    %991 = vmatprep.subr.mxu0 0.0
    %992 = vmatpush1.msra.mxu0 0.0
    %993 = vmatprep.subr.mxu0 0.0
    %994 = vmatpush1.msra.mxu0 0.0
    %995 = vmatprep.subr.mxu0 0.0
    %996 = vmatpush1.msra.mxu0 0.0
    %997 = vmatprep.subr.mxu0 0.0
    %998 = vmatpush1.msra.mxu0 0.0
    %999 = vmatprep.subr.mxu0 0.0
    %1000 = vmatpush1.msra.mxu0 0.0
    %1001 = vmatprep.subr.mxu0 0.0
    %1002 = vmatpush1.msra.mxu0 0.0
    %1003 = vmatprep.subr.mxu0 0.0
    %1004 = vmatpush1.msra.mxu0 0.0
    %1005 = vmatprep.subr.mxu0 0.0
    %1006 = vmatpush1.msra.mxu0 0.0
    %1007 = vmatprep.subr.mxu0 0.0
    %1008 = vmatpush1.msra.mxu0 0.0
    %1009 = vmatprep.subr.mxu0 0.0
    %1010 = vmatpush1.msra.mxu0 0.0
    %1011 = vmatprep.subr.mxu0 0.0
    %1012 = vmatpush1.msra.mxu0 0.0
    %1013 = vmatprep.subr.mxu0 0.0
    %1014 = vmatpush1.msra.mxu0 0.0
    %1015 = vmatprep.subr.mxu0 0.0
    %1016 = vmatpush1.msra.mxu0 0.0
    %1017 = vmatprep.subr.mxu0 0.0
    %1018 = vmatpush1.msra.mxu0 0.0
    %1019 = vmatprep.subr.mxu0 0.0
    %1020 = vmatpush1.msra.mxu0 0.0
    %1021 = vmatprep.subr.mxu0 0.0
    %1022 = vmatpush1.msra.mxu0 0.0
    %1023 = vmatprep.subr.mxu0 0.0
    %1024 = vmatpush1.msra.mxu0 0.0
    %1025 = vmatprep.subr.mxu0 0.0
    %1026 = vmatpush1.msra.mxu0 0.0
    %1027 = vmatprep.subr.mxu0 0.0
    %1028 = vmatpush1.msra.mxu0 0.0
    %1029 = vmatprep.subr.mxu0 0.0
    %1030 = vmatpush1.msra.mxu0 0.0
    %1031 = vmatprep.subr.mxu0 0.0
    %1032 = vmatpush1.msra.mxu0 0.0
    %1033 = vmatprep.subr.mxu0 0.0
    %1034 = vmatpush1.msra.mxu0 0.0
    %1035 = vmatprep.subr.mxu0 0.0
    %1036 = vmatpush1.msra.mxu0 0.0
    %1037 = vmatprep.subr.mxu0 0.0
    %1038 = vmatpush1.msra.mxu0 0.0
    %1039 = vmatprep.mubr.f32.mxu0 0.0
    %1040 = vmatmul.mubr.f32.gmra.mrb[0].mxu0 %v973
    %v1041 = vpop.f32.mrb[0].mxu0
    %v1042 = vadd.f32 0.0, %v1041
    %v1043 = vpop.f32.mrb[0].mxu0
    %1044 = vdwg.mxu0
    %v1045 = vmul.f32 %v1042, %v970
    %1047 = vrot.lane.b32.xlu0 %v1045, 16
    %v1048 = vpop.permute.xlu0 %1047
    %v1050 = vsel %vm310, %v829, %v1048
    %v1051 = vld [vmem:[%s3] sm:$0xff]
    %v1052 = vld [vmem:[%s3 + $0x8] sm:$0xff]
    %v1053 = vld [vmem:[%s3 + $0x10] sm:$0xff]
    %v1054 = vld [vmem:[%s3 + $0x18] sm:$0xff]
    %v1055 = vld [vmem:[#allocation4] sm:$0x1]
    %v1057 = vlaneseq
    %v1058 = vshrl.u32 %v1057, 7
    %v1059 = vsub.s32 0, %v1058
    %v1060 = vrot.slane %v1055, %v1059
    %v1063 = vsel %vm87, %v611, 0
    %v1066 = vsel %vm87, %v1050, 0
    %1068 = vmatprep.subr.mxu0 0.0
    %1069 = vmatpush1.msra.mxu0 %v1051
    %1070 = vmatprep.subr.mxu0 0.0
    %1071 = vmatpush1.msra.mxu0 %v1052
    %1072 = vmatprep.subr.mxu0 0.0
    %1073 = vmatpush1.msra.mxu0 %v1053
    %1074 = vmatprep.subr.mxu0 0.0
    %1075 = vmatpush1.msra.mxu0 %v1054
    %1076 = vmatprep.subr.mxu0 0.0
    %1077 = vmatpush1.msra.mxu0 0.0
    %1078 = vmatprep.subr.mxu0 0.0
    %1079 = vmatpush1.msra.mxu0 0.0
    %1080 = vmatprep.subr.mxu0 0.0
    %1081 = vmatpush1.msra.mxu0 0.0
    %1082 = vmatprep.subr.mxu0 0.0
    %1083 = vmatpush1.msra.mxu0 0.0
    %1084 = vmatprep.subr.mxu0 0.0
    %1085 = vmatpush1.msra.mxu0 0.0
    %1086 = vmatprep.subr.mxu0 0.0
    %1087 = vmatpush1.msra.mxu0 0.0
    %1088 = vmatprep.subr.mxu0 0.0
    %1089 = vmatpush1.msra.mxu0 0.0
    %1090 = vmatprep.subr.mxu0 0.0
    %1091 = vmatpush1.msra.mxu0 0.0
    %1092 = vmatprep.subr.mxu0 0.0
    %1093 = vmatpush1.msra.mxu0 0.0
    %1094 = vmatprep.subr.mxu0 0.0
    %1095 = vmatpush1.msra.mxu0 0.0
    %1096 = vmatprep.subr.mxu0 0.0
    %1097 = vmatpush1.msra.mxu0 0.0
    %1098 = vmatprep.subr.mxu0 0.0
    %1099 = vmatpush1.msra.mxu0 0.0
    %1100 = vmatprep.subr.mxu0 0.0
    %1101 = vmatpush1.msra.mxu0 0.0
    %1102 = vmatprep.subr.mxu0 0.0
    %1103 = vmatpush1.msra.mxu0 0.0
    %1104 = vmatprep.subr.mxu0 0.0
    %1105 = vmatpush1.msra.mxu0 0.0
    %1106 = vmatprep.subr.mxu0 0.0
    %1107 = vmatpush1.msra.mxu0 0.0
    %1108 = vmatprep.subr.mxu0 0.0
    %1109 = vmatpush1.msra.mxu0 0.0
    %1110 = vmatprep.subr.mxu0 0.0
    %1111 = vmatpush1.msra.mxu0 0.0
    %1112 = vmatprep.subr.mxu0 0.0
    %1113 = vmatpush1.msra.mxu0 0.0
    %1114 = vmatprep.subr.mxu0 0.0
    %1115 = vmatpush1.msra.mxu0 0.0
    %1116 = vmatprep.subr.mxu0 0.0
    %1117 = vmatpush1.msra.mxu0 0.0
    %1118 = vmatprep.subr.mxu0 0.0
    %1119 = vmatpush1.msra.mxu0 0.0
    %1120 = vmatprep.subr.mxu0 0.0
    %1121 = vmatpush1.msra.mxu0 0.0
    %1122 = vmatprep.subr.mxu0 0.0
    %1123 = vmatpush1.msra.mxu0 0.0
    %1124 = vmatprep.subr.mxu0 0.0
    %1125 = vmatpush1.msra.mxu0 0.0
    %1126 = vmatprep.subr.mxu0 0.0
    %1127 = vmatpush1.msra.mxu0 0.0
    %1128 = vmatprep.subr.mxu0 0.0
    %1129 = vmatpush1.msra.mxu0 0.0
    %1130 = vmatprep.subr.mxu0 0.0
    %1131 = vmatpush1.msra.mxu0 0.0
    %1132 = vmatprep.mubr.f32.mxu0 0.0
    %1133 = vmatmul.mubr.f32.gmra.mrb[0].mxu0 %v1063
    %v1134 = vpop.f32.mrb[0].mxu0
    %v1135 = vadd.f32 %v1060, %v1134
    %v1136 = vpop.f32.mrb[0].mxu0
    %1137 = vmatprep.mubr.f32.mxu0 0.0
    %1138 = vmatmul.mubr.f32.gmra.mrb[0].mxu0 %v1066
    %v1139 = vpop.f32.mrb[0].mxu0
    %v1140 = vadd.f32 %v1060, %v1139
    %v1141 = vpop.f32.mrb[0].mxu0
    %1142 = vdwg.mxu0
    %v1143 = vadd.f32 %v74, %v1135
    %v1144 = vadd.f32 %v75, %v1140
    %v1145 = vld [vmem:[%s5] sm:$0x1]
    %v1146 = vld [vmem:[%s6] sm:$0x1]
    %v1147 = vsel %vm87, %v1143, 0.0
    %1148 = vadd.xlane.f32.xlu0 %v1147
    %v1149 = vpop.xlane.xlu0 %1148
    %v1150 = vsel %vm87, %v1144, 0.0
    %1151 = vadd.xlane.f32.xlu0 %v1150
    %v1152 = vpop.xlane.xlu0 %1151
    %v1153 = vrcp.pop 32.0
    %v1154 = vmul.f32 %v1149, %v1153
    %v1155 = vmul.f32 %v1152, %v1153
    %v1156 = vsub.f32 %v1143, %v1154
    %v1157 = vsub.f32 %v1144, %v1155
    %v1158 = vmul.f32 %v1156, %v1156
    %v1159 = vmul.f32 %v1157, %v1157
    %v1160 = vsel %vm87, %v1158, 0.0
    %1161 = vadd.xlane.f32.xlu0 %v1160
    %v1162 = vpop.xlane.xlu0 %1161
    %v1163 = vsel %vm87, %v1159, 0.0
    %1164 = vadd.xlane.f32.xlu0 %v1163
    %v1165 = vpop.xlane.xlu0 %1164
    %v1166 = vmul.f32 %v1162, %v1153
    %v1167 = vmul.f32 %v1165, %v1153
    %v1168 = vadd.f32 %v1166, 1e-05
    %v1169 = vadd.f32 %v1167, 1e-05
    %v1170 = vrsqrt.pop %v1168
    %v1171 = vrsqrt.pop %v1169
    %v1172 = vmul.f32 %v1156, %v1170
    %v1173 = vmul.f32 %v1157, %v1171
    %v1175 = vlaneseq
    %v1176 = vshrl.u32 %v1175, 7
    %v1177 = vsub.s32 0, %v1176
    %v1178 = vrot.slane %v1145, %v1177
    %v1180 = vmul.f32 %v1172, %v1178
    %v1181 = vmul.f32 %v1173, %v1178
    %v1183 = vlaneseq
    %v1184 = vshrl.u32 %v1183, 7
    %v1185 = vsub.s32 0, %v1184
    %v1186 = vrot.slane %v1146, %v1185
    %v1188 = vadd.f32 %v1180, %v1186
    %v1189 = vadd.f32 %v1181, %v1186
    %v1190 = vld [vmem:[%s7] sm:$0xff]
    %v1191 = vld [vmem:[%s7 + $0x8] sm:$0xff]
    %v1192 = vld [vmem:[%s7 + $0x10] sm:$0xff]
    %v1193 = vld [vmem:[%s7 + $0x18] sm:$0xff]
    %v1194 = vld [vmem:[%s8] sm:$0x1]
    %v1196 = vlaneseq
    %v1197 = vshrl.u32 %v1196, 7
    %v1198 = vsub.s32 0, %v1197
    %v1199 = vrot.slane %v1194, %v1198
    %v1202 = vsel %vm87, %v1188, 0
    %v1205 = vsel %vm87, %v1189, 0
    %1207 = vmatprep.subr.mxu0 0.0
    %1208 = vmatpush1.msra.mxu0 %v1190
    %1209 = vmatprep.subr.mxu0 0.0
    %1210 = vmatpush1.msra.mxu0 %v1191
    %1211 = vmatprep.subr.mxu0 0.0
    %1212 = vmatpush1.msra.mxu0 %v1192
    %1213 = vmatprep.subr.mxu0 0.0
    %1214 = vmatpush1.msra.mxu0 %v1193
    %1215 = vmatprep.subr.mxu0 0.0
    %1216 = vmatpush1.msra.mxu0 0.0
    %1217 = vmatprep.subr.mxu0 0.0
    %1218 = vmatpush1.msra.mxu0 0.0
    %1219 = vmatprep.subr.mxu0 0.0
    %1220 = vmatpush1.msra.mxu0 0.0
    %1221 = vmatprep.subr.mxu0 0.0
    %1222 = vmatpush1.msra.mxu0 0.0
    %1223 = vmatprep.subr.mxu0 0.0
    %1224 = vmatpush1.msra.mxu0 0.0
    %1225 = vmatprep.subr.mxu0 0.0
    %1226 = vmatpush1.msra.mxu0 0.0
    %1227 = vmatprep.subr.mxu0 0.0
    %1228 = vmatpush1.msra.mxu0 0.0
    %1229 = vmatprep.subr.mxu0 0.0
    %1230 = vmatpush1.msra.mxu0 0.0
    %1231 = vmatprep.subr.mxu0 0.0
    %1232 = vmatpush1.msra.mxu0 0.0
    %1233 = vmatprep.subr.mxu0 0.0
    %1234 = vmatpush1.msra.mxu0 0.0
    %1235 = vmatprep.subr.mxu0 0.0
    %1236 = vmatpush1.msra.mxu0 0.0
    %1237 = vmatprep.subr.mxu0 0.0
    %1238 = vmatpush1.msra.mxu0 0.0
    %1239 = vmatprep.subr.mxu0 0.0
    %1240 = vmatpush1.msra.mxu0 0.0
    %1241 = vmatprep.subr.mxu0 0.0
    %1242 = vmatpush1.msra.mxu0 0.0
    %1243 = vmatprep.subr.mxu0 0.0
    %1244 = vmatpush1.msra.mxu0 0.0
    %1245 = vmatprep.subr.mxu0 0.0
    %1246 = vmatpush1.msra.mxu0 0.0
    %1247 = vmatprep.subr.mxu0 0.0
    %1248 = vmatpush1.msra.mxu0 0.0
    %1249 = vmatprep.subr.mxu0 0.0
    %1250 = vmatpush1.msra.mxu0 0.0
    %1251 = vmatprep.subr.mxu0 0.0
    %1252 = vmatpush1.msra.mxu0 0.0
    %1253 = vmatprep.subr.mxu0 0.0
    %1254 = vmatpush1.msra.mxu0 0.0
    %1255 = vmatprep.subr.mxu0 0.0
    %1256 = vmatpush1.msra.mxu0 0.0
    %1257 = vmatprep.subr.mxu0 0.0
    %1258 = vmatpush1.msra.mxu0 0.0
    %1259 = vmatprep.subr.mxu0 0.0
    %1260 = vmatpush1.msra.mxu0 0.0
    %1261 = vmatprep.subr.mxu0 0.0
    %1262 = vmatpush1.msra.mxu0 0.0
    %1263 = vmatprep.subr.mxu0 0.0
    %1264 = vmatpush1.msra.mxu0 0.0
    %1265 = vmatprep.subr.mxu0 0.0
    %1266 = vmatpush1.msra.mxu0 0.0
    %1267 = vmatprep.subr.mxu0 0.0
    %1268 = vmatpush1.msra.mxu0 0.0
    %1269 = vmatprep.subr.mxu0 0.0
    %1270 = vmatpush1.msra.mxu0 0.0
    %1271 = vmatprep.mubr.f32.mxu0 0.0
    %1272 = vmatmul.mubr.f32.gmra.mrb[0].mxu0 %v1202
    %v1273 = vpop.f32.mrb[0].mxu0
    %v1274 = vadd.f32 %v1199, %v1273
    %v1275 = vpop.f32.mrb[0].mxu0
    %1276 = vmatprep.mubr.f32.mxu0 0.0
    %1277 = vmatmul.mubr.f32.gmra.mrb[0].mxu0 %v1205
    %v1278 = vpop.f32.mrb[0].mxu0
    %v1279 = vadd.f32 %v1199, %v1278
    %v1280 = vpop.f32.mrb[0].mxu0
    %1281 = vdwg.mxu0
    %v1282 = vmax.f32 %v1274, 0.0
    %v1283 = vmax.f32 %v1279, 0.0
    %v1284 = vld [vmem:[%s9] sm:$0xff]
    %v1285 = vld [vmem:[%s9 + $0x8] sm:$0xff]
    %v1286 = vld [vmem:[%s9 + $0x10] sm:$0xff]
    %v1287 = vld [vmem:[%s9 + $0x18] sm:$0xff]
    %v1288 = vld [vmem:[%s9 + $0x20] sm:$0xff]
    %v1289 = vld [vmem:[%s9 + $0x28] sm:$0xff]
    %v1290 = vld [vmem:[%s9 + $0x30] sm:$0xff]
    %v1291 = vld [vmem:[%s9 + $0x38] sm:$0xff]
    %v1292 = vld [vmem:[%s10] sm:$0x1]
    %v1294 = vlaneseq
    %v1295 = vshrl.u32 %v1294, 7
    %v1296 = vsub.s32 0, %v1295
    %v1297 = vrot.slane %v1292, %v1296
    %vm1299 = vcmask 523264
    %v1301 = vsel %vm1299, %v1282, 0
    %v1304 = vsel %vm1299, %v1283, 0
    %1306 = vmatprep.subr.mxu0 0.0
    %1307 = vmatpush1.msra.mxu0 %v1284
    %1308 = vmatprep.subr.mxu0 0.0
    %1309 = vmatpush1.msra.mxu0 %v1285
    %1310 = vmatprep.subr.mxu0 0.0
    %1311 = vmatpush1.msra.mxu0 %v1286
    %1312 = vmatprep.subr.mxu0 0.0
    %1313 = vmatpush1.msra.mxu0 %v1287
    %1314 = vmatprep.subr.mxu0 0.0
    %1315 = vmatpush1.msra.mxu0 %v1288
    %1316 = vmatprep.subr.mxu0 0.0
    %1317 = vmatpush1.msra.mxu0 %v1289
    %1318 = vmatprep.subr.mxu0 0.0
    %1319 = vmatpush1.msra.mxu0 %v1290
    %1320 = vmatprep.subr.mxu0 0.0
    %1321 = vmatpush1.msra.mxu0 %v1291
    %1322 = vmatprep.subr.mxu0 0.0
    %1323 = vmatpush1.msra.mxu0 0.0
    %1324 = vmatprep.subr.mxu0 0.0
    %1325 = vmatpush1.msra.mxu0 0.0
    %1326 = vmatprep.subr.mxu0 0.0
    %1327 = vmatpush1.msra.mxu0 0.0
    %1328 = vmatprep.subr.mxu0 0.0
    %1329 = vmatpush1.msra.mxu0 0.0
    %1330 = vmatprep.subr.mxu0 0.0
    %1331 = vmatpush1.msra.mxu0 0.0
    %1332 = vmatprep.subr.mxu0 0.0
    %1333 = vmatpush1.msra.mxu0 0.0
    %1334 = vmatprep.subr.mxu0 0.0
    %1335 = vmatpush1.msra.mxu0 0.0
    %1336 = vmatprep.subr.mxu0 0.0
    %1337 = vmatpush1.msra.mxu0 0.0
    %1338 = vmatprep.subr.mxu0 0.0
    %1339 = vmatpush1.msra.mxu0 0.0
    %1340 = vmatprep.subr.mxu0 0.0
    %1341 = vmatpush1.msra.mxu0 0.0
    %1342 = vmatprep.subr.mxu0 0.0
    %1343 = vmatpush1.msra.mxu0 0.0
    %1344 = vmatprep.subr.mxu0 0.0
    %1345 = vmatpush1.msra.mxu0 0.0
    %1346 = vmatprep.subr.mxu0 0.0
    %1347 = vmatpush1.msra.mxu0 0.0
    %1348 = vmatprep.subr.mxu0 0.0
    %1349 = vmatpush1.msra.mxu0 0.0
    %1350 = vmatprep.subr.mxu0 0.0
    %1351 = vmatpush1.msra.mxu0 0.0
    %1352 = vmatprep.subr.mxu0 0.0
    %1353 = vmatpush1.msra.mxu0 0.0
    %1354 = vmatprep.subr.mxu0 0.0
    %1355 = vmatpush1.msra.mxu0 0.0
    %1356 = vmatprep.subr.mxu0 0.0
    %1357 = vmatpush1.msra.mxu0 0.0
    %1358 = vmatprep.subr.mxu0 0.0
    %1359 = vmatpush1.msra.mxu0 0.0
    %1360 = vmatprep.subr.mxu0 0.0
    %1361 = vmatpush1.msra.mxu0 0.0
    %1362 = vmatprep.subr.mxu0 0.0
    %1363 = vmatpush1.msra.mxu0 0.0
    %1364 = vmatprep.subr.mxu0 0.0
    %1365 = vmatpush1.msra.mxu0 0.0
    %1366 = vmatprep.subr.mxu0 0.0
    %1367 = vmatpush1.msra.mxu0 0.0
    %1368 = vmatprep.subr.mxu0 0.0
    %1369 = vmatpush1.msra.mxu0 0.0
    %1370 = vmatprep.mubr.f32.mxu0 0.0
    %1371 = vmatmul.mubr.f32.gmra.mrb[0].mxu0 %v1301
    %v1372 = vpop.f32.mrb[0].mxu0
    %v1373 = vadd.f32 %v1297, %v1372
    %v1374 = vpop.f32.mrb[0].mxu0
    %1375 = vmatprep.mubr.f32.mxu0 0.0
    %1376 = vmatmul.mubr.f32.gmra.mrb[0].mxu0 %v1304
    %v1377 = vpop.f32.mrb[0].mxu0
    %v1378 = vadd.f32 %v1297, %v1377
    %v1379 = vpop.f32.mrb[0].mxu0
    %1380 = vdwg.mxu0
    %v1381 = vadd.f32 %v1188, %v1373
    %v1382 = vadd.f32 %v1189, %v1378
    %v1383 = vld [vmem:[%s11] sm:$0x1]
    %v1384 = vld [vmem:[%s12] sm:$0x1]
    %v1385 = vsel %vm87, %v1381, 0.0
    %1386 = vadd.xlane.f32.xlu0 %v1385
    %v1387 = vpop.xlane.xlu0 %1386
    %v1388 = vsel %vm87, %v1382, 0.0
    %1389 = vadd.xlane.f32.xlu0 %v1388
    %v1390 = vpop.xlane.xlu0 %1389
    %v1391 = vmul.f32 %v1387, %v1153
    %v1392 = vmul.f32 %v1390, %v1153
    %v1393 = vsub.f32 %v1381, %v1391
    %v1394 = vsub.f32 %v1382, %v1392
    %v1395 = vmul.f32 %v1393, %v1393
    %v1396 = vmul.f32 %v1394, %v1394
    %v1397 = vsel %vm87, %v1395, 0.0
    %1398 = vadd.xlane.f32.xlu0 %v1397
    %v1399 = vpop.xlane.xlu0 %1398
    %v1400 = vsel %vm87, %v1396, 0.0
    %1401 = vadd.xlane.f32.xlu0 %v1400
    %v1402 = vpop.xlane.xlu0 %1401
    %v1403 = vmul.f32 %v1399, %v1153
    %v1404 = vmul.f32 %v1402, %v1153
    %v1405 = vadd.f32 %v1403, 1e-05
    %v1406 = vadd.f32 %v1404, 1e-05
    %v1407 = vrsqrt.pop %v1405
    %v1408 = vrsqrt.pop %v1406
    %v1409 = vmul.f32 %v1393, %v1407
    %v1410 = vmul.f32 %v1394, %v1408
    %v1412 = vlaneseq
    %v1413 = vshrl.u32 %v1412, 7
    %v1414 = vsub.s32 0, %v1413
    %v1415 = vrot.slane %v1383, %v1414
    %v1417 = vmul.f32 %v1409, %v1415
    %v1418 = vmul.f32 %v1410, %v1415
    %v1420 = vlaneseq
    %v1421 = vshrl.u32 %v1420, 7
    %v1422 = vsub.s32 0, %v1421
    %v1423 = vrot.slane %v1384, %v1422
    %v1425 = vadd.f32 %v1417, %v1423
    %v1426 = vadd.f32 %v1418, %v1423
    %v1427 = vld [vmem:[%s13] sm:$0x1]
    %v1428 = vld [vmem:[%s14] sm:$0x1]
    %v1429 = vsel %vm87, %v1425, 0.0
    %1430 = vadd.xlane.f32.xlu0 %v1429
    %v1431 = vpop.xlane.xlu0 %1430
    %v1432 = vsel %vm87, %v1426, 0.0
    %1433 = vadd.xlane.f32.xlu0 %v1432
    %v1434 = vpop.xlane.xlu0 %1433
    %v1435 = vmul.f32 %v1431, %v1153
    %v1436 = vmul.f32 %v1434, %v1153
    %v1437 = vsub.f32 %v1425, %v1435
    %v1438 = vsub.f32 %v1426, %v1436
    %v1439 = vmul.f32 %v1437, %v1437
    %v1440 = vmul.f32 %v1438, %v1438
    %v1441 = vsel %vm87, %v1439, 0.0
    %1442 = vadd.xlane.f32.xlu0 %v1441
    %v1443 = vpop.xlane.xlu0 %1442
    %v1444 = vsel %vm87, %v1440, 0.0
    %1445 = vadd.xlane.f32.xlu0 %v1444
    %v1446 = vpop.xlane.xlu0 %1445
    %v1447 = vmul.f32 %v1443, %v1153
    %v1448 = vmul.f32 %v1446, %v1153
    %v1449 = vadd.f32 %v1447, 1e-05
    %v1450 = vadd.f32 %v1448, 1e-05
    %v1451 = vrsqrt.pop %v1449
    %v1452 = vrsqrt.pop %v1450
    %v1453 = vmul.f32 %v1437, %v1451
    %v1454 = vmul.f32 %v1438, %v1452
    %v1456 = vlaneseq
    %v1457 = vshrl.u32 %v1456, 7
    %v1458 = vsub.s32 0, %v1457
    %v1459 = vrot.slane %v1427, %v1458
    %v1461 = vmul.f32 %v1453, %v1459
    %v1462 = vmul.f32 %v1454, %v1459
    %v1464 = vlaneseq
    %v1465 = vshrl.u32 %v1464, 7
    %v1466 = vsub.s32 0, %v1465
    %v1467 = vrot.slane %v1428, %v1466
    %v1469 = vadd.f32 %v1461, %v1467
    %v1470 = vadd.f32 %v1462, %v1467
    %1471 = vst.msk [vmem:[%s15] sm:$0xff] %vm87, %v1469
    %1472 = vst.msk [vmem:[%s15 + $0x8] sm:$0xff] %vm87, %v1470
    // Predicated region
    $region70: #{_lambda_.5} parent=1 // pred_check
      _
    $region71: #{_lambda_.5} parent=1 // pred_check_branch
      %1474 = sbr.rel (0) target = $region73
    $region72: #{_lambda_.5} parent=1 // pred_region
      _
    $region73: #{_lambda_.5} parent=1 // pred_fallthru
      _
    // Predicated region
    $region74: #{_lambda_.5} parent=1 // pred_check
      _
    $region75: #{_lambda_.5} parent=1 // pred_check_branch
      %1476 = sbr.rel (0) target = $region77
    $region76: #{_lambda_.5} parent=1 // pred_region
      _
    $region77: #{_lambda_.5} parent=1 // pred_fallthru
      _
    %1477 = vsyncpa [#allocation3], 1
    %1478 = vsyncpa [#allocation5], 1

// kernel: _lambda_.6
$region0: #{_lambda_.6}
  #allocation0 [shape = 'u32[]', space=smem, size = 0x4, offset = 0x4, fixed_abs, tag = 'smem constant byte address 0x4 - core index']
  #allocation1 [shape = 'u32[144,128]{1,0:T(1,128)}', space=vmem, size = 0x12000, scoped, tag = 'internal scratch']
  %s0 = inlined_call_operand.vmem [shape: f32[16,32], index: 0, kind: input, shape index: {}]
  %s1 = inlined_call_operand.vmem [shape: f32[32,96], index: 1, kind: input, shape index: {}]
  %s2 = inlined_call_operand.vmem [shape: f32[1,96], index: 2, kind: input, shape index: {}]
  %s3 = inlined_call_operand.vmem [shape: f32[32,32], index: 3, kind: input, shape index: {}]
  %s4 = inlined_call_operand.vmem [shape: f32[1,32], index: 4, kind: input, shape index: {}]
  %s5 = inlined_call_operand.vmem [shape: f32[1,32], index: 5, kind: input, shape index: {}, may-alias: {5,11,13}]
  %s6 = inlined_call_operand.vmem [shape: f32[1,32], index: 6, kind: input, shape index: {}, may-alias: {6,12,14}]
  %s7 = inlined_call_operand.vmem [shape: f32[32,64], index: 7, kind: input, shape index: {}]
  %s8 = inlined_call_operand.vmem [shape: f32[1,64], index: 8, kind: input, shape index: {}]
  %s9 = inlined_call_operand.vmem [shape: f32[64,32], index: 9, kind: input, shape index: {}]
  %s10 = inlined_call_operand.vmem [shape: f32[1,32], index: 10, kind: input, shape index: {}]
  %s11 = inlined_call_operand.vmem [shape: f32[1,32], index: 11, kind: input, shape index: {}, may-alias: {5,11,13}]
  %s12 = inlined_call_operand.vmem [shape: f32[1,32], index: 12, kind: input, shape index: {}, may-alias: {6,12,14}]
  %s13 = inlined_call_operand.vmem [shape: f32[1,32], index: 13, kind: input, shape index: {}, may-alias: {5,11,13}]
  %s14 = inlined_call_operand.vmem [shape: f32[1,32], index: 14, kind: input, shape index: {}, may-alias: {6,12,14}]
  %s15 = inlined_call_operand.vmem [shape: f32[16,32], index: 15, kind: output, shape index: {}]
  %s16 = sld [smem:[#allocation0]]
  $region70: #{_lambda_.6} parent=0
    _
  %s18 = ssub.s32 1, %s16
  %s19 = scalar_select 0, %s18, %s16
  // Predicated region
  $region2: #{_lambda_.6} parent=0 // pred_check
    _
  $region3: #{_lambda_.6} parent=0 // pred_check_branch
    %21 = sbr.rel (0) target = $region5
  $region4: #{_lambda_.6} parent=0 // pred_region
    _
  $region5: #{_lambda_.6} parent=0 // pred_fallthru
    _
  // Predicated region
  $region6: #{_lambda_.6} parent=0 // pred_check
    _
  $region7: #{_lambda_.6} parent=0 // pred_check_branch
    %23 = sbr.rel (0) target = $region9
  $region8: #{_lambda_.6} parent=0 // pred_region
    _
  $region9: #{_lambda_.6} parent=0 // pred_fallthru
    _
  // Predicated region
  $region10: #{_lambda_.6} parent=0 // pred_check
    _
  $region11: #{_lambda_.6} parent=0 // pred_check_branch
    %25 = sbr.rel (0) target = $region13
  $region12: #{_lambda_.6} parent=0 // pred_region
    _
  $region13: #{_lambda_.6} parent=0 // pred_fallthru
    _
  // Predicated region
  $region14: #{_lambda_.6} parent=0 // pred_check
    _
  $region15: #{_lambda_.6} parent=0 // pred_check_branch
    %27 = sbr.rel (0) target = $region17
  $region16: #{_lambda_.6} parent=0 // pred_region
    _
  $region17: #{_lambda_.6} parent=0 // pred_fallthru
    _
  // Predicated region
  $region18: #{_lambda_.6} parent=0 // pred_check
    _
  $region19: #{_lambda_.6} parent=0 // pred_check_branch
    %29 = sbr.rel (0) target = $region21
  $region20: #{_lambda_.6} parent=0 // pred_region
    _
  $region21: #{_lambda_.6} parent=0 // pred_fallthru
    _
  // Predicated region
  $region22: #{_lambda_.6} parent=0 // pred_check
    _
  $region23: #{_lambda_.6} parent=0 // pred_check_branch
    %31 = sbr.rel (0) target = $region25
  $region24: #{_lambda_.6} parent=0 // pred_region
    _
  $region25: #{_lambda_.6} parent=0 // pred_fallthru
    _
  // Predicated region
  $region26: #{_lambda_.6} parent=0 // pred_check
    _
  $region27: #{_lambda_.6} parent=0 // pred_check_branch
    %33 = sbr.rel (0) target = $region29
  $region28: #{_lambda_.6} parent=0 // pred_region
    _
  $region29: #{_lambda_.6} parent=0 // pred_fallthru
    _
  // Predicated region
  $region30: #{_lambda_.6} parent=0 // pred_check
    _
  $region31: #{_lambda_.6} parent=0 // pred_check_branch
    %35 = sbr.rel (0) target = $region33
  $region32: #{_lambda_.6} parent=0 // pred_region
    _
  $region33: #{_lambda_.6} parent=0 // pred_fallthru
    _
  // Predicated region
  $region34: #{_lambda_.6} parent=0 // pred_check
    _
  $region35: #{_lambda_.6} parent=0 // pred_check_branch
    %37 = sbr.rel (0) target = $region37
  $region36: #{_lambda_.6} parent=0 // pred_region
    _
  $region37: #{_lambda_.6} parent=0 // pred_fallthru
    _
  // Predicated region
  $region38: #{_lambda_.6} parent=0 // pred_check
    _
  $region39: #{_lambda_.6} parent=0 // pred_check_branch
    %39 = sbr.rel (0) target = $region41
  $region40: #{_lambda_.6} parent=0 // pred_region
    _
  $region41: #{_lambda_.6} parent=0 // pred_fallthru
    _
  // Predicated region
  $region42: #{_lambda_.6} parent=0 // pred_check
    _
  $region43: #{_lambda_.6} parent=0 // pred_check_branch
    %41 = sbr.rel (0) target = $region45
  $region44: #{_lambda_.6} parent=0 // pred_region
    _
  $region45: #{_lambda_.6} parent=0 // pred_fallthru
    _
  // Predicated region
  $region46: #{_lambda_.6} parent=0 // pred_check
    _
  $region47: #{_lambda_.6} parent=0 // pred_check_branch
    %43 = sbr.rel (0) target = $region49
  $region48: #{_lambda_.6} parent=0 // pred_region
    _
  $region49: #{_lambda_.6} parent=0 // pred_fallthru
    _
  // Predicated region
  $region50: #{_lambda_.6} parent=0 // pred_check
    _
  $region51: #{_lambda_.6} parent=0 // pred_check_branch
    %45 = sbr.rel (0) target = $region53
  $region52: #{_lambda_.6} parent=0 // pred_region
    _
  $region53: #{_lambda_.6} parent=0 // pred_fallthru
    _
  // Predicated region
  $region54: #{_lambda_.6} parent=0 // pred_check
    _
  $region55: #{_lambda_.6} parent=0 // pred_check_branch
    %47 = sbr.rel (0) target = $region57
  $region56: #{_lambda_.6} parent=0 // pred_region
    _
  $region57: #{_lambda_.6} parent=0 // pred_fallthru
    _
  // Predicated region
  $region58: #{_lambda_.6} parent=0 // pred_check
    _
  $region59: #{_lambda_.6} parent=0 // pred_check_branch
    %49 = sbr.rel (0) target = $region61
  $region60: #{_lambda_.6} parent=0 // pred_region
    _
  $region61: #{_lambda_.6} parent=0 // pred_fallthru
    _
  %v50 = vld [vmem:[%s0] sm:$0xff]
  %v51 = vld [vmem:[%s0 + $0x8] sm:$0xff]
  %v52 = vld [vmem:[%s1] sm:$0xff]
  %v53 = vld [vmem:[%s1 + $0x8] sm:$0xff]
  %v54 = vld [vmem:[%s1 + $0x10] sm:$0xff]
  %v55 = vld [vmem:[%s1 + $0x18] sm:$0xff]
  %v56 = vld [vmem:[%s2] sm:$0x1]
  %v58 = vlaneseq
  %v59 = vshrl.u32 %v58, 7
  %v60 = vsub.s32 0, %v59
  %v61 = vrot.slane %v56, %v60
  %vm63 = vcmask 261120
  %v65 = vsel %vm63, %v50, 0
  %v68 = vsel %vm63, %v51, 0
  %70 = vmatprep.subr.mxu0 0.0
  %71 = vmatpush1.msra.mxu0 %v52
  %72 = vmatprep.subr.mxu0 0.0
  %73 = vmatpush1.msra.mxu0 %v53
  %74 = vmatprep.subr.mxu0 0.0
  %75 = vmatpush1.msra.mxu0 %v54
  %76 = vmatprep.subr.mxu0 0.0
  %77 = vmatpush1.msra.mxu0 %v55
  %78 = vmatprep.subr.mxu0 0.0
  %79 = vmatpush1.msra.mxu0 0.0
  %80 = vmatprep.subr.mxu0 0.0
  %81 = vmatpush1.msra.mxu0 0.0
  %82 = vmatprep.subr.mxu0 0.0
  %83 = vmatpush1.msra.mxu0 0.0
  %84 = vmatprep.subr.mxu0 0.0
  %85 = vmatpush1.msra.mxu0 0.0
  %86 = vmatprep.subr.mxu0 0.0
  %87 = vmatpush1.msra.mxu0 0.0
  %88 = vmatprep.subr.mxu0 0.0
  %89 = vmatpush1.msra.mxu0 0.0
  %90 = vmatprep.subr.mxu0 0.0
  %91 = vmatpush1.msra.mxu0 0.0
  %92 = vmatprep.subr.mxu0 0.0
  %93 = vmatpush1.msra.mxu0 0.0
  %94 = vmatprep.subr.mxu0 0.0
  %95 = vmatpush1.msra.mxu0 0.0
  %96 = vmatprep.subr.mxu0 0.0
  %97 = vmatpush1.msra.mxu0 0.0
  %98 = vmatprep.subr.mxu0 0.0
  %99 = vmatpush1.msra.mxu0 0.0
  %100 = vmatprep.subr.mxu0 0.0
  %101 = vmatpush1.msra.mxu0 0.0
  %102 = vmatprep.subr.mxu0 0.0
  %103 = vmatpush1.msra.mxu0 0.0
  %104 = vmatprep.subr.mxu0 0.0
  %105 = vmatpush1.msra.mxu0 0.0
  %106 = vmatprep.subr.mxu0 0.0
  %107 = vmatpush1.msra.mxu0 0.0
  %108 = vmatprep.subr.mxu0 0.0
  %109 = vmatpush1.msra.mxu0 0.0
  %110 = vmatprep.subr.mxu0 0.0
  %111 = vmatpush1.msra.mxu0 0.0
  %112 = vmatprep.subr.mxu0 0.0
  %113 = vmatpush1.msra.mxu0 0.0
  %114 = vmatprep.subr.mxu0 0.0
  %115 = vmatpush1.msra.mxu0 0.0
  %116 = vmatprep.subr.mxu0 0.0
  %117 = vmatpush1.msra.mxu0 0.0
  %118 = vmatprep.subr.mxu0 0.0
  %119 = vmatpush1.msra.mxu0 0.0
  %120 = vmatprep.subr.mxu0 0.0
  %121 = vmatpush1.msra.mxu0 0.0
  %122 = vmatprep.subr.mxu0 0.0
  %123 = vmatpush1.msra.mxu0 0.0
  %124 = vmatprep.subr.mxu0 0.0
  %125 = vmatpush1.msra.mxu0 0.0
  %126 = vmatprep.subr.mxu0 0.0
  %127 = vmatpush1.msra.mxu0 0.0
  %128 = vmatprep.subr.mxu0 0.0
  %129 = vmatpush1.msra.mxu0 0.0
  %130 = vmatprep.subr.mxu0 0.0
  %131 = vmatpush1.msra.mxu0 0.0
  %132 = vmatprep.subr.mxu0 0.0
  %133 = vmatpush1.msra.mxu0 0.0
  %134 = vmatprep.mubr.f32.mxu0 0.0
  %135 = vmatmul.mubr.f32.gmra.mrb[0].mxu0 %v65
  %v136 = vpop.f32.mrb[0].mxu0
  %v137 = vadd.f32 %v61, %v136
  %v138 = vpop.f32.mrb[0].mxu0
  %139 = vmatprep.mubr.f32.mxu0 0.0
  %140 = vmatmul.mubr.f32.gmra.mrb[0].mxu0 %v68
  %v141 = vpop.f32.mrb[0].mxu0
  %v142 = vadd.f32 %v61, %v141
  %v143 = vpop.f32.mrb[0].mxu0
  %144 = vdwg.mxu0
  %vm145 = vcmp.gt.f32.partialorder %v137, 0.0
  %v146 = vadd.f32 %v137, 1.0
  %v147 = vmin.f32 %v137, 0.0
  %v148 = vmul.f32 %v147, 1.442695
  %v149 = vpow.pop %v148
  %v150 = vsel %vm145, %v146, %v149
  %152 = vrot.lane.b32.xlu0 %v150, 96
  %v153 = vpop.permute.xlu0 %152
  %155 = vxpose.xlu0.b32.start [1/16] %v153, 128
  %156 = vxpose.xlu0.b32.cont [2/16] 0.0, 128
  %157 = vxpose.xlu0.b32.cont [3/16] 0.0, 128
  %158 = vxpose.xlu0.b32.cont [4/16] 0.0, 128
  %159 = vxpose.xlu0.b32.cont [5/16] 0.0, 128
  %160 = vxpose.xlu0.b32.cont [6/16] 0.0, 128
  %161 = vxpose.xlu0.b32.cont [7/16] 0.0, 128
  %162 = vxpose.xlu0.b32.cont [8/16] 0.0, 128
  %163 = vxpose.xlu0.b32.cont [9/16] 0.0, 128
  %164 = vxpose.xlu0.b32.cont [10/16] 0.0, 128
  %165 = vxpose.xlu0.b32.cont [11/16] 0.0, 128
  %166 = vxpose.xlu0.b32.cont [12/16] 0.0, 128
  %167 = vxpose.xlu0.b32.cont [13/16] 0.0, 128
  %168 = vxpose.xlu0.b32.cont [14/16] 0.0, 128
  %169 = vxpose.xlu0.b32.cont [15/16] 0.0, 128
  %170 = vxpose.xlu0.b32.end [16/16] 0.0, 128
  %v171 = vpop.trf.xlu0
  %v172 = vpop.trf.xlu0
  %v173 = vpop.trf.xlu0
  %v174 = vpop.trf.xlu0
  %v175 = vpop.trf.xlu0
  %v176 = vpop.trf.xlu0
  %v177 = vpop.trf.xlu0
  %v178 = vpop.trf.xlu0
  %v179 = vpop.trf.xlu0
  %v180 = vpop.trf.xlu0
  %v181 = vpop.trf.xlu0
  %v182 = vpop.trf.xlu0
  %v183 = vpop.trf.xlu0
  %v184 = vpop.trf.xlu0
  %v185 = vpop.trf.xlu0
  %v186 = vpop.trf.xlu0
  %188 = vrot.lane.b32.xlu0 %v137, 64
  %v189 = vpop.permute.xlu0 %188
  %vm191 = vcmask 64512
  %v193 = vsel %vm191, %v171, 0
  %v196 = vsel %vm191, %v172, 0
  %198 = vmatprep.subr.mxu0 0.0
  %199 = vmatpush1.msra.mxu0 %v189
  %200 = vmatprep.subr.mxu0 0.0
  %201 = vmatpush1.msra.mxu0 0.0
  %202 = vmatprep.subr.mxu0 0.0
  %203 = vmatpush1.msra.mxu0 0.0
  %204 = vmatprep.subr.mxu0 0.0
  %205 = vmatpush1.msra.mxu0 0.0
  %206 = vmatprep.subr.mxu0 0.0
  %207 = vmatpush1.msra.mxu0 0.0
  %208 = vmatprep.subr.mxu0 0.0
  %209 = vmatpush1.msra.mxu0 0.0
  %210 = vmatprep.subr.mxu0 0.0
  %211 = vmatpush1.msra.mxu0 0.0
  %212 = vmatprep.subr.mxu0 0.0
  %213 = vmatpush1.msra.mxu0 0.0
  %214 = vmatprep.subr.mxu0 0.0
  %215 = vmatpush1.msra.mxu0 0.0
  %216 = vmatprep.subr.mxu0 0.0
  %217 = vmatpush1.msra.mxu0 0.0
  %218 = vmatprep.subr.mxu0 0.0
  %219 = vmatpush1.msra.mxu0 0.0
  %220 = vmatprep.subr.mxu0 0.0
  %221 = vmatpush1.msra.mxu0 0.0
  %222 = vmatprep.subr.mxu0 0.0
  %223 = vmatpush1.msra.mxu0 0.0
  %224 = vmatprep.subr.mxu0 0.0
  %225 = vmatpush1.msra.mxu0 0.0
  %226 = vmatprep.subr.mxu0 0.0
  %227 = vmatpush1.msra.mxu0 0.0
  %228 = vmatprep.subr.mxu0 0.0
  %229 = vmatpush1.msra.mxu0 0.0
  %230 = vmatprep.subr.mxu0 0.0
  %231 = vmatpush1.msra.mxu0 0.0
  %232 = vmatprep.subr.mxu0 0.0
  %233 = vmatpush1.msra.mxu0 0.0
  %234 = vmatprep.subr.mxu0 0.0
  %235 = vmatpush1.msra.mxu0 0.0
  %236 = vmatprep.subr.mxu0 0.0
  %237 = vmatpush1.msra.mxu0 0.0
  %238 = vmatprep.subr.mxu0 0.0
  %239 = vmatpush1.msra.mxu0 0.0
  %240 = vmatprep.subr.mxu0 0.0
  %241 = vmatpush1.msra.mxu0 0.0
  %242 = vmatprep.subr.mxu0 0.0
  %243 = vmatpush1.msra.mxu0 0.0
  %244 = vmatprep.subr.mxu0 0.0
  %245 = vmatpush1.msra.mxu0 0.0
  %246 = vmatprep.subr.mxu0 0.0
  %247 = vmatpush1.msra.mxu0 0.0
  %248 = vmatprep.subr.mxu0 0.0
  %249 = vmatpush1.msra.mxu0 0.0
  %250 = vmatprep.subr.mxu0 0.0
  %251 = vmatpush1.msra.mxu0 0.0
  %252 = vmatprep.subr.mxu0 0.0
  %253 = vmatpush1.msra.mxu0 0.0
  %254 = vmatprep.subr.mxu0 0.0
  %255 = vmatpush1.msra.mxu0 0.0
  %256 = vmatprep.subr.mxu0 0.0
  %257 = vmatpush1.msra.mxu0 0.0
  %258 = vmatprep.subr.mxu0 0.0
  %259 = vmatpush1.msra.mxu0 0.0
  %260 = vmatprep.subr.mxu0 0.0
  %261 = vmatpush1.msra.mxu0 0.0
  %262 = vmatprep.mubr.f32.mxu0 0.0
  %263 = vmatmul.mubr.f32.gmra.mrb[0].mxu0 %v193
  %v264 = vpop.f32.mrb[0].mxu0
  %v265 = vadd.f32 0.0, %v264
  %v266 = vpop.f32.mrb[0].mxu0
  %267 = vmatprep.mubr.f32.mxu0 0.0
  %268 = vmatmul.mubr.f32.gmra.mrb[0].mxu0 %v196
  %v269 = vpop.f32.mrb[0].mxu0
  %v270 = vadd.f32 0.0, %v269
  %v271 = vpop.f32.mrb[0].mxu0
  %272 = vdwg.mxu0
  %vm273 = vcmask 392448
  %v274 = vsel %vm273, %v150, 0.0
  %v275 = vrot.slane %v274, 4
  %v276 = vadd.f32 %v274, %v275
  %v277 = vrot.slane %v276, 2
  %v278 = vadd.f32 %v276, %v277
  %v279 = vrot.slane %v278, 1
  %v280 = vadd.f32 %v278, %v279
  %282 = vrot.lane.b32.xlu0 %v280, 96
  %v283 = vpop.permute.xlu0 %282
  %v285 = vmul.f32 %v150, %v283
  %vm286 = vcmask 130048
  %v287 = vsel %vm286, %v285, 0.0
  %288 = vadd.xlane.f32.xlu0 %v287
  %v289 = vpop.xlane.xlu0 %288
  %v290 = vadd.f32 %v289, 1e-06
  %v291 = vrcp.pop %v290
  %v292 = vmul.f32 1.0, %v291
  %v293 = vsel %vm286, %v150, 0
  %295 = vmatprep.subr.mxu0 0.0
  %296 = vmatpush1.msra.mxu0 %v265
  %297 = vmatprep.subr.mxu0 0.0
  %298 = vmatpush1.msra.mxu0 %v270
  %299 = vmatprep.subr.mxu0 0.0
  %300 = vmatpush1.msra.mxu0 0.0
  %301 = vmatprep.subr.mxu0 0.0
  %302 = vmatpush1.msra.mxu0 0.0
  %303 = vmatprep.subr.mxu0 0.0
  %304 = vmatpush1.msra.mxu0 0.0
  %305 = vmatprep.subr.mxu0 0.0
  %306 = vmatpush1.msra.mxu0 0.0
  %307 = vmatprep.subr.mxu0 0.0
  %308 = vmatpush1.msra.mxu0 0.0
  %309 = vmatprep.subr.mxu0 0.0
  %310 = vmatpush1.msra.mxu0 0.0
  %311 = vmatprep.subr.mxu0 0.0
  %312 = vmatpush1.msra.mxu0 0.0
  %313 = vmatprep.subr.mxu0 0.0
  %314 = vmatpush1.msra.mxu0 0.0
  %315 = vmatprep.subr.mxu0 0.0
  %316 = vmatpush1.msra.mxu0 0.0
  %317 = vmatprep.subr.mxu0 0.0
  %318 = vmatpush1.msra.mxu0 0.0
  %319 = vmatprep.subr.mxu0 0.0
  %320 = vmatpush1.msra.mxu0 0.0
  %321 = vmatprep.subr.mxu0 0.0
  %322 = vmatpush1.msra.mxu0 0.0
  %323 = vmatprep.subr.mxu0 0.0
  %324 = vmatpush1.msra.mxu0 0.0
  %325 = vmatprep.subr.mxu0 0.0
  %326 = vmatpush1.msra.mxu0 0.0
  %327 = vmatprep.subr.mxu0 0.0
  %328 = vmatpush1.msra.mxu0 0.0
  %329 = vmatprep.subr.mxu0 0.0
  %330 = vmatpush1.msra.mxu0 0.0
  %331 = vmatprep.subr.mxu0 0.0
  %332 = vmatpush1.msra.mxu0 0.0
  %333 = vmatprep.subr.mxu0 0.0
  %334 = vmatpush1.msra.mxu0 0.0
  %335 = vmatprep.subr.mxu0 0.0
  %336 = vmatpush1.msra.mxu0 0.0
  %337 = vmatprep.subr.mxu0 0.0
  %338 = vmatpush1.msra.mxu0 0.0
  %339 = vmatprep.subr.mxu0 0.0
  %340 = vmatpush1.msra.mxu0 0.0
  %341 = vmatprep.subr.mxu0 0.0
  %342 = vmatpush1.msra.mxu0 0.0
  %343 = vmatprep.subr.mxu0 0.0
  %344 = vmatpush1.msra.mxu0 0.0
  %345 = vmatprep.subr.mxu0 0.0
  %346 = vmatpush1.msra.mxu0 0.0
  %347 = vmatprep.subr.mxu0 0.0
  %348 = vmatpush1.msra.mxu0 0.0
  %349 = vmatprep.subr.mxu0 0.0
  %350 = vmatpush1.msra.mxu0 0.0
  %351 = vmatprep.subr.mxu0 0.0
  %352 = vmatpush1.msra.mxu0 0.0
  %353 = vmatprep.subr.mxu0 0.0
  %354 = vmatpush1.msra.mxu0 0.0
  %355 = vmatprep.subr.mxu0 0.0
  %356 = vmatpush1.msra.mxu0 0.0
  %357 = vmatprep.subr.mxu0 0.0
  %358 = vmatpush1.msra.mxu0 0.0
  %359 = vmatprep.mubr.f32.mxu0 0.0
  %360 = vmatmul.mubr.f32.gmra.mrb[0].mxu0 %v293
  %v361 = vpop.f32.mrb[0].mxu0
  %v362 = vadd.f32 0.0, %v361
  %v363 = vpop.f32.mrb[0].mxu0
  %364 = vdwg.mxu0
  %v365 = vmul.f32 %v362, %v292
  %366 = vrot.lane.b32.xlu0 %v150, 80
  %v367 = vpop.permute.xlu0 %366
  %369 = vxpose.xlu0.b32.start [1/16] %v367, 128
  %370 = vxpose.xlu0.b32.cont [2/16] 0.0, 128
  %371 = vxpose.xlu0.b32.cont [3/16] 0.0, 128
  %372 = vxpose.xlu0.b32.cont [4/16] 0.0, 128
  %373 = vxpose.xlu0.b32.cont [5/16] 0.0, 128
  %374 = vxpose.xlu0.b32.cont [6/16] 0.0, 128
  %375 = vxpose.xlu0.b32.cont [7/16] 0.0, 128
  %376 = vxpose.xlu0.b32.cont [8/16] 0.0, 128
  %377 = vxpose.xlu0.b32.cont [9/16] 0.0, 128
  %378 = vxpose.xlu0.b32.cont [10/16] 0.0, 128
  %379 = vxpose.xlu0.b32.cont [11/16] 0.0, 128
  %380 = vxpose.xlu0.b32.cont [12/16] 0.0, 128
  %381 = vxpose.xlu0.b32.cont [13/16] 0.0, 128
  %382 = vxpose.xlu0.b32.cont [14/16] 0.0, 128
  %383 = vxpose.xlu0.b32.cont [15/16] 0.0, 128
  %384 = vxpose.xlu0.b32.end [16/16] 0.0, 128
  %v385 = vpop.trf.xlu0
  %v386 = vpop.trf.xlu0
  %v387 = vpop.trf.xlu0
  %v388 = vpop.trf.xlu0
  %v389 = vpop.trf.xlu0
  %v390 = vpop.trf.xlu0
  %v391 = vpop.trf.xlu0
  %v392 = vpop.trf.xlu0
  %v393 = vpop.trf.xlu0
  %v394 = vpop.trf.xlu0
  %v395 = vpop.trf.xlu0
  %v396 = vpop.trf.xlu0
  %v397 = vpop.trf.xlu0
  %v398 = vpop.trf.xlu0
  %v399 = vpop.trf.xlu0
  %v400 = vpop.trf.xlu0
  %401 = vrot.lane.b32.xlu0 %v137, 48
  %v402 = vpop.permute.xlu0 %401
  %v405 = vsel %vm191, %v385, 0
  %v408 = vsel %vm191, %v386, 0
  %410 = vmatprep.subr.mxu0 0.0
  %411 = vmatpush1.msra.mxu0 %v402
  %412 = vmatprep.subr.mxu0 0.0
  %413 = vmatpush1.msra.mxu0 0.0
  %414 = vmatprep.subr.mxu0 0.0
  %415 = vmatpush1.msra.mxu0 0.0
  %416 = vmatprep.subr.mxu0 0.0
  %417 = vmatpush1.msra.mxu0 0.0
  %418 = vmatprep.subr.mxu0 0.0
  %419 = vmatpush1.msra.mxu0 0.0
  %420 = vmatprep.subr.mxu0 0.0
  %421 = vmatpush1.msra.mxu0 0.0
  %422 = vmatprep.subr.mxu0 0.0
  %423 = vmatpush1.msra.mxu0 0.0
  %424 = vmatprep.subr.mxu0 0.0
  %425 = vmatpush1.msra.mxu0 0.0
  %426 = vmatprep.subr.mxu0 0.0
  %427 = vmatpush1.msra.mxu0 0.0
  %428 = vmatprep.subr.mxu0 0.0
  %429 = vmatpush1.msra.mxu0 0.0
  %430 = vmatprep.subr.mxu0 0.0
  %431 = vmatpush1.msra.mxu0 0.0
  %432 = vmatprep.subr.mxu0 0.0
  %433 = vmatpush1.msra.mxu0 0.0
  %434 = vmatprep.subr.mxu0 0.0
  %435 = vmatpush1.msra.mxu0 0.0
  %436 = vmatprep.subr.mxu0 0.0
  %437 = vmatpush1.msra.mxu0 0.0
  %438 = vmatprep.subr.mxu0 0.0
  %439 = vmatpush1.msra.mxu0 0.0
  %440 = vmatprep.subr.mxu0 0.0
  %441 = vmatpush1.msra.mxu0 0.0
  %442 = vmatprep.subr.mxu0 0.0
  %443 = vmatpush1.msra.mxu0 0.0
  %444 = vmatprep.subr.mxu0 0.0
  %445 = vmatpush1.msra.mxu0 0.0
  %446 = vmatprep.subr.mxu0 0.0
  %447 = vmatpush1.msra.mxu0 0.0
  %448 = vmatprep.subr.mxu0 0.0
  %449 = vmatpush1.msra.mxu0 0.0
  %450 = vmatprep.subr.mxu0 0.0
  %451 = vmatpush1.msra.mxu0 0.0
  %452 = vmatprep.subr.mxu0 0.0
  %453 = vmatpush1.msra.mxu0 0.0
  %454 = vmatprep.subr.mxu0 0.0
  %455 = vmatpush1.msra.mxu0 0.0
  %456 = vmatprep.subr.mxu0 0.0
  %457 = vmatpush1.msra.mxu0 0.0
  %458 = vmatprep.subr.mxu0 0.0
  %459 = vmatpush1.msra.mxu0 0.0
  %460 = vmatprep.subr.mxu0 0.0
  %461 = vmatpush1.msra.mxu0 0.0
  %462 = vmatprep.subr.mxu0 0.0
  %463 = vmatpush1.msra.mxu0 0.0
  %464 = vmatprep.subr.mxu0 0.0
  %465 = vmatpush1.msra.mxu0 0.0
  %466 = vmatprep.subr.mxu0 0.0
  %467 = vmatpush1.msra.mxu0 0.0
  %468 = vmatprep.subr.mxu0 0.0
  %469 = vmatpush1.msra.mxu0 0.0
  %470 = vmatprep.subr.mxu0 0.0
  %471 = vmatpush1.msra.mxu0 0.0
  %472 = vmatprep.subr.mxu0 0.0
  %473 = vmatpush1.msra.mxu0 0.0
  %474 = vmatprep.mubr.f32.mxu0 0.0
  %475 = vmatmul.mubr.f32.gmra.mrb[0].mxu0 %v405
  %v476 = vpop.f32.mrb[0].mxu0
  %v477 = vadd.f32 0.0, %v476
  %v478 = vpop.f32.mrb[0].mxu0
  %479 = vmatprep.mubr.f32.mxu0 0.0
  %480 = vmatmul.mubr.f32.gmra.mrb[0].mxu0 %v408
  %v481 = vpop.f32.mrb[0].mxu0
  %v482 = vadd.f32 0.0, %v481
  %v483 = vpop.f32.mrb[0].mxu0
  %484 = vdwg.mxu0
  %vm485 = vcmask 523648
  %v486 = vsel %vm485, %v150, 0.0
  %v487 = vrot.slane %v486, 4
  %v488 = vadd.f32 %v486, %v487
  %v489 = vrot.slane %v488, 2
  %v490 = vadd.f32 %v488, %v489
  %v491 = vrot.slane %v490, 1
  %v492 = vadd.f32 %v490, %v491
  %494 = vrot.lane.b32.xlu0 %v492, 96
  %v495 = vpop.permute.xlu0 %494
  %v497 = vmul.f32 %v150, %v495
  %499 = vrot.lane.b32.xlu0 %v497, 112
  %v500 = vpop.permute.xlu0 %499
  %v502 = vsel %vm286, %v500, 0.0
  %503 = vadd.xlane.f32.xlu0 %v502
  %v504 = vpop.xlane.xlu0 %503
  %v505 = vadd.f32 %v504, 1e-06
  %v506 = vrcp.pop %v505
  %v507 = vmul.f32 1.0, %v506
  %508 = vrot.lane.b32.xlu0 %v150, 112
  %v509 = vpop.permute.xlu0 %508
  %v510 = vsel %vm286, %v509, 0
  %512 = vmatprep.subr.mxu0 0.0
  %513 = vmatpush1.msra.mxu0 %v477
  %514 = vmatprep.subr.mxu0 0.0
  %515 = vmatpush1.msra.mxu0 %v482
  %516 = vmatprep.subr.mxu0 0.0
  %517 = vmatpush1.msra.mxu0 0.0
  %518 = vmatprep.subr.mxu0 0.0
  %519 = vmatpush1.msra.mxu0 0.0
  %520 = vmatprep.subr.mxu0 0.0
  %521 = vmatpush1.msra.mxu0 0.0
  %522 = vmatprep.subr.mxu0 0.0
  %523 = vmatpush1.msra.mxu0 0.0
  %524 = vmatprep.subr.mxu0 0.0
  %525 = vmatpush1.msra.mxu0 0.0
  %526 = vmatprep.subr.mxu0 0.0
  %527 = vmatpush1.msra.mxu0 0.0
  %528 = vmatprep.subr.mxu0 0.0
  %529 = vmatpush1.msra.mxu0 0.0
  %530 = vmatprep.subr.mxu0 0.0
  %531 = vmatpush1.msra.mxu0 0.0
  %532 = vmatprep.subr.mxu0 0.0
  %533 = vmatpush1.msra.mxu0 0.0
  %534 = vmatprep.subr.mxu0 0.0
  %535 = vmatpush1.msra.mxu0 0.0
  %536 = vmatprep.subr.mxu0 0.0
  %537 = vmatpush1.msra.mxu0 0.0
  %538 = vmatprep.subr.mxu0 0.0
  %539 = vmatpush1.msra.mxu0 0.0
  %540 = vmatprep.subr.mxu0 0.0
  %541 = vmatpush1.msra.mxu0 0.0
  %542 = vmatprep.subr.mxu0 0.0
  %543 = vmatpush1.msra.mxu0 0.0
  %544 = vmatprep.subr.mxu0 0.0
  %545 = vmatpush1.msra.mxu0 0.0
  %546 = vmatprep.subr.mxu0 0.0
  %547 = vmatpush1.msra.mxu0 0.0
  %548 = vmatprep.subr.mxu0 0.0
  %549 = vmatpush1.msra.mxu0 0.0
  %550 = vmatprep.subr.mxu0 0.0
  %551 = vmatpush1.msra.mxu0 0.0
  %552 = vmatprep.subr.mxu0 0.0
  %553 = vmatpush1.msra.mxu0 0.0
  %554 = vmatprep.subr.mxu0 0.0
  %555 = vmatpush1.msra.mxu0 0.0
  %556 = vmatprep.subr.mxu0 0.0
  %557 = vmatpush1.msra.mxu0 0.0
  %558 = vmatprep.subr.mxu0 0.0
  %559 = vmatpush1.msra.mxu0 0.0
  %560 = vmatprep.subr.mxu0 0.0
  %561 = vmatpush1.msra.mxu0 0.0
  %562 = vmatprep.subr.mxu0 0.0
  %563 = vmatpush1.msra.mxu0 0.0
  %564 = vmatprep.subr.mxu0 0.0
  %565 = vmatpush1.msra.mxu0 0.0
  %566 = vmatprep.subr.mxu0 0.0
  %567 = vmatpush1.msra.mxu0 0.0
  %568 = vmatprep.subr.mxu0 0.0
  %569 = vmatpush1.msra.mxu0 0.0
  %570 = vmatprep.subr.mxu0 0.0
  %571 = vmatpush1.msra.mxu0 0.0
  %572 = vmatprep.subr.mxu0 0.0
  %573 = vmatpush1.msra.mxu0 0.0
  %574 = vmatprep.subr.mxu0 0.0
  %575 = vmatpush1.msra.mxu0 0.0
  %576 = vmatprep.mubr.f32.mxu0 0.0
  %577 = vmatmul.mubr.f32.gmra.mrb[0].mxu0 %v510
  %v578 = vpop.f32.mrb[0].mxu0
  %v579 = vadd.f32 0.0, %v578
  %v580 = vpop.f32.mrb[0].mxu0
  %581 = vdwg.mxu0
  %v582 = vmul.f32 %v579, %v507
  %584 = vrot.lane.b32.xlu0 %v582, 16
  %v585 = vpop.permute.xlu0 %584
  %v587 = vsel %vm286, %v365, %v585
  %vm588 = vcmp.gt.f32.partialorder %v142, 0.0
  %v589 = vadd.f32 %v142, 1.0
  %v590 = vmin.f32 %v142, 0.0
  %v591 = vmul.f32 %v590, 1.442695
  %v592 = vpow.pop %v591
  %v593 = vsel %vm588, %v589, %v592
  %595 = vrot.lane.b32.xlu0 %v593, 96
  %v596 = vpop.permute.xlu0 %595
  %598 = vxpose.xlu0.b32.start [1/16] %v596, 128
  %599 = vxpose.xlu0.b32.cont [2/16] 0.0, 128
  %600 = vxpose.xlu0.b32.cont [3/16] 0.0, 128
  %601 = vxpose.xlu0.b32.cont [4/16] 0.0, 128
  %602 = vxpose.xlu0.b32.cont [5/16] 0.0, 128
  %603 = vxpose.xlu0.b32.cont [6/16] 0.0, 128
  %604 = vxpose.xlu0.b32.cont [7/16] 0.0, 128
  %605 = vxpose.xlu0.b32.cont [8/16] 0.0, 128
  %606 = vxpose.xlu0.b32.cont [9/16] 0.0, 128
  %607 = vxpose.xlu0.b32.cont [10/16] 0.0, 128
  %608 = vxpose.xlu0.b32.cont [11/16] 0.0, 128
  %609 = vxpose.xlu0.b32.cont [12/16] 0.0, 128
  %610 = vxpose.xlu0.b32.cont [13/16] 0.0, 128
  %611 = vxpose.xlu0.b32.cont [14/16] 0.0, 128
  %612 = vxpose.xlu0.b32.cont [15/16] 0.0, 128
  %613 = vxpose.xlu0.b32.end [16/16] 0.0, 128
  %v614 = vpop.trf.xlu0
  %v615 = vpop.trf.xlu0
  %v616 = vpop.trf.xlu0
  %v617 = vpop.trf.xlu0
  %v618 = vpop.trf.xlu0
  %v619 = vpop.trf.xlu0
  %v620 = vpop.trf.xlu0
  %v621 = vpop.trf.xlu0
  %v622 = vpop.trf.xlu0
  %v623 = vpop.trf.xlu0
  %v624 = vpop.trf.xlu0
  %v625 = vpop.trf.xlu0
  %v626 = vpop.trf.xlu0
  %v627 = vpop.trf.xlu0
  %v628 = vpop.trf.xlu0
  %v629 = vpop.trf.xlu0
  %631 = vrot.lane.b32.xlu0 %v142, 64
  %v632 = vpop.permute.xlu0 %631
  %v635 = vsel %vm191, %v614, 0
  %v638 = vsel %vm191, %v615, 0
  %640 = vmatprep.subr.mxu0 0.0
  %641 = vmatpush1.msra.mxu0 %v632
  %642 = vmatprep.subr.mxu0 0.0
  %643 = vmatpush1.msra.mxu0 0.0
  %644 = vmatprep.subr.mxu0 0.0
  %645 = vmatpush1.msra.mxu0 0.0
  %646 = vmatprep.subr.mxu0 0.0
  %647 = vmatpush1.msra.mxu0 0.0
  %648 = vmatprep.subr.mxu0 0.0
  %649 = vmatpush1.msra.mxu0 0.0
  %650 = vmatprep.subr.mxu0 0.0
  %651 = vmatpush1.msra.mxu0 0.0
  %652 = vmatprep.subr.mxu0 0.0
  %653 = vmatpush1.msra.mxu0 0.0
  %654 = vmatprep.subr.mxu0 0.0
  %655 = vmatpush1.msra.mxu0 0.0
  %656 = vmatprep.subr.mxu0 0.0
  %657 = vmatpush1.msra.mxu0 0.0
  %658 = vmatprep.subr.mxu0 0.0
  %659 = vmatpush1.msra.mxu0 0.0
  %660 = vmatprep.subr.mxu0 0.0
  %661 = vmatpush1.msra.mxu0 0.0
  %662 = vmatprep.subr.mxu0 0.0
  %663 = vmatpush1.msra.mxu0 0.0
  %664 = vmatprep.subr.mxu0 0.0
  %665 = vmatpush1.msra.mxu0 0.0
  %666 = vmatprep.subr.mxu0 0.0
  %667 = vmatpush1.msra.mxu0 0.0
  %668 = vmatprep.subr.mxu0 0.0
  %669 = vmatpush1.msra.mxu0 0.0
  %670 = vmatprep.subr.mxu0 0.0
  %671 = vmatpush1.msra.mxu0 0.0
  %672 = vmatprep.subr.mxu0 0.0
  %673 = vmatpush1.msra.mxu0 0.0
  %674 = vmatprep.subr.mxu0 0.0
  %675 = vmatpush1.msra.mxu0 0.0
  %676 = vmatprep.subr.mxu0 0.0
  %677 = vmatpush1.msra.mxu0 0.0
  %678 = vmatprep.subr.mxu0 0.0
  %679 = vmatpush1.msra.mxu0 0.0
  %680 = vmatprep.subr.mxu0 0.0
  %681 = vmatpush1.msra.mxu0 0.0
  %682 = vmatprep.subr.mxu0 0.0
  %683 = vmatpush1.msra.mxu0 0.0
  %684 = vmatprep.subr.mxu0 0.0
  %685 = vmatpush1.msra.mxu0 0.0
  %686 = vmatprep.subr.mxu0 0.0
  %687 = vmatpush1.msra.mxu0 0.0
  %688 = vmatprep.subr.mxu0 0.0
  %689 = vmatpush1.msra.mxu0 0.0
  %690 = vmatprep.subr.mxu0 0.0
  %691 = vmatpush1.msra.mxu0 0.0
  %692 = vmatprep.subr.mxu0 0.0
  %693 = vmatpush1.msra.mxu0 0.0
  %694 = vmatprep.subr.mxu0 0.0
  %695 = vmatpush1.msra.mxu0 0.0
  %696 = vmatprep.subr.mxu0 0.0
  %697 = vmatpush1.msra.mxu0 0.0
  %698 = vmatprep.subr.mxu0 0.0
  %699 = vmatpush1.msra.mxu0 0.0
  %700 = vmatprep.subr.mxu0 0.0
  %701 = vmatpush1.msra.mxu0 0.0
  %702 = vmatprep.subr.mxu0 0.0
  %703 = vmatpush1.msra.mxu0 0.0
  %704 = vmatprep.mubr.f32.mxu0 0.0
  %705 = vmatmul.mubr.f32.gmra.mrb[0].mxu0 %v635
  %v706 = vpop.f32.mrb[0].mxu0
  %v707 = vadd.f32 0.0, %v706
  %v708 = vpop.f32.mrb[0].mxu0
  %709 = vmatprep.mubr.f32.mxu0 0.0
  %710 = vmatmul.mubr.f32.gmra.mrb[0].mxu0 %v638
  %v711 = vpop.f32.mrb[0].mxu0
  %v712 = vadd.f32 0.0, %v711
  %v713 = vpop.f32.mrb[0].mxu0
  %714 = vdwg.mxu0
  %v715 = vsel %vm273, %v593, 0.0
  %v716 = vrot.slane %v715, 4
  %v717 = vadd.f32 %v715, %v716
  %v718 = vrot.slane %v717, 2
  %v719 = vadd.f32 %v717, %v718
  %v720 = vrot.slane %v719, 1
  %v721 = vadd.f32 %v719, %v720
  %723 = vrot.lane.b32.xlu0 %v721, 96
  %v724 = vpop.permute.xlu0 %723
  %v726 = vmul.f32 %v593, %v724
  %v727 = vsel %vm286, %v726, 0.0
  %728 = vadd.xlane.f32.xlu0 %v727
  %v729 = vpop.xlane.xlu0 %728
  %v730 = vadd.f32 %v729, 1e-06
  %v731 = vrcp.pop %v730
  %v732 = vmul.f32 1.0, %v731
  %v733 = vsel %vm286, %v593, 0
  %735 = vmatprep.subr.mxu0 0.0
  %736 = vmatpush1.msra.mxu0 %v707
  %737 = vmatprep.subr.mxu0 0.0
  %738 = vmatpush1.msra.mxu0 %v712
  %739 = vmatprep.subr.mxu0 0.0
  %740 = vmatpush1.msra.mxu0 0.0
  %741 = vmatprep.subr.mxu0 0.0
  %742 = vmatpush1.msra.mxu0 0.0
  %743 = vmatprep.subr.mxu0 0.0
  %744 = vmatpush1.msra.mxu0 0.0
  %745 = vmatprep.subr.mxu0 0.0
  %746 = vmatpush1.msra.mxu0 0.0
  %747 = vmatprep.subr.mxu0 0.0
  %748 = vmatpush1.msra.mxu0 0.0
  %749 = vmatprep.subr.mxu0 0.0
  %750 = vmatpush1.msra.mxu0 0.0
  %751 = vmatprep.subr.mxu0 0.0
  %752 = vmatpush1.msra.mxu0 0.0
  %753 = vmatprep.subr.mxu0 0.0
  %754 = vmatpush1.msra.mxu0 0.0
  %755 = vmatprep.subr.mxu0 0.0
  %756 = vmatpush1.msra.mxu0 0.0
  %757 = vmatprep.subr.mxu0 0.0
  %758 = vmatpush1.msra.mxu0 0.0
  %759 = vmatprep.subr.mxu0 0.0
  %760 = vmatpush1.msra.mxu0 0.0
  %761 = vmatprep.subr.mxu0 0.0
  %762 = vmatpush1.msra.mxu0 0.0
  %763 = vmatprep.subr.mxu0 0.0
  %764 = vmatpush1.msra.mxu0 0.0
  %765 = vmatprep.subr.mxu0 0.0
  %766 = vmatpush1.msra.mxu0 0.0
  %767 = vmatprep.subr.mxu0 0.0
  %768 = vmatpush1.msra.mxu0 0.0
  %769 = vmatprep.subr.mxu0 0.0
  %770 = vmatpush1.msra.mxu0 0.0
  %771 = vmatprep.subr.mxu0 0.0
  %772 = vmatpush1.msra.mxu0 0.0
  %773 = vmatprep.subr.mxu0 0.0
  %774 = vmatpush1.msra.mxu0 0.0
  %775 = vmatprep.subr.mxu0 0.0
  %776 = vmatpush1.msra.mxu0 0.0
  %777 = vmatprep.subr.mxu0 0.0
  %778 = vmatpush1.msra.mxu0 0.0
  %779 = vmatprep.subr.mxu0 0.0
  %780 = vmatpush1.msra.mxu0 0.0
  %781 = vmatprep.subr.mxu0 0.0
  %782 = vmatpush1.msra.mxu0 0.0
  %783 = vmatprep.subr.mxu0 0.0
  %784 = vmatpush1.msra.mxu0 0.0
  %785 = vmatprep.subr.mxu0 0.0
  %786 = vmatpush1.msra.mxu0 0.0
  %787 = vmatprep.subr.mxu0 0.0
  %788 = vmatpush1.msra.mxu0 0.0
  %789 = vmatprep.subr.mxu0 0.0
  %790 = vmatpush1.msra.mxu0 0.0
  %791 = vmatprep.subr.mxu0 0.0
  %792 = vmatpush1.msra.mxu0 0.0
  %793 = vmatprep.subr.mxu0 0.0
  %794 = vmatpush1.msra.mxu0 0.0
  %795 = vmatprep.subr.mxu0 0.0
  %796 = vmatpush1.msra.mxu0 0.0
  %797 = vmatprep.subr.mxu0 0.0
  %798 = vmatpush1.msra.mxu0 0.0
  %799 = vmatprep.mubr.f32.mxu0 0.0
  %800 = vmatmul.mubr.f32.gmra.mrb[0].mxu0 %v733
  %v801 = vpop.f32.mrb[0].mxu0
  %v802 = vadd.f32 0.0, %v801
  %v803 = vpop.f32.mrb[0].mxu0
  %804 = vdwg.mxu0
  %v805 = vmul.f32 %v802, %v732
  %806 = vrot.lane.b32.xlu0 %v593, 80
  %v807 = vpop.permute.xlu0 %806
  %809 = vxpose.xlu0.b32.start [1/16] %v807, 128
  %810 = vxpose.xlu0.b32.cont [2/16] 0.0, 128
  %811 = vxpose.xlu0.b32.cont [3/16] 0.0, 128
  %812 = vxpose.xlu0.b32.cont [4/16] 0.0, 128
  %813 = vxpose.xlu0.b32.cont [5/16] 0.0, 128
  %814 = vxpose.xlu0.b32.cont [6/16] 0.0, 128
  %815 = vxpose.xlu0.b32.cont [7/16] 0.0, 128
  %816 = vxpose.xlu0.b32.cont [8/16] 0.0, 128
  %817 = vxpose.xlu0.b32.cont [9/16] 0.0, 128
  %818 = vxpose.xlu0.b32.cont [10/16] 0.0, 128
  %819 = vxpose.xlu0.b32.cont [11/16] 0.0, 128
  %820 = vxpose.xlu0.b32.cont [12/16] 0.0, 128
  %821 = vxpose.xlu0.b32.cont [13/16] 0.0, 128
  %822 = vxpose.xlu0.b32.cont [14/16] 0.0, 128
  %823 = vxpose.xlu0.b32.cont [15/16] 0.0, 128
  %824 = vxpose.xlu0.b32.end [16/16] 0.0, 128
  %v825 = vpop.trf.xlu0
  %v826 = vpop.trf.xlu0
  %v827 = vpop.trf.xlu0
  %v828 = vpop.trf.xlu0
  %v829 = vpop.trf.xlu0
  %v830 = vpop.trf.xlu0
  %v831 = vpop.trf.xlu0
  %v832 = vpop.trf.xlu0
  %v833 = vpop.trf.xlu0
  %v834 = vpop.trf.xlu0
  %v835 = vpop.trf.xlu0
  %v836 = vpop.trf.xlu0
  %v837 = vpop.trf.xlu0
  %v838 = vpop.trf.xlu0
  %v839 = vpop.trf.xlu0
  %v840 = vpop.trf.xlu0
  %841 = vrot.lane.b32.xlu0 %v142, 48
  %v842 = vpop.permute.xlu0 %841
  %v845 = vsel %vm191, %v825, 0
  %v848 = vsel %vm191, %v826, 0
  %850 = vmatprep.subr.mxu0 0.0
  %851 = vmatpush1.msra.mxu0 %v842
  %852 = vmatprep.subr.mxu0 0.0
  %853 = vmatpush1.msra.mxu0 0.0
  %854 = vmatprep.subr.mxu0 0.0
  %855 = vmatpush1.msra.mxu0 0.0
  %856 = vmatprep.subr.mxu0 0.0
  %857 = vmatpush1.msra.mxu0 0.0
  %858 = vmatprep.subr.mxu0 0.0
  %859 = vmatpush1.msra.mxu0 0.0
  %860 = vmatprep.subr.mxu0 0.0
  %861 = vmatpush1.msra.mxu0 0.0
  %862 = vmatprep.subr.mxu0 0.0
  %863 = vmatpush1.msra.mxu0 0.0
  %864 = vmatprep.subr.mxu0 0.0
  %865 = vmatpush1.msra.mxu0 0.0
  %866 = vmatprep.subr.mxu0 0.0
  %867 = vmatpush1.msra.mxu0 0.0
  %868 = vmatprep.subr.mxu0 0.0
  %869 = vmatpush1.msra.mxu0 0.0
  %870 = vmatprep.subr.mxu0 0.0
  %871 = vmatpush1.msra.mxu0 0.0
  %872 = vmatprep.subr.mxu0 0.0
  %873 = vmatpush1.msra.mxu0 0.0
  %874 = vmatprep.subr.mxu0 0.0
  %875 = vmatpush1.msra.mxu0 0.0
  %876 = vmatprep.subr.mxu0 0.0
  %877 = vmatpush1.msra.mxu0 0.0
  %878 = vmatprep.subr.mxu0 0.0
  %879 = vmatpush1.msra.mxu0 0.0
  %880 = vmatprep.subr.mxu0 0.0
  %881 = vmatpush1.msra.mxu0 0.0
  %882 = vmatprep.subr.mxu0 0.0
  %883 = vmatpush1.msra.mxu0 0.0
  %884 = vmatprep.subr.mxu0 0.0
  %885 = vmatpush1.msra.mxu0 0.0
  %886 = vmatprep.subr.mxu0 0.0
  %887 = vmatpush1.msra.mxu0 0.0
  %888 = vmatprep.subr.mxu0 0.0
  %889 = vmatpush1.msra.mxu0 0.0
  %890 = vmatprep.subr.mxu0 0.0
  %891 = vmatpush1.msra.mxu0 0.0
  %892 = vmatprep.subr.mxu0 0.0
  %893 = vmatpush1.msra.mxu0 0.0
  %894 = vmatprep.subr.mxu0 0.0
  %895 = vmatpush1.msra.mxu0 0.0
  %896 = vmatprep.subr.mxu0 0.0
  %897 = vmatpush1.msra.mxu0 0.0
  %898 = vmatprep.subr.mxu0 0.0
  %899 = vmatpush1.msra.mxu0 0.0
  %900 = vmatprep.subr.mxu0 0.0
  %901 = vmatpush1.msra.mxu0 0.0
  %902 = vmatprep.subr.mxu0 0.0
  %903 = vmatpush1.msra.mxu0 0.0
  %904 = vmatprep.subr.mxu0 0.0
  %905 = vmatpush1.msra.mxu0 0.0
  %906 = vmatprep.subr.mxu0 0.0
  %907 = vmatpush1.msra.mxu0 0.0
  %908 = vmatprep.subr.mxu0 0.0
  %909 = vmatpush1.msra.mxu0 0.0
  %910 = vmatprep.subr.mxu0 0.0
  %911 = vmatpush1.msra.mxu0 0.0
  %912 = vmatprep.subr.mxu0 0.0
  %913 = vmatpush1.msra.mxu0 0.0
  %914 = vmatprep.mubr.f32.mxu0 0.0
  %915 = vmatmul.mubr.f32.gmra.mrb[0].mxu0 %v845
  %v916 = vpop.f32.mrb[0].mxu0
  %v917 = vadd.f32 0.0, %v916
  %v918 = vpop.f32.mrb[0].mxu0
  %919 = vmatprep.mubr.f32.mxu0 0.0
  %920 = vmatmul.mubr.f32.gmra.mrb[0].mxu0 %v848
  %v921 = vpop.f32.mrb[0].mxu0
  %v922 = vadd.f32 0.0, %v921
  %v923 = vpop.f32.mrb[0].mxu0
  %924 = vdwg.mxu0
  %v925 = vsel %vm485, %v593, 0.0
  %v926 = vrot.slane %v925, 4
  %v927 = vadd.f32 %v925, %v926
  %v928 = vrot.slane %v927, 2
  %v929 = vadd.f32 %v927, %v928
  %v930 = vrot.slane %v929, 1
  %v931 = vadd.f32 %v929, %v930
  %933 = vrot.lane.b32.xlu0 %v931, 96
  %v934 = vpop.permute.xlu0 %933
  %v936 = vmul.f32 %v593, %v934
  %938 = vrot.lane.b32.xlu0 %v936, 112
  %v939 = vpop.permute.xlu0 %938
  %v941 = vsel %vm286, %v939, 0.0
  %942 = vadd.xlane.f32.xlu0 %v941
  %v943 = vpop.xlane.xlu0 %942
  %v944 = vadd.f32 %v943, 1e-06
  %v945 = vrcp.pop %v944
  %v946 = vmul.f32 1.0, %v945
  %947 = vrot.lane.b32.xlu0 %v593, 112
  %v948 = vpop.permute.xlu0 %947
  %v949 = vsel %vm286, %v948, 0
  %951 = vmatprep.subr.mxu0 0.0
  %952 = vmatpush1.msra.mxu0 %v917
  %953 = vmatprep.subr.mxu0 0.0
  %954 = vmatpush1.msra.mxu0 %v922
  %955 = vmatprep.subr.mxu0 0.0
  %956 = vmatpush1.msra.mxu0 0.0
  %957 = vmatprep.subr.mxu0 0.0
  %958 = vmatpush1.msra.mxu0 0.0
  %959 = vmatprep.subr.mxu0 0.0
  %960 = vmatpush1.msra.mxu0 0.0
  %961 = vmatprep.subr.mxu0 0.0
  %962 = vmatpush1.msra.mxu0 0.0
  %963 = vmatprep.subr.mxu0 0.0
  %964 = vmatpush1.msra.mxu0 0.0
  %965 = vmatprep.subr.mxu0 0.0
  %966 = vmatpush1.msra.mxu0 0.0
  %967 = vmatprep.subr.mxu0 0.0
  %968 = vmatpush1.msra.mxu0 0.0
  %969 = vmatprep.subr.mxu0 0.0
  %970 = vmatpush1.msra.mxu0 0.0
  %971 = vmatprep.subr.mxu0 0.0
  %972 = vmatpush1.msra.mxu0 0.0
  %973 = vmatprep.subr.mxu0 0.0
  %974 = vmatpush1.msra.mxu0 0.0
  %975 = vmatprep.subr.mxu0 0.0
  %976 = vmatpush1.msra.mxu0 0.0
  %977 = vmatprep.subr.mxu0 0.0
  %978 = vmatpush1.msra.mxu0 0.0
  %979 = vmatprep.subr.mxu0 0.0
  %980 = vmatpush1.msra.mxu0 0.0
  %981 = vmatprep.subr.mxu0 0.0
  %982 = vmatpush1.msra.mxu0 0.0
  %983 = vmatprep.subr.mxu0 0.0
  %984 = vmatpush1.msra.mxu0 0.0
  %985 = vmatprep.subr.mxu0 0.0
  %986 = vmatpush1.msra.mxu0 0.0
  %987 = vmatprep.subr.mxu0 0.0
  %988 = vmatpush1.msra.mxu0 0.0
  %989 = vmatprep.subr.mxu0 0.0
  %990 = vmatpush1.msra.mxu0 0.0
  %991 = vmatprep.subr.mxu0 0.0
  %992 = vmatpush1.msra.mxu0 0.0
  %993 = vmatprep.subr.mxu0 0.0
  %994 = vmatpush1.msra.mxu0 0.0
  %995 = vmatprep.subr.mxu0 0.0
  %996 = vmatpush1.msra.mxu0 0.0
  %997 = vmatprep.subr.mxu0 0.0
  %998 = vmatpush1.msra.mxu0 0.0
  %999 = vmatprep.subr.mxu0 0.0
  %1000 = vmatpush1.msra.mxu0 0.0
  %1001 = vmatprep.subr.mxu0 0.0
  %1002 = vmatpush1.msra.mxu0 0.0
  %1003 = vmatprep.subr.mxu0 0.0
  %1004 = vmatpush1.msra.mxu0 0.0
  %1005 = vmatprep.subr.mxu0 0.0
  %1006 = vmatpush1.msra.mxu0 0.0
  %1007 = vmatprep.subr.mxu0 0.0
  %1008 = vmatpush1.msra.mxu0 0.0
  %1009 = vmatprep.subr.mxu0 0.0
  %1010 = vmatpush1.msra.mxu0 0.0
  %1011 = vmatprep.subr.mxu0 0.0
  %1012 = vmatpush1.msra.mxu0 0.0
  %1013 = vmatprep.subr.mxu0 0.0
  %1014 = vmatpush1.msra.mxu0 0.0
  %1015 = vmatprep.mubr.f32.mxu0 0.0
  %1016 = vmatmul.mubr.f32.gmra.mrb[0].mxu0 %v949
  %v1017 = vpop.f32.mrb[0].mxu0
  %v1018 = vadd.f32 0.0, %v1017
  %v1019 = vpop.f32.mrb[0].mxu0
  %1020 = vdwg.mxu0
  %v1021 = vmul.f32 %v1018, %v946
  %1023 = vrot.lane.b32.xlu0 %v1021, 16
  %v1024 = vpop.permute.xlu0 %1023
  %v1026 = vsel %vm286, %v805, %v1024
  %v1027 = vld [vmem:[%s3] sm:$0xff]
  %v1028 = vld [vmem:[%s3 + $0x8] sm:$0xff]
  %v1029 = vld [vmem:[%s3 + $0x10] sm:$0xff]
  %v1030 = vld [vmem:[%s3 + $0x18] sm:$0xff]
  %v1031 = vld [vmem:[%s4] sm:$0x1]
  %v1033 = vlaneseq
  %v1034 = vshrl.u32 %v1033, 7
  %v1035 = vsub.s32 0, %v1034
  %v1036 = vrot.slane %v1031, %v1035
  %v1039 = vsel %vm63, %v587, 0
  %v1042 = vsel %vm63, %v1026, 0
  %1044 = vmatprep.subr.mxu0 0.0
  %1045 = vmatpush1.msra.mxu0 %v1027
  %1046 = vmatprep.subr.mxu0 0.0
  %1047 = vmatpush1.msra.mxu0 %v1028
  %1048 = vmatprep.subr.mxu0 0.0
  %1049 = vmatpush1.msra.mxu0 %v1029
  %1050 = vmatprep.subr.mxu0 0.0
  %1051 = vmatpush1.msra.mxu0 %v1030
  %1052 = vmatprep.subr.mxu0 0.0
  %1053 = vmatpush1.msra.mxu0 0.0
  %1054 = vmatprep.subr.mxu0 0.0
  %1055 = vmatpush1.msra.mxu0 0.0
  %1056 = vmatprep.subr.mxu0 0.0
  %1057 = vmatpush1.msra.mxu0 0.0
  %1058 = vmatprep.subr.mxu0 0.0
  %1059 = vmatpush1.msra.mxu0 0.0
  %1060 = vmatprep.subr.mxu0 0.0
  %1061 = vmatpush1.msra.mxu0 0.0
  %1062 = vmatprep.subr.mxu0 0.0
  %1063 = vmatpush1.msra.mxu0 0.0
  %1064 = vmatprep.subr.mxu0 0.0
  %1065 = vmatpush1.msra.mxu0 0.0
  %1066 = vmatprep.subr.mxu0 0.0
  %1067 = vmatpush1.msra.mxu0 0.0
  %1068 = vmatprep.subr.mxu0 0.0
  %1069 = vmatpush1.msra.mxu0 0.0
  %1070 = vmatprep.subr.mxu0 0.0
  %1071 = vmatpush1.msra.mxu0 0.0
  %1072 = vmatprep.subr.mxu0 0.0
  %1073 = vmatpush1.msra.mxu0 0.0
  %1074 = vmatprep.subr.mxu0 0.0
  %1075 = vmatpush1.msra.mxu0 0.0
  %1076 = vmatprep.subr.mxu0 0.0
  %1077 = vmatpush1.msra.mxu0 0.0
  %1078 = vmatprep.subr.mxu0 0.0
  %1079 = vmatpush1.msra.mxu0 0.0
  %1080 = vmatprep.subr.mxu0 0.0
  %1081 = vmatpush1.msra.mxu0 0.0
  %1082 = vmatprep.subr.mxu0 0.0
  %1083 = vmatpush1.msra.mxu0 0.0
  %1084 = vmatprep.subr.mxu0 0.0
  %1085 = vmatpush1.msra.mxu0 0.0
  %1086 = vmatprep.subr.mxu0 0.0
  %1087 = vmatpush1.msra.mxu0 0.0
  %1088 = vmatprep.subr.mxu0 0.0
  %1089 = vmatpush1.msra.mxu0 0.0
  %1090 = vmatprep.subr.mxu0 0.0
  %1091 = vmatpush1.msra.mxu0 0.0
  %1092 = vmatprep.subr.mxu0 0.0
  %1093 = vmatpush1.msra.mxu0 0.0
  %1094 = vmatprep.subr.mxu0 0.0
  %1095 = vmatpush1.msra.mxu0 0.0
  %1096 = vmatprep.subr.mxu0 0.0
  %1097 = vmatpush1.msra.mxu0 0.0
  %1098 = vmatprep.subr.mxu0 0.0
  %1099 = vmatpush1.msra.mxu0 0.0
  %1100 = vmatprep.subr.mxu0 0.0
  %1101 = vmatpush1.msra.mxu0 0.0
  %1102 = vmatprep.subr.mxu0 0.0
  %1103 = vmatpush1.msra.mxu0 0.0
  %1104 = vmatprep.subr.mxu0 0.0
  %1105 = vmatpush1.msra.mxu0 0.0
  %1106 = vmatprep.subr.mxu0 0.0
  %1107 = vmatpush1.msra.mxu0 0.0
  %1108 = vmatprep.mubr.f32.mxu0 0.0
  %1109 = vmatmul.mubr.f32.gmra.mrb[0].mxu0 %v1039
  %v1110 = vpop.f32.mrb[0].mxu0
  %v1111 = vadd.f32 %v1036, %v1110
  %v1112 = vpop.f32.mrb[0].mxu0
  %1113 = vmatprep.mubr.f32.mxu0 0.0
  %1114 = vmatmul.mubr.f32.gmra.mrb[0].mxu0 %v1042
  %v1115 = vpop.f32.mrb[0].mxu0
  %v1116 = vadd.f32 %v1036, %v1115
  %v1117 = vpop.f32.mrb[0].mxu0
  %1118 = vdwg.mxu0
  %v1119 = vadd.f32 %v50, %v1111
  %v1120 = vadd.f32 %v51, %v1116
  %v1121 = vld [vmem:[%s5] sm:$0x1]
  %v1122 = vld [vmem:[%s6] sm:$0x1]
  %v1123 = vsel %vm63, %v1119, 0.0
  %1124 = vadd.xlane.f32.xlu0 %v1123
  %v1125 = vpop.xlane.xlu0 %1124
  %v1126 = vsel %vm63, %v1120, 0.0
  %1127 = vadd.xlane.f32.xlu0 %v1126
  %v1128 = vpop.xlane.xlu0 %1127
  %v1129 = vrcp.pop 32.0
  %v1130 = vmul.f32 %v1125, %v1129
  %v1131 = vmul.f32 %v1128, %v1129
  %v1132 = vsub.f32 %v1119, %v1130
  %v1133 = vsub.f32 %v1120, %v1131
  %v1134 = vmul.f32 %v1132, %v1132
  %v1135 = vmul.f32 %v1133, %v1133
  %v1136 = vsel %vm63, %v1134, 0.0
  %1137 = vadd.xlane.f32.xlu0 %v1136
  %v1138 = vpop.xlane.xlu0 %1137
  %v1139 = vsel %vm63, %v1135, 0.0
  %1140 = vadd.xlane.f32.xlu0 %v1139
  %v1141 = vpop.xlane.xlu0 %1140
  %v1142 = vmul.f32 %v1138, %v1129
  %v1143 = vmul.f32 %v1141, %v1129
  %v1144 = vadd.f32 %v1142, 1e-05
  %v1145 = vadd.f32 %v1143, 1e-05
  %v1146 = vrsqrt.pop %v1144
  %v1147 = vrsqrt.pop %v1145
  %v1148 = vmul.f32 %v1132, %v1146
  %v1149 = vmul.f32 %v1133, %v1147
  %v1151 = vlaneseq
  %v1152 = vshrl.u32 %v1151, 7
  %v1153 = vsub.s32 0, %v1152
  %v1154 = vrot.slane %v1121, %v1153
  %v1156 = vmul.f32 %v1148, %v1154
  %v1157 = vmul.f32 %v1149, %v1154
  %v1159 = vlaneseq
  %v1160 = vshrl.u32 %v1159, 7
  %v1161 = vsub.s32 0, %v1160
  %v1162 = vrot.slane %v1122, %v1161
  %v1164 = vadd.f32 %v1156, %v1162
  %v1165 = vadd.f32 %v1157, %v1162
  %v1166 = vld [vmem:[%s7] sm:$0xff]
  %v1167 = vld [vmem:[%s7 + $0x8] sm:$0xff]
  %v1168 = vld [vmem:[%s7 + $0x10] sm:$0xff]
  %v1169 = vld [vmem:[%s7 + $0x18] sm:$0xff]
  %v1170 = vld [vmem:[%s8] sm:$0x1]
  %v1172 = vlaneseq
  %v1173 = vshrl.u32 %v1172, 7
  %v1174 = vsub.s32 0, %v1173
  %v1175 = vrot.slane %v1170, %v1174
  %v1178 = vsel %vm63, %v1164, 0
  %v1181 = vsel %vm63, %v1165, 0
  %1183 = vmatprep.subr.mxu0 0.0
  %1184 = vmatpush1.msra.mxu0 %v1166
  %1185 = vmatprep.subr.mxu0 0.0
  %1186 = vmatpush1.msra.mxu0 %v1167
  %1187 = vmatprep.subr.mxu0 0.0
  %1188 = vmatpush1.msra.mxu0 %v1168
  %1189 = vmatprep.subr.mxu0 0.0
  %1190 = vmatpush1.msra.mxu0 %v1169
  %1191 = vmatprep.subr.mxu0 0.0
  %1192 = vmatpush1.msra.mxu0 0.0
  %1193 = vmatprep.subr.mxu0 0.0
  %1194 = vmatpush1.msra.mxu0 0.0
  %1195 = vmatprep.subr.mxu0 0.0
  %1196 = vmatpush1.msra.mxu0 0.0
  %1197 = vmatprep.subr.mxu0 0.0
  %1198 = vmatpush1.msra.mxu0 0.0
  %1199 = vmatprep.subr.mxu0 0.0
  %1200 = vmatpush1.msra.mxu0 0.0
  %1201 = vmatprep.subr.mxu0 0.0
  %1202 = vmatpush1.msra.mxu0 0.0
  %1203 = vmatprep.subr.mxu0 0.0
  %1204 = vmatpush1.msra.mxu0 0.0
  %1205 = vmatprep.subr.mxu0 0.0
  %1206 = vmatpush1.msra.mxu0 0.0
  %1207 = vmatprep.subr.mxu0 0.0
  %1208 = vmatpush1.msra.mxu0 0.0
  %1209 = vmatprep.subr.mxu0 0.0
  %1210 = vmatpush1.msra.mxu0 0.0
  %1211 = vmatprep.subr.mxu0 0.0
  %1212 = vmatpush1.msra.mxu0 0.0
  %1213 = vmatprep.subr.mxu0 0.0
  %1214 = vmatpush1.msra.mxu0 0.0
  %1215 = vmatprep.subr.mxu0 0.0
  %1216 = vmatpush1.msra.mxu0 0.0
  %1217 = vmatprep.subr.mxu0 0.0
  %1218 = vmatpush1.msra.mxu0 0.0
  %1219 = vmatprep.subr.mxu0 0.0
  %1220 = vmatpush1.msra.mxu0 0.0
  %1221 = vmatprep.subr.mxu0 0.0
  %1222 = vmatpush1.msra.mxu0 0.0
  %1223 = vmatprep.subr.mxu0 0.0
  %1224 = vmatpush1.msra.mxu0 0.0
  %1225 = vmatprep.subr.mxu0 0.0
  %1226 = vmatpush1.msra.mxu0 0.0
  %1227 = vmatprep.subr.mxu0 0.0
  %1228 = vmatpush1.msra.mxu0 0.0
  %1229 = vmatprep.subr.mxu0 0.0
  %1230 = vmatpush1.msra.mxu0 0.0
  %1231 = vmatprep.subr.mxu0 0.0
  %1232 = vmatpush1.msra.mxu0 0.0
  %1233 = vmatprep.subr.mxu0 0.0
  %1234 = vmatpush1.msra.mxu0 0.0
  %1235 = vmatprep.subr.mxu0 0.0
  %1236 = vmatpush1.msra.mxu0 0.0
  %1237 = vmatprep.subr.mxu0 0.0
  %1238 = vmatpush1.msra.mxu0 0.0
  %1239 = vmatprep.subr.mxu0 0.0
  %1240 = vmatpush1.msra.mxu0 0.0
  %1241 = vmatprep.subr.mxu0 0.0
  %1242 = vmatpush1.msra.mxu0 0.0
  %1243 = vmatprep.subr.mxu0 0.0
  %1244 = vmatpush1.msra.mxu0 0.0
  %1245 = vmatprep.subr.mxu0 0.0
  %1246 = vmatpush1.msra.mxu0 0.0
  %1247 = vmatprep.mubr.f32.mxu0 0.0
  %1248 = vmatmul.mubr.f32.gmra.mrb[0].mxu0 %v1178
  %v1249 = vpop.f32.mrb[0].mxu0
  %v1250 = vadd.f32 %v1175, %v1249
  %v1251 = vpop.f32.mrb[0].mxu0
  %1252 = vmatprep.mubr.f32.mxu0 0.0
  %1253 = vmatmul.mubr.f32.gmra.mrb[0].mxu0 %v1181
  %v1254 = vpop.f32.mrb[0].mxu0
  %v1255 = vadd.f32 %v1175, %v1254
  %v1256 = vpop.f32.mrb[0].mxu0
  %1257 = vdwg.mxu0
  %v1258 = vmax.f32 %v1250, 0.0
  %v1259 = vmax.f32 %v1255, 0.0
  %v1260 = vld [vmem:[%s9] sm:$0xff]
  %v1261 = vld [vmem:[%s9 + $0x8] sm:$0xff]
  %v1262 = vld [vmem:[%s9 + $0x10] sm:$0xff]
  %v1263 = vld [vmem:[%s9 + $0x18] sm:$0xff]
  %v1264 = vld [vmem:[%s9 + $0x20] sm:$0xff]
  %v1265 = vld [vmem:[%s9 + $0x28] sm:$0xff]
  %v1266 = vld [vmem:[%s9 + $0x30] sm:$0xff]
  %v1267 = vld [vmem:[%s9 + $0x38] sm:$0xff]
  %v1268 = vld [vmem:[%s10] sm:$0x1]
  %v1270 = vlaneseq
  %v1271 = vshrl.u32 %v1270, 7
  %v1272 = vsub.s32 0, %v1271
  %v1273 = vrot.slane %v1268, %v1272
  %vm1275 = vcmask 523264
  %v1277 = vsel %vm1275, %v1258, 0
  %v1280 = vsel %vm1275, %v1259, 0
  %1282 = vmatprep.subr.mxu0 0.0
  %1283 = vmatpush1.msra.mxu0 %v1260
  %1284 = vmatprep.subr.mxu0 0.0
  %1285 = vmatpush1.msra.mxu0 %v1261
  %1286 = vmatprep.subr.mxu0 0.0
  %1287 = vmatpush1.msra.mxu0 %v1262
  %1288 = vmatprep.subr.mxu0 0.0
  %1289 = vmatpush1.msra.mxu0 %v1263
  %1290 = vmatprep.subr.mxu0 0.0
  %1291 = vmatpush1.msra.mxu0 %v1264
  %1292 = vmatprep.subr.mxu0 0.0
  %1293 = vmatpush1.msra.mxu0 %v1265
  %1294 = vmatprep.subr.mxu0 0.0
  %1295 = vmatpush1.msra.mxu0 %v1266
  %1296 = vmatprep.subr.mxu0 0.0
  %1297 = vmatpush1.msra.mxu0 %v1267
  %1298 = vmatprep.subr.mxu0 0.0
  %1299 = vmatpush1.msra.mxu0 0.0
  %1300 = vmatprep.subr.mxu0 0.0
  %1301 = vmatpush1.msra.mxu0 0.0
  %1302 = vmatprep.subr.mxu0 0.0
  %1303 = vmatpush1.msra.mxu0 0.0
  %1304 = vmatprep.subr.mxu0 0.0
  %1305 = vmatpush1.msra.mxu0 0.0
  %1306 = vmatprep.subr.mxu0 0.0
  %1307 = vmatpush1.msra.mxu0 0.0
  %1308 = vmatprep.subr.mxu0 0.0
  %1309 = vmatpush1.msra.mxu0 0.0
  %1310 = vmatprep.subr.mxu0 0.0
  %1311 = vmatpush1.msra.mxu0 0.0
  %1312 = vmatprep.subr.mxu0 0.0
  %1313 = vmatpush1.msra.mxu0 0.0
  %1314 = vmatprep.subr.mxu0 0.0
  %1315 = vmatpush1.msra.mxu0 0.0
  %1316 = vmatprep.subr.mxu0 0.0
  %1317 = vmatpush1.msra.mxu0 0.0
  %1318 = vmatprep.subr.mxu0 0.0
  %1319 = vmatpush1.msra.mxu0 0.0
  %1320 = vmatprep.subr.mxu0 0.0
  %1321 = vmatpush1.msra.mxu0 0.0
  %1322 = vmatprep.subr.mxu0 0.0
  %1323 = vmatpush1.msra.mxu0 0.0
  %1324 = vmatprep.subr.mxu0 0.0
  %1325 = vmatpush1.msra.mxu0 0.0
  %1326 = vmatprep.subr.mxu0 0.0
  %1327 = vmatpush1.msra.mxu0 0.0
  %1328 = vmatprep.subr.mxu0 0.0
  %1329 = vmatpush1.msra.mxu0 0.0
  %1330 = vmatprep.subr.mxu0 0.0
  %1331 = vmatpush1.msra.mxu0 0.0
  %1332 = vmatprep.subr.mxu0 0.0
  %1333 = vmatpush1.msra.mxu0 0.0
  %1334 = vmatprep.subr.mxu0 0.0
  %1335 = vmatpush1.msra.mxu0 0.0
  %1336 = vmatprep.subr.mxu0 0.0
  %1337 = vmatpush1.msra.mxu0 0.0
  %1338 = vmatprep.subr.mxu0 0.0
  %1339 = vmatpush1.msra.mxu0 0.0
  %1340 = vmatprep.subr.mxu0 0.0
  %1341 = vmatpush1.msra.mxu0 0.0
  %1342 = vmatprep.subr.mxu0 0.0
  %1343 = vmatpush1.msra.mxu0 0.0
  %1344 = vmatprep.subr.mxu0 0.0
  %1345 = vmatpush1.msra.mxu0 0.0
  %1346 = vmatprep.mubr.f32.mxu0 0.0
  %1347 = vmatmul.mubr.f32.gmra.mrb[0].mxu0 %v1277
  %v1348 = vpop.f32.mrb[0].mxu0
  %v1349 = vadd.f32 %v1273, %v1348
  %v1350 = vpop.f32.mrb[0].mxu0
  %1351 = vmatprep.mubr.f32.mxu0 0.0
  %1352 = vmatmul.mubr.f32.gmra.mrb[0].mxu0 %v1280
  %v1353 = vpop.f32.mrb[0].mxu0
  %v1354 = vadd.f32 %v1273, %v1353
  %v1355 = vpop.f32.mrb[0].mxu0
  %1356 = vdwg.mxu0
  %v1357 = vadd.f32 %v1164, %v1349
  %v1358 = vadd.f32 %v1165, %v1354
  %v1359 = vld [vmem:[%s11] sm:$0x1]
  %v1360 = vld [vmem:[%s12] sm:$0x1]
  %v1361 = vsel %vm63, %v1357, 0.0
  %1362 = vadd.xlane.f32.xlu0 %v1361
  %v1363 = vpop.xlane.xlu0 %1362
  %v1364 = vsel %vm63, %v1358, 0.0
  %1365 = vadd.xlane.f32.xlu0 %v1364
  %v1366 = vpop.xlane.xlu0 %1365
  %v1367 = vmul.f32 %v1363, %v1129
  %v1368 = vmul.f32 %v1366, %v1129
  %v1369 = vsub.f32 %v1357, %v1367
  %v1370 = vsub.f32 %v1358, %v1368
  %v1371 = vmul.f32 %v1369, %v1369
  %v1372 = vmul.f32 %v1370, %v1370
  %v1373 = vsel %vm63, %v1371, 0.0
  %1374 = vadd.xlane.f32.xlu0 %v1373
  %v1375 = vpop.xlane.xlu0 %1374
  %v1376 = vsel %vm63, %v1372, 0.0
  %1377 = vadd.xlane.f32.xlu0 %v1376
  %v1378 = vpop.xlane.xlu0 %1377
  %v1379 = vmul.f32 %v1375, %v1129
  %v1380 = vmul.f32 %v1378, %v1129
  %v1381 = vadd.f32 %v1379, 1e-05
  %v1382 = vadd.f32 %v1380, 1e-05
  %v1383 = vrsqrt.pop %v1381
  %v1384 = vrsqrt.pop %v1382
  %v1385 = vmul.f32 %v1369, %v1383
  %v1386 = vmul.f32 %v1370, %v1384
  %v1388 = vlaneseq
  %v1389 = vshrl.u32 %v1388, 7
  %v1390 = vsub.s32 0, %v1389
  %v1391 = vrot.slane %v1359, %v1390
  %v1393 = vmul.f32 %v1385, %v1391
  %v1394 = vmul.f32 %v1386, %v1391
  %v1396 = vlaneseq
  %v1397 = vshrl.u32 %v1396, 7
  %v1398 = vsub.s32 0, %v1397
  %v1399 = vrot.slane %v1360, %v1398
  %v1401 = vadd.f32 %v1393, %v1399
  %v1402 = vadd.f32 %v1394, %v1399
  %v1403 = vld [vmem:[%s13] sm:$0x1]
  %v1404 = vld [vmem:[%s14] sm:$0x1]
  %v1405 = vsel %vm63, %v1401, 0.0
  %1406 = vadd.xlane.f32.xlu0 %v1405
  %v1407 = vpop.xlane.xlu0 %1406
  %v1408 = vsel %vm63, %v1402, 0.0
  %1409 = vadd.xlane.f32.xlu0 %v1408
  %v1410 = vpop.xlane.xlu0 %1409
  %v1411 = vmul.f32 %v1407, %v1129
  %v1412 = vmul.f32 %v1410, %v1129
  %v1413 = vsub.f32 %v1401, %v1411
  %v1414 = vsub.f32 %v1402, %v1412
  %v1415 = vmul.f32 %v1413, %v1413
  %v1416 = vmul.f32 %v1414, %v1414
  %v1417 = vsel %vm63, %v1415, 0.0
  %1418 = vadd.xlane.f32.xlu0 %v1417
  %v1419 = vpop.xlane.xlu0 %1418
  %v1420 = vsel %vm63, %v1416, 0.0
  %1421 = vadd.xlane.f32.xlu0 %v1420
  %v1422 = vpop.xlane.xlu0 %1421
  %v1423 = vmul.f32 %v1419, %v1129
  %v1424 = vmul.f32 %v1422, %v1129
  %v1425 = vadd.f32 %v1423, 1e-05
  %v1426 = vadd.f32 %v1424, 1e-05
  %v1427 = vrsqrt.pop %v1425
  %v1428 = vrsqrt.pop %v1426
  %v1429 = vmul.f32 %v1413, %v1427
  %v1430 = vmul.f32 %v1414, %v1428
  %v1432 = vlaneseq
  %v1433 = vshrl.u32 %v1432, 7
  %v1434 = vsub.s32 0, %v1433
  %v1435 = vrot.slane %v1403, %v1434
  %v1437 = vmul.f32 %v1429, %v1435
  %v1438 = vmul.f32 %v1430, %v1435
  %v1440 = vlaneseq
  %v1441 = vshrl.u32 %v1440, 7
  %v1442 = vsub.s32 0, %v1441
  %v1443 = vrot.slane %v1404, %v1442
  %v1445 = vadd.f32 %v1437, %v1443
  %v1446 = vadd.f32 %v1438, %v1443
  %1447 = vst.msk [vmem:[%s15] sm:$0xff] %vm63, %v1445
  %1448 = vst.msk [vmem:[%s15 + $0x8] sm:$0xff] %vm63, %v1446
  // Predicated region
  $region62: #{_lambda_.6} parent=0 // pred_check
    _
  $region63: #{_lambda_.6} parent=0 // pred_check_branch
    %1450 = sbr.rel (0) target = $region65
  $region64: #{_lambda_.6} parent=0 // pred_region
    _
  $region65: #{_lambda_.6} parent=0 // pred_fallthru
    _
  // Predicated region
  $region66: #{_lambda_.6} parent=0 // pred_check
    _
  $region67: #{_lambda_.6} parent=0 // pred_check_branch
    %1452 = sbr.rel (0) target = $region69
  $region68: #{_lambda_.6} parent=0 // pred_region
    _
  $region69: #{_lambda_.6} parent=0 // pred_fallthru
    _

// kernel: _lambda_.7
$region0: #{_lambda_.7}
  #allocation0 [shape = 'u32[]', space=smem, size = 0x4, offset = 0x4, fixed_abs, tag = 'smem constant byte address 0x4 - core index']
  #allocation1 [shape = 'u32[144,128]{1,0:T(1,128)}', space=vmem, size = 0x12000, scoped, tag = 'internal scratch']
  %s0 = inlined_call_operand.vmem [shape: f32[16,32], index: 0, kind: input, shape index: {}]
  %s1 = inlined_call_operand.vmem [shape: f32[32,64], index: 1, kind: input, shape index: {}]
  %s2 = inlined_call_operand.vmem [shape: f32[16,64], index: 2, kind: input, shape index: {}]
  %s3 = inlined_call_operand.vmem [shape: f32[1,64], index: 3, kind: input, shape index: {}]
  %s4 = inlined_call_operand.vmem [shape: f32[32,64], index: 4, kind: input, shape index: {}]
  %s5 = inlined_call_operand.vmem [shape: f32[16,64], index: 5, kind: input, shape index: {}]
  %s6 = inlined_call_operand.vmem [shape: f32[1,64], index: 6, kind: input, shape index: {}]
  %s7 = inlined_call_operand.vmem [shape: f32[32,3], index: 7, kind: input, shape index: {}]
  %s8 = inlined_call_operand.vmem [shape: f32[1,3], index: 8, kind: input, shape index: {}]
  %s9 = inlined_call_operand.vmem [shape: f32[16,3], index: 9, kind: output, shape index: {}]
  %s10 = sld [smem:[#allocation0]]
  $region46: #{_lambda_.7} parent=0
    _
  %s12 = ssub.s32 1, %s10
  %s13 = scalar_select 0, %s12, %s10
  // Predicated region
  $region2: #{_lambda_.7} parent=0 // pred_check
    _
  $region3: #{_lambda_.7} parent=0 // pred_check_branch
    %15 = sbr.rel (0) target = $region5
  $region4: #{_lambda_.7} parent=0 // pred_region
    _
  $region5: #{_lambda_.7} parent=0 // pred_fallthru
    _
  // Predicated region
  $region6: #{_lambda_.7} parent=0 // pred_check
    _
  $region7: #{_lambda_.7} parent=0 // pred_check_branch
    %17 = sbr.rel (0) target = $region9
  $region8: #{_lambda_.7} parent=0 // pred_region
    _
  $region9: #{_lambda_.7} parent=0 // pred_fallthru
    _
  // Predicated region
  $region10: #{_lambda_.7} parent=0 // pred_check
    _
  $region11: #{_lambda_.7} parent=0 // pred_check_branch
    %19 = sbr.rel (0) target = $region13
  $region12: #{_lambda_.7} parent=0 // pred_region
    _
  $region13: #{_lambda_.7} parent=0 // pred_fallthru
    _
  // Predicated region
  $region14: #{_lambda_.7} parent=0 // pred_check
    _
  $region15: #{_lambda_.7} parent=0 // pred_check_branch
    %21 = sbr.rel (0) target = $region17
  $region16: #{_lambda_.7} parent=0 // pred_region
    _
  $region17: #{_lambda_.7} parent=0 // pred_fallthru
    _
  // Predicated region
  $region18: #{_lambda_.7} parent=0 // pred_check
    _
  $region19: #{_lambda_.7} parent=0 // pred_check_branch
    %23 = sbr.rel (0) target = $region21
  $region20: #{_lambda_.7} parent=0 // pred_region
    _
  $region21: #{_lambda_.7} parent=0 // pred_fallthru
    _
  // Predicated region
  $region22: #{_lambda_.7} parent=0 // pred_check
    _
  $region23: #{_lambda_.7} parent=0 // pred_check_branch
    %25 = sbr.rel (0) target = $region25
  $region24: #{_lambda_.7} parent=0 // pred_region
    _
  $region25: #{_lambda_.7} parent=0 // pred_fallthru
    _
  // Predicated region
  $region26: #{_lambda_.7} parent=0 // pred_check
    _
  $region27: #{_lambda_.7} parent=0 // pred_check_branch
    %27 = sbr.rel (0) target = $region29
  $region28: #{_lambda_.7} parent=0 // pred_region
    _
  $region29: #{_lambda_.7} parent=0 // pred_fallthru
    _
  // Predicated region
  $region30: #{_lambda_.7} parent=0 // pred_check
    _
  $region31: #{_lambda_.7} parent=0 // pred_check_branch
    %29 = sbr.rel (0) target = $region33
  $region32: #{_lambda_.7} parent=0 // pred_region
    _
  $region33: #{_lambda_.7} parent=0 // pred_fallthru
    _
  // Predicated region
  $region34: #{_lambda_.7} parent=0 // pred_check
    _
  $region35: #{_lambda_.7} parent=0 // pred_check_branch
    %31 = sbr.rel (0) target = $region37
  $region36: #{_lambda_.7} parent=0 // pred_region
    _
  $region37: #{_lambda_.7} parent=0 // pred_fallthru
    _
  %v32 = vld [vmem:[%s0] sm:$0xff]
  %v33 = vld [vmem:[%s0 + $0x8] sm:$0xff]
  %v34 = vld [vmem:[%s1] sm:$0xff]
  %v35 = vld [vmem:[%s1 + $0x8] sm:$0xff]
  %v36 = vld [vmem:[%s1 + $0x10] sm:$0xff]
  %v37 = vld [vmem:[%s1 + $0x18] sm:$0xff]
  %v38 = vld [vmem:[%s3] sm:$0x1]
  %v40 = vlaneseq
  %v41 = vshrl.u32 %v40, 7
  %v42 = vsub.s32 0, %v41
  %v43 = vrot.slane %v38, %v42
  %vm45 = vcmask 261120
  %v47 = vsel %vm45, %v32, 0
  %v50 = vsel %vm45, %v33, 0
  %52 = vmatprep.subr.mxu0 0.0
  %53 = vmatpush1.msra.mxu0 %v34
  %54 = vmatprep.subr.mxu0 0.0
  %55 = vmatpush1.msra.mxu0 %v35
  %56 = vmatprep.subr.mxu0 0.0
  %57 = vmatpush1.msra.mxu0 %v36
  %58 = vmatprep.subr.mxu0 0.0
  %59 = vmatpush1.msra.mxu0 %v37
  %60 = vmatprep.subr.mxu0 0.0
  %61 = vmatpush1.msra.mxu0 0.0
  %62 = vmatprep.subr.mxu0 0.0
  %63 = vmatpush1.msra.mxu0 0.0
  %64 = vmatprep.subr.mxu0 0.0
  %65 = vmatpush1.msra.mxu0 0.0
  %66 = vmatprep.subr.mxu0 0.0
  %67 = vmatpush1.msra.mxu0 0.0
  %68 = vmatprep.subr.mxu0 0.0
  %69 = vmatpush1.msra.mxu0 0.0
  %70 = vmatprep.subr.mxu0 0.0
  %71 = vmatpush1.msra.mxu0 0.0
  %72 = vmatprep.subr.mxu0 0.0
  %73 = vmatpush1.msra.mxu0 0.0
  %74 = vmatprep.subr.mxu0 0.0
  %75 = vmatpush1.msra.mxu0 0.0
  %76 = vmatprep.subr.mxu0 0.0
  %77 = vmatpush1.msra.mxu0 0.0
  %78 = vmatprep.subr.mxu0 0.0
  %79 = vmatpush1.msra.mxu0 0.0
  %80 = vmatprep.subr.mxu0 0.0
  %81 = vmatpush1.msra.mxu0 0.0
  %82 = vmatprep.subr.mxu0 0.0
  %83 = vmatpush1.msra.mxu0 0.0
  %84 = vmatprep.subr.mxu0 0.0
  %85 = vmatpush1.msra.mxu0 0.0
  %86 = vmatprep.subr.mxu0 0.0
  %87 = vmatpush1.msra.mxu0 0.0
  %88 = vmatprep.subr.mxu0 0.0
  %89 = vmatpush1.msra.mxu0 0.0
  %90 = vmatprep.subr.mxu0 0.0
  %91 = vmatpush1.msra.mxu0 0.0
  %92 = vmatprep.subr.mxu0 0.0
  %93 = vmatpush1.msra.mxu0 0.0
  %94 = vmatprep.subr.mxu0 0.0
  %95 = vmatpush1.msra.mxu0 0.0
  %96 = vmatprep.subr.mxu0 0.0
  %97 = vmatpush1.msra.mxu0 0.0
  %98 = vmatprep.subr.mxu0 0.0
  %99 = vmatpush1.msra.mxu0 0.0
  %100 = vmatprep.subr.mxu0 0.0
  %101 = vmatpush1.msra.mxu0 0.0
  %102 = vmatprep.subr.mxu0 0.0
  %103 = vmatpush1.msra.mxu0 0.0
  %104 = vmatprep.subr.mxu0 0.0
  %105 = vmatpush1.msra.mxu0 0.0
  %106 = vmatprep.subr.mxu0 0.0
  %107 = vmatpush1.msra.mxu0 0.0
  %108 = vmatprep.subr.mxu0 0.0
  %109 = vmatpush1.msra.mxu0 0.0
  %110 = vmatprep.subr.mxu0 0.0
  %111 = vmatpush1.msra.mxu0 0.0
  %112 = vmatprep.subr.mxu0 0.0
  %113 = vmatpush1.msra.mxu0 0.0
  %114 = vmatprep.subr.mxu0 0.0
  %115 = vmatpush1.msra.mxu0 0.0
  %116 = vmatprep.mubr.f32.mxu0 0.0
  %117 = vmatmul.mubr.f32.gmra.mrb[0].mxu0 %v47
  %v118 = vpop.f32.mrb[0].mxu0
  %v119 = vadd.f32 %v43, %v118
  %v120 = vpop.f32.mrb[0].mxu0
  %121 = vmatprep.mubr.f32.mxu0 0.0
  %122 = vmatmul.mubr.f32.gmra.mrb[0].mxu0 %v50
  %v123 = vpop.f32.mrb[0].mxu0
  %v124 = vadd.f32 %v43, %v123
  %v125 = vpop.f32.mrb[0].mxu0
  %126 = vdwg.mxu0
  %v127 = vld [vmem:[%s4] sm:$0xff]
  %v128 = vld [vmem:[%s4 + $0x8] sm:$0xff]
  %v129 = vld [vmem:[%s4 + $0x10] sm:$0xff]
  %v130 = vld [vmem:[%s4 + $0x18] sm:$0xff]
  %v131 = vld [vmem:[%s6] sm:$0x1]
  %v133 = vlaneseq
  %v134 = vshrl.u32 %v133, 7
  %v135 = vsub.s32 0, %v134
  %v136 = vrot.slane %v131, %v135
  %138 = vmatprep.subr.mxu0 0.0
  %139 = vmatpush1.msra.mxu0 %v127
  %140 = vmatprep.subr.mxu0 0.0
  %141 = vmatpush1.msra.mxu0 %v128
  %142 = vmatprep.subr.mxu0 0.0
  %143 = vmatpush1.msra.mxu0 %v129
  %144 = vmatprep.subr.mxu0 0.0
  %145 = vmatpush1.msra.mxu0 %v130
  %146 = vmatprep.subr.mxu0 0.0
  %147 = vmatpush1.msra.mxu0 0.0
  %148 = vmatprep.subr.mxu0 0.0
  %149 = vmatpush1.msra.mxu0 0.0
  %150 = vmatprep.subr.mxu0 0.0
  %151 = vmatpush1.msra.mxu0 0.0
  %152 = vmatprep.subr.mxu0 0.0
  %153 = vmatpush1.msra.mxu0 0.0
  %154 = vmatprep.subr.mxu0 0.0
  %155 = vmatpush1.msra.mxu0 0.0
  %156 = vmatprep.subr.mxu0 0.0
  %157 = vmatpush1.msra.mxu0 0.0
  %158 = vmatprep.subr.mxu0 0.0
  %159 = vmatpush1.msra.mxu0 0.0
  %160 = vmatprep.subr.mxu0 0.0
  %161 = vmatpush1.msra.mxu0 0.0
  %162 = vmatprep.subr.mxu0 0.0
  %163 = vmatpush1.msra.mxu0 0.0
  %164 = vmatprep.subr.mxu0 0.0
  %165 = vmatpush1.msra.mxu0 0.0
  %166 = vmatprep.subr.mxu0 0.0
  %167 = vmatpush1.msra.mxu0 0.0
  %168 = vmatprep.subr.mxu0 0.0
  %169 = vmatpush1.msra.mxu0 0.0
  %170 = vmatprep.subr.mxu0 0.0
  %171 = vmatpush1.msra.mxu0 0.0
  %172 = vmatprep.subr.mxu0 0.0
  %173 = vmatpush1.msra.mxu0 0.0
  %174 = vmatprep.subr.mxu0 0.0
  %175 = vmatpush1.msra.mxu0 0.0
  %176 = vmatprep.subr.mxu0 0.0
  %177 = vmatpush1.msra.mxu0 0.0
  %178 = vmatprep.subr.mxu0 0.0
  %179 = vmatpush1.msra.mxu0 0.0
  %180 = vmatprep.subr.mxu0 0.0
  %181 = vmatpush1.msra.mxu0 0.0
  %182 = vmatprep.subr.mxu0 0.0
  %183 = vmatpush1.msra.mxu0 0.0
  %184 = vmatprep.subr.mxu0 0.0
  %185 = vmatpush1.msra.mxu0 0.0
  %186 = vmatprep.subr.mxu0 0.0
  %187 = vmatpush1.msra.mxu0 0.0
  %188 = vmatprep.subr.mxu0 0.0
  %189 = vmatpush1.msra.mxu0 0.0
  %190 = vmatprep.subr.mxu0 0.0
  %191 = vmatpush1.msra.mxu0 0.0
  %192 = vmatprep.subr.mxu0 0.0
  %193 = vmatpush1.msra.mxu0 0.0
  %194 = vmatprep.subr.mxu0 0.0
  %195 = vmatpush1.msra.mxu0 0.0
  %196 = vmatprep.subr.mxu0 0.0
  %197 = vmatpush1.msra.mxu0 0.0
  %198 = vmatprep.subr.mxu0 0.0
  %199 = vmatpush1.msra.mxu0 0.0
  %200 = vmatprep.subr.mxu0 0.0
  %201 = vmatpush1.msra.mxu0 0.0
  %202 = vmatprep.mubr.f32.mxu0 0.0
  %203 = vmatmul.mubr.f32.gmra.mrb[0].mxu0 %v47
  %v204 = vpop.f32.mrb[0].mxu0
  %v205 = vadd.f32 %v136, %v204
  %v206 = vpop.f32.mrb[0].mxu0
  %207 = vmatprep.mubr.f32.mxu0 0.0
  %208 = vmatmul.mubr.f32.gmra.mrb[0].mxu0 %v50
  %v209 = vpop.f32.mrb[0].mxu0
  %v210 = vadd.f32 %v136, %v209
  %v211 = vpop.f32.mrb[0].mxu0
  %212 = vdwg.mxu0
  %v213 = vld [vmem:[%s2] sm:$0xff]
  %v214 = vld [vmem:[%s2 + $0x8] sm:$0xff]
  %v215 = vld [vmem:[%s5] sm:$0xff]
  %v216 = vld [vmem:[%s5 + $0x8] sm:$0xff]
  %v218 = vrot.slane %v124, 7
  %vm220 = vcmask 1040384
  %v221 = vsel %vm220, %v119, %v218
  %vm222 = vcmask 130048
  %v224 = vsel %vm222, 0.0, 0
  %226 = vmatprep.subr.mxu0 0.0
  %227 = vmatpush1.msra.mxu0 %v213
  %228 = vmatprep.subr.mxu0 0.0
  %229 = vmatpush1.msra.mxu0 %v214
  %230 = vmatprep.subr.mxu0 0.0
  %231 = vmatpush1.msra.mxu0 0.0
  %232 = vmatprep.subr.mxu0 0.0
  %233 = vmatpush1.msra.mxu0 0.0
  %234 = vmatprep.subr.mxu0 0.0
  %235 = vmatpush1.msra.mxu0 0.0
  %236 = vmatprep.subr.mxu0 0.0
  %237 = vmatpush1.msra.mxu0 0.0
  %238 = vmatprep.subr.mxu0 0.0
  %239 = vmatpush1.msra.mxu0 0.0
  %240 = vmatprep.subr.mxu0 0.0
  %241 = vmatpush1.msra.mxu0 0.0
  %242 = vmatprep.subr.mxu0 0.0
  %243 = vmatpush1.msra.mxu0 0.0
  %244 = vmatprep.subr.mxu0 0.0
  %245 = vmatpush1.msra.mxu0 0.0
  %246 = vmatprep.subr.mxu0 0.0
  %247 = vmatpush1.msra.mxu0 0.0
  %248 = vmatprep.subr.mxu0 0.0
  %249 = vmatpush1.msra.mxu0 0.0
  %250 = vmatprep.subr.mxu0 0.0
  %251 = vmatpush1.msra.mxu0 0.0
  %252 = vmatprep.subr.mxu0 0.0
  %253 = vmatpush1.msra.mxu0 0.0
  %254 = vmatprep.subr.mxu0 0.0
  %255 = vmatpush1.msra.mxu0 0.0
  %256 = vmatprep.subr.mxu0 0.0
  %257 = vmatpush1.msra.mxu0 0.0
  %258 = vmatprep.subr.mxu0 0.0
  %259 = vmatpush1.msra.mxu0 0.0
  %260 = vmatprep.subr.mxu0 0.0
  %261 = vmatpush1.msra.mxu0 0.0
  %262 = vmatprep.subr.mxu0 0.0
  %263 = vmatpush1.msra.mxu0 0.0
  %264 = vmatprep.subr.mxu0 0.0
  %265 = vmatpush1.msra.mxu0 0.0
  %266 = vmatprep.subr.mxu0 0.0
  %267 = vmatpush1.msra.mxu0 0.0
  %268 = vmatprep.subr.mxu0 0.0
  %269 = vmatpush1.msra.mxu0 0.0
  %270 = vmatprep.subr.mxu0 0.0
  %271 = vmatpush1.msra.mxu0 0.0
  %272 = vmatprep.subr.mxu0 0.0
  %273 = vmatpush1.msra.mxu0 0.0
  %274 = vmatprep.subr.mxu0 0.0
  %275 = vmatpush1.msra.mxu0 0.0
  %276 = vmatprep.subr.mxu0 0.0
  %277 = vmatpush1.msra.mxu0 0.0
  %278 = vmatprep.subr.mxu0 0.0
  %279 = vmatpush1.msra.mxu0 0.0
  %280 = vmatprep.subr.mxu0 0.0
  %281 = vmatpush1.msra.mxu0 0.0
  %282 = vmatprep.subr.mxu0 0.0
  %283 = vmatpush1.msra.mxu0 0.0
  %284 = vmatprep.subr.mxu0 0.0
  %285 = vmatpush1.msra.mxu0 0.0
  %286 = vmatprep.subr.mxu0 0.0
  %287 = vmatpush1.msra.mxu0 0.0
  %288 = vmatprep.subr.mxu0 0.0
  %289 = vmatpush1.msra.mxu0 0.0
  %290 = vmatprep.mubr.f32.mxu0 0.0
  %291 = vmatmul.mubr.f32.gmra.mrb[0].mxu0 %v224
  %v292 = vpop.f32.mrb[0].mxu0
  %v293 = vadd.f32 0.0, %v292
  %v294 = vpop.f32.mrb[0].mxu0
  %295 = vdwg.mxu0
  %v296 = vadd.f32 %v221, %v293
  %v297 = vxor.u32 %v296, 2147483648
  %v298 = vmul.f32 %v297, 1.442695
  %v299 = vpow.pop %v298
  %v300 = vadd.f32 %v299, 1.0
  %v301 = vrcp.pop %v300
  %v302 = vmul.f32 1.0, %v301
  %v303 = vtanh.pop %v296
  %v304 = vmul.f32 %v302, 0.0
  %306 = vrot.lane.b32.xlu0 %v303, 96
  %v307 = vpop.permute.xlu0 %306
  %v309 = vmul.f32 %v302, %v307
  %311 = vrot.lane.b32.xlu0 %v309, 16
  %v312 = vpop.permute.xlu0 %311
  %v314 = vadd.f32 %v304, %v312
  %v315 = vtanh.pop %v314
  %317 = vrot.lane.b32.xlu0 %v315, 32
  %v318 = vpop.permute.xlu0 %317
  %v320 = vmul.f32 %v302, %v318
  %v322 = vrot.slane %v119, 1
  %v324 = vsel %vm220, %v322, %v124
  %326 = vrot.lane.b32.xlu0 %v320, 80
  %v327 = vpop.permute.xlu0 %326
  %v328 = vsel %vm222, %v327, 0
  %330 = vmatprep.subr.mxu0 0.0
  %331 = vmatpush1.msra.mxu0 %v213
  %332 = vmatprep.subr.mxu0 0.0
  %333 = vmatpush1.msra.mxu0 %v214
  %334 = vmatprep.subr.mxu0 0.0
  %335 = vmatpush1.msra.mxu0 0.0
  %336 = vmatprep.subr.mxu0 0.0
  %337 = vmatpush1.msra.mxu0 0.0
  %338 = vmatprep.subr.mxu0 0.0
  %339 = vmatpush1.msra.mxu0 0.0
  %340 = vmatprep.subr.mxu0 0.0
  %341 = vmatpush1.msra.mxu0 0.0
  %342 = vmatprep.subr.mxu0 0.0
  %343 = vmatpush1.msra.mxu0 0.0
  %344 = vmatprep.subr.mxu0 0.0
  %345 = vmatpush1.msra.mxu0 0.0
  %346 = vmatprep.subr.mxu0 0.0
  %347 = vmatpush1.msra.mxu0 0.0
  %348 = vmatprep.subr.mxu0 0.0
  %349 = vmatpush1.msra.mxu0 0.0
  %350 = vmatprep.subr.mxu0 0.0
  %351 = vmatpush1.msra.mxu0 0.0
  %352 = vmatprep.subr.mxu0 0.0
  %353 = vmatpush1.msra.mxu0 0.0
  %354 = vmatprep.subr.mxu0 0.0
  %355 = vmatpush1.msra.mxu0 0.0
  %356 = vmatprep.subr.mxu0 0.0
  %357 = vmatpush1.msra.mxu0 0.0
  %358 = vmatprep.subr.mxu0 0.0
  %359 = vmatpush1.msra.mxu0 0.0
  %360 = vmatprep.subr.mxu0 0.0
  %361 = vmatpush1.msra.mxu0 0.0
  %362 = vmatprep.subr.mxu0 0.0
  %363 = vmatpush1.msra.mxu0 0.0
  %364 = vmatprep.subr.mxu0 0.0
  %365 = vmatpush1.msra.mxu0 0.0
  %366 = vmatprep.subr.mxu0 0.0
  %367 = vmatpush1.msra.mxu0 0.0
  %368 = vmatprep.subr.mxu0 0.0
  %369 = vmatpush1.msra.mxu0 0.0
  %370 = vmatprep.subr.mxu0 0.0
  %371 = vmatpush1.msra.mxu0 0.0
  %372 = vmatprep.subr.mxu0 0.0
  %373 = vmatpush1.msra.mxu0 0.0
  %374 = vmatprep.subr.mxu0 0.0
  %375 = vmatpush1.msra.mxu0 0.0
  %376 = vmatprep.subr.mxu0 0.0
  %377 = vmatpush1.msra.mxu0 0.0
  %378 = vmatprep.subr.mxu0 0.0
  %379 = vmatpush1.msra.mxu0 0.0
  %380 = vmatprep.subr.mxu0 0.0
  %381 = vmatpush1.msra.mxu0 0.0
  %382 = vmatprep.subr.mxu0 0.0
  %383 = vmatpush1.msra.mxu0 0.0
  %384 = vmatprep.subr.mxu0 0.0
  %385 = vmatpush1.msra.mxu0 0.0
  %386 = vmatprep.subr.mxu0 0.0
  %387 = vmatpush1.msra.mxu0 0.0
  %388 = vmatprep.subr.mxu0 0.0
  %389 = vmatpush1.msra.mxu0 0.0
  %390 = vmatprep.subr.mxu0 0.0
  %391 = vmatpush1.msra.mxu0 0.0
  %392 = vmatprep.subr.mxu0 0.0
  %393 = vmatpush1.msra.mxu0 0.0
  %394 = vmatprep.mubr.f32.mxu0 0.0
  %395 = vmatmul.mubr.f32.gmra.mrb[0].mxu0 %v328
  %v396 = vpop.f32.mrb[0].mxu0
  %v397 = vadd.f32 0.0, %v396
  %v398 = vpop.f32.mrb[0].mxu0
  %399 = vdwg.mxu0
  %v400 = vadd.f32 %v324, %v397
  %v401 = vxor.u32 %v400, 2147483648
  %v402 = vmul.f32 %v401, 1.442695
  %v403 = vpow.pop %v402
  %v404 = vadd.f32 %v403, 1.0
  %v405 = vrcp.pop %v404
  %v406 = vmul.f32 1.0, %v405
  %v407 = vtanh.pop %v400
  %v408 = vmul.f32 %v406, %v314
  %410 = vrot.lane.b32.xlu0 %v407, 96
  %v411 = vpop.permute.xlu0 %410
  %v413 = vmul.f32 %v406, %v411
  %415 = vrot.lane.b32.xlu0 %v413, 16
  %v416 = vpop.permute.xlu0 %415
  %v418 = vadd.f32 %v408, %v416
  %v419 = vtanh.pop %v418
  %421 = vrot.lane.b32.xlu0 %v419, 32
  %v422 = vpop.permute.xlu0 %421
  %v424 = vmul.f32 %v406, %v422
  %v425 = vrot.slane %v119, 2
  %v427 = vrot.slane %v124, 1
  %v429 = vsel %vm220, %v425, %v427
  %431 = vrot.lane.b32.xlu0 %v424, 80
  %v432 = vpop.permute.xlu0 %431
  %v433 = vsel %vm222, %v432, 0
  %435 = vmatprep.subr.mxu0 0.0
  %436 = vmatpush1.msra.mxu0 %v213
  %437 = vmatprep.subr.mxu0 0.0
  %438 = vmatpush1.msra.mxu0 %v214
  %439 = vmatprep.subr.mxu0 0.0
  %440 = vmatpush1.msra.mxu0 0.0
  %441 = vmatprep.subr.mxu0 0.0
  %442 = vmatpush1.msra.mxu0 0.0
  %443 = vmatprep.subr.mxu0 0.0
  %444 = vmatpush1.msra.mxu0 0.0
  %445 = vmatprep.subr.mxu0 0.0
  %446 = vmatpush1.msra.mxu0 0.0
  %447 = vmatprep.subr.mxu0 0.0
  %448 = vmatpush1.msra.mxu0 0.0
  %449 = vmatprep.subr.mxu0 0.0
  %450 = vmatpush1.msra.mxu0 0.0
  %451 = vmatprep.subr.mxu0 0.0
  %452 = vmatpush1.msra.mxu0 0.0
  %453 = vmatprep.subr.mxu0 0.0
  %454 = vmatpush1.msra.mxu0 0.0
  %455 = vmatprep.subr.mxu0 0.0
  %456 = vmatpush1.msra.mxu0 0.0
  %457 = vmatprep.subr.mxu0 0.0
  %458 = vmatpush1.msra.mxu0 0.0
  %459 = vmatprep.subr.mxu0 0.0
  %460 = vmatpush1.msra.mxu0 0.0
  %461 = vmatprep.subr.mxu0 0.0
  %462 = vmatpush1.msra.mxu0 0.0
  %463 = vmatprep.subr.mxu0 0.0
  %464 = vmatpush1.msra.mxu0 0.0
  %465 = vmatprep.subr.mxu0 0.0
  %466 = vmatpush1.msra.mxu0 0.0
  %467 = vmatprep.subr.mxu0 0.0
  %468 = vmatpush1.msra.mxu0 0.0
  %469 = vmatprep.subr.mxu0 0.0
  %470 = vmatpush1.msra.mxu0 0.0
  %471 = vmatprep.subr.mxu0 0.0
  %472 = vmatpush1.msra.mxu0 0.0
  %473 = vmatprep.subr.mxu0 0.0
  %474 = vmatpush1.msra.mxu0 0.0
  %475 = vmatprep.subr.mxu0 0.0
  %476 = vmatpush1.msra.mxu0 0.0
  %477 = vmatprep.subr.mxu0 0.0
  %478 = vmatpush1.msra.mxu0 0.0
  %479 = vmatprep.subr.mxu0 0.0
  %480 = vmatpush1.msra.mxu0 0.0
  %481 = vmatprep.subr.mxu0 0.0
  %482 = vmatpush1.msra.mxu0 0.0
  %483 = vmatprep.subr.mxu0 0.0
  %484 = vmatpush1.msra.mxu0 0.0
  %485 = vmatprep.subr.mxu0 0.0
  %486 = vmatpush1.msra.mxu0 0.0
  %487 = vmatprep.subr.mxu0 0.0
  %488 = vmatpush1.msra.mxu0 0.0
  %489 = vmatprep.subr.mxu0 0.0
  %490 = vmatpush1.msra.mxu0 0.0
  %491 = vmatprep.subr.mxu0 0.0
  %492 = vmatpush1.msra.mxu0 0.0
  %493 = vmatprep.subr.mxu0 0.0
  %494 = vmatpush1.msra.mxu0 0.0
  %495 = vmatprep.subr.mxu0 0.0
  %496 = vmatpush1.msra.mxu0 0.0
  %497 = vmatprep.subr.mxu0 0.0
  %498 = vmatpush1.msra.mxu0 0.0
  %499 = vmatprep.mubr.f32.mxu0 0.0
  %500 = vmatmul.mubr.f32.gmra.mrb[0].mxu0 %v433
  %v501 = vpop.f32.mrb[0].mxu0
  %v502 = vadd.f32 0.0, %v501
  %v503 = vpop.f32.mrb[0].mxu0
  %504 = vdwg.mxu0
  %v505 = vadd.f32 %v429, %v502
  %v506 = vxor.u32 %v505, 2147483648
  %v507 = vmul.f32 %v506, 1.442695
  %v508 = vpow.pop %v507
  %v509 = vadd.f32 %v508, 1.0
  %v510 = vrcp.pop %v509
  %v511 = vmul.f32 1.0, %v510
  %v512 = vtanh.pop %v505
  %v513 = vmul.f32 %v511, %v418
  %515 = vrot.lane.b32.xlu0 %v512, 96
  %v516 = vpop.permute.xlu0 %515
  %v518 = vmul.f32 %v511, %v516
  %520 = vrot.lane.b32.xlu0 %v518, 16
  %v521 = vpop.permute.xlu0 %520
  %v523 = vadd.f32 %v513, %v521
  %v524 = vtanh.pop %v523
  %526 = vrot.lane.b32.xlu0 %v524, 32
  %v527 = vpop.permute.xlu0 %526
  %v529 = vmul.f32 %v511, %v527
  %v530 = vrot.slane %v119, 3
  %v532 = vrot.slane %v124, 2
  %v534 = vsel %vm220, %v530, %v532
  %536 = vrot.lane.b32.xlu0 %v529, 80
  %v537 = vpop.permute.xlu0 %536
  %v538 = vsel %vm222, %v537, 0
  %540 = vmatprep.subr.mxu0 0.0
  %541 = vmatpush1.msra.mxu0 %v213
  %542 = vmatprep.subr.mxu0 0.0
  %543 = vmatpush1.msra.mxu0 %v214
  %544 = vmatprep.subr.mxu0 0.0
  %545 = vmatpush1.msra.mxu0 0.0
  %546 = vmatprep.subr.mxu0 0.0
  %547 = vmatpush1.msra.mxu0 0.0
  %548 = vmatprep.subr.mxu0 0.0
  %549 = vmatpush1.msra.mxu0 0.0
  %550 = vmatprep.subr.mxu0 0.0
  %551 = vmatpush1.msra.mxu0 0.0
  %552 = vmatprep.subr.mxu0 0.0
  %553 = vmatpush1.msra.mxu0 0.0
  %554 = vmatprep.subr.mxu0 0.0
  %555 = vmatpush1.msra.mxu0 0.0
  %556 = vmatprep.subr.mxu0 0.0
  %557 = vmatpush1.msra.mxu0 0.0
  %558 = vmatprep.subr.mxu0 0.0
  %559 = vmatpush1.msra.mxu0 0.0
  %560 = vmatprep.subr.mxu0 0.0
  %561 = vmatpush1.msra.mxu0 0.0
  %562 = vmatprep.subr.mxu0 0.0
  %563 = vmatpush1.msra.mxu0 0.0
  %564 = vmatprep.subr.mxu0 0.0
  %565 = vmatpush1.msra.mxu0 0.0
  %566 = vmatprep.subr.mxu0 0.0
  %567 = vmatpush1.msra.mxu0 0.0
  %568 = vmatprep.subr.mxu0 0.0
  %569 = vmatpush1.msra.mxu0 0.0
  %570 = vmatprep.subr.mxu0 0.0
  %571 = vmatpush1.msra.mxu0 0.0
  %572 = vmatprep.subr.mxu0 0.0
  %573 = vmatpush1.msra.mxu0 0.0
  %574 = vmatprep.subr.mxu0 0.0
  %575 = vmatpush1.msra.mxu0 0.0
  %576 = vmatprep.subr.mxu0 0.0
  %577 = vmatpush1.msra.mxu0 0.0
  %578 = vmatprep.subr.mxu0 0.0
  %579 = vmatpush1.msra.mxu0 0.0
  %580 = vmatprep.subr.mxu0 0.0
  %581 = vmatpush1.msra.mxu0 0.0
  %582 = vmatprep.subr.mxu0 0.0
  %583 = vmatpush1.msra.mxu0 0.0
  %584 = vmatprep.subr.mxu0 0.0
  %585 = vmatpush1.msra.mxu0 0.0
  %586 = vmatprep.subr.mxu0 0.0
  %587 = vmatpush1.msra.mxu0 0.0
  %588 = vmatprep.subr.mxu0 0.0
  %589 = vmatpush1.msra.mxu0 0.0
  %590 = vmatprep.subr.mxu0 0.0
  %591 = vmatpush1.msra.mxu0 0.0
  %592 = vmatprep.subr.mxu0 0.0
  %593 = vmatpush1.msra.mxu0 0.0
  %594 = vmatprep.subr.mxu0 0.0
  %595 = vmatpush1.msra.mxu0 0.0
  %596 = vmatprep.subr.mxu0 0.0
  %597 = vmatpush1.msra.mxu0 0.0
  %598 = vmatprep.subr.mxu0 0.0
  %599 = vmatpush1.msra.mxu0 0.0
  %600 = vmatprep.subr.mxu0 0.0
  %601 = vmatpush1.msra.mxu0 0.0
  %602 = vmatprep.subr.mxu0 0.0
  %603 = vmatpush1.msra.mxu0 0.0
  %604 = vmatprep.mubr.f32.mxu0 0.0
  %605 = vmatmul.mubr.f32.gmra.mrb[0].mxu0 %v538
  %v606 = vpop.f32.mrb[0].mxu0
  %v607 = vadd.f32 0.0, %v606
  %v608 = vpop.f32.mrb[0].mxu0
  %609 = vdwg.mxu0
  %v610 = vadd.f32 %v534, %v607
  %v611 = vxor.u32 %v610, 2147483648
  %v612 = vmul.f32 %v611, 1.442695
  %v613 = vpow.pop %v612
  %v614 = vadd.f32 %v613, 1.0
  %v615 = vrcp.pop %v614
  %v616 = vmul.f32 1.0, %v615
  %v617 = vtanh.pop %v610
  %v618 = vmul.f32 %v616, %v523
  %620 = vrot.lane.b32.xlu0 %v617, 96
  %v621 = vpop.permute.xlu0 %620
  %v623 = vmul.f32 %v616, %v621
  %625 = vrot.lane.b32.xlu0 %v623, 16
  %v626 = vpop.permute.xlu0 %625
  %v628 = vadd.f32 %v618, %v626
  %v629 = vtanh.pop %v628
  %631 = vrot.lane.b32.xlu0 %v629, 32
  %v632 = vpop.permute.xlu0 %631
  %v634 = vmul.f32 %v616, %v632
  %v635 = vrot.slane %v119, 4
  %v637 = vrot.slane %v124, 3
  %v639 = vsel %vm220, %v635, %v637
  %641 = vrot.lane.b32.xlu0 %v634, 80
  %v642 = vpop.permute.xlu0 %641
  %v643 = vsel %vm222, %v642, 0
  %645 = vmatprep.subr.mxu0 0.0
  %646 = vmatpush1.msra.mxu0 %v213
  %647 = vmatprep.subr.mxu0 0.0
  %648 = vmatpush1.msra.mxu0 %v214
  %649 = vmatprep.subr.mxu0 0.0
  %650 = vmatpush1.msra.mxu0 0.0
  %651 = vmatprep.subr.mxu0 0.0
  %652 = vmatpush1.msra.mxu0 0.0
  %653 = vmatprep.subr.mxu0 0.0
  %654 = vmatpush1.msra.mxu0 0.0
  %655 = vmatprep.subr.mxu0 0.0
  %656 = vmatpush1.msra.mxu0 0.0
  %657 = vmatprep.subr.mxu0 0.0
  %658 = vmatpush1.msra.mxu0 0.0
  %659 = vmatprep.subr.mxu0 0.0
  %660 = vmatpush1.msra.mxu0 0.0
  %661 = vmatprep.subr.mxu0 0.0
  %662 = vmatpush1.msra.mxu0 0.0
  %663 = vmatprep.subr.mxu0 0.0
  %664 = vmatpush1.msra.mxu0 0.0
  %665 = vmatprep.subr.mxu0 0.0
  %666 = vmatpush1.msra.mxu0 0.0
  %667 = vmatprep.subr.mxu0 0.0
  %668 = vmatpush1.msra.mxu0 0.0
  %669 = vmatprep.subr.mxu0 0.0
  %670 = vmatpush1.msra.mxu0 0.0
  %671 = vmatprep.subr.mxu0 0.0
  %672 = vmatpush1.msra.mxu0 0.0
  %673 = vmatprep.subr.mxu0 0.0
  %674 = vmatpush1.msra.mxu0 0.0
  %675 = vmatprep.subr.mxu0 0.0
  %676 = vmatpush1.msra.mxu0 0.0
  %677 = vmatprep.subr.mxu0 0.0
  %678 = vmatpush1.msra.mxu0 0.0
  %679 = vmatprep.subr.mxu0 0.0
  %680 = vmatpush1.msra.mxu0 0.0
  %681 = vmatprep.subr.mxu0 0.0
  %682 = vmatpush1.msra.mxu0 0.0
  %683 = vmatprep.subr.mxu0 0.0
  %684 = vmatpush1.msra.mxu0 0.0
  %685 = vmatprep.subr.mxu0 0.0
  %686 = vmatpush1.msra.mxu0 0.0
  %687 = vmatprep.subr.mxu0 0.0
  %688 = vmatpush1.msra.mxu0 0.0
  %689 = vmatprep.subr.mxu0 0.0
  %690 = vmatpush1.msra.mxu0 0.0
  %691 = vmatprep.subr.mxu0 0.0
  %692 = vmatpush1.msra.mxu0 0.0
  %693 = vmatprep.subr.mxu0 0.0
  %694 = vmatpush1.msra.mxu0 0.0
  %695 = vmatprep.subr.mxu0 0.0
  %696 = vmatpush1.msra.mxu0 0.0
  %697 = vmatprep.subr.mxu0 0.0
  %698 = vmatpush1.msra.mxu0 0.0
  %699 = vmatprep.subr.mxu0 0.0
  %700 = vmatpush1.msra.mxu0 0.0
  %701 = vmatprep.subr.mxu0 0.0
  %702 = vmatpush1.msra.mxu0 0.0
  %703 = vmatprep.subr.mxu0 0.0
  %704 = vmatpush1.msra.mxu0 0.0
  %705 = vmatprep.subr.mxu0 0.0
  %706 = vmatpush1.msra.mxu0 0.0
  %707 = vmatprep.subr.mxu0 0.0
  %708 = vmatpush1.msra.mxu0 0.0
  %709 = vmatprep.mubr.f32.mxu0 0.0
  %710 = vmatmul.mubr.f32.gmra.mrb[0].mxu0 %v643
  %v711 = vpop.f32.mrb[0].mxu0
  %v712 = vadd.f32 0.0, %v711
  %v713 = vpop.f32.mrb[0].mxu0
  %714 = vdwg.mxu0
  %v715 = vadd.f32 %v639, %v712
  %v716 = vxor.u32 %v715, 2147483648
  %v717 = vmul.f32 %v716, 1.442695
  %v718 = vpow.pop %v717
  %v719 = vadd.f32 %v718, 1.0
  %v720 = vrcp.pop %v719
  %v721 = vmul.f32 1.0, %v720
  %v722 = vtanh.pop %v715
  %v723 = vmul.f32 %v721, %v628
  %725 = vrot.lane.b32.xlu0 %v722, 96
  %v726 = vpop.permute.xlu0 %725
  %v728 = vmul.f32 %v721, %v726
  %730 = vrot.lane.b32.xlu0 %v728, 16
  %v731 = vpop.permute.xlu0 %730
  %v733 = vadd.f32 %v723, %v731
  %v734 = vtanh.pop %v733
  %736 = vrot.lane.b32.xlu0 %v734, 32
  %v737 = vpop.permute.xlu0 %736
  %v739 = vmul.f32 %v721, %v737
  %v740 = vrot.slane %v119, 5
  %v742 = vrot.slane %v124, 4
  %v744 = vsel %vm220, %v740, %v742
  %746 = vrot.lane.b32.xlu0 %v739, 80
  %v747 = vpop.permute.xlu0 %746
  %v748 = vsel %vm222, %v747, 0
  %750 = vmatprep.subr.mxu0 0.0
  %751 = vmatpush1.msra.mxu0 %v213
  %752 = vmatprep.subr.mxu0 0.0
  %753 = vmatpush1.msra.mxu0 %v214
  %754 = vmatprep.subr.mxu0 0.0
  %755 = vmatpush1.msra.mxu0 0.0
  %756 = vmatprep.subr.mxu0 0.0
  %757 = vmatpush1.msra.mxu0 0.0
  %758 = vmatprep.subr.mxu0 0.0
  %759 = vmatpush1.msra.mxu0 0.0
  %760 = vmatprep.subr.mxu0 0.0
  %761 = vmatpush1.msra.mxu0 0.0
  %762 = vmatprep.subr.mxu0 0.0
  %763 = vmatpush1.msra.mxu0 0.0
  %764 = vmatprep.subr.mxu0 0.0
  %765 = vmatpush1.msra.mxu0 0.0
  %766 = vmatprep.subr.mxu0 0.0
  %767 = vmatpush1.msra.mxu0 0.0
  %768 = vmatprep.subr.mxu0 0.0
  %769 = vmatpush1.msra.mxu0 0.0
  %770 = vmatprep.subr.mxu0 0.0
  %771 = vmatpush1.msra.mxu0 0.0
  %772 = vmatprep.subr.mxu0 0.0
  %773 = vmatpush1.msra.mxu0 0.0
  %774 = vmatprep.subr.mxu0 0.0
  %775 = vmatpush1.msra.mxu0 0.0
  %776 = vmatprep.subr.mxu0 0.0
  %777 = vmatpush1.msra.mxu0 0.0
  %778 = vmatprep.subr.mxu0 0.0
  %779 = vmatpush1.msra.mxu0 0.0
  %780 = vmatprep.subr.mxu0 0.0
  %781 = vmatpush1.msra.mxu0 0.0
  %782 = vmatprep.subr.mxu0 0.0
  %783 = vmatpush1.msra.mxu0 0.0
  %784 = vmatprep.subr.mxu0 0.0
  %785 = vmatpush1.msra.mxu0 0.0
  %786 = vmatprep.subr.mxu0 0.0
  %787 = vmatpush1.msra.mxu0 0.0
  %788 = vmatprep.subr.mxu0 0.0
  %789 = vmatpush1.msra.mxu0 0.0
  %790 = vmatprep.subr.mxu0 0.0
  %791 = vmatpush1.msra.mxu0 0.0
  %792 = vmatprep.subr.mxu0 0.0
  %793 = vmatpush1.msra.mxu0 0.0
  %794 = vmatprep.subr.mxu0 0.0
  %795 = vmatpush1.msra.mxu0 0.0
  %796 = vmatprep.subr.mxu0 0.0
  %797 = vmatpush1.msra.mxu0 0.0
  %798 = vmatprep.subr.mxu0 0.0
  %799 = vmatpush1.msra.mxu0 0.0
  %800 = vmatprep.subr.mxu0 0.0
  %801 = vmatpush1.msra.mxu0 0.0
  %802 = vmatprep.subr.mxu0 0.0
  %803 = vmatpush1.msra.mxu0 0.0
  %804 = vmatprep.subr.mxu0 0.0
  %805 = vmatpush1.msra.mxu0 0.0
  %806 = vmatprep.subr.mxu0 0.0
  %807 = vmatpush1.msra.mxu0 0.0
  %808 = vmatprep.subr.mxu0 0.0
  %809 = vmatpush1.msra.mxu0 0.0
  %810 = vmatprep.subr.mxu0 0.0
  %811 = vmatpush1.msra.mxu0 0.0
  %812 = vmatprep.subr.mxu0 0.0
  %813 = vmatpush1.msra.mxu0 0.0
  %814 = vmatprep.mubr.f32.mxu0 0.0
  %815 = vmatmul.mubr.f32.gmra.mrb[0].mxu0 %v748
  %v816 = vpop.f32.mrb[0].mxu0
  %v817 = vadd.f32 0.0, %v816
  %v818 = vpop.f32.mrb[0].mxu0
  %819 = vdwg.mxu0
  %v820 = vadd.f32 %v744, %v817
  %v821 = vxor.u32 %v820, 2147483648
  %v822 = vmul.f32 %v821, 1.442695
  %v823 = vpow.pop %v822
  %v824 = vadd.f32 %v823, 1.0
  %v825 = vrcp.pop %v824
  %v826 = vmul.f32 1.0, %v825
  %v827 = vtanh.pop %v820
  %v828 = vmul.f32 %v826, %v733
  %830 = vrot.lane.b32.xlu0 %v827, 96
  %v831 = vpop.permute.xlu0 %830
  %v833 = vmul.f32 %v826, %v831
  %835 = vrot.lane.b32.xlu0 %v833, 16
  %v836 = vpop.permute.xlu0 %835
  %v838 = vadd.f32 %v828, %v836
  %v839 = vtanh.pop %v838
  %841 = vrot.lane.b32.xlu0 %v839, 32
  %v842 = vpop.permute.xlu0 %841
  %v844 = vmul.f32 %v826, %v842
  %v845 = vrot.slane %v119, 6
  %v847 = vrot.slane %v124, 5
  %v849 = vsel %vm220, %v845, %v847
  %851 = vrot.lane.b32.xlu0 %v844, 80
  %v852 = vpop.permute.xlu0 %851
  %v853 = vsel %vm222, %v852, 0
  %855 = vmatprep.subr.mxu0 0.0
  %856 = vmatpush1.msra.mxu0 %v213
  %857 = vmatprep.subr.mxu0 0.0
  %858 = vmatpush1.msra.mxu0 %v214
  %859 = vmatprep.subr.mxu0 0.0
  %860 = vmatpush1.msra.mxu0 0.0
  %861 = vmatprep.subr.mxu0 0.0
  %862 = vmatpush1.msra.mxu0 0.0
  %863 = vmatprep.subr.mxu0 0.0
  %864 = vmatpush1.msra.mxu0 0.0
  %865 = vmatprep.subr.mxu0 0.0
  %866 = vmatpush1.msra.mxu0 0.0
  %867 = vmatprep.subr.mxu0 0.0
  %868 = vmatpush1.msra.mxu0 0.0
  %869 = vmatprep.subr.mxu0 0.0
  %870 = vmatpush1.msra.mxu0 0.0
  %871 = vmatprep.subr.mxu0 0.0
  %872 = vmatpush1.msra.mxu0 0.0
  %873 = vmatprep.subr.mxu0 0.0
  %874 = vmatpush1.msra.mxu0 0.0
  %875 = vmatprep.subr.mxu0 0.0
  %876 = vmatpush1.msra.mxu0 0.0
  %877 = vmatprep.subr.mxu0 0.0
  %878 = vmatpush1.msra.mxu0 0.0
  %879 = vmatprep.subr.mxu0 0.0
  %880 = vmatpush1.msra.mxu0 0.0
  %881 = vmatprep.subr.mxu0 0.0
  %882 = vmatpush1.msra.mxu0 0.0
  %883 = vmatprep.subr.mxu0 0.0
  %884 = vmatpush1.msra.mxu0 0.0
  %885 = vmatprep.subr.mxu0 0.0
  %886 = vmatpush1.msra.mxu0 0.0
  %887 = vmatprep.subr.mxu0 0.0
  %888 = vmatpush1.msra.mxu0 0.0
  %889 = vmatprep.subr.mxu0 0.0
  %890 = vmatpush1.msra.mxu0 0.0
  %891 = vmatprep.subr.mxu0 0.0
  %892 = vmatpush1.msra.mxu0 0.0
  %893 = vmatprep.subr.mxu0 0.0
  %894 = vmatpush1.msra.mxu0 0.0
  %895 = vmatprep.subr.mxu0 0.0
  %896 = vmatpush1.msra.mxu0 0.0
  %897 = vmatprep.subr.mxu0 0.0
  %898 = vmatpush1.msra.mxu0 0.0
  %899 = vmatprep.subr.mxu0 0.0
  %900 = vmatpush1.msra.mxu0 0.0
  %901 = vmatprep.subr.mxu0 0.0
  %902 = vmatpush1.msra.mxu0 0.0
  %903 = vmatprep.subr.mxu0 0.0
  %904 = vmatpush1.msra.mxu0 0.0
  %905 = vmatprep.subr.mxu0 0.0
  %906 = vmatpush1.msra.mxu0 0.0
  %907 = vmatprep.subr.mxu0 0.0
  %908 = vmatpush1.msra.mxu0 0.0
  %909 = vmatprep.subr.mxu0 0.0
  %910 = vmatpush1.msra.mxu0 0.0
  %911 = vmatprep.subr.mxu0 0.0
  %912 = vmatpush1.msra.mxu0 0.0
  %913 = vmatprep.subr.mxu0 0.0
  %914 = vmatpush1.msra.mxu0 0.0
  %915 = vmatprep.subr.mxu0 0.0
  %916 = vmatpush1.msra.mxu0 0.0
  %917 = vmatprep.subr.mxu0 0.0
  %918 = vmatpush1.msra.mxu0 0.0
  %919 = vmatprep.mubr.f32.mxu0 0.0
  %920 = vmatmul.mubr.f32.gmra.mrb[0].mxu0 %v853
  %v921 = vpop.f32.mrb[0].mxu0
  %v922 = vadd.f32 0.0, %v921
  %v923 = vpop.f32.mrb[0].mxu0
  %924 = vdwg.mxu0
  %v925 = vadd.f32 %v849, %v922
  %v926 = vxor.u32 %v925, 2147483648
  %v927 = vmul.f32 %v926, 1.442695
  %v928 = vpow.pop %v927
  %v929 = vadd.f32 %v928, 1.0
  %v930 = vrcp.pop %v929
  %v931 = vmul.f32 1.0, %v930
  %v932 = vtanh.pop %v925
  %v933 = vmul.f32 %v931, %v838
  %935 = vrot.lane.b32.xlu0 %v932, 96
  %v936 = vpop.permute.xlu0 %935
  %v938 = vmul.f32 %v931, %v936
  %940 = vrot.lane.b32.xlu0 %v938, 16
  %v941 = vpop.permute.xlu0 %940
  %v943 = vadd.f32 %v933, %v941
  %v944 = vtanh.pop %v943
  %946 = vrot.lane.b32.xlu0 %v944, 32
  %v947 = vpop.permute.xlu0 %946
  %v949 = vmul.f32 %v931, %v947
  %v950 = vrot.slane %v119, 7
  %v952 = vrot.slane %v124, 6
  %v954 = vsel %vm220, %v950, %v952
  %956 = vrot.lane.b32.xlu0 %v949, 80
  %v957 = vpop.permute.xlu0 %956
  %v958 = vsel %vm222, %v957, 0
  %960 = vmatprep.subr.mxu0 0.0
  %961 = vmatpush1.msra.mxu0 %v213
  %962 = vmatprep.subr.mxu0 0.0
  %963 = vmatpush1.msra.mxu0 %v214
  %964 = vmatprep.subr.mxu0 0.0
  %965 = vmatpush1.msra.mxu0 0.0
  %966 = vmatprep.subr.mxu0 0.0
  %967 = vmatpush1.msra.mxu0 0.0
  %968 = vmatprep.subr.mxu0 0.0
  %969 = vmatpush1.msra.mxu0 0.0
  %970 = vmatprep.subr.mxu0 0.0
  %971 = vmatpush1.msra.mxu0 0.0
  %972 = vmatprep.subr.mxu0 0.0
  %973 = vmatpush1.msra.mxu0 0.0
  %974 = vmatprep.subr.mxu0 0.0
  %975 = vmatpush1.msra.mxu0 0.0
  %976 = vmatprep.subr.mxu0 0.0
  %977 = vmatpush1.msra.mxu0 0.0
  %978 = vmatprep.subr.mxu0 0.0
  %979 = vmatpush1.msra.mxu0 0.0
  %980 = vmatprep.subr.mxu0 0.0
  %981 = vmatpush1.msra.mxu0 0.0
  %982 = vmatprep.subr.mxu0 0.0
  %983 = vmatpush1.msra.mxu0 0.0
  %984 = vmatprep.subr.mxu0 0.0
  %985 = vmatpush1.msra.mxu0 0.0
  %986 = vmatprep.subr.mxu0 0.0
  %987 = vmatpush1.msra.mxu0 0.0
  %988 = vmatprep.subr.mxu0 0.0
  %989 = vmatpush1.msra.mxu0 0.0
  %990 = vmatprep.subr.mxu0 0.0
  %991 = vmatpush1.msra.mxu0 0.0
  %992 = vmatprep.subr.mxu0 0.0
  %993 = vmatpush1.msra.mxu0 0.0
  %994 = vmatprep.subr.mxu0 0.0
  %995 = vmatpush1.msra.mxu0 0.0
  %996 = vmatprep.subr.mxu0 0.0
  %997 = vmatpush1.msra.mxu0 0.0
  %998 = vmatprep.subr.mxu0 0.0
  %999 = vmatpush1.msra.mxu0 0.0
  %1000 = vmatprep.subr.mxu0 0.0
  %1001 = vmatpush1.msra.mxu0 0.0
  %1002 = vmatprep.subr.mxu0 0.0
  %1003 = vmatpush1.msra.mxu0 0.0
  %1004 = vmatprep.subr.mxu0 0.0
  %1005 = vmatpush1.msra.mxu0 0.0
  %1006 = vmatprep.subr.mxu0 0.0
  %1007 = vmatpush1.msra.mxu0 0.0
  %1008 = vmatprep.subr.mxu0 0.0
  %1009 = vmatpush1.msra.mxu0 0.0
  %1010 = vmatprep.subr.mxu0 0.0
  %1011 = vmatpush1.msra.mxu0 0.0
  %1012 = vmatprep.subr.mxu0 0.0
  %1013 = vmatpush1.msra.mxu0 0.0
  %1014 = vmatprep.subr.mxu0 0.0
  %1015 = vmatpush1.msra.mxu0 0.0
  %1016 = vmatprep.subr.mxu0 0.0
  %1017 = vmatpush1.msra.mxu0 0.0
  %1018 = vmatprep.subr.mxu0 0.0
  %1019 = vmatpush1.msra.mxu0 0.0
  %1020 = vmatprep.subr.mxu0 0.0
  %1021 = vmatpush1.msra.mxu0 0.0
  %1022 = vmatprep.subr.mxu0 0.0
  %1023 = vmatpush1.msra.mxu0 0.0
  %1024 = vmatprep.mubr.f32.mxu0 0.0
  %1025 = vmatmul.mubr.f32.gmra.mrb[0].mxu0 %v958
  %v1026 = vpop.f32.mrb[0].mxu0
  %v1027 = vadd.f32 0.0, %v1026
  %v1028 = vpop.f32.mrb[0].mxu0
  %1029 = vdwg.mxu0
  %v1030 = vadd.f32 %v954, %v1027
  %v1031 = vxor.u32 %v1030, 2147483648
  %v1032 = vmul.f32 %v1031, 1.442695
  %v1033 = vpow.pop %v1032
  %v1034 = vadd.f32 %v1033, 1.0
  %v1035 = vrcp.pop %v1034
  %v1036 = vmul.f32 1.0, %v1035
  %v1037 = vtanh.pop %v1030
  %v1038 = vmul.f32 %v1036, %v943
  %1040 = vrot.lane.b32.xlu0 %v1037, 96
  %v1041 = vpop.permute.xlu0 %1040
  %v1043 = vmul.f32 %v1036, %v1041
  %1045 = vrot.lane.b32.xlu0 %v1043, 16
  %v1046 = vpop.permute.xlu0 %1045
  %v1048 = vadd.f32 %v1038, %v1046
  %v1049 = vtanh.pop %v1048
  %1051 = vrot.lane.b32.xlu0 %v1049, 32
  %v1052 = vpop.permute.xlu0 %1051
  %v1054 = vmul.f32 %v1036, %v1052
  %v1056 = vrot.slane %v205, 7
  %v1059 = vrot.slane %v210, 6
  %v1061 = vsel %vm220, %v1056, %v1059
  %1062 = vmatprep.subr.mxu0 0.0
  %1063 = vmatpush1.msra.mxu0 %v215
  %1064 = vmatprep.subr.mxu0 0.0
  %1065 = vmatpush1.msra.mxu0 %v216
  %1066 = vmatprep.subr.mxu0 0.0
  %1067 = vmatpush1.msra.mxu0 0.0
  %1068 = vmatprep.subr.mxu0 0.0
  %1069 = vmatpush1.msra.mxu0 0.0
  %1070 = vmatprep.subr.mxu0 0.0
  %1071 = vmatpush1.msra.mxu0 0.0
  %1072 = vmatprep.subr.mxu0 0.0
  %1073 = vmatpush1.msra.mxu0 0.0
  %1074 = vmatprep.subr.mxu0 0.0
  %1075 = vmatpush1.msra.mxu0 0.0
  %1076 = vmatprep.subr.mxu0 0.0
  %1077 = vmatpush1.msra.mxu0 0.0
  %1078 = vmatprep.subr.mxu0 0.0
  %1079 = vmatpush1.msra.mxu0 0.0
  %1080 = vmatprep.subr.mxu0 0.0
  %1081 = vmatpush1.msra.mxu0 0.0
  %1082 = vmatprep.subr.mxu0 0.0
  %1083 = vmatpush1.msra.mxu0 0.0
  %1084 = vmatprep.subr.mxu0 0.0
  %1085 = vmatpush1.msra.mxu0 0.0
  %1086 = vmatprep.subr.mxu0 0.0
  %1087 = vmatpush1.msra.mxu0 0.0
  %1088 = vmatprep.subr.mxu0 0.0
  %1089 = vmatpush1.msra.mxu0 0.0
  %1090 = vmatprep.subr.mxu0 0.0
  %1091 = vmatpush1.msra.mxu0 0.0
  %1092 = vmatprep.subr.mxu0 0.0
  %1093 = vmatpush1.msra.mxu0 0.0
  %1094 = vmatprep.subr.mxu0 0.0
  %1095 = vmatpush1.msra.mxu0 0.0
  %1096 = vmatprep.subr.mxu0 0.0
  %1097 = vmatpush1.msra.mxu0 0.0
  %1098 = vmatprep.subr.mxu0 0.0
  %1099 = vmatpush1.msra.mxu0 0.0
  %1100 = vmatprep.subr.mxu0 0.0
  %1101 = vmatpush1.msra.mxu0 0.0
  %1102 = vmatprep.subr.mxu0 0.0
  %1103 = vmatpush1.msra.mxu0 0.0
  %1104 = vmatprep.subr.mxu0 0.0
  %1105 = vmatpush1.msra.mxu0 0.0
  %1106 = vmatprep.subr.mxu0 0.0
  %1107 = vmatpush1.msra.mxu0 0.0
  %1108 = vmatprep.subr.mxu0 0.0
  %1109 = vmatpush1.msra.mxu0 0.0
  %1110 = vmatprep.subr.mxu0 0.0
  %1111 = vmatpush1.msra.mxu0 0.0
  %1112 = vmatprep.subr.mxu0 0.0
  %1113 = vmatpush1.msra.mxu0 0.0
  %1114 = vmatprep.subr.mxu0 0.0
  %1115 = vmatpush1.msra.mxu0 0.0
  %1116 = vmatprep.subr.mxu0 0.0
  %1117 = vmatpush1.msra.mxu0 0.0
  %1118 = vmatprep.subr.mxu0 0.0
  %1119 = vmatpush1.msra.mxu0 0.0
  %1120 = vmatprep.subr.mxu0 0.0
  %1121 = vmatpush1.msra.mxu0 0.0
  %1122 = vmatprep.subr.mxu0 0.0
  %1123 = vmatpush1.msra.mxu0 0.0
  %1124 = vmatprep.subr.mxu0 0.0
  %1125 = vmatpush1.msra.mxu0 0.0
  %1126 = vmatprep.mubr.f32.mxu0 0.0
  %1127 = vmatmul.mubr.f32.gmra.mrb[0].mxu0 %v224
  %v1128 = vpop.f32.mrb[0].mxu0
  %v1129 = vadd.f32 0.0, %v1128
  %v1130 = vpop.f32.mrb[0].mxu0
  %1131 = vdwg.mxu0
  %v1132 = vadd.f32 %v1061, %v1129
  %v1133 = vxor.u32 %v1132, 2147483648
  %v1134 = vmul.f32 %v1133, 1.442695
  %v1135 = vpow.pop %v1134
  %v1136 = vadd.f32 %v1135, 1.0
  %v1137 = vrcp.pop %v1136
  %v1138 = vmul.f32 1.0, %v1137
  %v1139 = vtanh.pop %v1132
  %v1140 = vmul.f32 %v1138, 0.0
  %1142 = vrot.lane.b32.xlu0 %v1139, 96
  %v1143 = vpop.permute.xlu0 %1142
  %v1145 = vmul.f32 %v1138, %v1143
  %1147 = vrot.lane.b32.xlu0 %v1145, 16
  %v1148 = vpop.permute.xlu0 %1147
  %v1150 = vadd.f32 %v1140, %v1148
  %v1151 = vtanh.pop %v1150
  %1153 = vrot.lane.b32.xlu0 %v1151, 32
  %v1154 = vpop.permute.xlu0 %1153
  %v1156 = vmul.f32 %v1138, %v1154
  %v1157 = vrot.slane %v205, 6
  %v1159 = vrot.slane %v210, 5
  %v1161 = vsel %vm220, %v1157, %v1159
  %1163 = vrot.lane.b32.xlu0 %v1156, 80
  %v1164 = vpop.permute.xlu0 %1163
  %v1165 = vsel %vm222, %v1164, 0
  %1167 = vmatprep.subr.mxu0 0.0
  %1168 = vmatpush1.msra.mxu0 %v215
  %1169 = vmatprep.subr.mxu0 0.0
  %1170 = vmatpush1.msra.mxu0 %v216
  %1171 = vmatprep.subr.mxu0 0.0
  %1172 = vmatpush1.msra.mxu0 0.0
  %1173 = vmatprep.subr.mxu0 0.0
  %1174 = vmatpush1.msra.mxu0 0.0
  %1175 = vmatprep.subr.mxu0 0.0
  %1176 = vmatpush1.msra.mxu0 0.0
  %1177 = vmatprep.subr.mxu0 0.0
  %1178 = vmatpush1.msra.mxu0 0.0
  %1179 = vmatprep.subr.mxu0 0.0
  %1180 = vmatpush1.msra.mxu0 0.0
  %1181 = vmatprep.subr.mxu0 0.0
  %1182 = vmatpush1.msra.mxu0 0.0
  %1183 = vmatprep.subr.mxu0 0.0
  %1184 = vmatpush1.msra.mxu0 0.0
  %1185 = vmatprep.subr.mxu0 0.0
  %1186 = vmatpush1.msra.mxu0 0.0
  %1187 = vmatprep.subr.mxu0 0.0
  %1188 = vmatpush1.msra.mxu0 0.0
  %1189 = vmatprep.subr.mxu0 0.0
  %1190 = vmatpush1.msra.mxu0 0.0
  %1191 = vmatprep.subr.mxu0 0.0
  %1192 = vmatpush1.msra.mxu0 0.0
  %1193 = vmatprep.subr.mxu0 0.0
  %1194 = vmatpush1.msra.mxu0 0.0
  %1195 = vmatprep.subr.mxu0 0.0
  %1196 = vmatpush1.msra.mxu0 0.0
  %1197 = vmatprep.subr.mxu0 0.0
  %1198 = vmatpush1.msra.mxu0 0.0
  %1199 = vmatprep.subr.mxu0 0.0
  %1200 = vmatpush1.msra.mxu0 0.0
  %1201 = vmatprep.subr.mxu0 0.0
  %1202 = vmatpush1.msra.mxu0 0.0
  %1203 = vmatprep.subr.mxu0 0.0
  %1204 = vmatpush1.msra.mxu0 0.0
  %1205 = vmatprep.subr.mxu0 0.0
  %1206 = vmatpush1.msra.mxu0 0.0
  %1207 = vmatprep.subr.mxu0 0.0
  %1208 = vmatpush1.msra.mxu0 0.0
  %1209 = vmatprep.subr.mxu0 0.0
  %1210 = vmatpush1.msra.mxu0 0.0
  %1211 = vmatprep.subr.mxu0 0.0
  %1212 = vmatpush1.msra.mxu0 0.0
  %1213 = vmatprep.subr.mxu0 0.0
  %1214 = vmatpush1.msra.mxu0 0.0
  %1215 = vmatprep.subr.mxu0 0.0
  %1216 = vmatpush1.msra.mxu0 0.0
  %1217 = vmatprep.subr.mxu0 0.0
  %1218 = vmatpush1.msra.mxu0 0.0
  %1219 = vmatprep.subr.mxu0 0.0
  %1220 = vmatpush1.msra.mxu0 0.0
  %1221 = vmatprep.subr.mxu0 0.0
  %1222 = vmatpush1.msra.mxu0 0.0
  %1223 = vmatprep.subr.mxu0 0.0
  %1224 = vmatpush1.msra.mxu0 0.0
  %1225 = vmatprep.subr.mxu0 0.0
  %1226 = vmatpush1.msra.mxu0 0.0
  %1227 = vmatprep.subr.mxu0 0.0
  %1228 = vmatpush1.msra.mxu0 0.0
  %1229 = vmatprep.subr.mxu0 0.0
  %1230 = vmatpush1.msra.mxu0 0.0
  %1231 = vmatprep.mubr.f32.mxu0 0.0
  %1232 = vmatmul.mubr.f32.gmra.mrb[0].mxu0 %v1165
  %v1233 = vpop.f32.mrb[0].mxu0
  %v1234 = vadd.f32 0.0, %v1233
  %v1235 = vpop.f32.mrb[0].mxu0
  %1236 = vdwg.mxu0
  %v1237 = vadd.f32 %v1161, %v1234
  %v1238 = vxor.u32 %v1237, 2147483648
  %v1239 = vmul.f32 %v1238, 1.442695
  %v1240 = vpow.pop %v1239
  %v1241 = vadd.f32 %v1240, 1.0
  %v1242 = vrcp.pop %v1241
  %v1243 = vmul.f32 1.0, %v1242
  %v1244 = vtanh.pop %v1237
  %v1245 = vmul.f32 %v1243, %v1150
  %1247 = vrot.lane.b32.xlu0 %v1244, 96
  %v1248 = vpop.permute.xlu0 %1247
  %v1250 = vmul.f32 %v1243, %v1248
  %1252 = vrot.lane.b32.xlu0 %v1250, 16
  %v1253 = vpop.permute.xlu0 %1252
  %v1255 = vadd.f32 %v1245, %v1253
  %v1256 = vtanh.pop %v1255
  %1258 = vrot.lane.b32.xlu0 %v1256, 32
  %v1259 = vpop.permute.xlu0 %1258
  %v1261 = vmul.f32 %v1243, %v1259
  %v1262 = vrot.slane %v205, 5
  %v1264 = vrot.slane %v210, 4
  %v1266 = vsel %vm220, %v1262, %v1264
  %1268 = vrot.lane.b32.xlu0 %v1261, 80
  %v1269 = vpop.permute.xlu0 %1268
  %v1270 = vsel %vm222, %v1269, 0
  %1272 = vmatprep.subr.mxu0 0.0
  %1273 = vmatpush1.msra.mxu0 %v215
  %1274 = vmatprep.subr.mxu0 0.0
  %1275 = vmatpush1.msra.mxu0 %v216
  %1276 = vmatprep.subr.mxu0 0.0
  %1277 = vmatpush1.msra.mxu0 0.0
  %1278 = vmatprep.subr.mxu0 0.0
  %1279 = vmatpush1.msra.mxu0 0.0
  %1280 = vmatprep.subr.mxu0 0.0
  %1281 = vmatpush1.msra.mxu0 0.0
  %1282 = vmatprep.subr.mxu0 0.0
  %1283 = vmatpush1.msra.mxu0 0.0
  %1284 = vmatprep.subr.mxu0 0.0
  %1285 = vmatpush1.msra.mxu0 0.0
  %1286 = vmatprep.subr.mxu0 0.0
  %1287 = vmatpush1.msra.mxu0 0.0
  %1288 = vmatprep.subr.mxu0 0.0
  %1289 = vmatpush1.msra.mxu0 0.0
  %1290 = vmatprep.subr.mxu0 0.0
  %1291 = vmatpush1.msra.mxu0 0.0
  %1292 = vmatprep.subr.mxu0 0.0
  %1293 = vmatpush1.msra.mxu0 0.0
  %1294 = vmatprep.subr.mxu0 0.0
  %1295 = vmatpush1.msra.mxu0 0.0
  %1296 = vmatprep.subr.mxu0 0.0
  %1297 = vmatpush1.msra.mxu0 0.0
  %1298 = vmatprep.subr.mxu0 0.0
  %1299 = vmatpush1.msra.mxu0 0.0
  %1300 = vmatprep.subr.mxu0 0.0
  %1301 = vmatpush1.msra.mxu0 0.0
  %1302 = vmatprep.subr.mxu0 0.0
  %1303 = vmatpush1.msra.mxu0 0.0
  %1304 = vmatprep.subr.mxu0 0.0
  %1305 = vmatpush1.msra.mxu0 0.0
  %1306 = vmatprep.subr.mxu0 0.0
  %1307 = vmatpush1.msra.mxu0 0.0
  %1308 = vmatprep.subr.mxu0 0.0
  %1309 = vmatpush1.msra.mxu0 0.0
  %1310 = vmatprep.subr.mxu0 0.0
  %1311 = vmatpush1.msra.mxu0 0.0
  %1312 = vmatprep.subr.mxu0 0.0
  %1313 = vmatpush1.msra.mxu0 0.0
  %1314 = vmatprep.subr.mxu0 0.0
  %1315 = vmatpush1.msra.mxu0 0.0
  %1316 = vmatprep.subr.mxu0 0.0
  %1317 = vmatpush1.msra.mxu0 0.0
  %1318 = vmatprep.subr.mxu0 0.0
  %1319 = vmatpush1.msra.mxu0 0.0
  %1320 = vmatprep.subr.mxu0 0.0
  %1321 = vmatpush1.msra.mxu0 0.0
  %1322 = vmatprep.subr.mxu0 0.0
  %1323 = vmatpush1.msra.mxu0 0.0
  %1324 = vmatprep.subr.mxu0 0.0
  %1325 = vmatpush1.msra.mxu0 0.0
  %1326 = vmatprep.subr.mxu0 0.0
  %1327 = vmatpush1.msra.mxu0 0.0
  %1328 = vmatprep.subr.mxu0 0.0
  %1329 = vmatpush1.msra.mxu0 0.0
  %1330 = vmatprep.subr.mxu0 0.0
  %1331 = vmatpush1.msra.mxu0 0.0
  %1332 = vmatprep.subr.mxu0 0.0
  %1333 = vmatpush1.msra.mxu0 0.0
  %1334 = vmatprep.subr.mxu0 0.0
  %1335 = vmatpush1.msra.mxu0 0.0
  %1336 = vmatprep.mubr.f32.mxu0 0.0
  %1337 = vmatmul.mubr.f32.gmra.mrb[0].mxu0 %v1270
  %v1338 = vpop.f32.mrb[0].mxu0
  %v1339 = vadd.f32 0.0, %v1338
  %v1340 = vpop.f32.mrb[0].mxu0
  %1341 = vdwg.mxu0
  %v1342 = vadd.f32 %v1266, %v1339
  %v1343 = vxor.u32 %v1342, 2147483648
  %v1344 = vmul.f32 %v1343, 1.442695
  %v1345 = vpow.pop %v1344
  %v1346 = vadd.f32 %v1345, 1.0
  %v1347 = vrcp.pop %v1346
  %v1348 = vmul.f32 1.0, %v1347
  %v1349 = vtanh.pop %v1342
  %v1350 = vmul.f32 %v1348, %v1255
  %1352 = vrot.lane.b32.xlu0 %v1349, 96
  %v1353 = vpop.permute.xlu0 %1352
  %v1355 = vmul.f32 %v1348, %v1353
  %1357 = vrot.lane.b32.xlu0 %v1355, 16
  %v1358 = vpop.permute.xlu0 %1357
  %v1360 = vadd.f32 %v1350, %v1358
  %v1361 = vtanh.pop %v1360
  %1363 = vrot.lane.b32.xlu0 %v1361, 32
  %v1364 = vpop.permute.xlu0 %1363
  %v1366 = vmul.f32 %v1348, %v1364
  %v1367 = vrot.slane %v205, 4
  %v1369 = vrot.slane %v210, 3
  %v1371 = vsel %vm220, %v1367, %v1369
  %1373 = vrot.lane.b32.xlu0 %v1366, 80
  %v1374 = vpop.permute.xlu0 %1373
  %v1375 = vsel %vm222, %v1374, 0
  %1377 = vmatprep.subr.mxu0 0.0
  %1378 = vmatpush1.msra.mxu0 %v215
  %1379 = vmatprep.subr.mxu0 0.0
  %1380 = vmatpush1.msra.mxu0 %v216
  %1381 = vmatprep.subr.mxu0 0.0
  %1382 = vmatpush1.msra.mxu0 0.0
  %1383 = vmatprep.subr.mxu0 0.0
  %1384 = vmatpush1.msra.mxu0 0.0
  %1385 = vmatprep.subr.mxu0 0.0
  %1386 = vmatpush1.msra.mxu0 0.0
  %1387 = vmatprep.subr.mxu0 0.0
  %1388 = vmatpush1.msra.mxu0 0.0
  %1389 = vmatprep.subr.mxu0 0.0
  %1390 = vmatpush1.msra.mxu0 0.0
  %1391 = vmatprep.subr.mxu0 0.0
  %1392 = vmatpush1.msra.mxu0 0.0
  %1393 = vmatprep.subr.mxu0 0.0
  %1394 = vmatpush1.msra.mxu0 0.0
  %1395 = vmatprep.subr.mxu0 0.0
  %1396 = vmatpush1.msra.mxu0 0.0
  %1397 = vmatprep.subr.mxu0 0.0
  %1398 = vmatpush1.msra.mxu0 0.0
  %1399 = vmatprep.subr.mxu0 0.0
  %1400 = vmatpush1.msra.mxu0 0.0
  %1401 = vmatprep.subr.mxu0 0.0
  %1402 = vmatpush1.msra.mxu0 0.0
  %1403 = vmatprep.subr.mxu0 0.0
  %1404 = vmatpush1.msra.mxu0 0.0
  %1405 = vmatprep.subr.mxu0 0.0
  %1406 = vmatpush1.msra.mxu0 0.0
  %1407 = vmatprep.subr.mxu0 0.0
  %1408 = vmatpush1.msra.mxu0 0.0
  %1409 = vmatprep.subr.mxu0 0.0
  %1410 = vmatpush1.msra.mxu0 0.0
  %1411 = vmatprep.subr.mxu0 0.0
  %1412 = vmatpush1.msra.mxu0 0.0
  %1413 = vmatprep.subr.mxu0 0.0
  %1414 = vmatpush1.msra.mxu0 0.0
  %1415 = vmatprep.subr.mxu0 0.0
  %1416 = vmatpush1.msra.mxu0 0.0
  %1417 = vmatprep.subr.mxu0 0.0
  %1418 = vmatpush1.msra.mxu0 0.0
  %1419 = vmatprep.subr.mxu0 0.0
  %1420 = vmatpush1.msra.mxu0 0.0
  %1421 = vmatprep.subr.mxu0 0.0
  %1422 = vmatpush1.msra.mxu0 0.0
  %1423 = vmatprep.subr.mxu0 0.0
  %1424 = vmatpush1.msra.mxu0 0.0
  %1425 = vmatprep.subr.mxu0 0.0
  %1426 = vmatpush1.msra.mxu0 0.0
  %1427 = vmatprep.subr.mxu0 0.0
  %1428 = vmatpush1.msra.mxu0 0.0
  %1429 = vmatprep.subr.mxu0 0.0
  %1430 = vmatpush1.msra.mxu0 0.0
  %1431 = vmatprep.subr.mxu0 0.0
  %1432 = vmatpush1.msra.mxu0 0.0
  %1433 = vmatprep.subr.mxu0 0.0
  %1434 = vmatpush1.msra.mxu0 0.0
  %1435 = vmatprep.subr.mxu0 0.0
  %1436 = vmatpush1.msra.mxu0 0.0
  %1437 = vmatprep.subr.mxu0 0.0
  %1438 = vmatpush1.msra.mxu0 0.0
  %1439 = vmatprep.subr.mxu0 0.0
  %1440 = vmatpush1.msra.mxu0 0.0
  %1441 = vmatprep.mubr.f32.mxu0 0.0
  %1442 = vmatmul.mubr.f32.gmra.mrb[0].mxu0 %v1375
  %v1443 = vpop.f32.mrb[0].mxu0
  %v1444 = vadd.f32 0.0, %v1443
  %v1445 = vpop.f32.mrb[0].mxu0
  %1446 = vdwg.mxu0
  %v1447 = vadd.f32 %v1371, %v1444
  %v1448 = vxor.u32 %v1447, 2147483648
  %v1449 = vmul.f32 %v1448, 1.442695
  %v1450 = vpow.pop %v1449
  %v1451 = vadd.f32 %v1450, 1.0
  %v1452 = vrcp.pop %v1451
  %v1453 = vmul.f32 1.0, %v1452
  %v1454 = vtanh.pop %v1447
  %v1455 = vmul.f32 %v1453, %v1360
  %1457 = vrot.lane.b32.xlu0 %v1454, 96
  %v1458 = vpop.permute.xlu0 %1457
  %v1460 = vmul.f32 %v1453, %v1458
  %1462 = vrot.lane.b32.xlu0 %v1460, 16
  %v1463 = vpop.permute.xlu0 %1462
  %v1465 = vadd.f32 %v1455, %v1463
  %v1466 = vtanh.pop %v1465
  %1468 = vrot.lane.b32.xlu0 %v1466, 32
  %v1469 = vpop.permute.xlu0 %1468
  %v1471 = vmul.f32 %v1453, %v1469
  %v1472 = vrot.slane %v205, 3
  %v1474 = vrot.slane %v210, 2
  %v1476 = vsel %vm220, %v1472, %v1474
  %1478 = vrot.lane.b32.xlu0 %v1471, 80
  %v1479 = vpop.permute.xlu0 %1478
  %v1480 = vsel %vm222, %v1479, 0
  %1482 = vmatprep.subr.mxu0 0.0
  %1483 = vmatpush1.msra.mxu0 %v215
  %1484 = vmatprep.subr.mxu0 0.0
  %1485 = vmatpush1.msra.mxu0 %v216
  %1486 = vmatprep.subr.mxu0 0.0
  %1487 = vmatpush1.msra.mxu0 0.0
  %1488 = vmatprep.subr.mxu0 0.0
  %1489 = vmatpush1.msra.mxu0 0.0
  %1490 = vmatprep.subr.mxu0 0.0
  %1491 = vmatpush1.msra.mxu0 0.0
  %1492 = vmatprep.subr.mxu0 0.0
  %1493 = vmatpush1.msra.mxu0 0.0
  %1494 = vmatprep.subr.mxu0 0.0
  %1495 = vmatpush1.msra.mxu0 0.0
  %1496 = vmatprep.subr.mxu0 0.0
  %1497 = vmatpush1.msra.mxu0 0.0
  %1498 = vmatprep.subr.mxu0 0.0
  %1499 = vmatpush1.msra.mxu0 0.0
  %1500 = vmatprep.subr.mxu0 0.0
  %1501 = vmatpush1.msra.mxu0 0.0
  %1502 = vmatprep.subr.mxu0 0.0
  %1503 = vmatpush1.msra.mxu0 0.0
  %1504 = vmatprep.subr.mxu0 0.0
  %1505 = vmatpush1.msra.mxu0 0.0
  %1506 = vmatprep.subr.mxu0 0.0
  %1507 = vmatpush1.msra.mxu0 0.0
  %1508 = vmatprep.subr.mxu0 0.0
  %1509 = vmatpush1.msra.mxu0 0.0
  %1510 = vmatprep.subr.mxu0 0.0
  %1511 = vmatpush1.msra.mxu0 0.0
  %1512 = vmatprep.subr.mxu0 0.0
  %1513 = vmatpush1.msra.mxu0 0.0
  %1514 = vmatprep.subr.mxu0 0.0
  %1515 = vmatpush1.msra.mxu0 0.0
  %1516 = vmatprep.subr.mxu0 0.0
  %1517 = vmatpush1.msra.mxu0 0.0
  %1518 = vmatprep.subr.mxu0 0.0
  %1519 = vmatpush1.msra.mxu0 0.0
  %1520 = vmatprep.subr.mxu0 0.0
  %1521 = vmatpush1.msra.mxu0 0.0
  %1522 = vmatprep.subr.mxu0 0.0
  %1523 = vmatpush1.msra.mxu0 0.0
  %1524 = vmatprep.subr.mxu0 0.0
  %1525 = vmatpush1.msra.mxu0 0.0
  %1526 = vmatprep.subr.mxu0 0.0
  %1527 = vmatpush1.msra.mxu0 0.0
  %1528 = vmatprep.subr.mxu0 0.0
  %1529 = vmatpush1.msra.mxu0 0.0
  %1530 = vmatprep.subr.mxu0 0.0
  %1531 = vmatpush1.msra.mxu0 0.0
  %1532 = vmatprep.subr.mxu0 0.0
  %1533 = vmatpush1.msra.mxu0 0.0
  %1534 = vmatprep.subr.mxu0 0.0
  %1535 = vmatpush1.msra.mxu0 0.0
  %1536 = vmatprep.subr.mxu0 0.0
  %1537 = vmatpush1.msra.mxu0 0.0
  %1538 = vmatprep.subr.mxu0 0.0
  %1539 = vmatpush1.msra.mxu0 0.0
  %1540 = vmatprep.subr.mxu0 0.0
  %1541 = vmatpush1.msra.mxu0 0.0
  %1542 = vmatprep.subr.mxu0 0.0
  %1543 = vmatpush1.msra.mxu0 0.0
  %1544 = vmatprep.subr.mxu0 0.0
  %1545 = vmatpush1.msra.mxu0 0.0
  %1546 = vmatprep.mubr.f32.mxu0 0.0
  %1547 = vmatmul.mubr.f32.gmra.mrb[0].mxu0 %v1480
  %v1548 = vpop.f32.mrb[0].mxu0
  %v1549 = vadd.f32 0.0, %v1548
  %v1550 = vpop.f32.mrb[0].mxu0
  %1551 = vdwg.mxu0
  %v1552 = vadd.f32 %v1476, %v1549
  %v1553 = vxor.u32 %v1552, 2147483648
  %v1554 = vmul.f32 %v1553, 1.442695
  %v1555 = vpow.pop %v1554
  %v1556 = vadd.f32 %v1555, 1.0
  %v1557 = vrcp.pop %v1556
  %v1558 = vmul.f32 1.0, %v1557
  %v1559 = vtanh.pop %v1552
  %v1560 = vmul.f32 %v1558, %v1465
  %1562 = vrot.lane.b32.xlu0 %v1559, 96
  %v1563 = vpop.permute.xlu0 %1562
  %v1565 = vmul.f32 %v1558, %v1563
  %1567 = vrot.lane.b32.xlu0 %v1565, 16
  %v1568 = vpop.permute.xlu0 %1567
  %v1570 = vadd.f32 %v1560, %v1568
  %v1571 = vtanh.pop %v1570
  %1573 = vrot.lane.b32.xlu0 %v1571, 32
  %v1574 = vpop.permute.xlu0 %1573
  %v1576 = vmul.f32 %v1558, %v1574
  %v1577 = vrot.slane %v205, 2
  %v1579 = vrot.slane %v210, 1
  %v1581 = vsel %vm220, %v1577, %v1579
  %1583 = vrot.lane.b32.xlu0 %v1576, 80
  %v1584 = vpop.permute.xlu0 %1583
  %v1585 = vsel %vm222, %v1584, 0
  %1587 = vmatprep.subr.mxu0 0.0
  %1588 = vmatpush1.msra.mxu0 %v215
  %1589 = vmatprep.subr.mxu0 0.0
  %1590 = vmatpush1.msra.mxu0 %v216
  %1591 = vmatprep.subr.mxu0 0.0
  %1592 = vmatpush1.msra.mxu0 0.0
  %1593 = vmatprep.subr.mxu0 0.0
  %1594 = vmatpush1.msra.mxu0 0.0
  %1595 = vmatprep.subr.mxu0 0.0
  %1596 = vmatpush1.msra.mxu0 0.0
  %1597 = vmatprep.subr.mxu0 0.0
  %1598 = vmatpush1.msra.mxu0 0.0
  %1599 = vmatprep.subr.mxu0 0.0
  %1600 = vmatpush1.msra.mxu0 0.0
  %1601 = vmatprep.subr.mxu0 0.0
  %1602 = vmatpush1.msra.mxu0 0.0
  %1603 = vmatprep.subr.mxu0 0.0
  %1604 = vmatpush1.msra.mxu0 0.0
  %1605 = vmatprep.subr.mxu0 0.0
  %1606 = vmatpush1.msra.mxu0 0.0
  %1607 = vmatprep.subr.mxu0 0.0
  %1608 = vmatpush1.msra.mxu0 0.0
  %1609 = vmatprep.subr.mxu0 0.0
  %1610 = vmatpush1.msra.mxu0 0.0
  %1611 = vmatprep.subr.mxu0 0.0
  %1612 = vmatpush1.msra.mxu0 0.0
  %1613 = vmatprep.subr.mxu0 0.0
  %1614 = vmatpush1.msra.mxu0 0.0
  %1615 = vmatprep.subr.mxu0 0.0
  %1616 = vmatpush1.msra.mxu0 0.0
  %1617 = vmatprep.subr.mxu0 0.0
  %1618 = vmatpush1.msra.mxu0 0.0
  %1619 = vmatprep.subr.mxu0 0.0
  %1620 = vmatpush1.msra.mxu0 0.0
  %1621 = vmatprep.subr.mxu0 0.0
  %1622 = vmatpush1.msra.mxu0 0.0
  %1623 = vmatprep.subr.mxu0 0.0
  %1624 = vmatpush1.msra.mxu0 0.0
  %1625 = vmatprep.subr.mxu0 0.0
  %1626 = vmatpush1.msra.mxu0 0.0
  %1627 = vmatprep.subr.mxu0 0.0
  %1628 = vmatpush1.msra.mxu0 0.0
  %1629 = vmatprep.subr.mxu0 0.0
  %1630 = vmatpush1.msra.mxu0 0.0
  %1631 = vmatprep.subr.mxu0 0.0
  %1632 = vmatpush1.msra.mxu0 0.0
  %1633 = vmatprep.subr.mxu0 0.0
  %1634 = vmatpush1.msra.mxu0 0.0
  %1635 = vmatprep.subr.mxu0 0.0
  %1636 = vmatpush1.msra.mxu0 0.0
  %1637 = vmatprep.subr.mxu0 0.0
  %1638 = vmatpush1.msra.mxu0 0.0
  %1639 = vmatprep.subr.mxu0 0.0
  %1640 = vmatpush1.msra.mxu0 0.0
  %1641 = vmatprep.subr.mxu0 0.0
  %1642 = vmatpush1.msra.mxu0 0.0
  %1643 = vmatprep.subr.mxu0 0.0
  %1644 = vmatpush1.msra.mxu0 0.0
  %1645 = vmatprep.subr.mxu0 0.0
  %1646 = vmatpush1.msra.mxu0 0.0
  %1647 = vmatprep.subr.mxu0 0.0
  %1648 = vmatpush1.msra.mxu0 0.0
  %1649 = vmatprep.subr.mxu0 0.0
  %1650 = vmatpush1.msra.mxu0 0.0
  %1651 = vmatprep.mubr.f32.mxu0 0.0
  %1652 = vmatmul.mubr.f32.gmra.mrb[0].mxu0 %v1585
  %v1653 = vpop.f32.mrb[0].mxu0
  %v1654 = vadd.f32 0.0, %v1653
  %v1655 = vpop.f32.mrb[0].mxu0
  %1656 = vdwg.mxu0
  %v1657 = vadd.f32 %v1581, %v1654
  %v1658 = vxor.u32 %v1657, 2147483648
  %v1659 = vmul.f32 %v1658, 1.442695
  %v1660 = vpow.pop %v1659
  %v1661 = vadd.f32 %v1660, 1.0
  %v1662 = vrcp.pop %v1661
  %v1663 = vmul.f32 1.0, %v1662
  %v1664 = vtanh.pop %v1657
  %v1665 = vmul.f32 %v1663, %v1570
  %1667 = vrot.lane.b32.xlu0 %v1664, 96
  %v1668 = vpop.permute.xlu0 %1667
  %v1670 = vmul.f32 %v1663, %v1668
  %1672 = vrot.lane.b32.xlu0 %v1670, 16
  %v1673 = vpop.permute.xlu0 %1672
  %v1675 = vadd.f32 %v1665, %v1673
  %v1676 = vtanh.pop %v1675
  %1678 = vrot.lane.b32.xlu0 %v1676, 32
  %v1679 = vpop.permute.xlu0 %1678
  %v1681 = vmul.f32 %v1663, %v1679
  %v1682 = vrot.slane %v205, 1
  %v1684 = vsel %vm220, %v1682, %v210
  %1686 = vrot.lane.b32.xlu0 %v1681, 80
  %v1687 = vpop.permute.xlu0 %1686
  %v1688 = vsel %vm222, %v1687, 0
  %1690 = vmatprep.subr.mxu0 0.0
  %1691 = vmatpush1.msra.mxu0 %v215
  %1692 = vmatprep.subr.mxu0 0.0
  %1693 = vmatpush1.msra.mxu0 %v216
  %1694 = vmatprep.subr.mxu0 0.0
  %1695 = vmatpush1.msra.mxu0 0.0
  %1696 = vmatprep.subr.mxu0 0.0
  %1697 = vmatpush1.msra.mxu0 0.0
  %1698 = vmatprep.subr.mxu0 0.0
  %1699 = vmatpush1.msra.mxu0 0.0
  %1700 = vmatprep.subr.mxu0 0.0
  %1701 = vmatpush1.msra.mxu0 0.0
  %1702 = vmatprep.subr.mxu0 0.0
  %1703 = vmatpush1.msra.mxu0 0.0
  %1704 = vmatprep.subr.mxu0 0.0
  %1705 = vmatpush1.msra.mxu0 0.0
  %1706 = vmatprep.subr.mxu0 0.0
  %1707 = vmatpush1.msra.mxu0 0.0
  %1708 = vmatprep.subr.mxu0 0.0
  %1709 = vmatpush1.msra.mxu0 0.0
  %1710 = vmatprep.subr.mxu0 0.0
  %1711 = vmatpush1.msra.mxu0 0.0
  %1712 = vmatprep.subr.mxu0 0.0
  %1713 = vmatpush1.msra.mxu0 0.0
  %1714 = vmatprep.subr.mxu0 0.0
  %1715 = vmatpush1.msra.mxu0 0.0
  %1716 = vmatprep.subr.mxu0 0.0
  %1717 = vmatpush1.msra.mxu0 0.0
  %1718 = vmatprep.subr.mxu0 0.0
  %1719 = vmatpush1.msra.mxu0 0.0
  %1720 = vmatprep.subr.mxu0 0.0
  %1721 = vmatpush1.msra.mxu0 0.0
  %1722 = vmatprep.subr.mxu0 0.0
  %1723 = vmatpush1.msra.mxu0 0.0
  %1724 = vmatprep.subr.mxu0 0.0
  %1725 = vmatpush1.msra.mxu0 0.0
  %1726 = vmatprep.subr.mxu0 0.0
  %1727 = vmatpush1.msra.mxu0 0.0
  %1728 = vmatprep.subr.mxu0 0.0
  %1729 = vmatpush1.msra.mxu0 0.0
  %1730 = vmatprep.subr.mxu0 0.0
  %1731 = vmatpush1.msra.mxu0 0.0
  %1732 = vmatprep.subr.mxu0 0.0
  %1733 = vmatpush1.msra.mxu0 0.0
  %1734 = vmatprep.subr.mxu0 0.0
  %1735 = vmatpush1.msra.mxu0 0.0
  %1736 = vmatprep.subr.mxu0 0.0
  %1737 = vmatpush1.msra.mxu0 0.0
  %1738 = vmatprep.subr.mxu0 0.0
  %1739 = vmatpush1.msra.mxu0 0.0
  %1740 = vmatprep.subr.mxu0 0.0
  %1741 = vmatpush1.msra.mxu0 0.0
  %1742 = vmatprep.subr.mxu0 0.0
  %1743 = vmatpush1.msra.mxu0 0.0
  %1744 = vmatprep.subr.mxu0 0.0
  %1745 = vmatpush1.msra.mxu0 0.0
  %1746 = vmatprep.subr.mxu0 0.0
  %1747 = vmatpush1.msra.mxu0 0.0
  %1748 = vmatprep.subr.mxu0 0.0
  %1749 = vmatpush1.msra.mxu0 0.0
  %1750 = vmatprep.subr.mxu0 0.0
  %1751 = vmatpush1.msra.mxu0 0.0
  %1752 = vmatprep.subr.mxu0 0.0
  %1753 = vmatpush1.msra.mxu0 0.0
  %1754 = vmatprep.mubr.f32.mxu0 0.0
  %1755 = vmatmul.mubr.f32.gmra.mrb[0].mxu0 %v1688
  %v1756 = vpop.f32.mrb[0].mxu0
  %v1757 = vadd.f32 0.0, %v1756
  %v1758 = vpop.f32.mrb[0].mxu0
  %1759 = vdwg.mxu0
  %v1760 = vadd.f32 %v1684, %v1757
  %v1761 = vxor.u32 %v1760, 2147483648
  %v1762 = vmul.f32 %v1761, 1.442695
  %v1763 = vpow.pop %v1762
  %v1764 = vadd.f32 %v1763, 1.0
  %v1765 = vrcp.pop %v1764
  %v1766 = vmul.f32 1.0, %v1765
  %v1767 = vtanh.pop %v1760
  %v1768 = vmul.f32 %v1766, %v1675
  %1770 = vrot.lane.b32.xlu0 %v1767, 96
  %v1771 = vpop.permute.xlu0 %1770
  %v1773 = vmul.f32 %v1766, %v1771
  %1775 = vrot.lane.b32.xlu0 %v1773, 16
  %v1776 = vpop.permute.xlu0 %1775
  %v1778 = vadd.f32 %v1768, %v1776
  %v1779 = vtanh.pop %v1778
  %1781 = vrot.lane.b32.xlu0 %v1779, 32
  %v1782 = vpop.permute.xlu0 %1781
  %v1784 = vmul.f32 %v1766, %v1782
  %v1785 = vrot.slane %v210, 7
  %v1787 = vsel %vm220, %v205, %v1785
  %1789 = vrot.lane.b32.xlu0 %v1784, 80
  %v1790 = vpop.permute.xlu0 %1789
  %v1791 = vsel %vm222, %v1790, 0
  %1793 = vmatprep.subr.mxu0 0.0
  %1794 = vmatpush1.msra.mxu0 %v215
  %1795 = vmatprep.subr.mxu0 0.0
  %1796 = vmatpush1.msra.mxu0 %v216
  %1797 = vmatprep.subr.mxu0 0.0
  %1798 = vmatpush1.msra.mxu0 0.0
  %1799 = vmatprep.subr.mxu0 0.0
  %1800 = vmatpush1.msra.mxu0 0.0
  %1801 = vmatprep.subr.mxu0 0.0
  %1802 = vmatpush1.msra.mxu0 0.0
  %1803 = vmatprep.subr.mxu0 0.0
  %1804 = vmatpush1.msra.mxu0 0.0
  %1805 = vmatprep.subr.mxu0 0.0
  %1806 = vmatpush1.msra.mxu0 0.0
  %1807 = vmatprep.subr.mxu0 0.0
  %1808 = vmatpush1.msra.mxu0 0.0
  %1809 = vmatprep.subr.mxu0 0.0
  %1810 = vmatpush1.msra.mxu0 0.0
  %1811 = vmatprep.subr.mxu0 0.0
  %1812 = vmatpush1.msra.mxu0 0.0
  %1813 = vmatprep.subr.mxu0 0.0
  %1814 = vmatpush1.msra.mxu0 0.0
  %1815 = vmatprep.subr.mxu0 0.0
  %1816 = vmatpush1.msra.mxu0 0.0
  %1817 = vmatprep.subr.mxu0 0.0
  %1818 = vmatpush1.msra.mxu0 0.0
  %1819 = vmatprep.subr.mxu0 0.0
  %1820 = vmatpush1.msra.mxu0 0.0
  %1821 = vmatprep.subr.mxu0 0.0
  %1822 = vmatpush1.msra.mxu0 0.0
  %1823 = vmatprep.subr.mxu0 0.0
  %1824 = vmatpush1.msra.mxu0 0.0
  %1825 = vmatprep.subr.mxu0 0.0
  %1826 = vmatpush1.msra.mxu0 0.0
  %1827 = vmatprep.subr.mxu0 0.0
  %1828 = vmatpush1.msra.mxu0 0.0
  %1829 = vmatprep.subr.mxu0 0.0
  %1830 = vmatpush1.msra.mxu0 0.0
  %1831 = vmatprep.subr.mxu0 0.0
  %1832 = vmatpush1.msra.mxu0 0.0
  %1833 = vmatprep.subr.mxu0 0.0
  %1834 = vmatpush1.msra.mxu0 0.0
  %1835 = vmatprep.subr.mxu0 0.0
  %1836 = vmatpush1.msra.mxu0 0.0
  %1837 = vmatprep.subr.mxu0 0.0
  %1838 = vmatpush1.msra.mxu0 0.0
  %1839 = vmatprep.subr.mxu0 0.0
  %1840 = vmatpush1.msra.mxu0 0.0
  %1841 = vmatprep.subr.mxu0 0.0
  %1842 = vmatpush1.msra.mxu0 0.0
  %1843 = vmatprep.subr.mxu0 0.0
  %1844 = vmatpush1.msra.mxu0 0.0
  %1845 = vmatprep.subr.mxu0 0.0
  %1846 = vmatpush1.msra.mxu0 0.0
  %1847 = vmatprep.subr.mxu0 0.0
  %1848 = vmatpush1.msra.mxu0 0.0
  %1849 = vmatprep.subr.mxu0 0.0
  %1850 = vmatpush1.msra.mxu0 0.0
  %1851 = vmatprep.subr.mxu0 0.0
  %1852 = vmatpush1.msra.mxu0 0.0
  %1853 = vmatprep.subr.mxu0 0.0
  %1854 = vmatpush1.msra.mxu0 0.0
  %1855 = vmatprep.subr.mxu0 0.0
  %1856 = vmatpush1.msra.mxu0 0.0
  %1857 = vmatprep.mubr.f32.mxu0 0.0
  %1858 = vmatmul.mubr.f32.gmra.mrb[0].mxu0 %v1791
  %v1859 = vpop.f32.mrb[0].mxu0
  %v1860 = vadd.f32 0.0, %v1859
  %v1861 = vpop.f32.mrb[0].mxu0
  %1862 = vdwg.mxu0
  %v1863 = vadd.f32 %v1787, %v1860
  %v1864 = vxor.u32 %v1863, 2147483648
  %v1865 = vmul.f32 %v1864, 1.442695
  %v1866 = vpow.pop %v1865
  %v1867 = vadd.f32 %v1866, 1.0
  %v1868 = vrcp.pop %v1867
  %v1869 = vmul.f32 1.0, %v1868
  %v1870 = vtanh.pop %v1863
  %v1871 = vmul.f32 %v1869, %v1778
  %1873 = vrot.lane.b32.xlu0 %v1870, 96
  %v1874 = vpop.permute.xlu0 %1873
  %v1876 = vmul.f32 %v1869, %v1874
  %1878 = vrot.lane.b32.xlu0 %v1876, 16
  %v1879 = vpop.permute.xlu0 %1878
  %v1881 = vadd.f32 %v1871, %v1879
  %v1882 = vtanh.pop %v1881
  %1884 = vrot.lane.b32.xlu0 %v1882, 32
  %v1885 = vpop.permute.xlu0 %1884
  %v1887 = vmul.f32 %v1869, %v1885
  %v1888 = vrot.slane %v424, 7
  %v1890 = vrot.slane %v529, 6
  %v1892 = vrot.slane %v634, 5
  %v1894 = vrot.slane %v739, 4
  %v1896 = vrot.slane %v844, 3
  %v1898 = vrot.slane %v949, 2
  %v1901 = vrot.slane %v1054, 1
  %v1903 = vsel %vm220, %v320, %v1888
  %vm1904 = vcmask 1041408
  %v1905 = vsel %vm1904, %v1903, %v1890
  %vm1906 = vcmask 1042432
  %v1907 = vsel %vm1906, %v1905, %v1892
  %vm1908 = vcmask 1043456
  %v1909 = vsel %vm1908, %v1907, %v1894
  %vm1910 = vcmask 1044480
  %v1911 = vsel %vm1910, %v1909, %v1896
  %vm1912 = vcmask 1045504
  %v1913 = vsel %vm1912, %v1911, %v1898
  %vm1914 = vcmask 1046528
  %v1915 = vsel %vm1914, %v1913, %v1901
  %v1916 = vrot.slane %v1784, 7
  %v1918 = vrot.slane %v1681, 6
  %v1920 = vrot.slane %v1576, 5
  %v1922 = vrot.slane %v1471, 4
  %v1924 = vrot.slane %v1366, 3
  %v1926 = vrot.slane %v1261, 2
  %v1928 = vrot.slane %v1156, 1
  %v1930 = vsel %vm220, %v1887, %v1916
  %v1931 = vsel %vm1904, %v1930, %v1918
  %v1932 = vsel %vm1906, %v1931, %v1920
  %v1933 = vsel %vm1908, %v1932, %v1922
  %v1934 = vsel %vm1910, %v1933, %v1924
  %v1935 = vsel %vm1912, %v1934, %v1926
  %v1936 = vsel %vm1914, %v1935, %v1928
  %1938 = vrot.lane.b32.xlu0 %v1915, 80
  %v1939 = vpop.permute.xlu0 %1938
  %1942 = vrot.lane.b32.xlu0 %v1936, 96
  %v1943 = vpop.permute.xlu0 %1942
  %v1945 = vsel %vm222, %v1939, %v1943
  %v1946 = vrot.slane %v320, 1
  %v1948 = vrot.slane %v529, 7
  %v1950 = vrot.slane %v634, 6
  %v1952 = vrot.slane %v739, 5
  %v1954 = vrot.slane %v844, 4
  %v1956 = vrot.slane %v949, 3
  %v1958 = vrot.slane %v1054, 2
  %v1960 = vsel %vm220, %v1946, %v424
  %v1961 = vsel %vm1904, %v1960, %v1948
  %v1962 = vsel %vm1906, %v1961, %v1950
  %v1963 = vsel %vm1908, %v1962, %v1952
  %v1964 = vsel %vm1910, %v1963, %v1954
  %v1965 = vsel %vm1912, %v1964, %v1956
  %v1966 = vsel %vm1914, %v1965, %v1958
  %v1968 = vrot.slane %v1887, 1
  %v1970 = vrot.slane %v1681, 7
  %v1972 = vrot.slane %v1576, 6
  %v1974 = vrot.slane %v1471, 5
  %v1976 = vrot.slane %v1366, 4
  %v1978 = vrot.slane %v1261, 3
  %v1980 = vrot.slane %v1156, 2
  %v1982 = vsel %vm220, %v1968, %v1784
  %v1983 = vsel %vm1904, %v1982, %v1970
  %v1984 = vsel %vm1906, %v1983, %v1972
  %v1985 = vsel %vm1908, %v1984, %v1974
  %v1986 = vsel %vm1910, %v1985, %v1976
  %v1987 = vsel %vm1912, %v1986, %v1978
  %v1988 = vsel %vm1914, %v1987, %v1980
  %1990 = vrot.lane.b32.xlu0 %v1966, 80
  %v1991 = vpop.permute.xlu0 %1990
  %1994 = vrot.lane.b32.xlu0 %v1988, 96
  %v1995 = vpop.permute.xlu0 %1994
  %v1997 = vsel %vm222, %v1991, %v1995
  %v1998 = vld [vmem:[%s7] sm:$0xff]
  %v1999 = vld [vmem:[%s7 + $0x8] sm:$0xff]
  %v2000 = vld [vmem:[%s7 + $0x10] sm:$0xff]
  %v2001 = vld [vmem:[%s7 + $0x18] sm:$0xff]
  %v2002 = vld [vmem:[%s8] sm:$0x1]
  %v2004 = vlaneseq
  %v2005 = vshrl.u32 %v2004, 7
  %v2006 = vsub.s32 0, %v2005
  %v2007 = vrot.slane %v2002, %v2006
  %v2010 = vsel %vm45, %v1945, 0
  %v2013 = vsel %vm45, %v1997, 0
  %2015 = vmatprep.subr.mxu0 0.0
  %2016 = vmatpush1.msra.mxu0 %v1998
  %2017 = vmatprep.subr.mxu0 0.0
  %2018 = vmatpush1.msra.mxu0 %v1999
  %2019 = vmatprep.subr.mxu0 0.0
  %2020 = vmatpush1.msra.mxu0 %v2000
  %2021 = vmatprep.subr.mxu0 0.0
  %2022 = vmatpush1.msra.mxu0 %v2001
  %2023 = vmatprep.subr.mxu0 0.0
  %2024 = vmatpush1.msra.mxu0 0.0
  %2025 = vmatprep.subr.mxu0 0.0
  %2026 = vmatpush1.msra.mxu0 0.0
  %2027 = vmatprep.subr.mxu0 0.0
  %2028 = vmatpush1.msra.mxu0 0.0
  %2029 = vmatprep.subr.mxu0 0.0
  %2030 = vmatpush1.msra.mxu0 0.0
  %2031 = vmatprep.subr.mxu0 0.0
  %2032 = vmatpush1.msra.mxu0 0.0
  %2033 = vmatprep.subr.mxu0 0.0
  %2034 = vmatpush1.msra.mxu0 0.0
  %2035 = vmatprep.subr.mxu0 0.0
  %2036 = vmatpush1.msra.mxu0 0.0
  %2037 = vmatprep.subr.mxu0 0.0
  %2038 = vmatpush1.msra.mxu0 0.0
  %2039 = vmatprep.subr.mxu0 0.0
  %2040 = vmatpush1.msra.mxu0 0.0
  %2041 = vmatprep.subr.mxu0 0.0
  %2042 = vmatpush1.msra.mxu0 0.0
  %2043 = vmatprep.subr.mxu0 0.0
  %2044 = vmatpush1.msra.mxu0 0.0
  %2045 = vmatprep.subr.mxu0 0.0
  %2046 = vmatpush1.msra.mxu0 0.0
  %2047 = vmatprep.subr.mxu0 0.0
  %2048 = vmatpush1.msra.mxu0 0.0
  %2049 = vmatprep.subr.mxu0 0.0
  %2050 = vmatpush1.msra.mxu0 0.0
  %2051 = vmatprep.subr.mxu0 0.0
  %2052 = vmatpush1.msra.mxu0 0.0
  %2053 = vmatprep.subr.mxu0 0.0
  %2054 = vmatpush1.msra.mxu0 0.0
  %2055 = vmatprep.subr.mxu0 0.0
  %2056 = vmatpush1.msra.mxu0 0.0
  %2057 = vmatprep.subr.mxu0 0.0
  %2058 = vmatpush1.msra.mxu0 0.0
  %2059 = vmatprep.subr.mxu0 0.0
  %2060 = vmatpush1.msra.mxu0 0.0
  %2061 = vmatprep.subr.mxu0 0.0
  %2062 = vmatpush1.msra.mxu0 0.0
  %2063 = vmatprep.subr.mxu0 0.0
  %2064 = vmatpush1.msra.mxu0 0.0
  %2065 = vmatprep.subr.mxu0 0.0
  %2066 = vmatpush1.msra.mxu0 0.0
  %2067 = vmatprep.subr.mxu0 0.0
  %2068 = vmatpush1.msra.mxu0 0.0
  %2069 = vmatprep.subr.mxu0 0.0
  %2070 = vmatpush1.msra.mxu0 0.0
  %2071 = vmatprep.subr.mxu0 0.0
  %2072 = vmatpush1.msra.mxu0 0.0
  %2073 = vmatprep.subr.mxu0 0.0
  %2074 = vmatpush1.msra.mxu0 0.0
  %2075 = vmatprep.subr.mxu0 0.0
  %2076 = vmatpush1.msra.mxu0 0.0
  %2077 = vmatprep.subr.mxu0 0.0
  %2078 = vmatpush1.msra.mxu0 0.0
  %2079 = vmatprep.mubr.f32.mxu0 0.0
  %2080 = vmatmul.mubr.f32.gmra.mrb[0].mxu0 %v2010
  %v2081 = vpop.f32.mrb[0].mxu0
  %v2082 = vadd.f32 %v2007, %v2081
  %v2083 = vpop.f32.mrb[0].mxu0
  %2084 = vmatprep.mubr.f32.mxu0 0.0
  %2085 = vmatmul.mubr.f32.gmra.mrb[0].mxu0 %v2013
  %v2086 = vpop.f32.mrb[0].mxu0
  %v2087 = vadd.f32 %v2007, %v2086
  %v2088 = vpop.f32.mrb[0].mxu0
  %2089 = vdwg.mxu0
  %vm2090 = vcmask 23552
  %2091 = vst.msk [vmem:[%s9] sm:$0xff] %vm2090, %v2082
  %2092 = vst.msk [vmem:[%s9 + $0x8] sm:$0xff] %vm2090, %v2087
  // Predicated region
  $region38: #{_lambda_.7} parent=0 // pred_check
    _
  $region39: #{_lambda_.7} parent=0 // pred_check_branch
    %2094 = sbr.rel (0) target = $region41
  $region40: #{_lambda_.7} parent=0 // pred_region
    _
  $region41: #{_lambda_.7} parent=0 // pred_fallthru
    _
  // Predicated region
  $region42: #{_lambda_.7} parent=0 // pred_check
    _
  $region43: #{_lambda_.7} parent=0 // pred_check_branch
    %2096 = sbr.rel (0) target = $region45
  $region44: #{_lambda_.7} parent=0 // pred_region
    _
  $region45: #{_lambda_.7} parent=0 // pred_fallthru
    _

</llo_original>
